<compile_context>
chip_gen: v7x
topology: tpu7x:2x2x1
jax: 0.10.0
libtpu: 0.0.40
codegen_flags: <defaults>
</compile_context>

<pallas_src>
import functools

import numpy as np

import jax
import jax.numpy as jnp
from jax.experimental import pallas as pl
from jax.experimental.pallas import tpu as pltpu

_BN_EPS = 1e-5
_LRELU_SLOPE = 0.2


def _round_up(x, m):
    return (x + m - 1) // m * m


def _bn_leaky_relu(z, gamma, beta, count):
    """Training-mode BatchNorm folded into one FMA, then LeakyReLU(0.2).

    z:      (C, Mp) f32 pre-activation, conv WITHOUT bias (bias is cancelled by
            the mean subtraction).  Columns >= count are exactly zero padding.
    gamma, beta: (C, 1) f32.  count: true number of positions (N*Ho*Wo).
    """
    inv_m = np.float32(1.0 / count)
    zsum = jnp.sum(z, axis=1, keepdims=True)           # pad cols contribute 0
    zsq = jnp.sum(z * z, axis=1, keepdims=True)
    mean = zsum * inv_m
    var = zsq * inv_m - mean * mean                    # biased batch variance
    scale = gamma * jax.lax.rsqrt(var + _BN_EPS)
    shift = beta - mean * scale
    y = z * scale + shift
    return jnp.where(y > 0, y, _LRELU_SLOPE * y)


def _disc_fused_kernel(p0_ref, w0_ref, g0_ref, bt0_ref,
                       w1_ref, s1_ref, g1_ref, bt1_ref,
                       w2_ref, s2_ref, b2_ref, o_ref,
                       *, m0_count, m1_count):
    n_taps = w1_ref.shape[0]                       # kh*kw = 16, fully unrolled

    # ---- block 0: conv as lane-dense GEMM (bf16 ops, f32 acc) + BN + LReLU --
    z0 = jnp.dot(w0_ref[...], p0_ref[...], preferred_element_type=jnp.float32)
    a0 = _bn_leaky_relu(z0, g0_ref[...], bt0_ref[...], m0_count)   # (C0, M0p)

    # ---- block 1: in-kernel im2col via one-hot selection matmuls -----------
    c1, m1p = w1_ref.shape[1], s1_ref.shape[2]
    z1 = jnp.zeros((c1, m1p), jnp.float32)
    for kk in range(n_taps):
        patches = jnp.dot(a0, s1_ref[kk], preferred_element_type=jnp.float32)
        z1 = z1 + jnp.dot(w1_ref[kk], patches,
                          preferred_element_type=jnp.float32)
    a1 = _bn_leaky_relu(z1, g1_ref[...], bt1_ref[...], m1_count)   # (C1, M1p)

    # ---- block 2 (final): conv + bias only ----------------------------------
    c2, m2 = w2_ref.shape[1], s2_ref.shape[2]
    z2 = jnp.zeros((c2, m2), jnp.float32)
    for kk in range(n_taps):
        v = jnp.dot(w2_ref[kk], a1, preferred_element_type=jnp.float32)
        z2 = z2 + jnp.dot(v, s2_ref[kk], preferred_element_type=jnp.float32)
    o_ref[...] = (z2 + b2_ref[...]).astype(o_ref.dtype)


def _im2col_T(x, kh, kw, stride):
    """x: (N, C, H, W) -> patches^T (C*kh*kw, N*Ho*Wo), rows ordered (c, ki, kj)."""
    n, c, h, w = x.shape
    ho = (h - kh) // stride + 1
    wo = (w - kw) // stride + 1
    cols = []
    for ki in range(kh):
        for kj in range(kw):
            cols.append(x[:, :, ki:ki + stride * ho:stride,
                          kj:kj + stride * wo:stride])
    p = jnp.stack(cols, axis=0).reshape(kh, kw, n, c, ho, wo)
    p = p.transpose(3, 0, 1, 2, 4, 5).reshape(c * kh * kw, n * ho * wo)
    return p, ho, wo


def _make_selection(n, h, w, kh, kw, stride, m_in_pad, m_out_pad):
    """Constant one-hot selection tensors S (kh*kw, m_in_pad, m_out_pad).

    For activation a (C, m_in) laid out with column index n*h*w + y*w + x,
    a @ S[ki*kw+kj] gives the (C, m_out) im2col slice for kernel tap (ki,kj).
    Padded rows/cols are all-zero, so garbage in padded activation columns is
    never selected and padded outputs stay exactly zero.
    """
    ho = (h - kh) // stride + 1
    wo = (w - kw) // stride + 1
    m_out = n * ho * wo
    ni, hi, wi = np.meshgrid(np.arange(n), np.arange(ho), np.arange(wo),
                             indexing="ij")
    ni, hi, wi = ni.ravel(), hi.ravel(), wi.ravel()
    cols = np.arange(m_out)
    s = np.zeros((kh * kw, m_in_pad, m_out_pad), np.float32)
    for ki in range(kh):
        for kj in range(kw):
            rows = ni * h * w + (stride * hi + ki) * w + (stride * wi + kj)
            s[ki * kw + kj, rows, cols] = 1.0
    return s, ho, wo


def _full_block_spec(a):
    nd = a.ndim
    if nd == 2:
        return pl.BlockSpec(a.shape, lambda i: (0, 0))
    if nd == 3:
        return pl.BlockSpec(a.shape, lambda i: (0, 0, 0))
    raise ValueError(f"unsupported rank {nd}")


def discriminator_forward(params, image):
    image = image.astype(jnp.float32)
    n, c_in, h, w_sp = image.shape
    w0, _b0, g0, bt0 = params["l0"]     # conv bias cancelled by BN -> unused
    w1, _b1, g1, bt1 = params["l1"]
    w2, b2, _g2, _bt2 = params["l2"]    # final layer: bias only, no BN

    c0_out, _, kh, kw = w0.shape
    c1_out = w1.shape[0]
    c2_out = w2.shape[0]
    stride = 2
    n_taps = kh * kw

    # ---- layer-0 im2col (once, in the wrapper, on the small input image) ---
    c_pad = _round_up(c_in, 8)                       # 11 -> 16 => K0 = 256
    img_p = jnp.pad(image, ((0, 0), (0, c_pad - c_in), (0, 0), (0, 0)))
    p0_t, h0, w0sp = _im2col_T(img_p, kh, kw, stride)
    m0 = n * h0 * w0sp
    m0p = _round_up(m0, 8)
    p0_t = jnp.pad(p0_t, ((0, 0), (0, m0p - m0))).astype(jnp.bfloat16)

    w0_pad = jnp.pad(w0, ((0, 0), (0, c_pad - c_in), (0, 0), (0, 0)))
    w0_mat = w0_pad.reshape(c0_out, c_pad * kh * kw).astype(jnp.bfloat16)
    k0 = c_pad * kh * kw

    # ---- constant one-hot "im2col" selections for blocks 1 & 2 -------------
    h1 = (h0 - kh) // stride + 1
    w1sp = (w0sp - kw) // stride + 1
    m1 = n * h1 * w1sp
    m1p = _round_up(m1, 8)
    s1_np, _, _ = _make_selection(n, h0, w0sp, kh, kw, stride, m0p, m1p)

    h2 = (h1 - kh) // stride + 1
    w2sp = (w1sp - kw) // stride + 1
    m2 = n * h2 * w2sp
    s2_np, _, _ = _make_selection(n, h1, w1sp, kh, kw, stride, m1p, m2)

    s1 = jnp.asarray(s1_np)
    s2 = jnp.asarray(s2_np)
    w1_s = jnp.transpose(w1, (2, 3, 0, 1)).reshape(n_taps, c1_out, c0_out)
    w2_s = jnp.transpose(w2, (2, 3, 0, 1)).reshape(n_taps, c2_out, c1_out)

    args = (
        p0_t, w0_mat, g0.reshape(c0_out, 1), bt0.reshape(c0_out, 1),
        w1_s, s1, g1.reshape(c1_out, 1), bt1.reshape(c1_out, 1),
        w2_s, s2, b2.reshape(c2_out, 1),
    )

    flops = (2 * c0_out * k0 * m0p
             + 2 * n_taps * (c0_out * m0p * m1p + c1_out * c0_out * m1p)
             + 2 * n_taps * (c2_out * c1_out * m1p + c2_out * m1p * m2)
             + 10 * (c0_out * m0p + c1_out * m1p))
    bytes_accessed = sum(int(np.prod(a.shape)) * a.dtype.itemsize for a in args)
    bytes_accessed += c2_out * m2 * 4

    kernel = functools.partial(_disc_fused_kernel, m0_count=m0, m1_count=m1)
    out_t = pl.pallas_call(
        kernel,
        out_shape=jax.ShapeDtypeStruct((c2_out, m2), jnp.float32),
        grid=(1,),
        in_specs=[_full_block_spec(a) for a in args],
        out_specs=pl.BlockSpec((c2_out, m2), lambda i: (0, 0)),
        compiler_params=pltpu.CompilerParams(
            dimension_semantics=("arbitrary",)),
        cost_estimate=pl.CostEstimate(
            flops=int(flops),
            transcendentals=int(c0_out + c1_out),
            bytes_accessed=int(bytes_accessed)),
    )(*args)

    # (C2, N*h2*w2) -> (N, C2*h2*w2); matches torch's out.view(len(out), -1)
    out = out_t.reshape(c2_out, n, h2 * w2sp).transpose(1, 0, 2).reshape(n, -1)
    return out


def init_params(key, im_chan=11, hidden_dim=16):
    def conv_init(k, cout, cin, ksz=4):
        fan_in = cin * ksz * ksz
        bound = 1.0 / np.sqrt(fan_in)
        kw_, kb_ = jax.random.split(k)
        w = jax.random.uniform(kw_, (cout, cin, ksz, ksz), jnp.float32,
                               -bound, bound)
        b = jax.random.uniform(kb_, (cout,), jnp.float32, -bound, bound)
        return w, b

    k0, k1, k2 = jax.random.split(key, 3)
    w0, b0 = conv_init(k0, hidden_dim, im_chan)
    w1, b1 = conv_init(k1, hidden_dim * 2, hidden_dim)
    w2, b2 = conv_init(k2, 1, hidden_dim * 2)
    params = {
        "l0": (w0, b0, jnp.ones((hidden_dim,), jnp.float32),
               jnp.zeros((hidden_dim,), jnp.float32)),
        "l1": (w1, b1, jnp.ones((hidden_dim * 2,), jnp.float32),
               jnp.zeros((hidden_dim * 2,), jnp.float32)),
        "l2": (w2, b2, jnp.ones((1,), jnp.float32),
               jnp.zeros((1,), jnp.float32)),   # gamma/beta unused (final)
    }
    return params


if __name__ == "__main__":
    key = jax.random.PRNGKey(0)
    k_img, k_par = jax.random.split(key)

    N, C, H, W = 2, 11, 28, 28   # spatial 28 -> 13 -> 5 -> 1 with k=4, s=2
    image = jax.random.normal(k_img, (N, C, H, W), jnp.float32)
    params = init_params(k_par, im_chan=C, hidden_dim=16)

    fwd = jax.jit(discriminator_forward)
    out = fwd(params, image)
    out = jax.block_until_ready(out)
    assert out.shape == (N, 1), out.shape
    assert bool(jnp.all(jnp.isfinite(out)))
    print("KERNEL_OK")
</pallas_src>

<mosaic_0001>
module attributes {stable_mosaic.version = 11 : i64} {
  func.func @_disc_fused_kernel(%arg0: i32, %arg1: memref<256x344xbf16, #tpu.memory_space<vmem>>, %arg2: memref<16x256xbf16, #tpu.memory_space<vmem>>, %arg3: memref<16x1xf32, #tpu.memory_space<vmem>>, %arg4: memref<16x1xf32, #tpu.memory_space<vmem>>, %arg5: memref<16x32x16xf32, #tpu.memory_space<vmem>>, %arg6: memref<16x344x56xf32, #tpu.memory_space<vmem>>, %arg7: memref<32x1xf32, #tpu.memory_space<vmem>>, %arg8: memref<32x1xf32, #tpu.memory_space<vmem>>, %arg9: memref<16x1x32xf32, #tpu.memory_space<vmem>>, %arg10: memref<16x56x2xf32, #tpu.memory_space<vmem>>, %arg11: memref<1x1xf32, #tpu.memory_space<vmem>>, %arg12: memref<1x2xf32, #tpu.memory_space<vmem>>) attributes {dimension_semantics = [#tpu.dimension_semantics<arbitrary>], iteration_bounds = array<i64: 1>, scalar_prefetch = 0 : i64, scratch_operands = 0 : i64, tpu.core_type = #tpu.core_type<tc>, window_params = [{pipeline_mode = #tpu.pipeline_mode<synchronous>, transform_indices = @transform_0, window_bounds = array<i64: 256, 344>}, {pipeline_mode = #tpu.pipeline_mode<synchronous>, transform_indices = @transform_1, window_bounds = array<i64: 16, 256>}, {pipeline_mode = #tpu.pipeline_mode<synchronous>, transform_indices = @transform_2, window_bounds = array<i64: 16, 1>}, {pipeline_mode = #tpu.pipeline_mode<synchronous>, transform_indices = @transform_3, window_bounds = array<i64: 16, 1>}, {pipeline_mode = #tpu.pipeline_mode<synchronous>, transform_indices = @transform_4, window_bounds = array<i64: 16, 32, 16>}, {pipeline_mode = #tpu.pipeline_mode<synchronous>, transform_indices = @transform_5, window_bounds = array<i64: 16, 344, 56>}, {pipeline_mode = #tpu.pipeline_mode<synchronous>, transform_indices = @transform_6, window_bounds = array<i64: 32, 1>}, {pipeline_mode = #tpu.pipeline_mode<synchronous>, transform_indices = @transform_7, window_bounds = array<i64: 32, 1>}, {pipeline_mode = #tpu.pipeline_mode<synchronous>, transform_indices = @transform_8, window_bounds = array<i64: 16, 1, 32>}, {pipeline_mode = #tpu.pipeline_mode<synchronous>, transform_indices = @transform_9, window_bounds = array<i64: 16, 56, 2>}, {pipeline_mode = #tpu.pipeline_mode<synchronous>, transform_indices = @transform_10, window_bounds = array<i64: 1, 1>}, {pipeline_mode = #tpu.pipeline_mode<synchronous>, transform_indices = @transform_11, window_bounds = array<i64: 1, 2>}]} {
    %c0 = arith.constant 0 : index
    %c0_0 = arith.constant 0 : index
    %0 = vector.load %arg2[%c0, %c0_0] : memref<16x256xbf16, #tpu.memory_space<vmem>>, vector<16x256xbf16>
    %c0_1 = arith.constant 0 : index
    %c0_2 = arith.constant 0 : index
    %1 = vector.load %arg1[%c0_1, %c0_2] : memref<256x344xbf16, #tpu.memory_space<vmem>>, vector<256x344xbf16>
    %cst = arith.constant dense<0.000000e+00> : vector<16x344xf32>
    %2 = tpu.matmul %0, %1, %cst {dimension_numbers = #tpu.dot_dimension_numbers<[1], [0], [0], [1], [0, 0, 1, 1], [], []>} : vector<16x256xbf16>, vector<256x344xbf16>, vector<16x344xf32> -> vector<16x344xf32>
    %c0_3 = arith.constant 0 : index
    %c0_4 = arith.constant 0 : index
    %3 = vector.load %arg3[%c0_3, %c0_4] : memref<16x1xf32, #tpu.memory_space<vmem>>, vector<16x1xf32>
    %c0_5 = arith.constant 0 : index
    %c0_6 = arith.constant 0 : index
    %4 = vector.load %arg4[%c0_5, %c0_6] : memref<16x1xf32, #tpu.memory_space<vmem>>, vector<16x1xf32>
    %cst_7 = arith.constant dense<0.000000e+00> : vector<16xf32>
    %5 = vector.multi_reduction <add>, %2, %cst_7 [1] : vector<16x344xf32> to vector<16xf32>
    %6 = vector.shape_cast %5 : vector<16xf32> to vector<16x1xf32>
    %7 = arith.mulf %2, %2 : vector<16x344xf32>
    %cst_8 = arith.constant dense<0.000000e+00> : vector<16xf32>
    %8 = vector.multi_reduction <add>, %7, %cst_8 [1] : vector<16x344xf32> to vector<16xf32>
    %9 = vector.shape_cast %8 : vector<16xf32> to vector<16x1xf32>
    %cst_9 = arith.constant 2.958580e-03 : f32
    %10 = vector.broadcast %cst_9 : f32 to vector<16x1xf32>
    %11 = arith.mulf %6, %10 : vector<16x1xf32>
    %cst_10 = arith.constant 2.958580e-03 : f32
    %12 = vector.broadcast %cst_10 : f32 to vector<16x1xf32>
    %13 = arith.mulf %9, %12 : vector<16x1xf32>
    %14 = arith.mulf %11, %11 : vector<16x1xf32>
    %15 = arith.subf %13, %14 : vector<16x1xf32>
    %cst_11 = arith.constant 9.99999974E-6 : f32
    %16 = vector.broadcast %cst_11 : f32 to vector<16x1xf32>
    %17 = arith.addf %15, %16 : vector<16x1xf32>
    %18 = math.rsqrt %17 : vector<16x1xf32>
    %19 = arith.mulf %3, %18 : vector<16x1xf32>
    %20 = arith.mulf %11, %19 : vector<16x1xf32>
    %21 = arith.subf %4, %20 : vector<16x1xf32>
    %22 = vector.broadcast %19 : vector<16x1xf32> to vector<16x344xf32>
    %23 = arith.mulf %2, %22 : vector<16x344xf32>
    %24 = vector.broadcast %21 : vector<16x1xf32> to vector<16x344xf32>
    %25 = arith.addf %23, %24 : vector<16x344xf32>
    %cst_12 = arith.constant 0.000000e+00 : f32
    %26 = vector.broadcast %cst_12 : f32 to vector<16x344xf32>
    %27 = arith.cmpf ogt, %25, %26 : vector<16x344xf32>
    %cst_13 = arith.constant 2.000000e-01 : f32
    %28 = vector.broadcast %cst_13 : f32 to vector<16x344xf32>
    %29 = arith.mulf %28, %25 : vector<16x344xf32>
    %30 = arith.select %27, %25, %29 : vector<16x344xi1>, vector<16x344xf32>
    %cst_14 = arith.constant 0.000000e+00 : f32
    %31 = vector.broadcast %cst_14 : f32 to vector<32x56xf32>
    %c0_15 = arith.constant 0 : index
    %c0_16 = arith.constant 0 : index
    %c0_17 = arith.constant 0 : index
    %32 = vector.load %arg6[%c0_15, %c0_16, %c0_17] : memref<16x344x56xf32, #tpu.memory_space<vmem>>, vector<1x344x56xf32>
    %33 = vector.shape_cast %32 : vector<1x344x56xf32> to vector<344x56xf32>
    %cst_18 = arith.constant dense<0.000000e+00> : vector<16x56xf32>
    %34 = tpu.matmul %30, %33, %cst_18 {dimension_numbers = #tpu.dot_dimension_numbers<[1], [0], [0], [1], [0, 0, 1, 1], [], []>} : vector<16x344xf32>, vector<344x56xf32>, vector<16x56xf32> -> vector<16x56xf32>
    %c0_19 = arith.constant 0 : index
    %c0_20 = arith.constant 0 : index
    %c0_21 = arith.constant 0 : index
    %35 = vector.load %arg5[%c0_19, %c0_20, %c0_21] : memref<16x32x16xf32, #tpu.memory_space<vmem>>, vector<1x32x16xf32>
    %36 = vector.shape_cast %35 : vector<1x32x16xf32> to vector<32x16xf32>
    %cst_22 = arith.constant dense<0.000000e+00> : vector<32x56xf32>
    %37 = tpu.matmul %36, %34, %cst_22 {dimension_numbers = #tpu.dot_dimension_numbers<[1], [0], [0], [1], [0, 0, 1, 1], [], []>} : vector<32x16xf32>, vector<16x56xf32>, vector<32x56xf32> -> vector<32x56xf32>
    %38 = arith.addf %31, %37 : vector<32x56xf32>
    %c1 = arith.constant 1 : index
    %c0_23 = arith.constant 0 : index
    %c0_24 = arith.constant 0 : index
    %39 = vector.load %arg6[%c1, %c0_23, %c0_24] : memref<16x344x56xf32, #tpu.memory_space<vmem>>, vector<1x344x56xf32>
    %40 = vector.shape_cast %39 : vector<1x344x56xf32> to vector<344x56xf32>
    %cst_25 = arith.constant dense<0.000000e+00> : vector<16x56xf32>
    %41 = tpu.matmul %30, %40, %cst_25 {dimension_numbers = #tpu.dot_dimension_numbers<[1], [0], [0], [1], [0, 0, 1, 1], [], []>} : vector<16x344xf32>, vector<344x56xf32>, vector<16x56xf32> -> vector<16x56xf32>
    %c1_26 = arith.constant 1 : index
    %c0_27 = arith.constant 0 : index
    %c0_28 = arith.constant 0 : index
    %42 = vector.load %arg5[%c1_26, %c0_27, %c0_28] : memref<16x32x16xf32, #tpu.memory_space<vmem>>, vector<1x32x16xf32>
    %43 = vector.shape_cast %42 : vector<1x32x16xf32> to vector<32x16xf32>
    %cst_29 = arith.constant dense<0.000000e+00> : vector<32x56xf32>
    %44 = tpu.matmul %43, %41, %cst_29 {dimension_numbers = #tpu.dot_dimension_numbers<[1], [0], [0], [1], [0, 0, 1, 1], [], []>} : vector<32x16xf32>, vector<16x56xf32>, vector<32x56xf32> -> vector<32x56xf32>
    %45 = arith.addf %38, %44 : vector<32x56xf32>
    %c2 = arith.constant 2 : index
    %c0_30 = arith.constant 0 : index
    %c0_31 = arith.constant 0 : index
    %46 = vector.load %arg6[%c2, %c0_30, %c0_31] : memref<16x344x56xf32, #tpu.memory_space<vmem>>, vector<1x344x56xf32>
    %47 = vector.shape_cast %46 : vector<1x344x56xf32> to vector<344x56xf32>
    %cst_32 = arith.constant dense<0.000000e+00> : vector<16x56xf32>
    %48 = tpu.matmul %30, %47, %cst_32 {dimension_numbers = #tpu.dot_dimension_numbers<[1], [0], [0], [1], [0, 0, 1, 1], [], []>} : vector<16x344xf32>, vector<344x56xf32>, vector<16x56xf32> -> vector<16x56xf32>
    %c2_33 = arith.constant 2 : index
    %c0_34 = arith.constant 0 : index
    %c0_35 = arith.constant 0 : index
    %49 = vector.load %arg5[%c2_33, %c0_34, %c0_35] : memref<16x32x16xf32, #tpu.memory_space<vmem>>, vector<1x32x16xf32>
    %50 = vector.shape_cast %49 : vector<1x32x16xf32> to vector<32x16xf32>
    %cst_36 = arith.constant dense<0.000000e+00> : vector<32x56xf32>
    %51 = tpu.matmul %50, %48, %cst_36 {dimension_numbers = #tpu.dot_dimension_numbers<[1], [0], [0], [1], [0, 0, 1, 1], [], []>} : vector<32x16xf32>, vector<16x56xf32>, vector<32x56xf32> -> vector<32x56xf32>
    %52 = arith.addf %45, %51 : vector<32x56xf32>
    %c3 = arith.constant 3 : index
    %c0_37 = arith.constant 0 : index
    %c0_38 = arith.constant 0 : index
    %53 = vector.load %arg6[%c3, %c0_37, %c0_38] : memref<16x344x56xf32, #tpu.memory_space<vmem>>, vector<1x344x56xf32>
    %54 = vector.shape_cast %53 : vector<1x344x56xf32> to vector<344x56xf32>
    %cst_39 = arith.constant dense<0.000000e+00> : vector<16x56xf32>
    %55 = tpu.matmul %30, %54, %cst_39 {dimension_numbers = #tpu.dot_dimension_numbers<[1], [0], [0], [1], [0, 0, 1, 1], [], []>} : vector<16x344xf32>, vector<344x56xf32>, vector<16x56xf32> -> vector<16x56xf32>
    %c3_40 = arith.constant 3 : index
    %c0_41 = arith.constant 0 : index
    %c0_42 = arith.constant 0 : index
    %56 = vector.load %arg5[%c3_40, %c0_41, %c0_42] : memref<16x32x16xf32, #tpu.memory_space<vmem>>, vector<1x32x16xf32>
    %57 = vector.shape_cast %56 : vector<1x32x16xf32> to vector<32x16xf32>
    %cst_43 = arith.constant dense<0.000000e+00> : vector<32x56xf32>
    %58 = tpu.matmul %57, %55, %cst_43 {dimension_numbers = #tpu.dot_dimension_numbers<[1], [0], [0], [1], [0, 0, 1, 1], [], []>} : vector<32x16xf32>, vector<16x56xf32>, vector<32x56xf32> -> vector<32x56xf32>
    %59 = arith.addf %52, %58 : vector<32x56xf32>
    %c4 = arith.constant 4 : index
    %c0_44 = arith.constant 0 : index
    %c0_45 = arith.constant 0 : index
    %60 = vector.load %arg6[%c4, %c0_44, %c0_45] : memref<16x344x56xf32, #tpu.memory_space<vmem>>, vector<1x344x56xf32>
    %61 = vector.shape_cast %60 : vector<1x344x56xf32> to vector<344x56xf32>
    %cst_46 = arith.constant dense<0.000000e+00> : vector<16x56xf32>
    %62 = tpu.matmul %30, %61, %cst_46 {dimension_numbers = #tpu.dot_dimension_numbers<[1], [0], [0], [1], [0, 0, 1, 1], [], []>} : vector<16x344xf32>, vector<344x56xf32>, vector<16x56xf32> -> vector<16x56xf32>
    %c4_47 = arith.constant 4 : index
    %c0_48 = arith.constant 0 : index
    %c0_49 = arith.constant 0 : index
    %63 = vector.load %arg5[%c4_47, %c0_48, %c0_49] : memref<16x32x16xf32, #tpu.memory_space<vmem>>, vector<1x32x16xf32>
    %64 = vector.shape_cast %63 : vector<1x32x16xf32> to vector<32x16xf32>
    %cst_50 = arith.constant dense<0.000000e+00> : vector<32x56xf32>
    %65 = tpu.matmul %64, %62, %cst_50 {dimension_numbers = #tpu.dot_dimension_numbers<[1], [0], [0], [1], [0, 0, 1, 1], [], []>} : vector<32x16xf32>, vector<16x56xf32>, vector<32x56xf32> -> vector<32x56xf32>
    %66 = arith.addf %59, %65 : vector<32x56xf32>
    %c5 = arith.constant 5 : index
    %c0_51 = arith.constant 0 : index
    %c0_52 = arith.constant 0 : index
    %67 = vector.load %arg6[%c5, %c0_51, %c0_52] : memref<16x344x56xf32, #tpu.memory_space<vmem>>, vector<1x344x56xf32>
    %68 = vector.shape_cast %67 : vector<1x344x56xf32> to vector<344x56xf32>
    %cst_53 = arith.constant dense<0.000000e+00> : vector<16x56xf32>
    %69 = tpu.matmul %30, %68, %cst_53 {dimension_numbers = #tpu.dot_dimension_numbers<[1], [0], [0], [1], [0, 0, 1, 1], [], []>} : vector<16x344xf32>, vector<344x56xf32>, vector<16x56xf32> -> vector<16x56xf32>
    %c5_54 = arith.constant 5 : index
    %c0_55 = arith.constant 0 : index
    %c0_56 = arith.constant 0 : index
    %70 = vector.load %arg5[%c5_54, %c0_55, %c0_56] : memref<16x32x16xf32, #tpu.memory_space<vmem>>, vector<1x32x16xf32>
    %71 = vector.shape_cast %70 : vector<1x32x16xf32> to vector<32x16xf32>
    %cst_57 = arith.constant dense<0.000000e+00> : vector<32x56xf32>
    %72 = tpu.matmul %71, %69, %cst_57 {dimension_numbers = #tpu.dot_dimension_numbers<[1], [0], [0], [1], [0, 0, 1, 1], [], []>} : vector<32x16xf32>, vector<16x56xf32>, vector<32x56xf32> -> vector<32x56xf32>
    %73 = arith.addf %66, %72 : vector<32x56xf32>
    %c6 = arith.constant 6 : index
    %c0_58 = arith.constant 0 : index
    %c0_59 = arith.constant 0 : index
    %74 = vector.load %arg6[%c6, %c0_58, %c0_59] : memref<16x344x56xf32, #tpu.memory_space<vmem>>, vector<1x344x56xf32>
    %75 = vector.shape_cast %74 : vector<1x344x56xf32> to vector<344x56xf32>
    %cst_60 = arith.constant dense<0.000000e+00> : vector<16x56xf32>
    %76 = tpu.matmul %30, %75, %cst_60 {dimension_numbers = #tpu.dot_dimension_numbers<[1], [0], [0], [1], [0, 0, 1, 1], [], []>} : vector<16x344xf32>, vector<344x56xf32>, vector<16x56xf32> -> vector<16x56xf32>
    %c6_61 = arith.constant 6 : index
    %c0_62 = arith.constant 0 : index
    %c0_63 = arith.constant 0 : index
    %77 = vector.load %arg5[%c6_61, %c0_62, %c0_63] : memref<16x32x16xf32, #tpu.memory_space<vmem>>, vector<1x32x16xf32>
    %78 = vector.shape_cast %77 : vector<1x32x16xf32> to vector<32x16xf32>
    %cst_64 = arith.constant dense<0.000000e+00> : vector<32x56xf32>
    %79 = tpu.matmul %78, %76, %cst_64 {dimension_numbers = #tpu.dot_dimension_numbers<[1], [0], [0], [1], [0, 0, 1, 1], [], []>} : vector<32x16xf32>, vector<16x56xf32>, vector<32x56xf32> -> vector<32x56xf32>
    %80 = arith.addf %73, %79 : vector<32x56xf32>
    %c7 = arith.constant 7 : index
    %c0_65 = arith.constant 0 : index
    %c0_66 = arith.constant 0 : index
    %81 = vector.load %arg6[%c7, %c0_65, %c0_66] : memref<16x344x56xf32, #tpu.memory_space<vmem>>, vector<1x344x56xf32>
    %82 = vector.shape_cast %81 : vector<1x344x56xf32> to vector<344x56xf32>
    %cst_67 = arith.constant dense<0.000000e+00> : vector<16x56xf32>
    %83 = tpu.matmul %30, %82, %cst_67 {dimension_numbers = #tpu.dot_dimension_numbers<[1], [0], [0], [1], [0, 0, 1, 1], [], []>} : vector<16x344xf32>, vector<344x56xf32>, vector<16x56xf32> -> vector<16x56xf32>
    %c7_68 = arith.constant 7 : index
    %c0_69 = arith.constant 0 : index
    %c0_70 = arith.constant 0 : index
    %84 = vector.load %arg5[%c7_68, %c0_69, %c0_70] : memref<16x32x16xf32, #tpu.memory_space<vmem>>, vector<1x32x16xf32>
    %85 = vector.shape_cast %84 : vector<1x32x16xf32> to vector<32x16xf32>
    %cst_71 = arith.constant dense<0.000000e+00> : vector<32x56xf32>
    %86 = tpu.matmul %85, %83, %cst_71 {dimension_numbers = #tpu.dot_dimension_numbers<[1], [0], [0], [1], [0, 0, 1, 1], [], []>} : vector<32x16xf32>, vector<16x56xf32>, vector<32x56xf32> -> vector<32x56xf32>
    %87 = arith.addf %80, %86 : vector<32x56xf32>
    %c8 = arith.constant 8 : index
    %c0_72 = arith.constant 0 : index
    %c0_73 = arith.constant 0 : index
    %88 = vector.load %arg6[%c8, %c0_72, %c0_73] : memref<16x344x56xf32, #tpu.memory_space<vmem>>, vector<1x344x56xf32>
    %89 = vector.shape_cast %88 : vector<1x344x56xf32> to vector<344x56xf32>
    %cst_74 = arith.constant dense<0.000000e+00> : vector<16x56xf32>
    %90 = tpu.matmul %30, %89, %cst_74 {dimension_numbers = #tpu.dot_dimension_numbers<[1], [0], [0], [1], [0, 0, 1, 1], [], []>} : vector<16x344xf32>, vector<344x56xf32>, vector<16x56xf32> -> vector<16x56xf32>
    %c8_75 = arith.constant 8 : index
    %c0_76 = arith.constant 0 : index
    %c0_77 = arith.constant 0 : index
    %91 = vector.load %arg5[%c8_75, %c0_76, %c0_77] : memref<16x32x16xf32, #tpu.memory_space<vmem>>, vector<1x32x16xf32>
    %92 = vector.shape_cast %91 : vector<1x32x16xf32> to vector<32x16xf32>
    %cst_78 = arith.constant dense<0.000000e+00> : vector<32x56xf32>
    %93 = tpu.matmul %92, %90, %cst_78 {dimension_numbers = #tpu.dot_dimension_numbers<[1], [0], [0], [1], [0, 0, 1, 1], [], []>} : vector<32x16xf32>, vector<16x56xf32>, vector<32x56xf32> -> vector<32x56xf32>
    %94 = arith.addf %87, %93 : vector<32x56xf32>
    %c9 = arith.constant 9 : index
    %c0_79 = arith.constant 0 : index
    %c0_80 = arith.constant 0 : index
    %95 = vector.load %arg6[%c9, %c0_79, %c0_80] : memref<16x344x56xf32, #tpu.memory_space<vmem>>, vector<1x344x56xf32>
    %96 = vector.shape_cast %95 : vector<1x344x56xf32> to vector<344x56xf32>
    %cst_81 = arith.constant dense<0.000000e+00> : vector<16x56xf32>
    %97 = tpu.matmul %30, %96, %cst_81 {dimension_numbers = #tpu.dot_dimension_numbers<[1], [0], [0], [1], [0, 0, 1, 1], [], []>} : vector<16x344xf32>, vector<344x56xf32>, vector<16x56xf32> -> vector<16x56xf32>
    %c9_82 = arith.constant 9 : index
    %c0_83 = arith.constant 0 : index
    %c0_84 = arith.constant 0 : index
    %98 = vector.load %arg5[%c9_82, %c0_83, %c0_84] : memref<16x32x16xf32, #tpu.memory_space<vmem>>, vector<1x32x16xf32>
    %99 = vector.shape_cast %98 : vector<1x32x16xf32> to vector<32x16xf32>
    %cst_85 = arith.constant dense<0.000000e+00> : vector<32x56xf32>
    %100 = tpu.matmul %99, %97, %cst_85 {dimension_numbers = #tpu.dot_dimension_numbers<[1], [0], [0], [1], [0, 0, 1, 1], [], []>} : vector<32x16xf32>, vector<16x56xf32>, vector<32x56xf32> -> vector<32x56xf32>
    %101 = arith.addf %94, %100 : vector<32x56xf32>
    %c10 = arith.constant 10 : index
    %c0_86 = arith.constant 0 : index
    %c0_87 = arith.constant 0 : index
    %102 = vector.load %arg6[%c10, %c0_86, %c0_87] : memref<16x344x56xf32, #tpu.memory_space<vmem>>, vector<1x344x56xf32>
    %103 = vector.shape_cast %102 : vector<1x344x56xf32> to vector<344x56xf32>
    %cst_88 = arith.constant dense<0.000000e+00> : vector<16x56xf32>
    %104 = tpu.matmul %30, %103, %cst_88 {dimension_numbers = #tpu.dot_dimension_numbers<[1], [0], [0], [1], [0, 0, 1, 1], [], []>} : vector<16x344xf32>, vector<344x56xf32>, vector<16x56xf32> -> vector<16x56xf32>
    %c10_89 = arith.constant 10 : index
    %c0_90 = arith.constant 0 : index
    %c0_91 = arith.constant 0 : index
    %105 = vector.load %arg5[%c10_89, %c0_90, %c0_91] : memref<16x32x16xf32, #tpu.memory_space<vmem>>, vector<1x32x16xf32>
    %106 = vector.shape_cast %105 : vector<1x32x16xf32> to vector<32x16xf32>
    %cst_92 = arith.constant dense<0.000000e+00> : vector<32x56xf32>
    %107 = tpu.matmul %106, %104, %cst_92 {dimension_numbers = #tpu.dot_dimension_numbers<[1], [0], [0], [1], [0, 0, 1, 1], [], []>} : vector<32x16xf32>, vector<16x56xf32>, vector<32x56xf32> -> vector<32x56xf32>
    %108 = arith.addf %101, %107 : vector<32x56xf32>
    %c11 = arith.constant 11 : index
    %c0_93 = arith.constant 0 : index
    %c0_94 = arith.constant 0 : index
    %109 = vector.load %arg6[%c11, %c0_93, %c0_94] : memref<16x344x56xf32, #tpu.memory_space<vmem>>, vector<1x344x56xf32>
    %110 = vector.shape_cast %109 : vector<1x344x56xf32> to vector<344x56xf32>
    %cst_95 = arith.constant dense<0.000000e+00> : vector<16x56xf32>
    %111 = tpu.matmul %30, %110, %cst_95 {dimension_numbers = #tpu.dot_dimension_numbers<[1], [0], [0], [1], [0, 0, 1, 1], [], []>} : vector<16x344xf32>, vector<344x56xf32>, vector<16x56xf32> -> vector<16x56xf32>
    %c11_96 = arith.constant 11 : index
    %c0_97 = arith.constant 0 : index
    %c0_98 = arith.constant 0 : index
    %112 = vector.load %arg5[%c11_96, %c0_97, %c0_98] : memref<16x32x16xf32, #tpu.memory_space<vmem>>, vector<1x32x16xf32>
    %113 = vector.shape_cast %112 : vector<1x32x16xf32> to vector<32x16xf32>
    %cst_99 = arith.constant dense<0.000000e+00> : vector<32x56xf32>
    %114 = tpu.matmul %113, %111, %cst_99 {dimension_numbers = #tpu.dot_dimension_numbers<[1], [0], [0], [1], [0, 0, 1, 1], [], []>} : vector<32x16xf32>, vector<16x56xf32>, vector<32x56xf32> -> vector<32x56xf32>
    %115 = arith.addf %108, %114 : vector<32x56xf32>
    %c12 = arith.constant 12 : index
    %c0_100 = arith.constant 0 : index
    %c0_101 = arith.constant 0 : index
    %116 = vector.load %arg6[%c12, %c0_100, %c0_101] : memref<16x344x56xf32, #tpu.memory_space<vmem>>, vector<1x344x56xf32>
    %117 = vector.shape_cast %116 : vector<1x344x56xf32> to vector<344x56xf32>
    %cst_102 = arith.constant dense<0.000000e+00> : vector<16x56xf32>
    %118 = tpu.matmul %30, %117, %cst_102 {dimension_numbers = #tpu.dot_dimension_numbers<[1], [0], [0], [1], [0, 0, 1, 1], [], []>} : vector<16x344xf32>, vector<344x56xf32>, vector<16x56xf32> -> vector<16x56xf32>
    %c12_103 = arith.constant 12 : index
    %c0_104 = arith.constant 0 : index
    %c0_105 = arith.constant 0 : index
    %119 = vector.load %arg5[%c12_103, %c0_104, %c0_105] : memref<16x32x16xf32, #tpu.memory_space<vmem>>, vector<1x32x16xf32>
    %120 = vector.shape_cast %119 : vector<1x32x16xf32> to vector<32x16xf32>
    %cst_106 = arith.constant dense<0.000000e+00> : vector<32x56xf32>
    %121 = tpu.matmul %120, %118, %cst_106 {dimension_numbers = #tpu.dot_dimension_numbers<[1], [0], [0], [1], [0, 0, 1, 1], [], []>} : vector<32x16xf32>, vector<16x56xf32>, vector<32x56xf32> -> vector<32x56xf32>
    %122 = arith.addf %115, %121 : vector<32x56xf32>
    %c13 = arith.constant 13 : index
    %c0_107 = arith.constant 0 : index
    %c0_108 = arith.constant 0 : index
    %123 = vector.load %arg6[%c13, %c0_107, %c0_108] : memref<16x344x56xf32, #tpu.memory_space<vmem>>, vector<1x344x56xf32>
    %124 = vector.shape_cast %123 : vector<1x344x56xf32> to vector<344x56xf32>
    %cst_109 = arith.constant dense<0.000000e+00> : vector<16x56xf32>
    %125 = tpu.matmul %30, %124, %cst_109 {dimension_numbers = #tpu.dot_dimension_numbers<[1], [0], [0], [1], [0, 0, 1, 1], [], []>} : vector<16x344xf32>, vector<344x56xf32>, vector<16x56xf32> -> vector<16x56xf32>
    %c13_110 = arith.constant 13 : index
    %c0_111 = arith.constant 0 : index
    %c0_112 = arith.constant 0 : index
    %126 = vector.load %arg5[%c13_110, %c0_111, %c0_112] : memref<16x32x16xf32, #tpu.memory_space<vmem>>, vector<1x32x16xf32>
    %127 = vector.shape_cast %126 : vector<1x32x16xf32> to vector<32x16xf32>
    %cst_113 = arith.constant dense<0.000000e+00> : vector<32x56xf32>
    %128 = tpu.matmul %127, %125, %cst_113 {dimension_numbers = #tpu.dot_dimension_numbers<[1], [0], [0], [1], [0, 0, 1, 1], [], []>} : vector<32x16xf32>, vector<16x56xf32>, vector<32x56xf32> -> vector<32x56xf32>
    %129 = arith.addf %122, %128 : vector<32x56xf32>
    %c14 = arith.constant 14 : index
    %c0_114 = arith.constant 0 : index
    %c0_115 = arith.constant 0 : index
    %130 = vector.load %arg6[%c14, %c0_114, %c0_115] : memref<16x344x56xf32, #tpu.memory_space<vmem>>, vector<1x344x56xf32>
    %131 = vector.shape_cast %130 : vector<1x344x56xf32> to vector<344x56xf32>
    %cst_116 = arith.constant dense<0.000000e+00> : vector<16x56xf32>
    %132 = tpu.matmul %30, %131, %cst_116 {dimension_numbers = #tpu.dot_dimension_numbers<[1], [0], [0], [1], [0, 0, 1, 1], [], []>} : vector<16x344xf32>, vector<344x56xf32>, vector<16x56xf32> -> vector<16x56xf32>
    %c14_117 = arith.constant 14 : index
    %c0_118 = arith.constant 0 : index
    %c0_119 = arith.constant 0 : index
    %133 = vector.load %arg5[%c14_117, %c0_118, %c0_119] : memref<16x32x16xf32, #tpu.memory_space<vmem>>, vector<1x32x16xf32>
    %134 = vector.shape_cast %133 : vector<1x32x16xf32> to vector<32x16xf32>
    %cst_120 = arith.constant dense<0.000000e+00> : vector<32x56xf32>
    %135 = tpu.matmul %134, %132, %cst_120 {dimension_numbers = #tpu.dot_dimension_numbers<[1], [0], [0], [1], [0, 0, 1, 1], [], []>} : vector<32x16xf32>, vector<16x56xf32>, vector<32x56xf32> -> vector<32x56xf32>
    %136 = arith.addf %129, %135 : vector<32x56xf32>
    %c15 = arith.constant 15 : index
    %c0_121 = arith.constant 0 : index
    %c0_122 = arith.constant 0 : index
    %137 = vector.load %arg6[%c15, %c0_121, %c0_122] : memref<16x344x56xf32, #tpu.memory_space<vmem>>, vector<1x344x56xf32>
    %138 = vector.shape_cast %137 : vector<1x344x56xf32> to vector<344x56xf32>
    %cst_123 = arith.constant dense<0.000000e+00> : vector<16x56xf32>
    %139 = tpu.matmul %30, %138, %cst_123 {dimension_numbers = #tpu.dot_dimension_numbers<[1], [0], [0], [1], [0, 0, 1, 1], [], []>} : vector<16x344xf32>, vector<344x56xf32>, vector<16x56xf32> -> vector<16x56xf32>
    %c15_124 = arith.constant 15 : index
    %c0_125 = arith.constant 0 : index
    %c0_126 = arith.constant 0 : index
    %140 = vector.load %arg5[%c15_124, %c0_125, %c0_126] : memref<16x32x16xf32, #tpu.memory_space<vmem>>, vector<1x32x16xf32>
    %141 = vector.shape_cast %140 : vector<1x32x16xf32> to vector<32x16xf32>
    %cst_127 = arith.constant dense<0.000000e+00> : vector<32x56xf32>
    %142 = tpu.matmul %141, %139, %cst_127 {dimension_numbers = #tpu.dot_dimension_numbers<[1], [0], [0], [1], [0, 0, 1, 1], [], []>} : vector<32x16xf32>, vector<16x56xf32>, vector<32x56xf32> -> vector<32x56xf32>
    %143 = arith.addf %136, %142 : vector<32x56xf32>
    %c0_128 = arith.constant 0 : index
    %c0_129 = arith.constant 0 : index
    %144 = vector.load %arg7[%c0_128, %c0_129] : memref<32x1xf32, #tpu.memory_space<vmem>>, vector<32x1xf32>
    %c0_130 = arith.constant 0 : index
    %c0_131 = arith.constant 0 : index
    %145 = vector.load %arg8[%c0_130, %c0_131] : memref<32x1xf32, #tpu.memory_space<vmem>>, vector<32x1xf32>
    %cst_132 = arith.constant dense<0.000000e+00> : vector<32xf32>
    %146 = vector.multi_reduction <add>, %143, %cst_132 [1] : vector<32x56xf32> to vector<32xf32>
    %147 = vector.shape_cast %146 : vector<32xf32> to vector<32x1xf32>
    %148 = arith.mulf %143, %143 : vector<32x56xf32>
    %cst_133 = arith.constant dense<0.000000e+00> : vector<32xf32>
    %149 = vector.multi_reduction <add>, %148, %cst_133 [1] : vector<32x56xf32> to vector<32xf32>
    %150 = vector.shape_cast %149 : vector<32xf32> to vector<32x1xf32>
    %cst_134 = arith.constant 2.000000e-02 : f32
    %151 = vector.broadcast %cst_134 : f32 to vector<32x1xf32>
    %152 = arith.mulf %147, %151 : vector<32x1xf32>
    %cst_135 = arith.constant 2.000000e-02 : f32
    %153 = vector.broadcast %cst_135 : f32 to vector<32x1xf32>
    %154 = arith.mulf %150, %153 : vector<32x1xf32>
    %155 = arith.mulf %152, %152 : vector<32x1xf32>
    %156 = arith.subf %154, %155 : vector<32x1xf32>
    %cst_136 = arith.constant 9.99999974E-6 : f32
    %157 = vector.broadcast %cst_136 : f32 to vector<32x1xf32>
    %158 = arith.addf %156, %157 : vector<32x1xf32>
    %159 = math.rsqrt %158 : vector<32x1xf32>
    %160 = arith.mulf %144, %159 : vector<32x1xf32>
    %161 = arith.mulf %152, %160 : vector<32x1xf32>
    %162 = arith.subf %145, %161 : vector<32x1xf32>
    %163 = vector.broadcast %160 : vector<32x1xf32> to vector<32x56xf32>
    %164 = arith.mulf %143, %163 : vector<32x56xf32>
    %165 = vector.broadcast %162 : vector<32x1xf32> to vector<32x56xf32>
    %166 = arith.addf %164, %165 : vector<32x56xf32>
    %cst_137 = arith.constant 0.000000e+00 : f32
    %167 = vector.broadcast %cst_137 : f32 to vector<32x56xf32>
    %168 = arith.cmpf ogt, %166, %167 : vector<32x56xf32>
    %cst_138 = arith.constant 2.000000e-01 : f32
    %169 = vector.broadcast %cst_138 : f32 to vector<32x56xf32>
    %170 = arith.mulf %169, %166 : vector<32x56xf32>
    %171 = arith.select %168, %166, %170 : vector<32x56xi1>, vector<32x56xf32>
    %cst_139 = arith.constant 0.000000e+00 : f32
    %172 = vector.broadcast %cst_139 : f32 to vector<1x2xf32>
    %c0_140 = arith.constant 0 : index
    %c0_141 = arith.constant 0 : index
    %c0_142 = arith.constant 0 : index
    %173 = vector.load %arg9[%c0_140, %c0_141, %c0_142] : memref<16x1x32xf32, #tpu.memory_space<vmem>>, vector<1x1x32xf32>
    %174 = vector.shape_cast %173 : vector<1x1x32xf32> to vector<1x32xf32>
    %cst_143 = arith.constant dense<0.000000e+00> : vector<1x56xf32>
    %175 = tpu.matmul %174, %171, %cst_143 {dimension_numbers = #tpu.dot_dimension_numbers<[1], [0], [0], [1], [0, 0, 1, 1], [], []>} : vector<1x32xf32>, vector<32x56xf32>, vector<1x56xf32> -> vector<1x56xf32>
    %c0_144 = arith.constant 0 : index
    %c0_145 = arith.constant 0 : index
    %c0_146 = arith.constant 0 : index
    %176 = vector.load %arg10[%c0_144, %c0_145, %c0_146] : memref<16x56x2xf32, #tpu.memory_space<vmem>>, vector<1x56x2xf32>
    %177 = vector.shape_cast %176 : vector<1x56x2xf32> to vector<56x2xf32>
    %cst_147 = arith.constant dense<0.000000e+00> : vector<1x2xf32>
    %178 = tpu.matmul %175, %177, %cst_147 {dimension_numbers = #tpu.dot_dimension_numbers<[1], [0], [0], [1], [0, 0, 1, 1], [], []>} : vector<1x56xf32>, vector<56x2xf32>, vector<1x2xf32> -> vector<1x2xf32>
    %179 = arith.addf %172, %178 : vector<1x2xf32>
    %c1_148 = arith.constant 1 : index
    %c0_149 = arith.constant 0 : index
    %c0_150 = arith.constant 0 : index
    %180 = vector.load %arg9[%c1_148, %c0_149, %c0_150] : memref<16x1x32xf32, #tpu.memory_space<vmem>>, vector<1x1x32xf32>
    %181 = vector.shape_cast %180 : vector<1x1x32xf32> to vector<1x32xf32>
    %cst_151 = arith.constant dense<0.000000e+00> : vector<1x56xf32>
    %182 = tpu.matmul %181, %171, %cst_151 {dimension_numbers = #tpu.dot_dimension_numbers<[1], [0], [0], [1], [0, 0, 1, 1], [], []>} : vector<1x32xf32>, vector<32x56xf32>, vector<1x56xf32> -> vector<1x56xf32>
    %c1_152 = arith.constant 1 : index
    %c0_153 = arith.constant 0 : index
    %c0_154 = arith.constant 0 : index
    %183 = vector.load %arg10[%c1_152, %c0_153, %c0_154] : memref<16x56x2xf32, #tpu.memory_space<vmem>>, vector<1x56x2xf32>
    %184 = vector.shape_cast %183 : vector<1x56x2xf32> to vector<56x2xf32>
    %cst_155 = arith.constant dense<0.000000e+00> : vector<1x2xf32>
    %185 = tpu.matmul %182, %184, %cst_155 {dimension_numbers = #tpu.dot_dimension_numbers<[1], [0], [0], [1], [0, 0, 1, 1], [], []>} : vector<1x56xf32>, vector<56x2xf32>, vector<1x2xf32> -> vector<1x2xf32>
    %186 = arith.addf %179, %185 : vector<1x2xf32>
    %c2_156 = arith.constant 2 : index
    %c0_157 = arith.constant 0 : index
    %c0_158 = arith.constant 0 : index
    %187 = vector.load %arg9[%c2_156, %c0_157, %c0_158] : memref<16x1x32xf32, #tpu.memory_space<vmem>>, vector<1x1x32xf32>
    %188 = vector.shape_cast %187 : vector<1x1x32xf32> to vector<1x32xf32>
    %cst_159 = arith.constant dense<0.000000e+00> : vector<1x56xf32>
    %189 = tpu.matmul %188, %171, %cst_159 {dimension_numbers = #tpu.dot_dimension_numbers<[1], [0], [0], [1], [0, 0, 1, 1], [], []>} : vector<1x32xf32>, vector<32x56xf32>, vector<1x56xf32> -> vector<1x56xf32>
    %c2_160 = arith.constant 2 : index
    %c0_161 = arith.constant 0 : index
    %c0_162 = arith.constant 0 : index
    %190 = vector.load %arg10[%c2_160, %c0_161, %c0_162] : memref<16x56x2xf32, #tpu.memory_space<vmem>>, vector<1x56x2xf32>
    %191 = vector.shape_cast %190 : vector<1x56x2xf32> to vector<56x2xf32>
    %cst_163 = arith.constant dense<0.000000e+00> : vector<1x2xf32>
    %192 = tpu.matmul %189, %191, %cst_163 {dimension_numbers = #tpu.dot_dimension_numbers<[1], [0], [0], [1], [0, 0, 1, 1], [], []>} : vector<1x56xf32>, vector<56x2xf32>, vector<1x2xf32> -> vector<1x2xf32>
    %193 = arith.addf %186, %192 : vector<1x2xf32>
    %c3_164 = arith.constant 3 : index
    %c0_165 = arith.constant 0 : index
    %c0_166 = arith.constant 0 : index
    %194 = vector.load %arg9[%c3_164, %c0_165, %c0_166] : memref<16x1x32xf32, #tpu.memory_space<vmem>>, vector<1x1x32xf32>
    %195 = vector.shape_cast %194 : vector<1x1x32xf32> to vector<1x32xf32>
    %cst_167 = arith.constant dense<0.000000e+00> : vector<1x56xf32>
    %196 = tpu.matmul %195, %171, %cst_167 {dimension_numbers = #tpu.dot_dimension_numbers<[1], [0], [0], [1], [0, 0, 1, 1], [], []>} : vector<1x32xf32>, vector<32x56xf32>, vector<1x56xf32> -> vector<1x56xf32>
    %c3_168 = arith.constant 3 : index
    %c0_169 = arith.constant 0 : index
    %c0_170 = arith.constant 0 : index
    %197 = vector.load %arg10[%c3_168, %c0_169, %c0_170] : memref<16x56x2xf32, #tpu.memory_space<vmem>>, vector<1x56x2xf32>
    %198 = vector.shape_cast %197 : vector<1x56x2xf32> to vector<56x2xf32>
    %cst_171 = arith.constant dense<0.000000e+00> : vector<1x2xf32>
    %199 = tpu.matmul %196, %198, %cst_171 {dimension_numbers = #tpu.dot_dimension_numbers<[1], [0], [0], [1], [0, 0, 1, 1], [], []>} : vector<1x56xf32>, vector<56x2xf32>, vector<1x2xf32> -> vector<1x2xf32>
    %200 = arith.addf %193, %199 : vector<1x2xf32>
    %c4_172 = arith.constant 4 : index
    %c0_173 = arith.constant 0 : index
    %c0_174 = arith.constant 0 : index
    %201 = vector.load %arg9[%c4_172, %c0_173, %c0_174] : memref<16x1x32xf32, #tpu.memory_space<vmem>>, vector<1x1x32xf32>
    %202 = vector.shape_cast %201 : vector<1x1x32xf32> to vector<1x32xf32>
    %cst_175 = arith.constant dense<0.000000e+00> : vector<1x56xf32>
    %203 = tpu.matmul %202, %171, %cst_175 {dimension_numbers = #tpu.dot_dimension_numbers<[1], [0], [0], [1], [0, 0, 1, 1], [], []>} : vector<1x32xf32>, vector<32x56xf32>, vector<1x56xf32> -> vector<1x56xf32>
    %c4_176 = arith.constant 4 : index
    %c0_177 = arith.constant 0 : index
    %c0_178 = arith.constant 0 : index
    %204 = vector.load %arg10[%c4_176, %c0_177, %c0_178] : memref<16x56x2xf32, #tpu.memory_space<vmem>>, vector<1x56x2xf32>
    %205 = vector.shape_cast %204 : vector<1x56x2xf32> to vector<56x2xf32>
    %cst_179 = arith.constant dense<0.000000e+00> : vector<1x2xf32>
    %206 = tpu.matmul %203, %205, %cst_179 {dimension_numbers = #tpu.dot_dimension_numbers<[1], [0], [0], [1], [0, 0, 1, 1], [], []>} : vector<1x56xf32>, vector<56x2xf32>, vector<1x2xf32> -> vector<1x2xf32>
    %207 = arith.addf %200, %206 : vector<1x2xf32>
    %c5_180 = arith.constant 5 : index
    %c0_181 = arith.constant 0 : index
    %c0_182 = arith.constant 0 : index
    %208 = vector.load %arg9[%c5_180, %c0_181, %c0_182] : memref<16x1x32xf32, #tpu.memory_space<vmem>>, vector<1x1x32xf32>
    %209 = vector.shape_cast %208 : vector<1x1x32xf32> to vector<1x32xf32>
    %cst_183 = arith.constant dense<0.000000e+00> : vector<1x56xf32>
    %210 = tpu.matmul %209, %171, %cst_183 {dimension_numbers = #tpu.dot_dimension_numbers<[1], [0], [0], [1], [0, 0, 1, 1], [], []>} : vector<1x32xf32>, vector<32x56xf32>, vector<1x56xf32> -> vector<1x56xf32>
    %c5_184 = arith.constant 5 : index
    %c0_185 = arith.constant 0 : index
    %c0_186 = arith.constant 0 : index
    %211 = vector.load %arg10[%c5_184, %c0_185, %c0_186] : memref<16x56x2xf32, #tpu.memory_space<vmem>>, vector<1x56x2xf32>
    %212 = vector.shape_cast %211 : vector<1x56x2xf32> to vector<56x2xf32>
    %cst_187 = arith.constant dense<0.000000e+00> : vector<1x2xf32>
    %213 = tpu.matmul %210, %212, %cst_187 {dimension_numbers = #tpu.dot_dimension_numbers<[1], [0], [0], [1], [0, 0, 1, 1], [], []>} : vector<1x56xf32>, vector<56x2xf32>, vector<1x2xf32> -> vector<1x2xf32>
    %214 = arith.addf %207, %213 : vector<1x2xf32>
    %c6_188 = arith.constant 6 : index
    %c0_189 = arith.constant 0 : index
    %c0_190 = arith.constant 0 : index
    %215 = vector.load %arg9[%c6_188, %c0_189, %c0_190] : memref<16x1x32xf32, #tpu.memory_space<vmem>>, vector<1x1x32xf32>
    %216 = vector.shape_cast %215 : vector<1x1x32xf32> to vector<1x32xf32>
    %cst_191 = arith.constant dense<0.000000e+00> : vector<1x56xf32>
    %217 = tpu.matmul %216, %171, %cst_191 {dimension_numbers = #tpu.dot_dimension_numbers<[1], [0], [0], [1], [0, 0, 1, 1], [], []>} : vector<1x32xf32>, vector<32x56xf32>, vector<1x56xf32> -> vector<1x56xf32>
    %c6_192 = arith.constant 6 : index
    %c0_193 = arith.constant 0 : index
    %c0_194 = arith.constant 0 : index
    %218 = vector.load %arg10[%c6_192, %c0_193, %c0_194] : memref<16x56x2xf32, #tpu.memory_space<vmem>>, vector<1x56x2xf32>
    %219 = vector.shape_cast %218 : vector<1x56x2xf32> to vector<56x2xf32>
    %cst_195 = arith.constant dense<0.000000e+00> : vector<1x2xf32>
    %220 = tpu.matmul %217, %219, %cst_195 {dimension_numbers = #tpu.dot_dimension_numbers<[1], [0], [0], [1], [0, 0, 1, 1], [], []>} : vector<1x56xf32>, vector<56x2xf32>, vector<1x2xf32> -> vector<1x2xf32>
    %221 = arith.addf %214, %220 : vector<1x2xf32>
    %c7_196 = arith.constant 7 : index
    %c0_197 = arith.constant 0 : index
    %c0_198 = arith.constant 0 : index
    %222 = vector.load %arg9[%c7_196, %c0_197, %c0_198] : memref<16x1x32xf32, #tpu.memory_space<vmem>>, vector<1x1x32xf32>
    %223 = vector.shape_cast %222 : vector<1x1x32xf32> to vector<1x32xf32>
    %cst_199 = arith.constant dense<0.000000e+00> : vector<1x56xf32>
    %224 = tpu.matmul %223, %171, %cst_199 {dimension_numbers = #tpu.dot_dimension_numbers<[1], [0], [0], [1], [0, 0, 1, 1], [], []>} : vector<1x32xf32>, vector<32x56xf32>, vector<1x56xf32> -> vector<1x56xf32>
    %c7_200 = arith.constant 7 : index
    %c0_201 = arith.constant 0 : index
    %c0_202 = arith.constant 0 : index
    %225 = vector.load %arg10[%c7_200, %c0_201, %c0_202] : memref<16x56x2xf32, #tpu.memory_space<vmem>>, vector<1x56x2xf32>
    %226 = vector.shape_cast %225 : vector<1x56x2xf32> to vector<56x2xf32>
    %cst_203 = arith.constant dense<0.000000e+00> : vector<1x2xf32>
    %227 = tpu.matmul %224, %226, %cst_203 {dimension_numbers = #tpu.dot_dimension_numbers<[1], [0], [0], [1], [0, 0, 1, 1], [], []>} : vector<1x56xf32>, vector<56x2xf32>, vector<1x2xf32> -> vector<1x2xf32>
    %228 = arith.addf %221, %227 : vector<1x2xf32>
    %c8_204 = arith.constant 8 : index
    %c0_205 = arith.constant 0 : index
    %c0_206 = arith.constant 0 : index
    %229 = vector.load %arg9[%c8_204, %c0_205, %c0_206] : memref<16x1x32xf32, #tpu.memory_space<vmem>>, vector<1x1x32xf32>
    %230 = vector.shape_cast %229 : vector<1x1x32xf32> to vector<1x32xf32>
    %cst_207 = arith.constant dense<0.000000e+00> : vector<1x56xf32>
    %231 = tpu.matmul %230, %171, %cst_207 {dimension_numbers = #tpu.dot_dimension_numbers<[1], [0], [0], [1], [0, 0, 1, 1], [], []>} : vector<1x32xf32>, vector<32x56xf32>, vector<1x56xf32> -> vector<1x56xf32>
    %c8_208 = arith.constant 8 : index
    %c0_209 = arith.constant 0 : index
    %c0_210 = arith.constant 0 : index
    %232 = vector.load %arg10[%c8_208, %c0_209, %c0_210] : memref<16x56x2xf32, #tpu.memory_space<vmem>>, vector<1x56x2xf32>
    %233 = vector.shape_cast %232 : vector<1x56x2xf32> to vector<56x2xf32>
    %cst_211 = arith.constant dense<0.000000e+00> : vector<1x2xf32>
    %234 = tpu.matmul %231, %233, %cst_211 {dimension_numbers = #tpu.dot_dimension_numbers<[1], [0], [0], [1], [0, 0, 1, 1], [], []>} : vector<1x56xf32>, vector<56x2xf32>, vector<1x2xf32> -> vector<1x2xf32>
    %235 = arith.addf %228, %234 : vector<1x2xf32>
    %c9_212 = arith.constant 9 : index
    %c0_213 = arith.constant 0 : index
    %c0_214 = arith.constant 0 : index
    %236 = vector.load %arg9[%c9_212, %c0_213, %c0_214] : memref<16x1x32xf32, #tpu.memory_space<vmem>>, vector<1x1x32xf32>
    %237 = vector.shape_cast %236 : vector<1x1x32xf32> to vector<1x32xf32>
    %cst_215 = arith.constant dense<0.000000e+00> : vector<1x56xf32>
    %238 = tpu.matmul %237, %171, %cst_215 {dimension_numbers = #tpu.dot_dimension_numbers<[1], [0], [0], [1], [0, 0, 1, 1], [], []>} : vector<1x32xf32>, vector<32x56xf32>, vector<1x56xf32> -> vector<1x56xf32>
    %c9_216 = arith.constant 9 : index
    %c0_217 = arith.constant 0 : index
    %c0_218 = arith.constant 0 : index
    %239 = vector.load %arg10[%c9_216, %c0_217, %c0_218] : memref<16x56x2xf32, #tpu.memory_space<vmem>>, vector<1x56x2xf32>
    %240 = vector.shape_cast %239 : vector<1x56x2xf32> to vector<56x2xf32>
    %cst_219 = arith.constant dense<0.000000e+00> : vector<1x2xf32>
    %241 = tpu.matmul %238, %240, %cst_219 {dimension_numbers = #tpu.dot_dimension_numbers<[1], [0], [0], [1], [0, 0, 1, 1], [], []>} : vector<1x56xf32>, vector<56x2xf32>, vector<1x2xf32> -> vector<1x2xf32>
    %242 = arith.addf %235, %241 : vector<1x2xf32>
    %c10_220 = arith.constant 10 : index
    %c0_221 = arith.constant 0 : index
    %c0_222 = arith.constant 0 : index
    %243 = vector.load %arg9[%c10_220, %c0_221, %c0_222] : memref<16x1x32xf32, #tpu.memory_space<vmem>>, vector<1x1x32xf32>
    %244 = vector.shape_cast %243 : vector<1x1x32xf32> to vector<1x32xf32>
    %cst_223 = arith.constant dense<0.000000e+00> : vector<1x56xf32>
    %245 = tpu.matmul %244, %171, %cst_223 {dimension_numbers = #tpu.dot_dimension_numbers<[1], [0], [0], [1], [0, 0, 1, 1], [], []>} : vector<1x32xf32>, vector<32x56xf32>, vector<1x56xf32> -> vector<1x56xf32>
    %c10_224 = arith.constant 10 : index
    %c0_225 = arith.constant 0 : index
    %c0_226 = arith.constant 0 : index
    %246 = vector.load %arg10[%c10_224, %c0_225, %c0_226] : memref<16x56x2xf32, #tpu.memory_space<vmem>>, vector<1x56x2xf32>
    %247 = vector.shape_cast %246 : vector<1x56x2xf32> to vector<56x2xf32>
    %cst_227 = arith.constant dense<0.000000e+00> : vector<1x2xf32>
    %248 = tpu.matmul %245, %247, %cst_227 {dimension_numbers = #tpu.dot_dimension_numbers<[1], [0], [0], [1], [0, 0, 1, 1], [], []>} : vector<1x56xf32>, vector<56x2xf32>, vector<1x2xf32> -> vector<1x2xf32>
    %249 = arith.addf %242, %248 : vector<1x2xf32>
    %c11_228 = arith.constant 11 : index
    %c0_229 = arith.constant 0 : index
    %c0_230 = arith.constant 0 : index
    %250 = vector.load %arg9[%c11_228, %c0_229, %c0_230] : memref<16x1x32xf32, #tpu.memory_space<vmem>>, vector<1x1x32xf32>
    %251 = vector.shape_cast %250 : vector<1x1x32xf32> to vector<1x32xf32>
    %cst_231 = arith.constant dense<0.000000e+00> : vector<1x56xf32>
    %252 = tpu.matmul %251, %171, %cst_231 {dimension_numbers = #tpu.dot_dimension_numbers<[1], [0], [0], [1], [0, 0, 1, 1], [], []>} : vector<1x32xf32>, vector<32x56xf32>, vector<1x56xf32> -> vector<1x56xf32>
    %c11_232 = arith.constant 11 : index
    %c0_233 = arith.constant 0 : index
    %c0_234 = arith.constant 0 : index
    %253 = vector.load %arg10[%c11_232, %c0_233, %c0_234] : memref<16x56x2xf32, #tpu.memory_space<vmem>>, vector<1x56x2xf32>
    %254 = vector.shape_cast %253 : vector<1x56x2xf32> to vector<56x2xf32>
    %cst_235 = arith.constant dense<0.000000e+00> : vector<1x2xf32>
    %255 = tpu.matmul %252, %254, %cst_235 {dimension_numbers = #tpu.dot_dimension_numbers<[1], [0], [0], [1], [0, 0, 1, 1], [], []>} : vector<1x56xf32>, vector<56x2xf32>, vector<1x2xf32> -> vector<1x2xf32>
    %256 = arith.addf %249, %255 : vector<1x2xf32>
    %c12_236 = arith.constant 12 : index
    %c0_237 = arith.constant 0 : index
    %c0_238 = arith.constant 0 : index
    %257 = vector.load %arg9[%c12_236, %c0_237, %c0_238] : memref<16x1x32xf32, #tpu.memory_space<vmem>>, vector<1x1x32xf32>
    %258 = vector.shape_cast %257 : vector<1x1x32xf32> to vector<1x32xf32>
    %cst_239 = arith.constant dense<0.000000e+00> : vector<1x56xf32>
    %259 = tpu.matmul %258, %171, %cst_239 {dimension_numbers = #tpu.dot_dimension_numbers<[1], [0], [0], [1], [0, 0, 1, 1], [], []>} : vector<1x32xf32>, vector<32x56xf32>, vector<1x56xf32> -> vector<1x56xf32>
    %c12_240 = arith.constant 12 : index
    %c0_241 = arith.constant 0 : index
    %c0_242 = arith.constant 0 : index
    %260 = vector.load %arg10[%c12_240, %c0_241, %c0_242] : memref<16x56x2xf32, #tpu.memory_space<vmem>>, vector<1x56x2xf32>
    %261 = vector.shape_cast %260 : vector<1x56x2xf32> to vector<56x2xf32>
    %cst_243 = arith.constant dense<0.000000e+00> : vector<1x2xf32>
    %262 = tpu.matmul %259, %261, %cst_243 {dimension_numbers = #tpu.dot_dimension_numbers<[1], [0], [0], [1], [0, 0, 1, 1], [], []>} : vector<1x56xf32>, vector<56x2xf32>, vector<1x2xf32> -> vector<1x2xf32>
    %263 = arith.addf %256, %262 : vector<1x2xf32>
    %c13_244 = arith.constant 13 : index
    %c0_245 = arith.constant 0 : index
    %c0_246 = arith.constant 0 : index
    %264 = vector.load %arg9[%c13_244, %c0_245, %c0_246] : memref<16x1x32xf32, #tpu.memory_space<vmem>>, vector<1x1x32xf32>
    %265 = vector.shape_cast %264 : vector<1x1x32xf32> to vector<1x32xf32>
    %cst_247 = arith.constant dense<0.000000e+00> : vector<1x56xf32>
    %266 = tpu.matmul %265, %171, %cst_247 {dimension_numbers = #tpu.dot_dimension_numbers<[1], [0], [0], [1], [0, 0, 1, 1], [], []>} : vector<1x32xf32>, vector<32x56xf32>, vector<1x56xf32> -> vector<1x56xf32>
    %c13_248 = arith.constant 13 : index
    %c0_249 = arith.constant 0 : index
    %c0_250 = arith.constant 0 : index
    %267 = vector.load %arg10[%c13_248, %c0_249, %c0_250] : memref<16x56x2xf32, #tpu.memory_space<vmem>>, vector<1x56x2xf32>
    %268 = vector.shape_cast %267 : vector<1x56x2xf32> to vector<56x2xf32>
    %cst_251 = arith.constant dense<0.000000e+00> : vector<1x2xf32>
    %269 = tpu.matmul %266, %268, %cst_251 {dimension_numbers = #tpu.dot_dimension_numbers<[1], [0], [0], [1], [0, 0, 1, 1], [], []>} : vector<1x56xf32>, vector<56x2xf32>, vector<1x2xf32> -> vector<1x2xf32>
    %270 = arith.addf %263, %269 : vector<1x2xf32>
    %c14_252 = arith.constant 14 : index
    %c0_253 = arith.constant 0 : index
    %c0_254 = arith.constant 0 : index
    %271 = vector.load %arg9[%c14_252, %c0_253, %c0_254] : memref<16x1x32xf32, #tpu.memory_space<vmem>>, vector<1x1x32xf32>
    %272 = vector.shape_cast %271 : vector<1x1x32xf32> to vector<1x32xf32>
    %cst_255 = arith.constant dense<0.000000e+00> : vector<1x56xf32>
    %273 = tpu.matmul %272, %171, %cst_255 {dimension_numbers = #tpu.dot_dimension_numbers<[1], [0], [0], [1], [0, 0, 1, 1], [], []>} : vector<1x32xf32>, vector<32x56xf32>, vector<1x56xf32> -> vector<1x56xf32>
    %c14_256 = arith.constant 14 : index
    %c0_257 = arith.constant 0 : index
    %c0_258 = arith.constant 0 : index
    %274 = vector.load %arg10[%c14_256, %c0_257, %c0_258] : memref<16x56x2xf32, #tpu.memory_space<vmem>>, vector<1x56x2xf32>
    %275 = vector.shape_cast %274 : vector<1x56x2xf32> to vector<56x2xf32>
    %cst_259 = arith.constant dense<0.000000e+00> : vector<1x2xf32>
    %276 = tpu.matmul %273, %275, %cst_259 {dimension_numbers = #tpu.dot_dimension_numbers<[1], [0], [0], [1], [0, 0, 1, 1], [], []>} : vector<1x56xf32>, vector<56x2xf32>, vector<1x2xf32> -> vector<1x2xf32>
    %277 = arith.addf %270, %276 : vector<1x2xf32>
    %c15_260 = arith.constant 15 : index
    %c0_261 = arith.constant 0 : index
    %c0_262 = arith.constant 0 : index
    %278 = vector.load %arg9[%c15_260, %c0_261, %c0_262] : memref<16x1x32xf32, #tpu.memory_space<vmem>>, vector<1x1x32xf32>
    %279 = vector.shape_cast %278 : vector<1x1x32xf32> to vector<1x32xf32>
    %cst_263 = arith.constant dense<0.000000e+00> : vector<1x56xf32>
    %280 = tpu.matmul %279, %171, %cst_263 {dimension_numbers = #tpu.dot_dimension_numbers<[1], [0], [0], [1], [0, 0, 1, 1], [], []>} : vector<1x32xf32>, vector<32x56xf32>, vector<1x56xf32> -> vector<1x56xf32>
    %c15_264 = arith.constant 15 : index
    %c0_265 = arith.constant 0 : index
    %c0_266 = arith.constant 0 : index
    %281 = vector.load %arg10[%c15_264, %c0_265, %c0_266] : memref<16x56x2xf32, #tpu.memory_space<vmem>>, vector<1x56x2xf32>
    %282 = vector.shape_cast %281 : vector<1x56x2xf32> to vector<56x2xf32>
    %cst_267 = arith.constant dense<0.000000e+00> : vector<1x2xf32>
    %283 = tpu.matmul %280, %282, %cst_267 {dimension_numbers = #tpu.dot_dimension_numbers<[1], [0], [0], [1], [0, 0, 1, 1], [], []>} : vector<1x56xf32>, vector<56x2xf32>, vector<1x2xf32> -> vector<1x2xf32>
    %284 = arith.addf %277, %283 : vector<1x2xf32>
    %c0_268 = arith.constant 0 : index
    %c0_269 = arith.constant 0 : index
    %285 = vector.load %arg11[%c0_268, %c0_269] : memref<1x1xf32, #tpu.memory_space<vmem>>, vector<1x1xf32>
    %286 = vector.broadcast %285 : vector<1x1xf32> to vector<1x2xf32>
    %287 = arith.addf %284, %286 : vector<1x2xf32>
    %c0_270 = arith.constant 0 : index
    %c0_271 = arith.constant 0 : index
    %288 = vector.load %arg12[%c0_270, %c0_271] : memref<1x2xf32, #tpu.memory_space<vmem>>, vector<1x2xf32>
    tpu.vector_store %arg12[%c0_270, %c0_271], %287 {strides = array<i32>} : memref<1x2xf32, #tpu.memory_space<vmem>>, vector<1x2xf32>,
    return
  }
  func.func @transform_0(%arg0: i32) -> (i32, i32) {
    %c0_i32 = arith.constant 0 : i32
    %c0_i32_0 = arith.constant 0 : i32
    %c0_i32_1 = arith.constant 0 : i32
    return %c0_i32, %c0_i32_0 : i32, i32
  }
  func.func @transform_1(%arg0: i32) -> (i32, i32) {
    %c0_i32 = arith.constant 0 : i32
    %c0_i32_0 = arith.constant 0 : i32
    %c0_i32_1 = arith.constant 0 : i32
    return %c0_i32, %c0_i32_0 : i32, i32
  }
  func.func @transform_2(%arg0: i32) -> (i32, i32) {
    %c0_i32 = arith.constant 0 : i32
    %c0_i32_0 = arith.constant 0 : i32
    %c0_i32_1 = arith.constant 0 : i32
    return %c0_i32, %c0_i32_0 : i32, i32
  }
  func.func @transform_3(%arg0: i32) -> (i32, i32) {
    %c0_i32 = arith.constant 0 : i32
    %c0_i32_0 = arith.constant 0 : i32
    %c0_i32_1 = arith.constant 0 : i32
    return %c0_i32, %c0_i32_0 : i32, i32
  }
  func.func @transform_4(%arg0: i32) -> (i32, i32, i32) {
    %c0_i32 = arith.constant 0 : i32
    %c0_i32_0 = arith.constant 0 : i32
    %c0_i32_1 = arith.constant 0 : i32
    %c0_i32_2 = arith.constant 0 : i32
    return %c0_i32, %c0_i32_0, %c0_i32_1 : i32, i32, i32
  }
  func.func @transform_5(%arg0: i32) -> (i32, i32, i32) {
    %c0_i32 = arith.constant 0 : i32
    %c0_i32_0 = arith.constant 0 : i32
    %c0_i32_1 = arith.constant 0 : i32
    %c0_i32_2 = arith.constant 0 : i32
    return %c0_i32, %c0_i32_0, %c0_i32_1 : i32, i32, i32
  }
  func.func @transform_6(%arg0: i32) -> (i32, i32) {
    %c0_i32 = arith.constant 0 : i32
    %c0_i32_0 = arith.constant 0 : i32
    %c0_i32_1 = arith.constant 0 : i32
    return %c0_i32, %c0_i32_0 : i32, i32
  }
  func.func @transform_7(%arg0: i32) -> (i32, i32) {
    %c0_i32 = arith.constant 0 : i32
    %c0_i32_0 = arith.constant 0 : i32
    %c0_i32_1 = arith.constant 0 : i32
    return %c0_i32, %c0_i32_0 : i32, i32
  }
  func.func @transform_8(%arg0: i32) -> (i32, i32, i32) {
    %c0_i32 = arith.constant 0 : i32
    %c0_i32_0 = arith.constant 0 : i32
    %c0_i32_1 = arith.constant 0 : i32
    %c0_i32_2 = arith.constant 0 : i32
    return %c0_i32, %c0_i32_0, %c0_i32_1 : i32, i32, i32
  }
  func.func @transform_9(%arg0: i32) -> (i32, i32, i32) {
    %c0_i32 = arith.constant 0 : i32
    %c0_i32_0 = arith.constant 0 : i32
    %c0_i32_1 = arith.constant 0 : i32
    %c0_i32_2 = arith.constant 0 : i32
    return %c0_i32, %c0_i32_0, %c0_i32_1 : i32, i32, i32
  }
  func.func @transform_10(%arg0: i32) -> (i32, i32) {
    %c0_i32 = arith.constant 0 : i32
    %c0_i32_0 = arith.constant 0 : i32
    %c0_i32_1 = arith.constant 0 : i32
    return %c0_i32, %c0_i32_0 : i32, i32
  }
  func.func @transform_11(%arg0: i32) -> (i32, i32) {
    %c0_i32 = arith.constant 0 : i32
    %c0_i32_0 = arith.constant 0 : i32
    %c0_i32_1 = arith.constant 0 : i32
    return %c0_i32, %c0_i32_0 : i32, i32
  }
}

</mosaic_0001>

<llo_original>
// kernel: discriminator_forward.1
$region0: #{discriminator_forward.1}
  #allocation0 [shape = 'u32[]', space=smem, size = 0x4, offset = 0x4, fixed_abs, tag = 'smem constant byte address 0x4 - core index']
  #allocation1 [shape = 'u32[144,128]{1,0:T(1,128)}', space=vmem, size = 0x12000, scoped, tag = 'internal scratch']
  #allocation2 [shape = 'f32[1,1]{1,0:T(1,128)S(1)}', space=vmem, size = 0x200, scoped, tag = 'scoped memory for discriminator_forward.1']
  %s0 = inlined_call_operand.vmem [shape: bf16[256,344], index: 0, kind: input, shape index: {}]
  %s1 = inlined_call_operand.vmem [shape: bf16[16,256], index: 1, kind: input, shape index: {}]
  %s2 = inlined_call_operand.vmem [shape: f32[16,1], index: 2, kind: input, shape index: {}]
  %s3 = inlined_call_operand.vmem [shape: f32[16,1], index: 3, kind: input, shape index: {}]
  %s4 = inlined_call_operand.vmem [shape: f32[16,32,16], index: 4, kind: input, shape index: {}]
  %s5 = inlined_call_operand.vmem [shape: f32[16,344,56], index: 5, kind: input, shape index: {}]
  %s6 = inlined_call_operand.vmem [shape: f32[32,1], index: 6, kind: input, shape index: {}]
  %s7 = inlined_call_operand.vmem [shape: f32[32,1], index: 7, kind: input, shape index: {}]
  %s8 = inlined_call_operand.vmem [shape: f32[16,1,32], index: 8, kind: input, shape index: {}]
  %s9 = inlined_call_operand.vmem [shape: f32[16,56,2], index: 9, kind: input, shape index: {}]
  %s10 = inlined_call_operand.<no memory space> [shape: f32[1,1], index: 10, kind: input, shape index: {}]
  %s11 = inlined_call_operand.hbm [shape: f32[1,2], index: 11, kind: output, shape index: {}]
  %s12 = sld [smem:[#allocation0]]
  $region54: #{discriminator_forward.1} parent=0
    _
  %s14 = ssub.s32 1, %s12
  %s15 = scalar_select 0, %s14, %s12
  %v16 = vstv %s10
  %17 = vst [vmem:[#allocation2] sm:$0x1] %v16
  $region1: #{discriminator_forward.1} parent=0
    #allocation3 [shape = 'u8[512]{0}', space=vmem, size = 0x400, scoped, tag = 'output window, operand 0, single buffered']
    #allocation4 [shape = 's32[1]{0}', space=sflag, size = 0x4, scoped, tag = 'scoped memory for discriminator_forward.1']
    %18 = vsyncpa [#allocation4], 0
    // Predicated region
    $region2: #{discriminator_forward.1} parent=1 // pred_check
      _
    $region3: #{discriminator_forward.1} parent=1 // pred_check_branch
      %20 = sbr.rel (0) target = $region5
    $region4: #{discriminator_forward.1} parent=1 // pred_region
      _
    $region5: #{discriminator_forward.1} parent=1 // pred_fallthru
      _
    // Predicated region
    $region6: #{discriminator_forward.1} parent=1 // pred_check
      _
    $region7: #{discriminator_forward.1} parent=1 // pred_check_branch
      %22 = sbr.rel (0) target = $region9
    $region8: #{discriminator_forward.1} parent=1 // pred_region
      _
    $region9: #{discriminator_forward.1} parent=1 // pred_fallthru
      _
    // Predicated region
    $region10: #{discriminator_forward.1} parent=1 // pred_check
      _
    $region11: #{discriminator_forward.1} parent=1 // pred_check_branch
      %24 = sbr.rel (0) target = $region13
    $region12: #{discriminator_forward.1} parent=1 // pred_region
      _
    $region13: #{discriminator_forward.1} parent=1 // pred_fallthru
      _
    // Predicated region
    $region14: #{discriminator_forward.1} parent=1 // pred_check
      _
    $region15: #{discriminator_forward.1} parent=1 // pred_check_branch
      %26 = sbr.rel (0) target = $region17
    $region16: #{discriminator_forward.1} parent=1 // pred_region
      _
    $region17: #{discriminator_forward.1} parent=1 // pred_fallthru
      _
    // Predicated region
    $region18: #{discriminator_forward.1} parent=1 // pred_check
      _
    $region19: #{discriminator_forward.1} parent=1 // pred_check_branch
      %28 = sbr.rel (0) target = $region21
    $region20: #{discriminator_forward.1} parent=1 // pred_region
      _
    $region21: #{discriminator_forward.1} parent=1 // pred_fallthru
      _
    // Predicated region
    $region22: #{discriminator_forward.1} parent=1 // pred_check
      _
    $region23: #{discriminator_forward.1} parent=1 // pred_check_branch
      %30 = sbr.rel (0) target = $region25
    $region24: #{discriminator_forward.1} parent=1 // pred_region
      _
    $region25: #{discriminator_forward.1} parent=1 // pred_fallthru
      _
    // Predicated region
    $region26: #{discriminator_forward.1} parent=1 // pred_check
      _
    $region27: #{discriminator_forward.1} parent=1 // pred_check_branch
      %32 = sbr.rel (0) target = $region29
    $region28: #{discriminator_forward.1} parent=1 // pred_region
      _
    $region29: #{discriminator_forward.1} parent=1 // pred_fallthru
      _
    // Predicated region
    $region30: #{discriminator_forward.1} parent=1 // pred_check
      _
    $region31: #{discriminator_forward.1} parent=1 // pred_check_branch
      %34 = sbr.rel (0) target = $region33
    $region32: #{discriminator_forward.1} parent=1 // pred_region
      _
    $region33: #{discriminator_forward.1} parent=1 // pred_fallthru
      _
    // Predicated region
    $region34: #{discriminator_forward.1} parent=1 // pred_check
      _
    $region35: #{discriminator_forward.1} parent=1 // pred_check_branch
      %36 = sbr.rel (0) target = $region37
    $region36: #{discriminator_forward.1} parent=1 // pred_region
      _
    $region37: #{discriminator_forward.1} parent=1 // pred_fallthru
      _
    // Predicated region
    $region38: #{discriminator_forward.1} parent=1 // pred_check
      _
    $region39: #{discriminator_forward.1} parent=1 // pred_check_branch
      %38 = sbr.rel (0) target = $region41
    $region40: #{discriminator_forward.1} parent=1 // pred_region
      _
    $region41: #{discriminator_forward.1} parent=1 // pred_fallthru
      _
    // Predicated region
    $region42: #{discriminator_forward.1} parent=1 // pred_check
      _
    $region43: #{discriminator_forward.1} parent=1 // pred_check_branch
      %40 = sbr.rel (0) target = $region45
    $region44: #{discriminator_forward.1} parent=1 // pred_region
      _
    $region45: #{discriminator_forward.1} parent=1 // pred_fallthru
      _
    %v42 = vld [vmem:[%s1] sm:$0xff]
    %v43 = vld [vmem:[%s1 + $0x8] sm:$0xff]
    %v44 = vld [vmem:[%s0] sm:$0xff]
    %v45 = vld [vmem:[%s0 + $0x8] sm:$0xf]
    %v46 = vld [vmem:[%s0 + $0xc] sm:$0xff]
    %v47 = vld [vmem:[%s0 + $0x14] sm:$0xf]
    %v48 = vld [vmem:[%s0 + $0x18] sm:$0xff]
    %v49 = vld [vmem:[%s0 + $0x20] sm:$0xf]
    %v50 = vld [vmem:[%s0 + $0x24] sm:$0xff]
    %v51 = vld [vmem:[%s0 + $0x2c] sm:$0xf]
    %v52 = vld [vmem:[%s0 + $0x30] sm:$0xff]
    %v53 = vld [vmem:[%s0 + $0x38] sm:$0xf]
    %v54 = vld [vmem:[%s0 + $0x3c] sm:$0xff]
    %v55 = vld [vmem:[%s0 + $0x44] sm:$0xf]
    %v56 = vld [vmem:[%s0 + $0x48] sm:$0xff]
    %v57 = vld [vmem:[%s0 + $0x50] sm:$0xf]
    %v58 = vld [vmem:[%s0 + $0x54] sm:$0xff]
    %v59 = vld [vmem:[%s0 + $0x5c] sm:$0xf]
    %v60 = vld [vmem:[%s0 + $0x60] sm:$0xff]
    %v61 = vld [vmem:[%s0 + $0x68] sm:$0xf]
    %v62 = vld [vmem:[%s0 + $0x6c] sm:$0xff]
    %v63 = vld [vmem:[%s0 + $0x74] sm:$0xf]
    %v64 = vld [vmem:[%s0 + $0x78] sm:$0xff]
    %v65 = vld [vmem:[%s0 + $0x80] sm:$0xf]
    %v66 = vld [vmem:[%s0 + $0x84] sm:$0xff]
    %v67 = vld [vmem:[%s0 + $0x8c] sm:$0xf]
    %v68 = vld [vmem:[%s0 + $0x90] sm:$0xff]
    %v69 = vld [vmem:[%s0 + $0x98] sm:$0xf]
    %v70 = vld [vmem:[%s0 + $0x9c] sm:$0xff]
    %v71 = vld [vmem:[%s0 + $0xa4] sm:$0xf]
    %v72 = vld [vmem:[%s0 + $0xa8] sm:$0xff]
    %v73 = vld [vmem:[%s0 + $0xb0] sm:$0xf]
    %v74 = vld [vmem:[%s0 + $0xb4] sm:$0xff]
    %v75 = vld [vmem:[%s0 + $0xbc] sm:$0xf]
    %v76 = vld [vmem:[%s0 + $0xc0] sm:$0xff]
    %v77 = vld [vmem:[%s0 + $0xc8] sm:$0xf]
    %v78 = vld [vmem:[%s0 + $0xcc] sm:$0xff]
    %v79 = vld [vmem:[%s0 + $0xd4] sm:$0xf]
    %v80 = vld [vmem:[%s0 + $0xd8] sm:$0xff]
    %v81 = vld [vmem:[%s0 + $0xe0] sm:$0xf]
    %v82 = vld [vmem:[%s0 + $0xe4] sm:$0xff]
    %v83 = vld [vmem:[%s0 + $0xec] sm:$0xf]
    %v84 = vld [vmem:[%s0 + $0xf0] sm:$0xff]
    %v85 = vld [vmem:[%s0 + $0xf8] sm:$0xf]
    %v86 = vld [vmem:[%s0 + $0xfc] sm:$0xff]
    %v87 = vld [vmem:[%s0 + $0x104] sm:$0xf]
    %v88 = vld [vmem:[%s0 + $0x108] sm:$0xff]
    %v89 = vld [vmem:[%s0 + $0x110] sm:$0xf]
    %v90 = vld [vmem:[%s0 + $0x114] sm:$0xff]
    %v91 = vld [vmem:[%s0 + $0x11c] sm:$0xf]
    %v92 = vld [vmem:[%s0 + $0x120] sm:$0xff]
    %v93 = vld [vmem:[%s0 + $0x128] sm:$0xf]
    %v94 = vld [vmem:[%s0 + $0x12c] sm:$0xff]
    %v95 = vld [vmem:[%s0 + $0x134] sm:$0xf]
    %v96 = vld [vmem:[%s0 + $0x138] sm:$0xff]
    %v97 = vld [vmem:[%s0 + $0x140] sm:$0xf]
    %v98 = vld [vmem:[%s0 + $0x144] sm:$0xff]
    %v99 = vld [vmem:[%s0 + $0x14c] sm:$0xf]
    %v100 = vld [vmem:[%s0 + $0x150] sm:$0xff]
    %v101 = vld [vmem:[%s0 + $0x158] sm:$0xf]
    %v102 = vld [vmem:[%s0 + $0x15c] sm:$0xff]
    %v103 = vld [vmem:[%s0 + $0x164] sm:$0xf]
    %v104 = vld [vmem:[%s0 + $0x168] sm:$0xff]
    %v105 = vld [vmem:[%s0 + $0x170] sm:$0xf]
    %v106 = vld [vmem:[%s0 + $0x174] sm:$0xff]
    %v107 = vld [vmem:[%s0 + $0x17c] sm:$0xf]
    %v110 = vunpack.c.l.b16 %v42
    %v111 = vunpack.c.h.b16 %v42
    %v112 = vunpack.c.l.b16 %v43
    %v113 = vunpack.c.h.b16 %v43
    %v114 = vpack.c.b16 %v112, %v110
    %v115 = vpack.c.b16 %v113, %v111
    %v182 = vunpack.c.l.b16 %v44
    %v183 = vunpack.c.h.b16 %v44
    %v184 = vunpack.c.l.b16 %v45
    %v185 = vunpack.c.l.b16 %v46
    %v186 = vunpack.c.h.b16 %v46
    %v187 = vunpack.c.l.b16 %v47
    %v188 = vunpack.c.l.b16 %v48
    %v189 = vunpack.c.h.b16 %v48
    %v190 = vunpack.c.l.b16 %v49
    %v191 = vunpack.c.l.b16 %v50
    %v192 = vunpack.c.h.b16 %v50
    %v193 = vunpack.c.l.b16 %v51
    %v194 = vunpack.c.l.b16 %v52
    %v195 = vunpack.c.h.b16 %v52
    %v196 = vunpack.c.l.b16 %v53
    %v197 = vunpack.c.l.b16 %v54
    %v198 = vunpack.c.h.b16 %v54
    %v199 = vunpack.c.l.b16 %v55
    %v200 = vunpack.c.l.b16 %v56
    %v201 = vunpack.c.h.b16 %v56
    %v202 = vunpack.c.l.b16 %v57
    %v203 = vunpack.c.l.b16 %v58
    %v204 = vunpack.c.h.b16 %v58
    %v205 = vunpack.c.l.b16 %v59
    %v206 = vunpack.c.l.b16 %v60
    %v207 = vunpack.c.h.b16 %v60
    %v208 = vunpack.c.l.b16 %v61
    %v209 = vunpack.c.l.b16 %v62
    %v210 = vunpack.c.h.b16 %v62
    %v211 = vunpack.c.l.b16 %v63
    %v212 = vunpack.c.l.b16 %v64
    %v213 = vunpack.c.h.b16 %v64
    %v214 = vunpack.c.l.b16 %v65
    %v215 = vunpack.c.l.b16 %v66
    %v216 = vunpack.c.h.b16 %v66
    %v217 = vunpack.c.l.b16 %v67
    %v218 = vunpack.c.l.b16 %v68
    %v219 = vunpack.c.h.b16 %v68
    %v220 = vunpack.c.l.b16 %v69
    %v221 = vunpack.c.l.b16 %v70
    %v222 = vunpack.c.h.b16 %v70
    %v223 = vunpack.c.l.b16 %v71
    %v224 = vunpack.c.l.b16 %v72
    %v225 = vunpack.c.h.b16 %v72
    %v226 = vunpack.c.l.b16 %v73
    %v227 = vunpack.c.l.b16 %v74
    %v228 = vunpack.c.h.b16 %v74
    %v229 = vunpack.c.l.b16 %v75
    %v230 = vunpack.c.l.b16 %v76
    %v231 = vunpack.c.h.b16 %v76
    %v232 = vunpack.c.l.b16 %v77
    %v233 = vunpack.c.l.b16 %v78
    %v234 = vunpack.c.h.b16 %v78
    %v235 = vunpack.c.l.b16 %v79
    %v236 = vunpack.c.l.b16 %v80
    %v237 = vunpack.c.h.b16 %v80
    %v238 = vunpack.c.l.b16 %v81
    %v239 = vunpack.c.l.b16 %v82
    %v240 = vunpack.c.h.b16 %v82
    %v241 = vunpack.c.l.b16 %v83
    %v242 = vunpack.c.l.b16 %v84
    %v243 = vunpack.c.h.b16 %v84
    %v244 = vunpack.c.l.b16 %v85
    %v245 = vunpack.c.l.b16 %v86
    %v246 = vunpack.c.h.b16 %v86
    %v247 = vunpack.c.l.b16 %v87
    %v248 = vunpack.c.l.b16 %v88
    %v249 = vunpack.c.h.b16 %v88
    %v250 = vunpack.c.l.b16 %v89
    %v251 = vunpack.c.l.b16 %v90
    %v252 = vunpack.c.h.b16 %v90
    %v253 = vunpack.c.l.b16 %v91
    %v254 = vunpack.c.l.b16 %v92
    %v255 = vunpack.c.h.b16 %v92
    %v256 = vunpack.c.l.b16 %v93
    %v257 = vunpack.c.l.b16 %v94
    %v258 = vunpack.c.h.b16 %v94
    %v259 = vunpack.c.l.b16 %v95
    %v260 = vunpack.c.l.b16 %v96
    %v261 = vunpack.c.h.b16 %v96
    %v262 = vunpack.c.l.b16 %v97
    %v263 = vunpack.c.l.b16 %v98
    %v264 = vunpack.c.h.b16 %v98
    %v265 = vunpack.c.l.b16 %v99
    %v266 = vunpack.c.l.b16 %v100
    %v267 = vunpack.c.h.b16 %v100
    %v268 = vunpack.c.l.b16 %v101
    %v269 = vunpack.c.l.b16 %v102
    %v270 = vunpack.c.h.b16 %v102
    %v271 = vunpack.c.l.b16 %v103
    %v272 = vunpack.c.l.b16 %v104
    %v273 = vunpack.c.h.b16 %v104
    %v274 = vunpack.c.l.b16 %v105
    %v275 = vunpack.c.l.b16 %v106
    %v276 = vunpack.c.h.b16 %v106
    %v277 = vunpack.c.l.b16 %v107
    %v278 = vpack.c.b16 %v185, %v182
    %v279 = vpack.c.b16 %v186, %v183
    %v280 = vpack.c.b16 %v187, %v184
    %v281 = vpack.c.b16 %v191, %v188
    %v282 = vpack.c.b16 %v192, %v189
    %v283 = vpack.c.b16 %v193, %v190
    %v284 = vpack.c.b16 %v197, %v194
    %v285 = vpack.c.b16 %v198, %v195
    %v286 = vpack.c.b16 %v199, %v196
    %v287 = vpack.c.b16 %v203, %v200
    %v288 = vpack.c.b16 %v204, %v201
    %v289 = vpack.c.b16 %v205, %v202
    %v290 = vpack.c.b16 %v209, %v206
    %v291 = vpack.c.b16 %v210, %v207
    %v292 = vpack.c.b16 %v211, %v208
    %v293 = vpack.c.b16 %v215, %v212
    %v294 = vpack.c.b16 %v216, %v213
    %v295 = vpack.c.b16 %v217, %v214
    %v296 = vpack.c.b16 %v221, %v218
    %v297 = vpack.c.b16 %v222, %v219
    %v298 = vpack.c.b16 %v223, %v220
    %v299 = vpack.c.b16 %v227, %v224
    %v300 = vpack.c.b16 %v228, %v225
    %v301 = vpack.c.b16 %v229, %v226
    %v302 = vpack.c.b16 %v233, %v230
    %v303 = vpack.c.b16 %v234, %v231
    %v304 = vpack.c.b16 %v235, %v232
    %v305 = vpack.c.b16 %v239, %v236
    %v306 = vpack.c.b16 %v240, %v237
    %v307 = vpack.c.b16 %v241, %v238
    %v308 = vpack.c.b16 %v245, %v242
    %v309 = vpack.c.b16 %v246, %v243
    %v310 = vpack.c.b16 %v247, %v244
    %v311 = vpack.c.b16 %v251, %v248
    %v312 = vpack.c.b16 %v252, %v249
    %v313 = vpack.c.b16 %v253, %v250
    %v314 = vpack.c.b16 %v257, %v254
    %v315 = vpack.c.b16 %v258, %v255
    %v316 = vpack.c.b16 %v259, %v256
    %v317 = vpack.c.b16 %v263, %v260
    %v318 = vpack.c.b16 %v264, %v261
    %v319 = vpack.c.b16 %v265, %v262
    %v320 = vpack.c.b16 %v269, %v266
    %v321 = vpack.c.b16 %v270, %v267
    %v322 = vpack.c.b16 %v271, %v268
    %v323 = vpack.c.b16 %v275, %v272
    %v324 = vpack.c.b16 %v276, %v273
    %v325 = vpack.c.b16 %v277, %v274
    %374 = vmatprep.subr.bf16.mxu0 %v279
    %375 = vmatpush1.bf16.msra.mxu0 %v278
    %376 = vmatprep.subr.bf16.mxu0 %v282
    %377 = vmatpush1.bf16.msra.mxu0 %v281
    %378 = vmatprep.subr.bf16.mxu0 %v285
    %379 = vmatpush1.bf16.msra.mxu0 %v284
    %380 = vmatprep.subr.bf16.mxu0 %v288
    %381 = vmatpush1.bf16.msra.mxu0 %v287
    %382 = vmatprep.subr.bf16.mxu0 %v291
    %383 = vmatpush1.bf16.msra.mxu0 %v290
    %384 = vmatprep.subr.bf16.mxu0 %v294
    %385 = vmatpush1.bf16.msra.mxu0 %v293
    %386 = vmatprep.subr.bf16.mxu0 %v297
    %387 = vmatpush1.bf16.msra.mxu0 %v296
    %388 = vmatprep.subr.bf16.mxu0 %v300
    %389 = vmatpush1.bf16.msra.mxu0 %v299
    %390 = vmatprep.subr.bf16.mxu0 %v303
    %391 = vmatpush1.bf16.msra.mxu0 %v302
    %392 = vmatprep.subr.bf16.mxu0 %v306
    %393 = vmatpush1.bf16.msra.mxu0 %v305
    %394 = vmatprep.subr.bf16.mxu0 %v309
    %395 = vmatpush1.bf16.msra.mxu0 %v308
    %396 = vmatprep.subr.bf16.mxu0 %v312
    %397 = vmatpush1.bf16.msra.mxu0 %v311
    %398 = vmatprep.subr.bf16.mxu0 %v315
    %399 = vmatpush1.bf16.msra.mxu0 %v314
    %400 = vmatprep.subr.bf16.mxu0 %v318
    %401 = vmatpush1.bf16.msra.mxu0 %v317
    %402 = vmatprep.subr.bf16.mxu0 %v321
    %403 = vmatpush1.bf16.msra.mxu0 %v320
    %404 = vmatprep.subr.bf16.mxu0 %v324
    %405 = vmatpush1.bf16.msra.mxu0 %v323
    %406 = vmatprep.mubr.bf16.mxu0 %v115
    %407 = vmatmul.mubr.bf16.gmra.mrb[0].mxu0 %v114
    %v408 = vpop.f32.mrb[0].mxu0
    %v409 = vadd.f32 0.0, %v408
    %v410 = vpop.f32.mrb[0].mxu0
    %v411 = vadd.f32 0.0, %v410
    %v412 = vpop.f32.mrb[0].mxu0
    %v413 = vadd.f32 0.0, %v412
    %v414 = vpop.f32.mrb[0].mxu0
    %v415 = vadd.f32 0.0, %v414
    %416 = vdwg.mxu0
    %417 = vmatprep.subr.bf16.mxu0 0
    %418 = vmatpush1.bf16.msra.mxu0 %v280
    %419 = vmatprep.subr.bf16.mxu0 0
    %420 = vmatpush1.bf16.msra.mxu0 %v283
    %421 = vmatprep.subr.bf16.mxu0 0
    %422 = vmatpush1.bf16.msra.mxu0 %v286
    %423 = vmatprep.subr.bf16.mxu0 0
    %424 = vmatpush1.bf16.msra.mxu0 %v289
    %425 = vmatprep.subr.bf16.mxu0 0
    %426 = vmatpush1.bf16.msra.mxu0 %v292
    %427 = vmatprep.subr.bf16.mxu0 0
    %428 = vmatpush1.bf16.msra.mxu0 %v295
    %429 = vmatprep.subr.bf16.mxu0 0
    %430 = vmatpush1.bf16.msra.mxu0 %v298
    %431 = vmatprep.subr.bf16.mxu0 0
    %432 = vmatpush1.bf16.msra.mxu0 %v301
    %433 = vmatprep.subr.bf16.mxu0 0
    %434 = vmatpush1.bf16.msra.mxu0 %v304
    %435 = vmatprep.subr.bf16.mxu0 0
    %436 = vmatpush1.bf16.msra.mxu0 %v307
    %437 = vmatprep.subr.bf16.mxu0 0
    %438 = vmatpush1.bf16.msra.mxu0 %v310
    %439 = vmatprep.subr.bf16.mxu0 0
    %440 = vmatpush1.bf16.msra.mxu0 %v313
    %441 = vmatprep.subr.bf16.mxu0 0
    %442 = vmatpush1.bf16.msra.mxu0 %v316
    %443 = vmatprep.subr.bf16.mxu0 0
    %444 = vmatpush1.bf16.msra.mxu0 %v319
    %445 = vmatprep.subr.bf16.mxu0 0
    %446 = vmatpush1.bf16.msra.mxu0 %v322
    %447 = vmatprep.subr.bf16.mxu0 0
    %448 = vmatpush1.bf16.msra.mxu0 %v325
    %449 = vmatprep.mubr.bf16.mxu0 %v115
    %450 = vmatmul.mubr.bf16.gmra.mrb[0].mxu0 %v114
    %v451 = vpop.f32.mrb[0].mxu0
    %v452 = vadd.f32 0.0, %v451
    %v453 = vpop.f32.mrb[0].mxu0
    %v454 = vpop.f32.mrb[0].mxu0
    %v455 = vadd.f32 0.0, %v454
    %v456 = vpop.f32.mrb[0].mxu0
    %457 = vdwg.mxu0
    %v458 = vld [vmem:[%s2] sm:$0xff]
    %v459 = vld [vmem:[%s2 + $0x8] sm:$0xff]
    %v460 = vld [vmem:[%s3] sm:$0xff]
    %v461 = vld [vmem:[%s3 + $0x8] sm:$0xff]
    %v462 = vadd.f32 %v409, %v411
    %vm463 = vcmask 719872
    %v464 = vsel %vm463, %v452, 0.0
    %v465 = vadd.f32 %v462, %v464
    %466 = vadd.xlane.f32.xlu0 %v465
    %v467 = vpop.xlane.xlu0 %466
    %v468 = vadd.f32 %v413, %v415
    %v469 = vsel %vm463, %v455, 0.0
    %v470 = vadd.f32 %v468, %v469
    %471 = vadd.xlane.f32.xlu0 %v470
    %v472 = vpop.xlane.xlu0 %471
    %v473 = vmul.f32 %v409, %v409
    %v474 = vmul.f32 %v411, %v411
    %v475 = vmul.f32 %v452, %v452
    %v476 = vmul.f32 %v413, %v413
    %v477 = vmul.f32 %v415, %v415
    %v478 = vmul.f32 %v455, %v455
    %v479 = vadd.f32 %v473, %v474
    %v480 = vsel %vm463, %v475, 0.0
    %v481 = vadd.f32 %v479, %v480
    %482 = vadd.xlane.f32.xlu0 %v481
    %v483 = vpop.xlane.xlu0 %482
    %v484 = vadd.f32 %v476, %v477
    %v485 = vsel %vm463, %v478, 0.0
    %v486 = vadd.f32 %v484, %v485
    %487 = vadd.xlane.f32.xlu0 %v486
    %v488 = vpop.xlane.xlu0 %487
    %v489 = vmul.f32 %v467, 0.00295858
    %v490 = vmul.f32 %v472, 0.00295858
    %v491 = vmul.f32 %v483, 0.00295858
    %v492 = vmul.f32 %v488, 0.00295858
    %v493 = vmul.f32 %v489, %v489
    %v494 = vmul.f32 %v490, %v490
    %v495 = vsub.f32 %v491, %v493
    %v496 = vsub.f32 %v492, %v494
    %v497 = vadd.f32 %v495, 1e-05
    %v498 = vadd.f32 %v496, 1e-05
    %v499 = vrsqrt.pop %v497
    %v500 = vrsqrt.pop %v498
    %v501 = vmul.f32 %v458, %v499
    %v502 = vmul.f32 %v459, %v500
    %v503 = vmul.f32 %v489, %v501
    %v504 = vmul.f32 %v490, %v502
    %v505 = vsub.f32 %v460, %v503
    %v506 = vsub.f32 %v461, %v504
    %508 = vset.pattern.permute.xlu0 0
    %509 = vperm.xlu0 %508, %v501
    %v510 = vpop.permute.xlu0 %509
    %513 = vset.pattern.permute.xlu0 0
    %514 = vperm.xlu0 %513, %v502
    %v515 = vpop.permute.xlu0 %514
    %v517 = vmul.f32 %v409, %v510
    %v518 = vmul.f32 %v411, %v510
    %v519 = vmul.f32 %v452, %v510
    %v520 = vmul.f32 %v413, %v515
    %v521 = vmul.f32 %v415, %v515
    %v522 = vmul.f32 %v455, %v515
    %524 = vset.pattern.permute.xlu0 0
    %525 = vperm.xlu0 %524, %v505
    %v526 = vpop.permute.xlu0 %525
    %529 = vset.pattern.permute.xlu0 0
    %530 = vperm.xlu0 %529, %v506
    %v531 = vpop.permute.xlu0 %530
    %v533 = vadd.f32 %v517, %v526
    %v534 = vadd.f32 %v518, %v526
    %v535 = vadd.f32 %v519, %v526
    %v536 = vadd.f32 %v520, %v531
    %v537 = vadd.f32 %v521, %v531
    %v538 = vadd.f32 %v522, %v531
    %vm539 = vcmp.gt.f32.partialorder %v533, 0.0
    %vm540 = vcmp.gt.f32.partialorder %v534, 0.0
    %vm541 = vcmp.gt.f32.partialorder %v535, 0.0
    %vm542 = vcmp.gt.f32.partialorder %v536, 0.0
    %vm543 = vcmp.gt.f32.partialorder %v537, 0.0
    %vm544 = vcmp.gt.f32.partialorder %v538, 0.0
    %v545 = vmul.f32 %v533, 0.2
    %v546 = vmul.f32 %v534, 0.2
    %v547 = vmul.f32 %v535, 0.2
    %v548 = vmul.f32 %v536, 0.2
    %v549 = vmul.f32 %v537, 0.2
    %v550 = vmul.f32 %v538, 0.2
    %v551 = vsel %vm539, %v533, %v545
    %v552 = vsel %vm540, %v534, %v546
    %v553 = vsel %vm541, %v535, %v547
    %v554 = vsel %vm542, %v536, %v548
    %v555 = vsel %vm543, %v537, %v549
    %v556 = vsel %vm544, %v538, %v550
    %v557 = vld [vmem:[%s5] sm:$0xff]
    %v558 = vld [vmem:[%s5 + $0x8] sm:$0xff]
    %v559 = vld [vmem:[%s5 + $0x10] sm:$0xff]
    %v560 = vld [vmem:[%s5 + $0x18] sm:$0xff]
    %v561 = vld [vmem:[%s5 + $0x20] sm:$0xff]
    %v562 = vld [vmem:[%s5 + $0x28] sm:$0xff]
    %v563 = vld [vmem:[%s5 + $0x30] sm:$0xff]
    %v564 = vld [vmem:[%s5 + $0x38] sm:$0xff]
    %v565 = vld [vmem:[%s5 + $0x40] sm:$0xff]
    %v566 = vld [vmem:[%s5 + $0x48] sm:$0xff]
    %v567 = vld [vmem:[%s5 + $0x50] sm:$0xff]
    %v568 = vld [vmem:[%s5 + $0x58] sm:$0xff]
    %v569 = vld [vmem:[%s5 + $0x60] sm:$0xff]
    %v570 = vld [vmem:[%s5 + $0x68] sm:$0xff]
    %v571 = vld [vmem:[%s5 + $0x70] sm:$0xff]
    %v572 = vld [vmem:[%s5 + $0x78] sm:$0xff]
    %v573 = vld [vmem:[%s5 + $0x80] sm:$0xff]
    %v574 = vld [vmem:[%s5 + $0x88] sm:$0xff]
    %v575 = vld [vmem:[%s5 + $0x90] sm:$0xff]
    %v576 = vld [vmem:[%s5 + $0x98] sm:$0xff]
    %v577 = vld [vmem:[%s5 + $0xa0] sm:$0xff]
    %v578 = vld [vmem:[%s5 + $0xa8] sm:$0xff]
    %v579 = vld [vmem:[%s5 + $0xb0] sm:$0xff]
    %v580 = vld [vmem:[%s5 + $0xb8] sm:$0xff]
    %v581 = vld [vmem:[%s5 + $0xc0] sm:$0xff]
    %v582 = vld [vmem:[%s5 + $0xc8] sm:$0xff]
    %v583 = vld [vmem:[%s5 + $0xd0] sm:$0xff]
    %v584 = vld [vmem:[%s5 + $0xd8] sm:$0xff]
    %v585 = vld [vmem:[%s5 + $0xe0] sm:$0xff]
    %v586 = vld [vmem:[%s5 + $0xe8] sm:$0xff]
    %v587 = vld [vmem:[%s5 + $0xf0] sm:$0xff]
    %v588 = vld [vmem:[%s5 + $0xf8] sm:$0xff]
    %v589 = vld [vmem:[%s5 + $0x100] sm:$0xff]
    %v590 = vld [vmem:[%s5 + $0x108] sm:$0xff]
    %v591 = vld [vmem:[%s5 + $0x110] sm:$0xff]
    %v592 = vld [vmem:[%s5 + $0x118] sm:$0xff]
    %v593 = vld [vmem:[%s5 + $0x120] sm:$0xff]
    %v594 = vld [vmem:[%s5 + $0x128] sm:$0xff]
    %v595 = vld [vmem:[%s5 + $0x130] sm:$0xff]
    %v596 = vld [vmem:[%s5 + $0x138] sm:$0xff]
    %v597 = vld [vmem:[%s5 + $0x140] sm:$0xff]
    %v598 = vld [vmem:[%s5 + $0x148] sm:$0xff]
    %v599 = vld [vmem:[%s5 + $0x150] sm:$0xff]
    %v601 = vsel %vm463, %v553, 0
    %v604 = vsel %vm463, %v556, 0
    %606 = vmatprep.subr.mxu0 0.0
    %607 = vmatpush1.msra.mxu0 %v557
    %608 = vmatprep.subr.mxu0 0.0
    %609 = vmatpush1.msra.mxu0 %v558
    %610 = vmatprep.subr.mxu0 0.0
    %611 = vmatpush1.msra.mxu0 %v559
    %612 = vmatprep.subr.mxu0 0.0
    %613 = vmatpush1.msra.mxu0 %v560
    %614 = vmatprep.subr.mxu0 0.0
    %615 = vmatpush1.msra.mxu0 %v561
    %616 = vmatprep.subr.mxu0 0.0
    %617 = vmatpush1.msra.mxu0 %v562
    %618 = vmatprep.subr.mxu0 0.0
    %619 = vmatpush1.msra.mxu0 %v563
    %620 = vmatprep.subr.mxu0 0.0
    %621 = vmatpush1.msra.mxu0 %v564
    %622 = vmatprep.subr.mxu0 0.0
    %623 = vmatpush1.msra.mxu0 %v565
    %624 = vmatprep.subr.mxu0 0.0
    %625 = vmatpush1.msra.mxu0 %v566
    %626 = vmatprep.subr.mxu0 0.0
    %627 = vmatpush1.msra.mxu0 %v567
    %628 = vmatprep.subr.mxu0 0.0
    %629 = vmatpush1.msra.mxu0 %v568
    %630 = vmatprep.subr.mxu0 0.0
    %631 = vmatpush1.msra.mxu0 %v569
    %632 = vmatprep.subr.mxu0 0.0
    %633 = vmatpush1.msra.mxu0 %v570
    %634 = vmatprep.subr.mxu0 0.0
    %635 = vmatpush1.msra.mxu0 %v571
    %636 = vmatprep.subr.mxu0 0.0
    %637 = vmatpush1.msra.mxu0 %v572
    %638 = vmatprep.subr.mxu0 0.0
    %639 = vmatpush1.msra.mxu0 %v573
    %640 = vmatprep.subr.mxu0 0.0
    %641 = vmatpush1.msra.mxu0 %v574
    %642 = vmatprep.subr.mxu0 0.0
    %643 = vmatpush1.msra.mxu0 %v575
    %644 = vmatprep.subr.mxu0 0.0
    %645 = vmatpush1.msra.mxu0 %v576
    %646 = vmatprep.subr.mxu0 0.0
    %647 = vmatpush1.msra.mxu0 %v577
    %648 = vmatprep.subr.mxu0 0.0
    %649 = vmatpush1.msra.mxu0 %v578
    %650 = vmatprep.subr.mxu0 0.0
    %651 = vmatpush1.msra.mxu0 %v579
    %652 = vmatprep.subr.mxu0 0.0
    %653 = vmatpush1.msra.mxu0 %v580
    %654 = vmatprep.subr.mxu0 0.0
    %655 = vmatpush1.msra.mxu0 %v581
    %656 = vmatprep.subr.mxu0 0.0
    %657 = vmatpush1.msra.mxu0 %v582
    %658 = vmatprep.subr.mxu0 0.0
    %659 = vmatpush1.msra.mxu0 %v583
    %660 = vmatprep.subr.mxu0 0.0
    %661 = vmatpush1.msra.mxu0 %v584
    %662 = vmatprep.subr.mxu0 0.0
    %663 = vmatpush1.msra.mxu0 %v585
    %664 = vmatprep.subr.mxu0 0.0
    %665 = vmatpush1.msra.mxu0 %v586
    %666 = vmatprep.subr.mxu0 0.0
    %667 = vmatpush1.msra.mxu0 %v587
    %668 = vmatprep.subr.mxu0 0.0
    %669 = vmatpush1.msra.mxu0 %v588
    %670 = vmatprep.mubr.f32.mxu0 %v552
    %671 = vmatmul.mubr.f32.gmra.mrb[0].mxu0 %v551
    %v672 = vpop.f32.mrb[0].mxu0
    %v673 = vadd.f32 0.0, %v672
    %v674 = vpop.f32.mrb[0].mxu0
    %675 = vmatprep.mubr.f32.mxu0 %v555
    %676 = vmatmul.mubr.f32.gmra.mrb[0].mxu0 %v554
    %v677 = vpop.f32.mrb[0].mxu0
    %v678 = vadd.f32 0.0, %v677
    %v679 = vpop.f32.mrb[0].mxu0
    %680 = vdwg.mxu0
    %681 = vmatprep.subr.mxu0 0.0
    %682 = vmatpush1.msra.mxu0 %v589
    %683 = vmatprep.subr.mxu0 0.0
    %684 = vmatpush1.msra.mxu0 %v590
    %685 = vmatprep.subr.mxu0 0.0
    %686 = vmatpush1.msra.mxu0 %v591
    %687 = vmatprep.subr.mxu0 0.0
    %688 = vmatpush1.msra.mxu0 %v592
    %689 = vmatprep.subr.mxu0 0.0
    %690 = vmatpush1.msra.mxu0 %v593
    %691 = vmatprep.subr.mxu0 0.0
    %692 = vmatpush1.msra.mxu0 %v594
    %693 = vmatprep.subr.mxu0 0.0
    %694 = vmatpush1.msra.mxu0 %v595
    %695 = vmatprep.subr.mxu0 0.0
    %696 = vmatpush1.msra.mxu0 %v596
    %697 = vmatprep.subr.mxu0 0.0
    %698 = vmatpush1.msra.mxu0 %v597
    %699 = vmatprep.subr.mxu0 0.0
    %700 = vmatpush1.msra.mxu0 %v598
    %701 = vmatprep.subr.mxu0 0.0
    %702 = vmatpush1.msra.mxu0 %v599
    %703 = vmatprep.subr.mxu0 0.0
    %704 = vmatpush1.msra.mxu0 0.0
    %705 = vmatprep.subr.mxu0 0.0
    %706 = vmatpush1.msra.mxu0 0.0
    %707 = vmatprep.subr.mxu0 0.0
    %708 = vmatpush1.msra.mxu0 0.0
    %709 = vmatprep.subr.mxu0 0.0
    %710 = vmatpush1.msra.mxu0 0.0
    %711 = vmatprep.subr.mxu0 0.0
    %712 = vmatpush1.msra.mxu0 0.0
    %713 = vmatprep.subr.mxu0 0.0
    %714 = vmatpush1.msra.mxu0 0.0
    %715 = vmatprep.subr.mxu0 0.0
    %716 = vmatpush1.msra.mxu0 0.0
    %717 = vmatprep.subr.mxu0 0.0
    %718 = vmatpush1.msra.mxu0 0.0
    %719 = vmatprep.subr.mxu0 0.0
    %720 = vmatpush1.msra.mxu0 0.0
    %721 = vmatprep.subr.mxu0 0.0
    %722 = vmatpush1.msra.mxu0 0.0
    %723 = vmatprep.subr.mxu0 0.0
    %724 = vmatpush1.msra.mxu0 0.0
    %725 = vmatprep.subr.mxu0 0.0
    %726 = vmatpush1.msra.mxu0 0.0
    %727 = vmatprep.subr.mxu0 0.0
    %728 = vmatpush1.msra.mxu0 0.0
    %729 = vmatprep.subr.mxu0 0.0
    %730 = vmatpush1.msra.mxu0 0.0
    %731 = vmatprep.subr.mxu0 0.0
    %732 = vmatpush1.msra.mxu0 0.0
    %733 = vmatprep.subr.mxu0 0.0
    %734 = vmatpush1.msra.mxu0 0.0
    %735 = vmatprep.subr.mxu0 0.0
    %736 = vmatpush1.msra.mxu0 0.0
    %737 = vmatprep.subr.mxu0 0.0
    %738 = vmatpush1.msra.mxu0 0.0
    %739 = vmatprep.subr.mxu0 0.0
    %740 = vmatpush1.msra.mxu0 0.0
    %741 = vmatprep.subr.mxu0 0.0
    %742 = vmatpush1.msra.mxu0 0.0
    %743 = vmatprep.subr.mxu0 0.0
    %744 = vmatpush1.msra.mxu0 0.0
    %745 = vmatprep.mubr.f32.mxu0 0.0
    %746 = vmatmul.mubr.f32.gmra.mrb[0].mxu0 %v601
    %v747 = vpop.f32.mrb[0].mxu0
    %v748 = vadd.f32 %v673, %v747
    %v749 = vpop.f32.mrb[0].mxu0
    %750 = vmatprep.mubr.f32.mxu0 0.0
    %751 = vmatmul.mubr.f32.gmra.mrb[0].mxu0 %v604
    %v752 = vpop.f32.mrb[0].mxu0
    %v753 = vadd.f32 %v678, %v752
    %v754 = vpop.f32.mrb[0].mxu0
    %755 = vdwg.mxu0
    %v756 = vld [vmem:[%s4] sm:$0xff]
    %v757 = vld [vmem:[%s4 + $0x8] sm:$0xff]
    %v758 = vld [vmem:[%s4 + $0x10] sm:$0xff]
    %v759 = vld [vmem:[%s4 + $0x18] sm:$0xff]
    %s760 = scalar_lea.vmem %s5, 344
    %v761 = vld [vmem:[%s760] sm:$0xff]
    %v762 = vld [vmem:[%s760 + $0x8] sm:$0xff]
    %v763 = vld [vmem:[%s760 + $0x10] sm:$0xff]
    %v764 = vld [vmem:[%s760 + $0x18] sm:$0xff]
    %v765 = vld [vmem:[%s760 + $0x20] sm:$0xff]
    %v766 = vld [vmem:[%s760 + $0x28] sm:$0xff]
    %v767 = vld [vmem:[%s760 + $0x30] sm:$0xff]
    %v768 = vld [vmem:[%s760 + $0x38] sm:$0xff]
    %v769 = vld [vmem:[%s760 + $0x40] sm:$0xff]
    %v770 = vld [vmem:[%s760 + $0x48] sm:$0xff]
    %v771 = vld [vmem:[%s760 + $0x50] sm:$0xff]
    %v772 = vld [vmem:[%s760 + $0x58] sm:$0xff]
    %v773 = vld [vmem:[%s760 + $0x60] sm:$0xff]
    %v774 = vld [vmem:[%s760 + $0x68] sm:$0xff]
    %v775 = vld [vmem:[%s760 + $0x70] sm:$0xff]
    %v776 = vld [vmem:[%s760 + $0x78] sm:$0xff]
    %v777 = vld [vmem:[%s760 + $0x80] sm:$0xff]
    %v778 = vld [vmem:[%s760 + $0x88] sm:$0xff]
    %v779 = vld [vmem:[%s760 + $0x90] sm:$0xff]
    %v780 = vld [vmem:[%s760 + $0x98] sm:$0xff]
    %v781 = vld [vmem:[%s760 + $0xa0] sm:$0xff]
    %v782 = vld [vmem:[%s760 + $0xa8] sm:$0xff]
    %v783 = vld [vmem:[%s760 + $0xb0] sm:$0xff]
    %v784 = vld [vmem:[%s760 + $0xb8] sm:$0xff]
    %v785 = vld [vmem:[%s760 + $0xc0] sm:$0xff]
    %v786 = vld [vmem:[%s760 + $0xc8] sm:$0xff]
    %v787 = vld [vmem:[%s760 + $0xd0] sm:$0xff]
    %v788 = vld [vmem:[%s760 + $0xd8] sm:$0xff]
    %v789 = vld [vmem:[%s760 + $0xe0] sm:$0xff]
    %v790 = vld [vmem:[%s760 + $0xe8] sm:$0xff]
    %v791 = vld [vmem:[%s760 + $0xf0] sm:$0xff]
    %v792 = vld [vmem:[%s760 + $0xf8] sm:$0xff]
    %v793 = vld [vmem:[%s760 + $0x100] sm:$0xff]
    %v794 = vld [vmem:[%s760 + $0x108] sm:$0xff]
    %v795 = vld [vmem:[%s760 + $0x110] sm:$0xff]
    %v796 = vld [vmem:[%s760 + $0x118] sm:$0xff]
    %v797 = vld [vmem:[%s760 + $0x120] sm:$0xff]
    %v798 = vld [vmem:[%s760 + $0x128] sm:$0xff]
    %v799 = vld [vmem:[%s760 + $0x130] sm:$0xff]
    %v800 = vld [vmem:[%s760 + $0x138] sm:$0xff]
    %v801 = vld [vmem:[%s760 + $0x140] sm:$0xff]
    %v802 = vld [vmem:[%s760 + $0x148] sm:$0xff]
    %v803 = vld [vmem:[%s760 + $0x150] sm:$0xff]
    %804 = vmatprep.subr.mxu0 0.0
    %805 = vmatpush1.msra.mxu0 %v761
    %806 = vmatprep.subr.mxu0 0.0
    %807 = vmatpush1.msra.mxu0 %v762
    %808 = vmatprep.subr.mxu0 0.0
    %809 = vmatpush1.msra.mxu0 %v763
    %810 = vmatprep.subr.mxu0 0.0
    %811 = vmatpush1.msra.mxu0 %v764
    %812 = vmatprep.subr.mxu0 0.0
    %813 = vmatpush1.msra.mxu0 %v765
    %814 = vmatprep.subr.mxu0 0.0
    %815 = vmatpush1.msra.mxu0 %v766
    %816 = vmatprep.subr.mxu0 0.0
    %817 = vmatpush1.msra.mxu0 %v767
    %818 = vmatprep.subr.mxu0 0.0
    %819 = vmatpush1.msra.mxu0 %v768
    %820 = vmatprep.subr.mxu0 0.0
    %821 = vmatpush1.msra.mxu0 %v769
    %822 = vmatprep.subr.mxu0 0.0
    %823 = vmatpush1.msra.mxu0 %v770
    %824 = vmatprep.subr.mxu0 0.0
    %825 = vmatpush1.msra.mxu0 %v771
    %826 = vmatprep.subr.mxu0 0.0
    %827 = vmatpush1.msra.mxu0 %v772
    %828 = vmatprep.subr.mxu0 0.0
    %829 = vmatpush1.msra.mxu0 %v773
    %830 = vmatprep.subr.mxu0 0.0
    %831 = vmatpush1.msra.mxu0 %v774
    %832 = vmatprep.subr.mxu0 0.0
    %833 = vmatpush1.msra.mxu0 %v775
    %834 = vmatprep.subr.mxu0 0.0
    %835 = vmatpush1.msra.mxu0 %v776
    %836 = vmatprep.subr.mxu0 0.0
    %837 = vmatpush1.msra.mxu0 %v777
    %838 = vmatprep.subr.mxu0 0.0
    %839 = vmatpush1.msra.mxu0 %v778
    %840 = vmatprep.subr.mxu0 0.0
    %841 = vmatpush1.msra.mxu0 %v779
    %842 = vmatprep.subr.mxu0 0.0
    %843 = vmatpush1.msra.mxu0 %v780
    %844 = vmatprep.subr.mxu0 0.0
    %845 = vmatpush1.msra.mxu0 %v781
    %846 = vmatprep.subr.mxu0 0.0
    %847 = vmatpush1.msra.mxu0 %v782
    %848 = vmatprep.subr.mxu0 0.0
    %849 = vmatpush1.msra.mxu0 %v783
    %850 = vmatprep.subr.mxu0 0.0
    %851 = vmatpush1.msra.mxu0 %v784
    %852 = vmatprep.subr.mxu0 0.0
    %853 = vmatpush1.msra.mxu0 %v785
    %854 = vmatprep.subr.mxu0 0.0
    %855 = vmatpush1.msra.mxu0 %v786
    %856 = vmatprep.subr.mxu0 0.0
    %857 = vmatpush1.msra.mxu0 %v787
    %858 = vmatprep.subr.mxu0 0.0
    %859 = vmatpush1.msra.mxu0 %v788
    %860 = vmatprep.subr.mxu0 0.0
    %861 = vmatpush1.msra.mxu0 %v789
    %862 = vmatprep.subr.mxu0 0.0
    %863 = vmatpush1.msra.mxu0 %v790
    %864 = vmatprep.subr.mxu0 0.0
    %865 = vmatpush1.msra.mxu0 %v791
    %866 = vmatprep.subr.mxu0 0.0
    %867 = vmatpush1.msra.mxu0 %v792
    %868 = vmatprep.mubr.f32.mxu0 %v552
    %869 = vmatmul.mubr.f32.gmra.mrb[0].mxu0 %v551
    %v870 = vpop.f32.mrb[0].mxu0
    %v871 = vadd.f32 0.0, %v870
    %v872 = vpop.f32.mrb[0].mxu0
    %873 = vmatprep.mubr.f32.mxu0 %v555
    %874 = vmatmul.mubr.f32.gmra.mrb[0].mxu0 %v554
    %v875 = vpop.f32.mrb[0].mxu0
    %v876 = vadd.f32 0.0, %v875
    %v877 = vpop.f32.mrb[0].mxu0
    %878 = vdwg.mxu0
    %879 = vmatprep.subr.mxu0 0.0
    %880 = vmatpush1.msra.mxu0 %v793
    %881 = vmatprep.subr.mxu0 0.0
    %882 = vmatpush1.msra.mxu0 %v794
    %883 = vmatprep.subr.mxu0 0.0
    %884 = vmatpush1.msra.mxu0 %v795
    %885 = vmatprep.subr.mxu0 0.0
    %886 = vmatpush1.msra.mxu0 %v796
    %887 = vmatprep.subr.mxu0 0.0
    %888 = vmatpush1.msra.mxu0 %v797
    %889 = vmatprep.subr.mxu0 0.0
    %890 = vmatpush1.msra.mxu0 %v798
    %891 = vmatprep.subr.mxu0 0.0
    %892 = vmatpush1.msra.mxu0 %v799
    %893 = vmatprep.subr.mxu0 0.0
    %894 = vmatpush1.msra.mxu0 %v800
    %895 = vmatprep.subr.mxu0 0.0
    %896 = vmatpush1.msra.mxu0 %v801
    %897 = vmatprep.subr.mxu0 0.0
    %898 = vmatpush1.msra.mxu0 %v802
    %899 = vmatprep.subr.mxu0 0.0
    %900 = vmatpush1.msra.mxu0 %v803
    %901 = vmatprep.subr.mxu0 0.0
    %902 = vmatpush1.msra.mxu0 0.0
    %903 = vmatprep.subr.mxu0 0.0
    %904 = vmatpush1.msra.mxu0 0.0
    %905 = vmatprep.subr.mxu0 0.0
    %906 = vmatpush1.msra.mxu0 0.0
    %907 = vmatprep.subr.mxu0 0.0
    %908 = vmatpush1.msra.mxu0 0.0
    %909 = vmatprep.subr.mxu0 0.0
    %910 = vmatpush1.msra.mxu0 0.0
    %911 = vmatprep.subr.mxu0 0.0
    %912 = vmatpush1.msra.mxu0 0.0
    %913 = vmatprep.subr.mxu0 0.0
    %914 = vmatpush1.msra.mxu0 0.0
    %915 = vmatprep.subr.mxu0 0.0
    %916 = vmatpush1.msra.mxu0 0.0
    %917 = vmatprep.subr.mxu0 0.0
    %918 = vmatpush1.msra.mxu0 0.0
    %919 = vmatprep.subr.mxu0 0.0
    %920 = vmatpush1.msra.mxu0 0.0
    %921 = vmatprep.subr.mxu0 0.0
    %922 = vmatpush1.msra.mxu0 0.0
    %923 = vmatprep.subr.mxu0 0.0
    %924 = vmatpush1.msra.mxu0 0.0
    %925 = vmatprep.subr.mxu0 0.0
    %926 = vmatpush1.msra.mxu0 0.0
    %927 = vmatprep.subr.mxu0 0.0
    %928 = vmatpush1.msra.mxu0 0.0
    %929 = vmatprep.subr.mxu0 0.0
    %930 = vmatpush1.msra.mxu0 0.0
    %931 = vmatprep.subr.mxu0 0.0
    %932 = vmatpush1.msra.mxu0 0.0
    %933 = vmatprep.subr.mxu0 0.0
    %934 = vmatpush1.msra.mxu0 0.0
    %935 = vmatprep.subr.mxu0 0.0
    %936 = vmatpush1.msra.mxu0 0.0
    %937 = vmatprep.subr.mxu0 0.0
    %938 = vmatpush1.msra.mxu0 0.0
    %939 = vmatprep.subr.mxu0 0.0
    %940 = vmatpush1.msra.mxu0 0.0
    %941 = vmatprep.subr.mxu0 0.0
    %942 = vmatpush1.msra.mxu0 0.0
    %943 = vmatprep.mubr.f32.mxu0 0.0
    %944 = vmatmul.mubr.f32.gmra.mrb[0].mxu0 %v601
    %v945 = vpop.f32.mrb[0].mxu0
    %v946 = vadd.f32 %v871, %v945
    %v947 = vpop.f32.mrb[0].mxu0
    %948 = vmatprep.mubr.f32.mxu0 0.0
    %949 = vmatmul.mubr.f32.gmra.mrb[0].mxu0 %v604
    %v950 = vpop.f32.mrb[0].mxu0
    %v951 = vadd.f32 %v876, %v950
    %v952 = vpop.f32.mrb[0].mxu0
    %953 = vdwg.mxu0
    %s954 = scalar_lea.vmem %s4, 32
    %v955 = vld [vmem:[%s954] sm:$0xff]
    %v956 = vld [vmem:[%s954 + $0x8] sm:$0xff]
    %v957 = vld [vmem:[%s954 + $0x10] sm:$0xff]
    %v958 = vld [vmem:[%s954 + $0x18] sm:$0xff]
    %vm959 = vcmask 130048
    %v961 = vsel %vm959, %v955, 0
    %v964 = vsel %vm959, %v956, 0
    %v967 = vsel %vm959, %v957, 0
    %v970 = vsel %vm959, %v958, 0
    %972 = vmatprep.subr.mxu0 0.0
    %973 = vmatpush1.msra.mxu0 %v946
    %974 = vmatprep.subr.mxu0 0.0
    %975 = vmatpush1.msra.mxu0 %v951
    %976 = vmatprep.subr.mxu0 0.0
    %977 = vmatpush1.msra.mxu0 0.0
    %978 = vmatprep.subr.mxu0 0.0
    %979 = vmatpush1.msra.mxu0 0.0
    %980 = vmatprep.subr.mxu0 0.0
    %981 = vmatpush1.msra.mxu0 0.0
    %982 = vmatprep.subr.mxu0 0.0
    %983 = vmatpush1.msra.mxu0 0.0
    %984 = vmatprep.subr.mxu0 0.0
    %985 = vmatpush1.msra.mxu0 0.0
    %986 = vmatprep.subr.mxu0 0.0
    %987 = vmatpush1.msra.mxu0 0.0
    %988 = vmatprep.subr.mxu0 0.0
    %989 = vmatpush1.msra.mxu0 0.0
    %990 = vmatprep.subr.mxu0 0.0
    %991 = vmatpush1.msra.mxu0 0.0
    %992 = vmatprep.subr.mxu0 0.0
    %993 = vmatpush1.msra.mxu0 0.0
    %994 = vmatprep.subr.mxu0 0.0
    %995 = vmatpush1.msra.mxu0 0.0
    %996 = vmatprep.subr.mxu0 0.0
    %997 = vmatpush1.msra.mxu0 0.0
    %998 = vmatprep.subr.mxu0 0.0
    %999 = vmatpush1.msra.mxu0 0.0
    %1000 = vmatprep.subr.mxu0 0.0
    %1001 = vmatpush1.msra.mxu0 0.0
    %1002 = vmatprep.subr.mxu0 0.0
    %1003 = vmatpush1.msra.mxu0 0.0
    %1004 = vmatprep.subr.mxu0 0.0
    %1005 = vmatpush1.msra.mxu0 0.0
    %1006 = vmatprep.subr.mxu0 0.0
    %1007 = vmatpush1.msra.mxu0 0.0
    %1008 = vmatprep.subr.mxu0 0.0
    %1009 = vmatpush1.msra.mxu0 0.0
    %1010 = vmatprep.subr.mxu0 0.0
    %1011 = vmatpush1.msra.mxu0 0.0
    %1012 = vmatprep.subr.mxu0 0.0
    %1013 = vmatpush1.msra.mxu0 0.0
    %1014 = vmatprep.subr.mxu0 0.0
    %1015 = vmatpush1.msra.mxu0 0.0
    %1016 = vmatprep.subr.mxu0 0.0
    %1017 = vmatpush1.msra.mxu0 0.0
    %1018 = vmatprep.subr.mxu0 0.0
    %1019 = vmatpush1.msra.mxu0 0.0
    %1020 = vmatprep.subr.mxu0 0.0
    %1021 = vmatpush1.msra.mxu0 0.0
    %1022 = vmatprep.subr.mxu0 0.0
    %1023 = vmatpush1.msra.mxu0 0.0
    %1024 = vmatprep.subr.mxu0 0.0
    %1025 = vmatpush1.msra.mxu0 0.0
    %1026 = vmatprep.subr.mxu0 0.0
    %1027 = vmatpush1.msra.mxu0 0.0
    %1028 = vmatprep.subr.mxu0 0.0
    %1029 = vmatpush1.msra.mxu0 0.0
    %1030 = vmatprep.subr.mxu0 0.0
    %1031 = vmatpush1.msra.mxu0 0.0
    %1032 = vmatprep.subr.mxu0 0.0
    %1033 = vmatpush1.msra.mxu0 0.0
    %1034 = vmatprep.subr.mxu0 0.0
    %1035 = vmatpush1.msra.mxu0 0.0
    %1036 = vmatprep.mubr.f32.mxu0 0.0
    %1037 = vmatmul.mubr.f32.gmra.mrb[0].mxu0 %v961
    %v1038 = vpop.f32.mrb[0].mxu0
    %v1039 = vadd.f32 0.0, %v1038
    %v1040 = vpop.f32.mrb[0].mxu0
    %1041 = vmatprep.mubr.f32.mxu0 0.0
    %1042 = vmatmul.mubr.f32.gmra.mrb[0].mxu0 %v964
    %v1043 = vpop.f32.mrb[0].mxu0
    %v1044 = vadd.f32 0.0, %v1043
    %v1045 = vpop.f32.mrb[0].mxu0
    %1046 = vmatprep.mubr.f32.mxu0 0.0
    %1047 = vmatmul.mubr.f32.gmra.mrb[0].mxu0 %v967
    %v1048 = vpop.f32.mrb[0].mxu0
    %v1049 = vadd.f32 0.0, %v1048
    %v1050 = vpop.f32.mrb[0].mxu0
    %1051 = vmatprep.mubr.f32.mxu0 0.0
    %1052 = vmatmul.mubr.f32.gmra.mrb[0].mxu0 %v970
    %v1053 = vpop.f32.mrb[0].mxu0
    %v1054 = vadd.f32 0.0, %v1053
    %v1055 = vpop.f32.mrb[0].mxu0
    %1056 = vdwg.mxu0
    %v1058 = vsel %vm959, %v756, 0
    %v1061 = vsel %vm959, %v757, 0
    %v1064 = vsel %vm959, %v758, 0
    %v1067 = vsel %vm959, %v759, 0
    %1069 = vmatprep.subr.mxu0 0.0
    %1070 = vmatpush1.msra.mxu0 %v748
    %1071 = vmatprep.subr.mxu0 0.0
    %1072 = vmatpush1.msra.mxu0 %v753
    %1073 = vmatprep.subr.mxu0 0.0
    %1074 = vmatpush1.msra.mxu0 0.0
    %1075 = vmatprep.subr.mxu0 0.0
    %1076 = vmatpush1.msra.mxu0 0.0
    %1077 = vmatprep.subr.mxu0 0.0
    %1078 = vmatpush1.msra.mxu0 0.0
    %1079 = vmatprep.subr.mxu0 0.0
    %1080 = vmatpush1.msra.mxu0 0.0
    %1081 = vmatprep.subr.mxu0 0.0
    %1082 = vmatpush1.msra.mxu0 0.0
    %1083 = vmatprep.subr.mxu0 0.0
    %1084 = vmatpush1.msra.mxu0 0.0
    %1085 = vmatprep.subr.mxu0 0.0
    %1086 = vmatpush1.msra.mxu0 0.0
    %1087 = vmatprep.subr.mxu0 0.0
    %1088 = vmatpush1.msra.mxu0 0.0
    %1089 = vmatprep.subr.mxu0 0.0
    %1090 = vmatpush1.msra.mxu0 0.0
    %1091 = vmatprep.subr.mxu0 0.0
    %1092 = vmatpush1.msra.mxu0 0.0
    %1093 = vmatprep.subr.mxu0 0.0
    %1094 = vmatpush1.msra.mxu0 0.0
    %1095 = vmatprep.subr.mxu0 0.0
    %1096 = vmatpush1.msra.mxu0 0.0
    %1097 = vmatprep.subr.mxu0 0.0
    %1098 = vmatpush1.msra.mxu0 0.0
    %1099 = vmatprep.subr.mxu0 0.0
    %1100 = vmatpush1.msra.mxu0 0.0
    %1101 = vmatprep.subr.mxu0 0.0
    %1102 = vmatpush1.msra.mxu0 0.0
    %1103 = vmatprep.subr.mxu0 0.0
    %1104 = vmatpush1.msra.mxu0 0.0
    %1105 = vmatprep.subr.mxu0 0.0
    %1106 = vmatpush1.msra.mxu0 0.0
    %1107 = vmatprep.subr.mxu0 0.0
    %1108 = vmatpush1.msra.mxu0 0.0
    %1109 = vmatprep.subr.mxu0 0.0
    %1110 = vmatpush1.msra.mxu0 0.0
    %1111 = vmatprep.subr.mxu0 0.0
    %1112 = vmatpush1.msra.mxu0 0.0
    %1113 = vmatprep.subr.mxu0 0.0
    %1114 = vmatpush1.msra.mxu0 0.0
    %1115 = vmatprep.subr.mxu0 0.0
    %1116 = vmatpush1.msra.mxu0 0.0
    %1117 = vmatprep.subr.mxu0 0.0
    %1118 = vmatpush1.msra.mxu0 0.0
    %1119 = vmatprep.subr.mxu0 0.0
    %1120 = vmatpush1.msra.mxu0 0.0
    %1121 = vmatprep.subr.mxu0 0.0
    %1122 = vmatpush1.msra.mxu0 0.0
    %1123 = vmatprep.subr.mxu0 0.0
    %1124 = vmatpush1.msra.mxu0 0.0
    %1125 = vmatprep.subr.mxu0 0.0
    %1126 = vmatpush1.msra.mxu0 0.0
    %1127 = vmatprep.subr.mxu0 0.0
    %1128 = vmatpush1.msra.mxu0 0.0
    %1129 = vmatprep.subr.mxu0 0.0
    %1130 = vmatpush1.msra.mxu0 0.0
    %1131 = vmatprep.subr.mxu0 0.0
    %1132 = vmatpush1.msra.mxu0 0.0
    %1133 = vmatprep.mubr.f32.mxu0 0.0
    %1134 = vmatmul.mubr.f32.gmra.mrb[0].mxu0 %v1058
    %v1135 = vpop.f32.mrb[0].mxu0
    %v1136 = vadd.f32 %v1039, %v1135
    %v1137 = vpop.f32.mrb[0].mxu0
    %1138 = vmatprep.mubr.f32.mxu0 0.0
    %1139 = vmatmul.mubr.f32.gmra.mrb[0].mxu0 %v1061
    %v1140 = vpop.f32.mrb[0].mxu0
    %v1141 = vadd.f32 %v1044, %v1140
    %v1142 = vpop.f32.mrb[0].mxu0
    %1143 = vmatprep.mubr.f32.mxu0 0.0
    %1144 = vmatmul.mubr.f32.gmra.mrb[0].mxu0 %v1064
    %v1145 = vpop.f32.mrb[0].mxu0
    %v1146 = vadd.f32 %v1049, %v1145
    %v1147 = vpop.f32.mrb[0].mxu0
    %1148 = vmatprep.mubr.f32.mxu0 0.0
    %1149 = vmatmul.mubr.f32.gmra.mrb[0].mxu0 %v1067
    %v1150 = vpop.f32.mrb[0].mxu0
    %v1151 = vadd.f32 %v1054, %v1150
    %v1152 = vpop.f32.mrb[0].mxu0
    %1153 = vdwg.mxu0
    %s1154 = scalar_lea.vmem %s5, 688
    %v1155 = vld [vmem:[%s1154] sm:$0xff]
    %v1156 = vld [vmem:[%s1154 + $0x8] sm:$0xff]
    %v1157 = vld [vmem:[%s1154 + $0x10] sm:$0xff]
    %v1158 = vld [vmem:[%s1154 + $0x18] sm:$0xff]
    %v1159 = vld [vmem:[%s1154 + $0x20] sm:$0xff]
    %v1160 = vld [vmem:[%s1154 + $0x28] sm:$0xff]
    %v1161 = vld [vmem:[%s1154 + $0x30] sm:$0xff]
    %v1162 = vld [vmem:[%s1154 + $0x38] sm:$0xff]
    %v1163 = vld [vmem:[%s1154 + $0x40] sm:$0xff]
    %v1164 = vld [vmem:[%s1154 + $0x48] sm:$0xff]
    %v1165 = vld [vmem:[%s1154 + $0x50] sm:$0xff]
    %v1166 = vld [vmem:[%s1154 + $0x58] sm:$0xff]
    %v1167 = vld [vmem:[%s1154 + $0x60] sm:$0xff]
    %v1168 = vld [vmem:[%s1154 + $0x68] sm:$0xff]
    %v1169 = vld [vmem:[%s1154 + $0x70] sm:$0xff]
    %v1170 = vld [vmem:[%s1154 + $0x78] sm:$0xff]
    %v1171 = vld [vmem:[%s1154 + $0x80] sm:$0xff]
    %v1172 = vld [vmem:[%s1154 + $0x88] sm:$0xff]
    %v1173 = vld [vmem:[%s1154 + $0x90] sm:$0xff]
    %v1174 = vld [vmem:[%s1154 + $0x98] sm:$0xff]
    %v1175 = vld [vmem:[%s1154 + $0xa0] sm:$0xff]
    %v1176 = vld [vmem:[%s1154 + $0xa8] sm:$0xff]
    %v1177 = vld [vmem:[%s1154 + $0xb0] sm:$0xff]
    %v1178 = vld [vmem:[%s1154 + $0xb8] sm:$0xff]
    %v1179 = vld [vmem:[%s1154 + $0xc0] sm:$0xff]
    %v1180 = vld [vmem:[%s1154 + $0xc8] sm:$0xff]
    %v1181 = vld [vmem:[%s1154 + $0xd0] sm:$0xff]
    %v1182 = vld [vmem:[%s1154 + $0xd8] sm:$0xff]
    %v1183 = vld [vmem:[%s1154 + $0xe0] sm:$0xff]
    %v1184 = vld [vmem:[%s1154 + $0xe8] sm:$0xff]
    %v1185 = vld [vmem:[%s1154 + $0xf0] sm:$0xff]
    %v1186 = vld [vmem:[%s1154 + $0xf8] sm:$0xff]
    %v1187 = vld [vmem:[%s1154 + $0x100] sm:$0xff]
    %v1188 = vld [vmem:[%s1154 + $0x108] sm:$0xff]
    %v1189 = vld [vmem:[%s1154 + $0x110] sm:$0xff]
    %v1190 = vld [vmem:[%s1154 + $0x118] sm:$0xff]
    %v1191 = vld [vmem:[%s1154 + $0x120] sm:$0xff]
    %v1192 = vld [vmem:[%s1154 + $0x128] sm:$0xff]
    %v1193 = vld [vmem:[%s1154 + $0x130] sm:$0xff]
    %v1194 = vld [vmem:[%s1154 + $0x138] sm:$0xff]
    %v1195 = vld [vmem:[%s1154 + $0x140] sm:$0xff]
    %v1196 = vld [vmem:[%s1154 + $0x148] sm:$0xff]
    %v1197 = vld [vmem:[%s1154 + $0x150] sm:$0xff]
    %1198 = vmatprep.subr.mxu0 0.0
    %1199 = vmatpush1.msra.mxu0 %v1155
    %1200 = vmatprep.subr.mxu0 0.0
    %1201 = vmatpush1.msra.mxu0 %v1156
    %1202 = vmatprep.subr.mxu0 0.0
    %1203 = vmatpush1.msra.mxu0 %v1157
    %1204 = vmatprep.subr.mxu0 0.0
    %1205 = vmatpush1.msra.mxu0 %v1158
    %1206 = vmatprep.subr.mxu0 0.0
    %1207 = vmatpush1.msra.mxu0 %v1159
    %1208 = vmatprep.subr.mxu0 0.0
    %1209 = vmatpush1.msra.mxu0 %v1160
    %1210 = vmatprep.subr.mxu0 0.0
    %1211 = vmatpush1.msra.mxu0 %v1161
    %1212 = vmatprep.subr.mxu0 0.0
    %1213 = vmatpush1.msra.mxu0 %v1162
    %1214 = vmatprep.subr.mxu0 0.0
    %1215 = vmatpush1.msra.mxu0 %v1163
    %1216 = vmatprep.subr.mxu0 0.0
    %1217 = vmatpush1.msra.mxu0 %v1164
    %1218 = vmatprep.subr.mxu0 0.0
    %1219 = vmatpush1.msra.mxu0 %v1165
    %1220 = vmatprep.subr.mxu0 0.0
    %1221 = vmatpush1.msra.mxu0 %v1166
    %1222 = vmatprep.subr.mxu0 0.0
    %1223 = vmatpush1.msra.mxu0 %v1167
    %1224 = vmatprep.subr.mxu0 0.0
    %1225 = vmatpush1.msra.mxu0 %v1168
    %1226 = vmatprep.subr.mxu0 0.0
    %1227 = vmatpush1.msra.mxu0 %v1169
    %1228 = vmatprep.subr.mxu0 0.0
    %1229 = vmatpush1.msra.mxu0 %v1170
    %1230 = vmatprep.subr.mxu0 0.0
    %1231 = vmatpush1.msra.mxu0 %v1171
    %1232 = vmatprep.subr.mxu0 0.0
    %1233 = vmatpush1.msra.mxu0 %v1172
    %1234 = vmatprep.subr.mxu0 0.0
    %1235 = vmatpush1.msra.mxu0 %v1173
    %1236 = vmatprep.subr.mxu0 0.0
    %1237 = vmatpush1.msra.mxu0 %v1174
    %1238 = vmatprep.subr.mxu0 0.0
    %1239 = vmatpush1.msra.mxu0 %v1175
    %1240 = vmatprep.subr.mxu0 0.0
    %1241 = vmatpush1.msra.mxu0 %v1176
    %1242 = vmatprep.subr.mxu0 0.0
    %1243 = vmatpush1.msra.mxu0 %v1177
    %1244 = vmatprep.subr.mxu0 0.0
    %1245 = vmatpush1.msra.mxu0 %v1178
    %1246 = vmatprep.subr.mxu0 0.0
    %1247 = vmatpush1.msra.mxu0 %v1179
    %1248 = vmatprep.subr.mxu0 0.0
    %1249 = vmatpush1.msra.mxu0 %v1180
    %1250 = vmatprep.subr.mxu0 0.0
    %1251 = vmatpush1.msra.mxu0 %v1181
    %1252 = vmatprep.subr.mxu0 0.0
    %1253 = vmatpush1.msra.mxu0 %v1182
    %1254 = vmatprep.subr.mxu0 0.0
    %1255 = vmatpush1.msra.mxu0 %v1183
    %1256 = vmatprep.subr.mxu0 0.0
    %1257 = vmatpush1.msra.mxu0 %v1184
    %1258 = vmatprep.subr.mxu0 0.0
    %1259 = vmatpush1.msra.mxu0 %v1185
    %1260 = vmatprep.subr.mxu0 0.0
    %1261 = vmatpush1.msra.mxu0 %v1186
    %1262 = vmatprep.mubr.f32.mxu0 %v552
    %1263 = vmatmul.mubr.f32.gmra.mrb[0].mxu0 %v551
    %v1264 = vpop.f32.mrb[0].mxu0
    %v1265 = vadd.f32 0.0, %v1264
    %v1266 = vpop.f32.mrb[0].mxu0
    %1267 = vmatprep.mubr.f32.mxu0 %v555
    %1268 = vmatmul.mubr.f32.gmra.mrb[0].mxu0 %v554
    %v1269 = vpop.f32.mrb[0].mxu0
    %v1270 = vadd.f32 0.0, %v1269
    %v1271 = vpop.f32.mrb[0].mxu0
    %1272 = vdwg.mxu0
    %1273 = vmatprep.subr.mxu0 0.0
    %1274 = vmatpush1.msra.mxu0 %v1187
    %1275 = vmatprep.subr.mxu0 0.0
    %1276 = vmatpush1.msra.mxu0 %v1188
    %1277 = vmatprep.subr.mxu0 0.0
    %1278 = vmatpush1.msra.mxu0 %v1189
    %1279 = vmatprep.subr.mxu0 0.0
    %1280 = vmatpush1.msra.mxu0 %v1190
    %1281 = vmatprep.subr.mxu0 0.0
    %1282 = vmatpush1.msra.mxu0 %v1191
    %1283 = vmatprep.subr.mxu0 0.0
    %1284 = vmatpush1.msra.mxu0 %v1192
    %1285 = vmatprep.subr.mxu0 0.0
    %1286 = vmatpush1.msra.mxu0 %v1193
    %1287 = vmatprep.subr.mxu0 0.0
    %1288 = vmatpush1.msra.mxu0 %v1194
    %1289 = vmatprep.subr.mxu0 0.0
    %1290 = vmatpush1.msra.mxu0 %v1195
    %1291 = vmatprep.subr.mxu0 0.0
    %1292 = vmatpush1.msra.mxu0 %v1196
    %1293 = vmatprep.subr.mxu0 0.0
    %1294 = vmatpush1.msra.mxu0 %v1197
    %1295 = vmatprep.subr.mxu0 0.0
    %1296 = vmatpush1.msra.mxu0 0.0
    %1297 = vmatprep.subr.mxu0 0.0
    %1298 = vmatpush1.msra.mxu0 0.0
    %1299 = vmatprep.subr.mxu0 0.0
    %1300 = vmatpush1.msra.mxu0 0.0
    %1301 = vmatprep.subr.mxu0 0.0
    %1302 = vmatpush1.msra.mxu0 0.0
    %1303 = vmatprep.subr.mxu0 0.0
    %1304 = vmatpush1.msra.mxu0 0.0
    %1305 = vmatprep.subr.mxu0 0.0
    %1306 = vmatpush1.msra.mxu0 0.0
    %1307 = vmatprep.subr.mxu0 0.0
    %1308 = vmatpush1.msra.mxu0 0.0
    %1309 = vmatprep.subr.mxu0 0.0
    %1310 = vmatpush1.msra.mxu0 0.0
    %1311 = vmatprep.subr.mxu0 0.0
    %1312 = vmatpush1.msra.mxu0 0.0
    %1313 = vmatprep.subr.mxu0 0.0
    %1314 = vmatpush1.msra.mxu0 0.0
    %1315 = vmatprep.subr.mxu0 0.0
    %1316 = vmatpush1.msra.mxu0 0.0
    %1317 = vmatprep.subr.mxu0 0.0
    %1318 = vmatpush1.msra.mxu0 0.0
    %1319 = vmatprep.subr.mxu0 0.0
    %1320 = vmatpush1.msra.mxu0 0.0
    %1321 = vmatprep.subr.mxu0 0.0
    %1322 = vmatpush1.msra.mxu0 0.0
    %1323 = vmatprep.subr.mxu0 0.0
    %1324 = vmatpush1.msra.mxu0 0.0
    %1325 = vmatprep.subr.mxu0 0.0
    %1326 = vmatpush1.msra.mxu0 0.0
    %1327 = vmatprep.subr.mxu0 0.0
    %1328 = vmatpush1.msra.mxu0 0.0
    %1329 = vmatprep.subr.mxu0 0.0
    %1330 = vmatpush1.msra.mxu0 0.0
    %1331 = vmatprep.subr.mxu0 0.0
    %1332 = vmatpush1.msra.mxu0 0.0
    %1333 = vmatprep.subr.mxu0 0.0
    %1334 = vmatpush1.msra.mxu0 0.0
    %1335 = vmatprep.subr.mxu0 0.0
    %1336 = vmatpush1.msra.mxu0 0.0
    %1337 = vmatprep.mubr.f32.mxu0 0.0
    %1338 = vmatmul.mubr.f32.gmra.mrb[0].mxu0 %v601
    %v1339 = vpop.f32.mrb[0].mxu0
    %v1340 = vadd.f32 %v1265, %v1339
    %v1341 = vpop.f32.mrb[0].mxu0
    %1342 = vmatprep.mubr.f32.mxu0 0.0
    %1343 = vmatmul.mubr.f32.gmra.mrb[0].mxu0 %v604
    %v1344 = vpop.f32.mrb[0].mxu0
    %v1345 = vadd.f32 %v1270, %v1344
    %v1346 = vpop.f32.mrb[0].mxu0
    %1347 = vdwg.mxu0
    %s1348 = scalar_lea.vmem %s4, 64
    %v1349 = vld [vmem:[%s1348] sm:$0xff]
    %v1350 = vld [vmem:[%s1348 + $0x8] sm:$0xff]
    %v1351 = vld [vmem:[%s1348 + $0x10] sm:$0xff]
    %v1352 = vld [vmem:[%s1348 + $0x18] sm:$0xff]
    %v1354 = vsel %vm959, %v1349, 0
    %v1357 = vsel %vm959, %v1350, 0
    %v1360 = vsel %vm959, %v1351, 0
    %v1363 = vsel %vm959, %v1352, 0
    %1365 = vmatprep.subr.mxu0 0.0
    %1366 = vmatpush1.msra.mxu0 %v1340
    %1367 = vmatprep.subr.mxu0 0.0
    %1368 = vmatpush1.msra.mxu0 %v1345
    %1369 = vmatprep.subr.mxu0 0.0
    %1370 = vmatpush1.msra.mxu0 0.0
    %1371 = vmatprep.subr.mxu0 0.0
    %1372 = vmatpush1.msra.mxu0 0.0
    %1373 = vmatprep.subr.mxu0 0.0
    %1374 = vmatpush1.msra.mxu0 0.0
    %1375 = vmatprep.subr.mxu0 0.0
    %1376 = vmatpush1.msra.mxu0 0.0
    %1377 = vmatprep.subr.mxu0 0.0
    %1378 = vmatpush1.msra.mxu0 0.0
    %1379 = vmatprep.subr.mxu0 0.0
    %1380 = vmatpush1.msra.mxu0 0.0
    %1381 = vmatprep.subr.mxu0 0.0
    %1382 = vmatpush1.msra.mxu0 0.0
    %1383 = vmatprep.subr.mxu0 0.0
    %1384 = vmatpush1.msra.mxu0 0.0
    %1385 = vmatprep.subr.mxu0 0.0
    %1386 = vmatpush1.msra.mxu0 0.0
    %1387 = vmatprep.subr.mxu0 0.0
    %1388 = vmatpush1.msra.mxu0 0.0
    %1389 = vmatprep.subr.mxu0 0.0
    %1390 = vmatpush1.msra.mxu0 0.0
    %1391 = vmatprep.subr.mxu0 0.0
    %1392 = vmatpush1.msra.mxu0 0.0
    %1393 = vmatprep.subr.mxu0 0.0
    %1394 = vmatpush1.msra.mxu0 0.0
    %1395 = vmatprep.subr.mxu0 0.0
    %1396 = vmatpush1.msra.mxu0 0.0
    %1397 = vmatprep.subr.mxu0 0.0
    %1398 = vmatpush1.msra.mxu0 0.0
    %1399 = vmatprep.subr.mxu0 0.0
    %1400 = vmatpush1.msra.mxu0 0.0
    %1401 = vmatprep.subr.mxu0 0.0
    %1402 = vmatpush1.msra.mxu0 0.0
    %1403 = vmatprep.subr.mxu0 0.0
    %1404 = vmatpush1.msra.mxu0 0.0
    %1405 = vmatprep.subr.mxu0 0.0
    %1406 = vmatpush1.msra.mxu0 0.0
    %1407 = vmatprep.subr.mxu0 0.0
    %1408 = vmatpush1.msra.mxu0 0.0
    %1409 = vmatprep.subr.mxu0 0.0
    %1410 = vmatpush1.msra.mxu0 0.0
    %1411 = vmatprep.subr.mxu0 0.0
    %1412 = vmatpush1.msra.mxu0 0.0
    %1413 = vmatprep.subr.mxu0 0.0
    %1414 = vmatpush1.msra.mxu0 0.0
    %1415 = vmatprep.subr.mxu0 0.0
    %1416 = vmatpush1.msra.mxu0 0.0
    %1417 = vmatprep.subr.mxu0 0.0
    %1418 = vmatpush1.msra.mxu0 0.0
    %1419 = vmatprep.subr.mxu0 0.0
    %1420 = vmatpush1.msra.mxu0 0.0
    %1421 = vmatprep.subr.mxu0 0.0
    %1422 = vmatpush1.msra.mxu0 0.0
    %1423 = vmatprep.subr.mxu0 0.0
    %1424 = vmatpush1.msra.mxu0 0.0
    %1425 = vmatprep.subr.mxu0 0.0
    %1426 = vmatpush1.msra.mxu0 0.0
    %1427 = vmatprep.subr.mxu0 0.0
    %1428 = vmatpush1.msra.mxu0 0.0
    %1429 = vmatprep.mubr.f32.mxu0 0.0
    %1430 = vmatmul.mubr.f32.gmra.mrb[0].mxu0 %v1354
    %v1431 = vpop.f32.mrb[0].mxu0
    %v1432 = vadd.f32 0.0, %v1431
    %v1433 = vpop.f32.mrb[0].mxu0
    %1434 = vmatprep.mubr.f32.mxu0 0.0
    %1435 = vmatmul.mubr.f32.gmra.mrb[0].mxu0 %v1357
    %v1436 = vpop.f32.mrb[0].mxu0
    %v1437 = vadd.f32 0.0, %v1436
    %v1438 = vpop.f32.mrb[0].mxu0
    %1439 = vmatprep.mubr.f32.mxu0 0.0
    %1440 = vmatmul.mubr.f32.gmra.mrb[0].mxu0 %v1360
    %v1441 = vpop.f32.mrb[0].mxu0
    %v1442 = vadd.f32 0.0, %v1441
    %v1443 = vpop.f32.mrb[0].mxu0
    %1444 = vmatprep.mubr.f32.mxu0 0.0
    %1445 = vmatmul.mubr.f32.gmra.mrb[0].mxu0 %v1363
    %v1446 = vpop.f32.mrb[0].mxu0
    %v1447 = vadd.f32 0.0, %v1446
    %v1448 = vpop.f32.mrb[0].mxu0
    %1449 = vdwg.mxu0
    %v1450 = vadd.f32 %v1136, %v1432
    %v1451 = vadd.f32 %v1141, %v1437
    %v1452 = vadd.f32 %v1146, %v1442
    %v1453 = vadd.f32 %v1151, %v1447
    %s1454 = scalar_lea.vmem %s5, 1032
    %v1455 = vld [vmem:[%s1454] sm:$0xff]
    %v1456 = vld [vmem:[%s1454 + $0x8] sm:$0xff]
    %v1457 = vld [vmem:[%s1454 + $0x10] sm:$0xff]
    %v1458 = vld [vmem:[%s1454 + $0x18] sm:$0xff]
    %v1459 = vld [vmem:[%s1454 + $0x20] sm:$0xff]
    %v1460 = vld [vmem:[%s1454 + $0x28] sm:$0xff]
    %v1461 = vld [vmem:[%s1454 + $0x30] sm:$0xff]
    %v1462 = vld [vmem:[%s1454 + $0x38] sm:$0xff]
    %v1463 = vld [vmem:[%s1454 + $0x40] sm:$0xff]
    %v1464 = vld [vmem:[%s1454 + $0x48] sm:$0xff]
    %v1465 = vld [vmem:[%s1454 + $0x50] sm:$0xff]
    %v1466 = vld [vmem:[%s1454 + $0x58] sm:$0xff]
    %v1467 = vld [vmem:[%s1454 + $0x60] sm:$0xff]
    %v1468 = vld [vmem:[%s1454 + $0x68] sm:$0xff]
    %v1469 = vld [vmem:[%s1454 + $0x70] sm:$0xff]
    %v1470 = vld [vmem:[%s1454 + $0x78] sm:$0xff]
    %v1471 = vld [vmem:[%s1454 + $0x80] sm:$0xff]
    %v1472 = vld [vmem:[%s1454 + $0x88] sm:$0xff]
    %v1473 = vld [vmem:[%s1454 + $0x90] sm:$0xff]
    %v1474 = vld [vmem:[%s1454 + $0x98] sm:$0xff]
    %v1475 = vld [vmem:[%s1454 + $0xa0] sm:$0xff]
    %v1476 = vld [vmem:[%s1454 + $0xa8] sm:$0xff]
    %v1477 = vld [vmem:[%s1454 + $0xb0] sm:$0xff]
    %v1478 = vld [vmem:[%s1454 + $0xb8] sm:$0xff]
    %v1479 = vld [vmem:[%s1454 + $0xc0] sm:$0xff]
    %v1480 = vld [vmem:[%s1454 + $0xc8] sm:$0xff]
    %v1481 = vld [vmem:[%s1454 + $0xd0] sm:$0xff]
    %v1482 = vld [vmem:[%s1454 + $0xd8] sm:$0xff]
    %v1483 = vld [vmem:[%s1454 + $0xe0] sm:$0xff]
    %v1484 = vld [vmem:[%s1454 + $0xe8] sm:$0xff]
    %v1485 = vld [vmem:[%s1454 + $0xf0] sm:$0xff]
    %v1486 = vld [vmem:[%s1454 + $0xf8] sm:$0xff]
    %v1487 = vld [vmem:[%s1454 + $0x100] sm:$0xff]
    %v1488 = vld [vmem:[%s1454 + $0x108] sm:$0xff]
    %v1489 = vld [vmem:[%s1454 + $0x110] sm:$0xff]
    %v1490 = vld [vmem:[%s1454 + $0x118] sm:$0xff]
    %v1491 = vld [vmem:[%s1454 + $0x120] sm:$0xff]
    %v1492 = vld [vmem:[%s1454 + $0x128] sm:$0xff]
    %v1493 = vld [vmem:[%s1454 + $0x130] sm:$0xff]
    %v1494 = vld [vmem:[%s1454 + $0x138] sm:$0xff]
    %v1495 = vld [vmem:[%s1454 + $0x140] sm:$0xff]
    %v1496 = vld [vmem:[%s1454 + $0x148] sm:$0xff]
    %v1497 = vld [vmem:[%s1454 + $0x150] sm:$0xff]
    %1498 = vmatprep.subr.mxu0 0.0
    %1499 = vmatpush1.msra.mxu0 %v1455
    %1500 = vmatprep.subr.mxu0 0.0
    %1501 = vmatpush1.msra.mxu0 %v1456
    %1502 = vmatprep.subr.mxu0 0.0
    %1503 = vmatpush1.msra.mxu0 %v1457
    %1504 = vmatprep.subr.mxu0 0.0
    %1505 = vmatpush1.msra.mxu0 %v1458
    %1506 = vmatprep.subr.mxu0 0.0
    %1507 = vmatpush1.msra.mxu0 %v1459
    %1508 = vmatprep.subr.mxu0 0.0
    %1509 = vmatpush1.msra.mxu0 %v1460
    %1510 = vmatprep.subr.mxu0 0.0
    %1511 = vmatpush1.msra.mxu0 %v1461
    %1512 = vmatprep.subr.mxu0 0.0
    %1513 = vmatpush1.msra.mxu0 %v1462
    %1514 = vmatprep.subr.mxu0 0.0
    %1515 = vmatpush1.msra.mxu0 %v1463
    %1516 = vmatprep.subr.mxu0 0.0
    %1517 = vmatpush1.msra.mxu0 %v1464
    %1518 = vmatprep.subr.mxu0 0.0
    %1519 = vmatpush1.msra.mxu0 %v1465
    %1520 = vmatprep.subr.mxu0 0.0
    %1521 = vmatpush1.msra.mxu0 %v1466
    %1522 = vmatprep.subr.mxu0 0.0
    %1523 = vmatpush1.msra.mxu0 %v1467
    %1524 = vmatprep.subr.mxu0 0.0
    %1525 = vmatpush1.msra.mxu0 %v1468
    %1526 = vmatprep.subr.mxu0 0.0
    %1527 = vmatpush1.msra.mxu0 %v1469
    %1528 = vmatprep.subr.mxu0 0.0
    %1529 = vmatpush1.msra.mxu0 %v1470
    %1530 = vmatprep.subr.mxu0 0.0
    %1531 = vmatpush1.msra.mxu0 %v1471
    %1532 = vmatprep.subr.mxu0 0.0
    %1533 = vmatpush1.msra.mxu0 %v1472
    %1534 = vmatprep.subr.mxu0 0.0
    %1535 = vmatpush1.msra.mxu0 %v1473
    %1536 = vmatprep.subr.mxu0 0.0
    %1537 = vmatpush1.msra.mxu0 %v1474
    %1538 = vmatprep.subr.mxu0 0.0
    %1539 = vmatpush1.msra.mxu0 %v1475
    %1540 = vmatprep.subr.mxu0 0.0
    %1541 = vmatpush1.msra.mxu0 %v1476
    %1542 = vmatprep.subr.mxu0 0.0
    %1543 = vmatpush1.msra.mxu0 %v1477
    %1544 = vmatprep.subr.mxu0 0.0
    %1545 = vmatpush1.msra.mxu0 %v1478
    %1546 = vmatprep.subr.mxu0 0.0
    %1547 = vmatpush1.msra.mxu0 %v1479
    %1548 = vmatprep.subr.mxu0 0.0
    %1549 = vmatpush1.msra.mxu0 %v1480
    %1550 = vmatprep.subr.mxu0 0.0
    %1551 = vmatpush1.msra.mxu0 %v1481
    %1552 = vmatprep.subr.mxu0 0.0
    %1553 = vmatpush1.msra.mxu0 %v1482
    %1554 = vmatprep.subr.mxu0 0.0
    %1555 = vmatpush1.msra.mxu0 %v1483
    %1556 = vmatprep.subr.mxu0 0.0
    %1557 = vmatpush1.msra.mxu0 %v1484
    %1558 = vmatprep.subr.mxu0 0.0
    %1559 = vmatpush1.msra.mxu0 %v1485
    %1560 = vmatprep.subr.mxu0 0.0
    %1561 = vmatpush1.msra.mxu0 %v1486
    %1562 = vmatprep.mubr.f32.mxu0 %v552
    %1563 = vmatmul.mubr.f32.gmra.mrb[0].mxu0 %v551
    %v1564 = vpop.f32.mrb[0].mxu0
    %v1565 = vadd.f32 0.0, %v1564
    %v1566 = vpop.f32.mrb[0].mxu0
    %1567 = vmatprep.mubr.f32.mxu0 %v555
    %1568 = vmatmul.mubr.f32.gmra.mrb[0].mxu0 %v554
    %v1569 = vpop.f32.mrb[0].mxu0
    %v1570 = vadd.f32 0.0, %v1569
    %v1571 = vpop.f32.mrb[0].mxu0
    %1572 = vdwg.mxu0
    %1573 = vmatprep.subr.mxu0 0.0
    %1574 = vmatpush1.msra.mxu0 %v1487
    %1575 = vmatprep.subr.mxu0 0.0
    %1576 = vmatpush1.msra.mxu0 %v1488
    %1577 = vmatprep.subr.mxu0 0.0
    %1578 = vmatpush1.msra.mxu0 %v1489
    %1579 = vmatprep.subr.mxu0 0.0
    %1580 = vmatpush1.msra.mxu0 %v1490
    %1581 = vmatprep.subr.mxu0 0.0
    %1582 = vmatpush1.msra.mxu0 %v1491
    %1583 = vmatprep.subr.mxu0 0.0
    %1584 = vmatpush1.msra.mxu0 %v1492
    %1585 = vmatprep.subr.mxu0 0.0
    %1586 = vmatpush1.msra.mxu0 %v1493
    %1587 = vmatprep.subr.mxu0 0.0
    %1588 = vmatpush1.msra.mxu0 %v1494
    %1589 = vmatprep.subr.mxu0 0.0
    %1590 = vmatpush1.msra.mxu0 %v1495
    %1591 = vmatprep.subr.mxu0 0.0
    %1592 = vmatpush1.msra.mxu0 %v1496
    %1593 = vmatprep.subr.mxu0 0.0
    %1594 = vmatpush1.msra.mxu0 %v1497
    %1595 = vmatprep.subr.mxu0 0.0
    %1596 = vmatpush1.msra.mxu0 0.0
    %1597 = vmatprep.subr.mxu0 0.0
    %1598 = vmatpush1.msra.mxu0 0.0
    %1599 = vmatprep.subr.mxu0 0.0
    %1600 = vmatpush1.msra.mxu0 0.0
    %1601 = vmatprep.subr.mxu0 0.0
    %1602 = vmatpush1.msra.mxu0 0.0
    %1603 = vmatprep.subr.mxu0 0.0
    %1604 = vmatpush1.msra.mxu0 0.0
    %1605 = vmatprep.subr.mxu0 0.0
    %1606 = vmatpush1.msra.mxu0 0.0
    %1607 = vmatprep.subr.mxu0 0.0
    %1608 = vmatpush1.msra.mxu0 0.0
    %1609 = vmatprep.subr.mxu0 0.0
    %1610 = vmatpush1.msra.mxu0 0.0
    %1611 = vmatprep.subr.mxu0 0.0
    %1612 = vmatpush1.msra.mxu0 0.0
    %1613 = vmatprep.subr.mxu0 0.0
    %1614 = vmatpush1.msra.mxu0 0.0
    %1615 = vmatprep.subr.mxu0 0.0
    %1616 = vmatpush1.msra.mxu0 0.0
    %1617 = vmatprep.subr.mxu0 0.0
    %1618 = vmatpush1.msra.mxu0 0.0
    %1619 = vmatprep.subr.mxu0 0.0
    %1620 = vmatpush1.msra.mxu0 0.0
    %1621 = vmatprep.subr.mxu0 0.0
    %1622 = vmatpush1.msra.mxu0 0.0
    %1623 = vmatprep.subr.mxu0 0.0
    %1624 = vmatpush1.msra.mxu0 0.0
    %1625 = vmatprep.subr.mxu0 0.0
    %1626 = vmatpush1.msra.mxu0 0.0
    %1627 = vmatprep.subr.mxu0 0.0
    %1628 = vmatpush1.msra.mxu0 0.0
    %1629 = vmatprep.subr.mxu0 0.0
    %1630 = vmatpush1.msra.mxu0 0.0
    %1631 = vmatprep.subr.mxu0 0.0
    %1632 = vmatpush1.msra.mxu0 0.0
    %1633 = vmatprep.subr.mxu0 0.0
    %1634 = vmatpush1.msra.mxu0 0.0
    %1635 = vmatprep.subr.mxu0 0.0
    %1636 = vmatpush1.msra.mxu0 0.0
    %1637 = vmatprep.mubr.f32.mxu0 0.0
    %1638 = vmatmul.mubr.f32.gmra.mrb[0].mxu0 %v601
    %v1639 = vpop.f32.mrb[0].mxu0
    %v1640 = vadd.f32 %v1565, %v1639
    %v1641 = vpop.f32.mrb[0].mxu0
    %1642 = vmatprep.mubr.f32.mxu0 0.0
    %1643 = vmatmul.mubr.f32.gmra.mrb[0].mxu0 %v604
    %v1644 = vpop.f32.mrb[0].mxu0
    %v1645 = vadd.f32 %v1570, %v1644
    %v1646 = vpop.f32.mrb[0].mxu0
    %1647 = vdwg.mxu0
    %s1648 = scalar_lea.vmem %s4, 96
    %v1649 = vld [vmem:[%s1648] sm:$0xff]
    %v1650 = vld [vmem:[%s1648 + $0x8] sm:$0xff]
    %v1651 = vld [vmem:[%s1648 + $0x10] sm:$0xff]
    %v1652 = vld [vmem:[%s1648 + $0x18] sm:$0xff]
    %v1654 = vsel %vm959, %v1649, 0
    %v1657 = vsel %vm959, %v1650, 0
    %v1660 = vsel %vm959, %v1651, 0
    %v1663 = vsel %vm959, %v1652, 0
    %1665 = vmatprep.subr.mxu0 0.0
    %1666 = vmatpush1.msra.mxu0 %v1640
    %1667 = vmatprep.subr.mxu0 0.0
    %1668 = vmatpush1.msra.mxu0 %v1645
    %1669 = vmatprep.subr.mxu0 0.0
    %1670 = vmatpush1.msra.mxu0 0.0
    %1671 = vmatprep.subr.mxu0 0.0
    %1672 = vmatpush1.msra.mxu0 0.0
    %1673 = vmatprep.subr.mxu0 0.0
    %1674 = vmatpush1.msra.mxu0 0.0
    %1675 = vmatprep.subr.mxu0 0.0
    %1676 = vmatpush1.msra.mxu0 0.0
    %1677 = vmatprep.subr.mxu0 0.0
    %1678 = vmatpush1.msra.mxu0 0.0
    %1679 = vmatprep.subr.mxu0 0.0
    %1680 = vmatpush1.msra.mxu0 0.0
    %1681 = vmatprep.subr.mxu0 0.0
    %1682 = vmatpush1.msra.mxu0 0.0
    %1683 = vmatprep.subr.mxu0 0.0
    %1684 = vmatpush1.msra.mxu0 0.0
    %1685 = vmatprep.subr.mxu0 0.0
    %1686 = vmatpush1.msra.mxu0 0.0
    %1687 = vmatprep.subr.mxu0 0.0
    %1688 = vmatpush1.msra.mxu0 0.0
    %1689 = vmatprep.subr.mxu0 0.0
    %1690 = vmatpush1.msra.mxu0 0.0
    %1691 = vmatprep.subr.mxu0 0.0
    %1692 = vmatpush1.msra.mxu0 0.0
    %1693 = vmatprep.subr.mxu0 0.0
    %1694 = vmatpush1.msra.mxu0 0.0
    %1695 = vmatprep.subr.mxu0 0.0
    %1696 = vmatpush1.msra.mxu0 0.0
    %1697 = vmatprep.subr.mxu0 0.0
    %1698 = vmatpush1.msra.mxu0 0.0
    %1699 = vmatprep.subr.mxu0 0.0
    %1700 = vmatpush1.msra.mxu0 0.0
    %1701 = vmatprep.subr.mxu0 0.0
    %1702 = vmatpush1.msra.mxu0 0.0
    %1703 = vmatprep.subr.mxu0 0.0
    %1704 = vmatpush1.msra.mxu0 0.0
    %1705 = vmatprep.subr.mxu0 0.0
    %1706 = vmatpush1.msra.mxu0 0.0
    %1707 = vmatprep.subr.mxu0 0.0
    %1708 = vmatpush1.msra.mxu0 0.0
    %1709 = vmatprep.subr.mxu0 0.0
    %1710 = vmatpush1.msra.mxu0 0.0
    %1711 = vmatprep.subr.mxu0 0.0
    %1712 = vmatpush1.msra.mxu0 0.0
    %1713 = vmatprep.subr.mxu0 0.0
    %1714 = vmatpush1.msra.mxu0 0.0
    %1715 = vmatprep.subr.mxu0 0.0
    %1716 = vmatpush1.msra.mxu0 0.0
    %1717 = vmatprep.subr.mxu0 0.0
    %1718 = vmatpush1.msra.mxu0 0.0
    %1719 = vmatprep.subr.mxu0 0.0
    %1720 = vmatpush1.msra.mxu0 0.0
    %1721 = vmatprep.subr.mxu0 0.0
    %1722 = vmatpush1.msra.mxu0 0.0
    %1723 = vmatprep.subr.mxu0 0.0
    %1724 = vmatpush1.msra.mxu0 0.0
    %1725 = vmatprep.subr.mxu0 0.0
    %1726 = vmatpush1.msra.mxu0 0.0
    %1727 = vmatprep.subr.mxu0 0.0
    %1728 = vmatpush1.msra.mxu0 0.0
    %1729 = vmatprep.mubr.f32.mxu0 0.0
    %1730 = vmatmul.mubr.f32.gmra.mrb[0].mxu0 %v1654
    %v1731 = vpop.f32.mrb[0].mxu0
    %v1732 = vadd.f32 0.0, %v1731
    %v1733 = vpop.f32.mrb[0].mxu0
    %1734 = vmatprep.mubr.f32.mxu0 0.0
    %1735 = vmatmul.mubr.f32.gmra.mrb[0].mxu0 %v1657
    %v1736 = vpop.f32.mrb[0].mxu0
    %v1737 = vadd.f32 0.0, %v1736
    %v1738 = vpop.f32.mrb[0].mxu0
    %1739 = vmatprep.mubr.f32.mxu0 0.0
    %1740 = vmatmul.mubr.f32.gmra.mrb[0].mxu0 %v1660
    %v1741 = vpop.f32.mrb[0].mxu0
    %v1742 = vadd.f32 0.0, %v1741
    %v1743 = vpop.f32.mrb[0].mxu0
    %1744 = vmatprep.mubr.f32.mxu0 0.0
    %1745 = vmatmul.mubr.f32.gmra.mrb[0].mxu0 %v1663
    %v1746 = vpop.f32.mrb[0].mxu0
    %v1747 = vadd.f32 0.0, %v1746
    %v1748 = vpop.f32.mrb[0].mxu0
    %1749 = vdwg.mxu0
    %v1750 = vadd.f32 %v1450, %v1732
    %v1751 = vadd.f32 %v1451, %v1737
    %v1752 = vadd.f32 %v1452, %v1742
    %v1753 = vadd.f32 %v1453, %v1747
    %s1754 = scalar_lea.vmem %s5, 1376
    %v1755 = vld [vmem:[%s1754] sm:$0xff]
    %v1756 = vld [vmem:[%s1754 + $0x8] sm:$0xff]
    %v1757 = vld [vmem:[%s1754 + $0x10] sm:$0xff]
    %v1758 = vld [vmem:[%s1754 + $0x18] sm:$0xff]
    %v1759 = vld [vmem:[%s1754 + $0x20] sm:$0xff]
    %v1760 = vld [vmem:[%s1754 + $0x28] sm:$0xff]
    %v1761 = vld [vmem:[%s1754 + $0x30] sm:$0xff]
    %v1762 = vld [vmem:[%s1754 + $0x38] sm:$0xff]
    %v1763 = vld [vmem:[%s1754 + $0x40] sm:$0xff]
    %v1764 = vld [vmem:[%s1754 + $0x48] sm:$0xff]
    %v1765 = vld [vmem:[%s1754 + $0x50] sm:$0xff]
    %v1766 = vld [vmem:[%s1754 + $0x58] sm:$0xff]
    %v1767 = vld [vmem:[%s1754 + $0x60] sm:$0xff]
    %v1768 = vld [vmem:[%s1754 + $0x68] sm:$0xff]
    %v1769 = vld [vmem:[%s1754 + $0x70] sm:$0xff]
    %v1770 = vld [vmem:[%s1754 + $0x78] sm:$0xff]
    %v1771 = vld [vmem:[%s1754 + $0x80] sm:$0xff]
    %v1772 = vld [vmem:[%s1754 + $0x88] sm:$0xff]
    %v1773 = vld [vmem:[%s1754 + $0x90] sm:$0xff]
    %v1774 = vld [vmem:[%s1754 + $0x98] sm:$0xff]
    %v1775 = vld [vmem:[%s1754 + $0xa0] sm:$0xff]
    %v1776 = vld [vmem:[%s1754 + $0xa8] sm:$0xff]
    %v1777 = vld [vmem:[%s1754 + $0xb0] sm:$0xff]
    %v1778 = vld [vmem:[%s1754 + $0xb8] sm:$0xff]
    %v1779 = vld [vmem:[%s1754 + $0xc0] sm:$0xff]
    %v1780 = vld [vmem:[%s1754 + $0xc8] sm:$0xff]
    %v1781 = vld [vmem:[%s1754 + $0xd0] sm:$0xff]
    %v1782 = vld [vmem:[%s1754 + $0xd8] sm:$0xff]
    %v1783 = vld [vmem:[%s1754 + $0xe0] sm:$0xff]
    %v1784 = vld [vmem:[%s1754 + $0xe8] sm:$0xff]
    %v1785 = vld [vmem:[%s1754 + $0xf0] sm:$0xff]
    %v1786 = vld [vmem:[%s1754 + $0xf8] sm:$0xff]
    %v1787 = vld [vmem:[%s1754 + $0x100] sm:$0xff]
    %v1788 = vld [vmem:[%s1754 + $0x108] sm:$0xff]
    %v1789 = vld [vmem:[%s1754 + $0x110] sm:$0xff]
    %v1790 = vld [vmem:[%s1754 + $0x118] sm:$0xff]
    %v1791 = vld [vmem:[%s1754 + $0x120] sm:$0xff]
    %v1792 = vld [vmem:[%s1754 + $0x128] sm:$0xff]
    %v1793 = vld [vmem:[%s1754 + $0x130] sm:$0xff]
    %v1794 = vld [vmem:[%s1754 + $0x138] sm:$0xff]
    %v1795 = vld [vmem:[%s1754 + $0x140] sm:$0xff]
    %v1796 = vld [vmem:[%s1754 + $0x148] sm:$0xff]
    %v1797 = vld [vmem:[%s1754 + $0x150] sm:$0xff]
    %1798 = vmatprep.subr.mxu0 0.0
    %1799 = vmatpush1.msra.mxu0 %v1755
    %1800 = vmatprep.subr.mxu0 0.0
    %1801 = vmatpush1.msra.mxu0 %v1756
    %1802 = vmatprep.subr.mxu0 0.0
    %1803 = vmatpush1.msra.mxu0 %v1757
    %1804 = vmatprep.subr.mxu0 0.0
    %1805 = vmatpush1.msra.mxu0 %v1758
    %1806 = vmatprep.subr.mxu0 0.0
    %1807 = vmatpush1.msra.mxu0 %v1759
    %1808 = vmatprep.subr.mxu0 0.0
    %1809 = vmatpush1.msra.mxu0 %v1760
    %1810 = vmatprep.subr.mxu0 0.0
    %1811 = vmatpush1.msra.mxu0 %v1761
    %1812 = vmatprep.subr.mxu0 0.0
    %1813 = vmatpush1.msra.mxu0 %v1762
    %1814 = vmatprep.subr.mxu0 0.0
    %1815 = vmatpush1.msra.mxu0 %v1763
    %1816 = vmatprep.subr.mxu0 0.0
    %1817 = vmatpush1.msra.mxu0 %v1764
    %1818 = vmatprep.subr.mxu0 0.0
    %1819 = vmatpush1.msra.mxu0 %v1765
    %1820 = vmatprep.subr.mxu0 0.0
    %1821 = vmatpush1.msra.mxu0 %v1766
    %1822 = vmatprep.subr.mxu0 0.0
    %1823 = vmatpush1.msra.mxu0 %v1767
    %1824 = vmatprep.subr.mxu0 0.0
    %1825 = vmatpush1.msra.mxu0 %v1768
    %1826 = vmatprep.subr.mxu0 0.0
    %1827 = vmatpush1.msra.mxu0 %v1769
    %1828 = vmatprep.subr.mxu0 0.0
    %1829 = vmatpush1.msra.mxu0 %v1770
    %1830 = vmatprep.subr.mxu0 0.0
    %1831 = vmatpush1.msra.mxu0 %v1771
    %1832 = vmatprep.subr.mxu0 0.0
    %1833 = vmatpush1.msra.mxu0 %v1772
    %1834 = vmatprep.subr.mxu0 0.0
    %1835 = vmatpush1.msra.mxu0 %v1773
    %1836 = vmatprep.subr.mxu0 0.0
    %1837 = vmatpush1.msra.mxu0 %v1774
    %1838 = vmatprep.subr.mxu0 0.0
    %1839 = vmatpush1.msra.mxu0 %v1775
    %1840 = vmatprep.subr.mxu0 0.0
    %1841 = vmatpush1.msra.mxu0 %v1776
    %1842 = vmatprep.subr.mxu0 0.0
    %1843 = vmatpush1.msra.mxu0 %v1777
    %1844 = vmatprep.subr.mxu0 0.0
    %1845 = vmatpush1.msra.mxu0 %v1778
    %1846 = vmatprep.subr.mxu0 0.0
    %1847 = vmatpush1.msra.mxu0 %v1779
    %1848 = vmatprep.subr.mxu0 0.0
    %1849 = vmatpush1.msra.mxu0 %v1780
    %1850 = vmatprep.subr.mxu0 0.0
    %1851 = vmatpush1.msra.mxu0 %v1781
    %1852 = vmatprep.subr.mxu0 0.0
    %1853 = vmatpush1.msra.mxu0 %v1782
    %1854 = vmatprep.subr.mxu0 0.0
    %1855 = vmatpush1.msra.mxu0 %v1783
    %1856 = vmatprep.subr.mxu0 0.0
    %1857 = vmatpush1.msra.mxu0 %v1784
    %1858 = vmatprep.subr.mxu0 0.0
    %1859 = vmatpush1.msra.mxu0 %v1785
    %1860 = vmatprep.subr.mxu0 0.0
    %1861 = vmatpush1.msra.mxu0 %v1786
    %1862 = vmatprep.mubr.f32.mxu0 %v552
    %1863 = vmatmul.mubr.f32.gmra.mrb[0].mxu0 %v551
    %v1864 = vpop.f32.mrb[0].mxu0
    %v1865 = vadd.f32 0.0, %v1864
    %v1866 = vpop.f32.mrb[0].mxu0
    %1867 = vmatprep.mubr.f32.mxu0 %v555
    %1868 = vmatmul.mubr.f32.gmra.mrb[0].mxu0 %v554
    %v1869 = vpop.f32.mrb[0].mxu0
    %v1870 = vadd.f32 0.0, %v1869
    %v1871 = vpop.f32.mrb[0].mxu0
    %1872 = vdwg.mxu0
    %1873 = vmatprep.subr.mxu0 0.0
    %1874 = vmatpush1.msra.mxu0 %v1787
    %1875 = vmatprep.subr.mxu0 0.0
    %1876 = vmatpush1.msra.mxu0 %v1788
    %1877 = vmatprep.subr.mxu0 0.0
    %1878 = vmatpush1.msra.mxu0 %v1789
    %1879 = vmatprep.subr.mxu0 0.0
    %1880 = vmatpush1.msra.mxu0 %v1790
    %1881 = vmatprep.subr.mxu0 0.0
    %1882 = vmatpush1.msra.mxu0 %v1791
    %1883 = vmatprep.subr.mxu0 0.0
    %1884 = vmatpush1.msra.mxu0 %v1792
    %1885 = vmatprep.subr.mxu0 0.0
    %1886 = vmatpush1.msra.mxu0 %v1793
    %1887 = vmatprep.subr.mxu0 0.0
    %1888 = vmatpush1.msra.mxu0 %v1794
    %1889 = vmatprep.subr.mxu0 0.0
    %1890 = vmatpush1.msra.mxu0 %v1795
    %1891 = vmatprep.subr.mxu0 0.0
    %1892 = vmatpush1.msra.mxu0 %v1796
    %1893 = vmatprep.subr.mxu0 0.0
    %1894 = vmatpush1.msra.mxu0 %v1797
    %1895 = vmatprep.subr.mxu0 0.0
    %1896 = vmatpush1.msra.mxu0 0.0
    %1897 = vmatprep.subr.mxu0 0.0
    %1898 = vmatpush1.msra.mxu0 0.0
    %1899 = vmatprep.subr.mxu0 0.0
    %1900 = vmatpush1.msra.mxu0 0.0
    %1901 = vmatprep.subr.mxu0 0.0
    %1902 = vmatpush1.msra.mxu0 0.0
    %1903 = vmatprep.subr.mxu0 0.0
    %1904 = vmatpush1.msra.mxu0 0.0
    %1905 = vmatprep.subr.mxu0 0.0
    %1906 = vmatpush1.msra.mxu0 0.0
    %1907 = vmatprep.subr.mxu0 0.0
    %1908 = vmatpush1.msra.mxu0 0.0
    %1909 = vmatprep.subr.mxu0 0.0
    %1910 = vmatpush1.msra.mxu0 0.0
    %1911 = vmatprep.subr.mxu0 0.0
    %1912 = vmatpush1.msra.mxu0 0.0
    %1913 = vmatprep.subr.mxu0 0.0
    %1914 = vmatpush1.msra.mxu0 0.0
    %1915 = vmatprep.subr.mxu0 0.0
    %1916 = vmatpush1.msra.mxu0 0.0
    %1917 = vmatprep.subr.mxu0 0.0
    %1918 = vmatpush1.msra.mxu0 0.0
    %1919 = vmatprep.subr.mxu0 0.0
    %1920 = vmatpush1.msra.mxu0 0.0
    %1921 = vmatprep.subr.mxu0 0.0
    %1922 = vmatpush1.msra.mxu0 0.0
    %1923 = vmatprep.subr.mxu0 0.0
    %1924 = vmatpush1.msra.mxu0 0.0
    %1925 = vmatprep.subr.mxu0 0.0
    %1926 = vmatpush1.msra.mxu0 0.0
    %1927 = vmatprep.subr.mxu0 0.0
    %1928 = vmatpush1.msra.mxu0 0.0
    %1929 = vmatprep.subr.mxu0 0.0
    %1930 = vmatpush1.msra.mxu0 0.0
    %1931 = vmatprep.subr.mxu0 0.0
    %1932 = vmatpush1.msra.mxu0 0.0
    %1933 = vmatprep.subr.mxu0 0.0
    %1934 = vmatpush1.msra.mxu0 0.0
    %1935 = vmatprep.subr.mxu0 0.0
    %1936 = vmatpush1.msra.mxu0 0.0
    %1937 = vmatprep.mubr.f32.mxu0 0.0
    %1938 = vmatmul.mubr.f32.gmra.mrb[0].mxu0 %v601
    %v1939 = vpop.f32.mrb[0].mxu0
    %v1940 = vadd.f32 %v1865, %v1939
    %v1941 = vpop.f32.mrb[0].mxu0
    %1942 = vmatprep.mubr.f32.mxu0 0.0
    %1943 = vmatmul.mubr.f32.gmra.mrb[0].mxu0 %v604
    %v1944 = vpop.f32.mrb[0].mxu0
    %v1945 = vadd.f32 %v1870, %v1944
    %v1946 = vpop.f32.mrb[0].mxu0
    %1947 = vdwg.mxu0
    %s1948 = scalar_lea.vmem %s4, 128
    %v1949 = vld [vmem:[%s1948] sm:$0xff]
    %v1950 = vld [vmem:[%s1948 + $0x8] sm:$0xff]
    %v1951 = vld [vmem:[%s1948 + $0x10] sm:$0xff]
    %v1952 = vld [vmem:[%s1948 + $0x18] sm:$0xff]
    %v1954 = vsel %vm959, %v1949, 0
    %v1957 = vsel %vm959, %v1950, 0
    %v1960 = vsel %vm959, %v1951, 0
    %v1963 = vsel %vm959, %v1952, 0
    %1965 = vmatprep.subr.mxu0 0.0
    %1966 = vmatpush1.msra.mxu0 %v1940
    %1967 = vmatprep.subr.mxu0 0.0
    %1968 = vmatpush1.msra.mxu0 %v1945
    %1969 = vmatprep.subr.mxu0 0.0
    %1970 = vmatpush1.msra.mxu0 0.0
    %1971 = vmatprep.subr.mxu0 0.0
    %1972 = vmatpush1.msra.mxu0 0.0
    %1973 = vmatprep.subr.mxu0 0.0
    %1974 = vmatpush1.msra.mxu0 0.0
    %1975 = vmatprep.subr.mxu0 0.0
    %1976 = vmatpush1.msra.mxu0 0.0
    %1977 = vmatprep.subr.mxu0 0.0
    %1978 = vmatpush1.msra.mxu0 0.0
    %1979 = vmatprep.subr.mxu0 0.0
    %1980 = vmatpush1.msra.mxu0 0.0
    %1981 = vmatprep.subr.mxu0 0.0
    %1982 = vmatpush1.msra.mxu0 0.0
    %1983 = vmatprep.subr.mxu0 0.0
    %1984 = vmatpush1.msra.mxu0 0.0
    %1985 = vmatprep.subr.mxu0 0.0
    %1986 = vmatpush1.msra.mxu0 0.0
    %1987 = vmatprep.subr.mxu0 0.0
    %1988 = vmatpush1.msra.mxu0 0.0
    %1989 = vmatprep.subr.mxu0 0.0
    %1990 = vmatpush1.msra.mxu0 0.0
    %1991 = vmatprep.subr.mxu0 0.0
    %1992 = vmatpush1.msra.mxu0 0.0
    %1993 = vmatprep.subr.mxu0 0.0
    %1994 = vmatpush1.msra.mxu0 0.0
    %1995 = vmatprep.subr.mxu0 0.0
    %1996 = vmatpush1.msra.mxu0 0.0
    %1997 = vmatprep.subr.mxu0 0.0
    %1998 = vmatpush1.msra.mxu0 0.0
    %1999 = vmatprep.subr.mxu0 0.0
    %2000 = vmatpush1.msra.mxu0 0.0
    %2001 = vmatprep.subr.mxu0 0.0
    %2002 = vmatpush1.msra.mxu0 0.0
    %2003 = vmatprep.subr.mxu0 0.0
    %2004 = vmatpush1.msra.mxu0 0.0
    %2005 = vmatprep.subr.mxu0 0.0
    %2006 = vmatpush1.msra.mxu0 0.0
    %2007 = vmatprep.subr.mxu0 0.0
    %2008 = vmatpush1.msra.mxu0 0.0
    %2009 = vmatprep.subr.mxu0 0.0
    %2010 = vmatpush1.msra.mxu0 0.0
    %2011 = vmatprep.subr.mxu0 0.0
    %2012 = vmatpush1.msra.mxu0 0.0
    %2013 = vmatprep.subr.mxu0 0.0
    %2014 = vmatpush1.msra.mxu0 0.0
    %2015 = vmatprep.subr.mxu0 0.0
    %2016 = vmatpush1.msra.mxu0 0.0
    %2017 = vmatprep.subr.mxu0 0.0
    %2018 = vmatpush1.msra.mxu0 0.0
    %2019 = vmatprep.subr.mxu0 0.0
    %2020 = vmatpush1.msra.mxu0 0.0
    %2021 = vmatprep.subr.mxu0 0.0
    %2022 = vmatpush1.msra.mxu0 0.0
    %2023 = vmatprep.subr.mxu0 0.0
    %2024 = vmatpush1.msra.mxu0 0.0
    %2025 = vmatprep.subr.mxu0 0.0
    %2026 = vmatpush1.msra.mxu0 0.0
    %2027 = vmatprep.subr.mxu0 0.0
    %2028 = vmatpush1.msra.mxu0 0.0
    %2029 = vmatprep.mubr.f32.mxu0 0.0
    %2030 = vmatmul.mubr.f32.gmra.mrb[0].mxu0 %v1954
    %v2031 = vpop.f32.mrb[0].mxu0
    %v2032 = vadd.f32 0.0, %v2031
    %v2033 = vpop.f32.mrb[0].mxu0
    %2034 = vmatprep.mubr.f32.mxu0 0.0
    %2035 = vmatmul.mubr.f32.gmra.mrb[0].mxu0 %v1957
    %v2036 = vpop.f32.mrb[0].mxu0
    %v2037 = vadd.f32 0.0, %v2036
    %v2038 = vpop.f32.mrb[0].mxu0
    %2039 = vmatprep.mubr.f32.mxu0 0.0
    %2040 = vmatmul.mubr.f32.gmra.mrb[0].mxu0 %v1960
    %v2041 = vpop.f32.mrb[0].mxu0
    %v2042 = vadd.f32 0.0, %v2041
    %v2043 = vpop.f32.mrb[0].mxu0
    %2044 = vmatprep.mubr.f32.mxu0 0.0
    %2045 = vmatmul.mubr.f32.gmra.mrb[0].mxu0 %v1963
    %v2046 = vpop.f32.mrb[0].mxu0
    %v2047 = vadd.f32 0.0, %v2046
    %v2048 = vpop.f32.mrb[0].mxu0
    %2049 = vdwg.mxu0
    %v2050 = vadd.f32 %v1750, %v2032
    %v2051 = vadd.f32 %v1751, %v2037
    %v2052 = vadd.f32 %v1752, %v2042
    %v2053 = vadd.f32 %v1753, %v2047
    %s2054 = scalar_lea.vmem %s5, 1720
    %v2055 = vld [vmem:[%s2054] sm:$0xff]
    %v2056 = vld [vmem:[%s2054 + $0x8] sm:$0xff]
    %v2057 = vld [vmem:[%s2054 + $0x10] sm:$0xff]
    %v2058 = vld [vmem:[%s2054 + $0x18] sm:$0xff]
    %v2059 = vld [vmem:[%s2054 + $0x20] sm:$0xff]
    %v2060 = vld [vmem:[%s2054 + $0x28] sm:$0xff]
    %v2061 = vld [vmem:[%s2054 + $0x30] sm:$0xff]
    %v2062 = vld [vmem:[%s2054 + $0x38] sm:$0xff]
    %v2063 = vld [vmem:[%s2054 + $0x40] sm:$0xff]
    %v2064 = vld [vmem:[%s2054 + $0x48] sm:$0xff]
    %v2065 = vld [vmem:[%s2054 + $0x50] sm:$0xff]
    %v2066 = vld [vmem:[%s2054 + $0x58] sm:$0xff]
    %v2067 = vld [vmem:[%s2054 + $0x60] sm:$0xff]
    %v2068 = vld [vmem:[%s2054 + $0x68] sm:$0xff]
    %v2069 = vld [vmem:[%s2054 + $0x70] sm:$0xff]
    %v2070 = vld [vmem:[%s2054 + $0x78] sm:$0xff]
    %v2071 = vld [vmem:[%s2054 + $0x80] sm:$0xff]
    %v2072 = vld [vmem:[%s2054 + $0x88] sm:$0xff]
    %v2073 = vld [vmem:[%s2054 + $0x90] sm:$0xff]
    %v2074 = vld [vmem:[%s2054 + $0x98] sm:$0xff]
    %v2075 = vld [vmem:[%s2054 + $0xa0] sm:$0xff]
    %v2076 = vld [vmem:[%s2054 + $0xa8] sm:$0xff]
    %v2077 = vld [vmem:[%s2054 + $0xb0] sm:$0xff]
    %v2078 = vld [vmem:[%s2054 + $0xb8] sm:$0xff]
    %v2079 = vld [vmem:[%s2054 + $0xc0] sm:$0xff]
    %v2080 = vld [vmem:[%s2054 + $0xc8] sm:$0xff]
    %v2081 = vld [vmem:[%s2054 + $0xd0] sm:$0xff]
    %v2082 = vld [vmem:[%s2054 + $0xd8] sm:$0xff]
    %v2083 = vld [vmem:[%s2054 + $0xe0] sm:$0xff]
    %v2084 = vld [vmem:[%s2054 + $0xe8] sm:$0xff]
    %v2085 = vld [vmem:[%s2054 + $0xf0] sm:$0xff]
    %v2086 = vld [vmem:[%s2054 + $0xf8] sm:$0xff]
    %v2087 = vld [vmem:[%s2054 + $0x100] sm:$0xff]
    %v2088 = vld [vmem:[%s2054 + $0x108] sm:$0xff]
    %v2089 = vld [vmem:[%s2054 + $0x110] sm:$0xff]
    %v2090 = vld [vmem:[%s2054 + $0x118] sm:$0xff]
    %v2091 = vld [vmem:[%s2054 + $0x120] sm:$0xff]
    %v2092 = vld [vmem:[%s2054 + $0x128] sm:$0xff]
    %v2093 = vld [vmem:[%s2054 + $0x130] sm:$0xff]
    %v2094 = vld [vmem:[%s2054 + $0x138] sm:$0xff]
    %v2095 = vld [vmem:[%s2054 + $0x140] sm:$0xff]
    %v2096 = vld [vmem:[%s2054 + $0x148] sm:$0xff]
    %v2097 = vld [vmem:[%s2054 + $0x150] sm:$0xff]
    %2098 = vmatprep.subr.mxu0 0.0
    %2099 = vmatpush1.msra.mxu0 %v2055
    %2100 = vmatprep.subr.mxu0 0.0
    %2101 = vmatpush1.msra.mxu0 %v2056
    %2102 = vmatprep.subr.mxu0 0.0
    %2103 = vmatpush1.msra.mxu0 %v2057
    %2104 = vmatprep.subr.mxu0 0.0
    %2105 = vmatpush1.msra.mxu0 %v2058
    %2106 = vmatprep.subr.mxu0 0.0
    %2107 = vmatpush1.msra.mxu0 %v2059
    %2108 = vmatprep.subr.mxu0 0.0
    %2109 = vmatpush1.msra.mxu0 %v2060
    %2110 = vmatprep.subr.mxu0 0.0
    %2111 = vmatpush1.msra.mxu0 %v2061
    %2112 = vmatprep.subr.mxu0 0.0
    %2113 = vmatpush1.msra.mxu0 %v2062
    %2114 = vmatprep.subr.mxu0 0.0
    %2115 = vmatpush1.msra.mxu0 %v2063
    %2116 = vmatprep.subr.mxu0 0.0
    %2117 = vmatpush1.msra.mxu0 %v2064
    %2118 = vmatprep.subr.mxu0 0.0
    %2119 = vmatpush1.msra.mxu0 %v2065
    %2120 = vmatprep.subr.mxu0 0.0
    %2121 = vmatpush1.msra.mxu0 %v2066
    %2122 = vmatprep.subr.mxu0 0.0
    %2123 = vmatpush1.msra.mxu0 %v2067
    %2124 = vmatprep.subr.mxu0 0.0
    %2125 = vmatpush1.msra.mxu0 %v2068
    %2126 = vmatprep.subr.mxu0 0.0
    %2127 = vmatpush1.msra.mxu0 %v2069
    %2128 = vmatprep.subr.mxu0 0.0
    %2129 = vmatpush1.msra.mxu0 %v2070
    %2130 = vmatprep.subr.mxu0 0.0
    %2131 = vmatpush1.msra.mxu0 %v2071
    %2132 = vmatprep.subr.mxu0 0.0
    %2133 = vmatpush1.msra.mxu0 %v2072
    %2134 = vmatprep.subr.mxu0 0.0
    %2135 = vmatpush1.msra.mxu0 %v2073
    %2136 = vmatprep.subr.mxu0 0.0
    %2137 = vmatpush1.msra.mxu0 %v2074
    %2138 = vmatprep.subr.mxu0 0.0
    %2139 = vmatpush1.msra.mxu0 %v2075
    %2140 = vmatprep.subr.mxu0 0.0
    %2141 = vmatpush1.msra.mxu0 %v2076
    %2142 = vmatprep.subr.mxu0 0.0
    %2143 = vmatpush1.msra.mxu0 %v2077
    %2144 = vmatprep.subr.mxu0 0.0
    %2145 = vmatpush1.msra.mxu0 %v2078
    %2146 = vmatprep.subr.mxu0 0.0
    %2147 = vmatpush1.msra.mxu0 %v2079
    %2148 = vmatprep.subr.mxu0 0.0
    %2149 = vmatpush1.msra.mxu0 %v2080
    %2150 = vmatprep.subr.mxu0 0.0
    %2151 = vmatpush1.msra.mxu0 %v2081
    %2152 = vmatprep.subr.mxu0 0.0
    %2153 = vmatpush1.msra.mxu0 %v2082
    %2154 = vmatprep.subr.mxu0 0.0
    %2155 = vmatpush1.msra.mxu0 %v2083
    %2156 = vmatprep.subr.mxu0 0.0
    %2157 = vmatpush1.msra.mxu0 %v2084
    %2158 = vmatprep.subr.mxu0 0.0
    %2159 = vmatpush1.msra.mxu0 %v2085
    %2160 = vmatprep.subr.mxu0 0.0
    %2161 = vmatpush1.msra.mxu0 %v2086
    %2162 = vmatprep.mubr.f32.mxu0 %v552
    %2163 = vmatmul.mubr.f32.gmra.mrb[0].mxu0 %v551
    %v2164 = vpop.f32.mrb[0].mxu0
    %v2165 = vadd.f32 0.0, %v2164
    %v2166 = vpop.f32.mrb[0].mxu0
    %2167 = vmatprep.mubr.f32.mxu0 %v555
    %2168 = vmatmul.mubr.f32.gmra.mrb[0].mxu0 %v554
    %v2169 = vpop.f32.mrb[0].mxu0
    %v2170 = vadd.f32 0.0, %v2169
    %v2171 = vpop.f32.mrb[0].mxu0
    %2172 = vdwg.mxu0
    %2173 = vmatprep.subr.mxu0 0.0
    %2174 = vmatpush1.msra.mxu0 %v2087
    %2175 = vmatprep.subr.mxu0 0.0
    %2176 = vmatpush1.msra.mxu0 %v2088
    %2177 = vmatprep.subr.mxu0 0.0
    %2178 = vmatpush1.msra.mxu0 %v2089
    %2179 = vmatprep.subr.mxu0 0.0
    %2180 = vmatpush1.msra.mxu0 %v2090
    %2181 = vmatprep.subr.mxu0 0.0
    %2182 = vmatpush1.msra.mxu0 %v2091
    %2183 = vmatprep.subr.mxu0 0.0
    %2184 = vmatpush1.msra.mxu0 %v2092
    %2185 = vmatprep.subr.mxu0 0.0
    %2186 = vmatpush1.msra.mxu0 %v2093
    %2187 = vmatprep.subr.mxu0 0.0
    %2188 = vmatpush1.msra.mxu0 %v2094
    %2189 = vmatprep.subr.mxu0 0.0
    %2190 = vmatpush1.msra.mxu0 %v2095
    %2191 = vmatprep.subr.mxu0 0.0
    %2192 = vmatpush1.msra.mxu0 %v2096
    %2193 = vmatprep.subr.mxu0 0.0
    %2194 = vmatpush1.msra.mxu0 %v2097
    %2195 = vmatprep.subr.mxu0 0.0
    %2196 = vmatpush1.msra.mxu0 0.0
    %2197 = vmatprep.subr.mxu0 0.0
    %2198 = vmatpush1.msra.mxu0 0.0
    %2199 = vmatprep.subr.mxu0 0.0
    %2200 = vmatpush1.msra.mxu0 0.0
    %2201 = vmatprep.subr.mxu0 0.0
    %2202 = vmatpush1.msra.mxu0 0.0
    %2203 = vmatprep.subr.mxu0 0.0
    %2204 = vmatpush1.msra.mxu0 0.0
    %2205 = vmatprep.subr.mxu0 0.0
    %2206 = vmatpush1.msra.mxu0 0.0
    %2207 = vmatprep.subr.mxu0 0.0
    %2208 = vmatpush1.msra.mxu0 0.0
    %2209 = vmatprep.subr.mxu0 0.0
    %2210 = vmatpush1.msra.mxu0 0.0
    %2211 = vmatprep.subr.mxu0 0.0
    %2212 = vmatpush1.msra.mxu0 0.0
    %2213 = vmatprep.subr.mxu0 0.0
    %2214 = vmatpush1.msra.mxu0 0.0
    %2215 = vmatprep.subr.mxu0 0.0
    %2216 = vmatpush1.msra.mxu0 0.0
    %2217 = vmatprep.subr.mxu0 0.0
    %2218 = vmatpush1.msra.mxu0 0.0
    %2219 = vmatprep.subr.mxu0 0.0
    %2220 = vmatpush1.msra.mxu0 0.0
    %2221 = vmatprep.subr.mxu0 0.0
    %2222 = vmatpush1.msra.mxu0 0.0
    %2223 = vmatprep.subr.mxu0 0.0
    %2224 = vmatpush1.msra.mxu0 0.0
    %2225 = vmatprep.subr.mxu0 0.0
    %2226 = vmatpush1.msra.mxu0 0.0
    %2227 = vmatprep.subr.mxu0 0.0
    %2228 = vmatpush1.msra.mxu0 0.0
    %2229 = vmatprep.subr.mxu0 0.0
    %2230 = vmatpush1.msra.mxu0 0.0
    %2231 = vmatprep.subr.mxu0 0.0
    %2232 = vmatpush1.msra.mxu0 0.0
    %2233 = vmatprep.subr.mxu0 0.0
    %2234 = vmatpush1.msra.mxu0 0.0
    %2235 = vmatprep.subr.mxu0 0.0
    %2236 = vmatpush1.msra.mxu0 0.0
    %2237 = vmatprep.mubr.f32.mxu0 0.0
    %2238 = vmatmul.mubr.f32.gmra.mrb[0].mxu0 %v601
    %v2239 = vpop.f32.mrb[0].mxu0
    %v2240 = vadd.f32 %v2165, %v2239
    %v2241 = vpop.f32.mrb[0].mxu0
    %2242 = vmatprep.mubr.f32.mxu0 0.0
    %2243 = vmatmul.mubr.f32.gmra.mrb[0].mxu0 %v604
    %v2244 = vpop.f32.mrb[0].mxu0
    %v2245 = vadd.f32 %v2170, %v2244
    %v2246 = vpop.f32.mrb[0].mxu0
    %2247 = vdwg.mxu0
    %s2248 = scalar_lea.vmem %s4, 160
    %v2249 = vld [vmem:[%s2248] sm:$0xff]
    %v2250 = vld [vmem:[%s2248 + $0x8] sm:$0xff]
    %v2251 = vld [vmem:[%s2248 + $0x10] sm:$0xff]
    %v2252 = vld [vmem:[%s2248 + $0x18] sm:$0xff]
    %v2254 = vsel %vm959, %v2249, 0
    %v2257 = vsel %vm959, %v2250, 0
    %v2260 = vsel %vm959, %v2251, 0
    %v2263 = vsel %vm959, %v2252, 0
    %2265 = vmatprep.subr.mxu0 0.0
    %2266 = vmatpush1.msra.mxu0 %v2240
    %2267 = vmatprep.subr.mxu0 0.0
    %2268 = vmatpush1.msra.mxu0 %v2245
    %2269 = vmatprep.subr.mxu0 0.0
    %2270 = vmatpush1.msra.mxu0 0.0
    %2271 = vmatprep.subr.mxu0 0.0
    %2272 = vmatpush1.msra.mxu0 0.0
    %2273 = vmatprep.subr.mxu0 0.0
    %2274 = vmatpush1.msra.mxu0 0.0
    %2275 = vmatprep.subr.mxu0 0.0
    %2276 = vmatpush1.msra.mxu0 0.0
    %2277 = vmatprep.subr.mxu0 0.0
    %2278 = vmatpush1.msra.mxu0 0.0
    %2279 = vmatprep.subr.mxu0 0.0
    %2280 = vmatpush1.msra.mxu0 0.0
    %2281 = vmatprep.subr.mxu0 0.0
    %2282 = vmatpush1.msra.mxu0 0.0
    %2283 = vmatprep.subr.mxu0 0.0
    %2284 = vmatpush1.msra.mxu0 0.0
    %2285 = vmatprep.subr.mxu0 0.0
    %2286 = vmatpush1.msra.mxu0 0.0
    %2287 = vmatprep.subr.mxu0 0.0
    %2288 = vmatpush1.msra.mxu0 0.0
    %2289 = vmatprep.subr.mxu0 0.0
    %2290 = vmatpush1.msra.mxu0 0.0
    %2291 = vmatprep.subr.mxu0 0.0
    %2292 = vmatpush1.msra.mxu0 0.0
    %2293 = vmatprep.subr.mxu0 0.0
    %2294 = vmatpush1.msra.mxu0 0.0
    %2295 = vmatprep.subr.mxu0 0.0
    %2296 = vmatpush1.msra.mxu0 0.0
    %2297 = vmatprep.subr.mxu0 0.0
    %2298 = vmatpush1.msra.mxu0 0.0
    %2299 = vmatprep.subr.mxu0 0.0
    %2300 = vmatpush1.msra.mxu0 0.0
    %2301 = vmatprep.subr.mxu0 0.0
    %2302 = vmatpush1.msra.mxu0 0.0
    %2303 = vmatprep.subr.mxu0 0.0
    %2304 = vmatpush1.msra.mxu0 0.0
    %2305 = vmatprep.subr.mxu0 0.0
    %2306 = vmatpush1.msra.mxu0 0.0
    %2307 = vmatprep.subr.mxu0 0.0
    %2308 = vmatpush1.msra.mxu0 0.0
    %2309 = vmatprep.subr.mxu0 0.0
    %2310 = vmatpush1.msra.mxu0 0.0
    %2311 = vmatprep.subr.mxu0 0.0
    %2312 = vmatpush1.msra.mxu0 0.0
    %2313 = vmatprep.subr.mxu0 0.0
    %2314 = vmatpush1.msra.mxu0 0.0
    %2315 = vmatprep.subr.mxu0 0.0
    %2316 = vmatpush1.msra.mxu0 0.0
    %2317 = vmatprep.subr.mxu0 0.0
    %2318 = vmatpush1.msra.mxu0 0.0
    %2319 = vmatprep.subr.mxu0 0.0
    %2320 = vmatpush1.msra.mxu0 0.0
    %2321 = vmatprep.subr.mxu0 0.0
    %2322 = vmatpush1.msra.mxu0 0.0
    %2323 = vmatprep.subr.mxu0 0.0
    %2324 = vmatpush1.msra.mxu0 0.0
    %2325 = vmatprep.subr.mxu0 0.0
    %2326 = vmatpush1.msra.mxu0 0.0
    %2327 = vmatprep.subr.mxu0 0.0
    %2328 = vmatpush1.msra.mxu0 0.0
    %2329 = vmatprep.mubr.f32.mxu0 0.0
    %2330 = vmatmul.mubr.f32.gmra.mrb[0].mxu0 %v2254
    %v2331 = vpop.f32.mrb[0].mxu0
    %v2332 = vadd.f32 0.0, %v2331
    %v2333 = vpop.f32.mrb[0].mxu0
    %2334 = vmatprep.mubr.f32.mxu0 0.0
    %2335 = vmatmul.mubr.f32.gmra.mrb[0].mxu0 %v2257
    %v2336 = vpop.f32.mrb[0].mxu0
    %v2337 = vadd.f32 0.0, %v2336
    %v2338 = vpop.f32.mrb[0].mxu0
    %2339 = vmatprep.mubr.f32.mxu0 0.0
    %2340 = vmatmul.mubr.f32.gmra.mrb[0].mxu0 %v2260
    %v2341 = vpop.f32.mrb[0].mxu0
    %v2342 = vadd.f32 0.0, %v2341
    %v2343 = vpop.f32.mrb[0].mxu0
    %2344 = vmatprep.mubr.f32.mxu0 0.0
    %2345 = vmatmul.mubr.f32.gmra.mrb[0].mxu0 %v2263
    %v2346 = vpop.f32.mrb[0].mxu0
    %v2347 = vadd.f32 0.0, %v2346
    %v2348 = vpop.f32.mrb[0].mxu0
    %2349 = vdwg.mxu0
    %v2350 = vadd.f32 %v2050, %v2332
    %v2351 = vadd.f32 %v2051, %v2337
    %v2352 = vadd.f32 %v2052, %v2342
    %v2353 = vadd.f32 %v2053, %v2347
    %s2354 = scalar_lea.vmem %s5, 2064
    %v2355 = vld [vmem:[%s2354] sm:$0xff]
    %v2356 = vld [vmem:[%s2354 + $0x8] sm:$0xff]
    %v2357 = vld [vmem:[%s2354 + $0x10] sm:$0xff]
    %v2358 = vld [vmem:[%s2354 + $0x18] sm:$0xff]
    %v2359 = vld [vmem:[%s2354 + $0x20] sm:$0xff]
    %v2360 = vld [vmem:[%s2354 + $0x28] sm:$0xff]
    %v2361 = vld [vmem:[%s2354 + $0x30] sm:$0xff]
    %v2362 = vld [vmem:[%s2354 + $0x38] sm:$0xff]
    %v2363 = vld [vmem:[%s2354 + $0x40] sm:$0xff]
    %v2364 = vld [vmem:[%s2354 + $0x48] sm:$0xff]
    %v2365 = vld [vmem:[%s2354 + $0x50] sm:$0xff]
    %v2366 = vld [vmem:[%s2354 + $0x58] sm:$0xff]
    %v2367 = vld [vmem:[%s2354 + $0x60] sm:$0xff]
    %v2368 = vld [vmem:[%s2354 + $0x68] sm:$0xff]
    %v2369 = vld [vmem:[%s2354 + $0x70] sm:$0xff]
    %v2370 = vld [vmem:[%s2354 + $0x78] sm:$0xff]
    %v2371 = vld [vmem:[%s2354 + $0x80] sm:$0xff]
    %v2372 = vld [vmem:[%s2354 + $0x88] sm:$0xff]
    %v2373 = vld [vmem:[%s2354 + $0x90] sm:$0xff]
    %v2374 = vld [vmem:[%s2354 + $0x98] sm:$0xff]
    %v2375 = vld [vmem:[%s2354 + $0xa0] sm:$0xff]
    %v2376 = vld [vmem:[%s2354 + $0xa8] sm:$0xff]
    %v2377 = vld [vmem:[%s2354 + $0xb0] sm:$0xff]
    %v2378 = vld [vmem:[%s2354 + $0xb8] sm:$0xff]
    %v2379 = vld [vmem:[%s2354 + $0xc0] sm:$0xff]
    %v2380 = vld [vmem:[%s2354 + $0xc8] sm:$0xff]
    %v2381 = vld [vmem:[%s2354 + $0xd0] sm:$0xff]
    %v2382 = vld [vmem:[%s2354 + $0xd8] sm:$0xff]
    %v2383 = vld [vmem:[%s2354 + $0xe0] sm:$0xff]
    %v2384 = vld [vmem:[%s2354 + $0xe8] sm:$0xff]
    %v2385 = vld [vmem:[%s2354 + $0xf0] sm:$0xff]
    %v2386 = vld [vmem:[%s2354 + $0xf8] sm:$0xff]
    %v2387 = vld [vmem:[%s2354 + $0x100] sm:$0xff]
    %v2388 = vld [vmem:[%s2354 + $0x108] sm:$0xff]
    %v2389 = vld [vmem:[%s2354 + $0x110] sm:$0xff]
    %v2390 = vld [vmem:[%s2354 + $0x118] sm:$0xff]
    %v2391 = vld [vmem:[%s2354 + $0x120] sm:$0xff]
    %v2392 = vld [vmem:[%s2354 + $0x128] sm:$0xff]
    %v2393 = vld [vmem:[%s2354 + $0x130] sm:$0xff]
    %v2394 = vld [vmem:[%s2354 + $0x138] sm:$0xff]
    %v2395 = vld [vmem:[%s2354 + $0x140] sm:$0xff]
    %v2396 = vld [vmem:[%s2354 + $0x148] sm:$0xff]
    %v2397 = vld [vmem:[%s2354 + $0x150] sm:$0xff]
    %2398 = vmatprep.subr.mxu0 0.0
    %2399 = vmatpush1.msra.mxu0 %v2355
    %2400 = vmatprep.subr.mxu0 0.0
    %2401 = vmatpush1.msra.mxu0 %v2356
    %2402 = vmatprep.subr.mxu0 0.0
    %2403 = vmatpush1.msra.mxu0 %v2357
    %2404 = vmatprep.subr.mxu0 0.0
    %2405 = vmatpush1.msra.mxu0 %v2358
    %2406 = vmatprep.subr.mxu0 0.0
    %2407 = vmatpush1.msra.mxu0 %v2359
    %2408 = vmatprep.subr.mxu0 0.0
    %2409 = vmatpush1.msra.mxu0 %v2360
    %2410 = vmatprep.subr.mxu0 0.0
    %2411 = vmatpush1.msra.mxu0 %v2361
    %2412 = vmatprep.subr.mxu0 0.0
    %2413 = vmatpush1.msra.mxu0 %v2362
    %2414 = vmatprep.subr.mxu0 0.0
    %2415 = vmatpush1.msra.mxu0 %v2363
    %2416 = vmatprep.subr.mxu0 0.0
    %2417 = vmatpush1.msra.mxu0 %v2364
    %2418 = vmatprep.subr.mxu0 0.0
    %2419 = vmatpush1.msra.mxu0 %v2365
    %2420 = vmatprep.subr.mxu0 0.0
    %2421 = vmatpush1.msra.mxu0 %v2366
    %2422 = vmatprep.subr.mxu0 0.0
    %2423 = vmatpush1.msra.mxu0 %v2367
    %2424 = vmatprep.subr.mxu0 0.0
    %2425 = vmatpush1.msra.mxu0 %v2368
    %2426 = vmatprep.subr.mxu0 0.0
    %2427 = vmatpush1.msra.mxu0 %v2369
    %2428 = vmatprep.subr.mxu0 0.0
    %2429 = vmatpush1.msra.mxu0 %v2370
    %2430 = vmatprep.subr.mxu0 0.0
    %2431 = vmatpush1.msra.mxu0 %v2371
    %2432 = vmatprep.subr.mxu0 0.0
    %2433 = vmatpush1.msra.mxu0 %v2372
    %2434 = vmatprep.subr.mxu0 0.0
    %2435 = vmatpush1.msra.mxu0 %v2373
    %2436 = vmatprep.subr.mxu0 0.0
    %2437 = vmatpush1.msra.mxu0 %v2374
    %2438 = vmatprep.subr.mxu0 0.0
    %2439 = vmatpush1.msra.mxu0 %v2375
    %2440 = vmatprep.subr.mxu0 0.0
    %2441 = vmatpush1.msra.mxu0 %v2376
    %2442 = vmatprep.subr.mxu0 0.0
    %2443 = vmatpush1.msra.mxu0 %v2377
    %2444 = vmatprep.subr.mxu0 0.0
    %2445 = vmatpush1.msra.mxu0 %v2378
    %2446 = vmatprep.subr.mxu0 0.0
    %2447 = vmatpush1.msra.mxu0 %v2379
    %2448 = vmatprep.subr.mxu0 0.0
    %2449 = vmatpush1.msra.mxu0 %v2380
    %2450 = vmatprep.subr.mxu0 0.0
    %2451 = vmatpush1.msra.mxu0 %v2381
    %2452 = vmatprep.subr.mxu0 0.0
    %2453 = vmatpush1.msra.mxu0 %v2382
    %2454 = vmatprep.subr.mxu0 0.0
    %2455 = vmatpush1.msra.mxu0 %v2383
    %2456 = vmatprep.subr.mxu0 0.0
    %2457 = vmatpush1.msra.mxu0 %v2384
    %2458 = vmatprep.subr.mxu0 0.0
    %2459 = vmatpush1.msra.mxu0 %v2385
    %2460 = vmatprep.subr.mxu0 0.0
    %2461 = vmatpush1.msra.mxu0 %v2386
    %2462 = vmatprep.mubr.f32.mxu0 %v552
    %2463 = vmatmul.mubr.f32.gmra.mrb[0].mxu0 %v551
    %v2464 = vpop.f32.mrb[0].mxu0
    %v2465 = vadd.f32 0.0, %v2464
    %v2466 = vpop.f32.mrb[0].mxu0
    %2467 = vmatprep.mubr.f32.mxu0 %v555
    %2468 = vmatmul.mubr.f32.gmra.mrb[0].mxu0 %v554
    %v2469 = vpop.f32.mrb[0].mxu0
    %v2470 = vadd.f32 0.0, %v2469
    %v2471 = vpop.f32.mrb[0].mxu0
    %2472 = vdwg.mxu0
    %2473 = vmatprep.subr.mxu0 0.0
    %2474 = vmatpush1.msra.mxu0 %v2387
    %2475 = vmatprep.subr.mxu0 0.0
    %2476 = vmatpush1.msra.mxu0 %v2388
    %2477 = vmatprep.subr.mxu0 0.0
    %2478 = vmatpush1.msra.mxu0 %v2389
    %2479 = vmatprep.subr.mxu0 0.0
    %2480 = vmatpush1.msra.mxu0 %v2390
    %2481 = vmatprep.subr.mxu0 0.0
    %2482 = vmatpush1.msra.mxu0 %v2391
    %2483 = vmatprep.subr.mxu0 0.0
    %2484 = vmatpush1.msra.mxu0 %v2392
    %2485 = vmatprep.subr.mxu0 0.0
    %2486 = vmatpush1.msra.mxu0 %v2393
    %2487 = vmatprep.subr.mxu0 0.0
    %2488 = vmatpush1.msra.mxu0 %v2394
    %2489 = vmatprep.subr.mxu0 0.0
    %2490 = vmatpush1.msra.mxu0 %v2395
    %2491 = vmatprep.subr.mxu0 0.0
    %2492 = vmatpush1.msra.mxu0 %v2396
    %2493 = vmatprep.subr.mxu0 0.0
    %2494 = vmatpush1.msra.mxu0 %v2397
    %2495 = vmatprep.subr.mxu0 0.0
    %2496 = vmatpush1.msra.mxu0 0.0
    %2497 = vmatprep.subr.mxu0 0.0
    %2498 = vmatpush1.msra.mxu0 0.0
    %2499 = vmatprep.subr.mxu0 0.0
    %2500 = vmatpush1.msra.mxu0 0.0
    %2501 = vmatprep.subr.mxu0 0.0
    %2502 = vmatpush1.msra.mxu0 0.0
    %2503 = vmatprep.subr.mxu0 0.0
    %2504 = vmatpush1.msra.mxu0 0.0
    %2505 = vmatprep.subr.mxu0 0.0
    %2506 = vmatpush1.msra.mxu0 0.0
    %2507 = vmatprep.subr.mxu0 0.0
    %2508 = vmatpush1.msra.mxu0 0.0
    %2509 = vmatprep.subr.mxu0 0.0
    %2510 = vmatpush1.msra.mxu0 0.0
    %2511 = vmatprep.subr.mxu0 0.0
    %2512 = vmatpush1.msra.mxu0 0.0
    %2513 = vmatprep.subr.mxu0 0.0
    %2514 = vmatpush1.msra.mxu0 0.0
    %2515 = vmatprep.subr.mxu0 0.0
    %2516 = vmatpush1.msra.mxu0 0.0
    %2517 = vmatprep.subr.mxu0 0.0
    %2518 = vmatpush1.msra.mxu0 0.0
    %2519 = vmatprep.subr.mxu0 0.0
    %2520 = vmatpush1.msra.mxu0 0.0
    %2521 = vmatprep.subr.mxu0 0.0
    %2522 = vmatpush1.msra.mxu0 0.0
    %2523 = vmatprep.subr.mxu0 0.0
    %2524 = vmatpush1.msra.mxu0 0.0
    %2525 = vmatprep.subr.mxu0 0.0
    %2526 = vmatpush1.msra.mxu0 0.0
    %2527 = vmatprep.subr.mxu0 0.0
    %2528 = vmatpush1.msra.mxu0 0.0
    %2529 = vmatprep.subr.mxu0 0.0
    %2530 = vmatpush1.msra.mxu0 0.0
    %2531 = vmatprep.subr.mxu0 0.0
    %2532 = vmatpush1.msra.mxu0 0.0
    %2533 = vmatprep.subr.mxu0 0.0
    %2534 = vmatpush1.msra.mxu0 0.0
    %2535 = vmatprep.subr.mxu0 0.0
    %2536 = vmatpush1.msra.mxu0 0.0
    %2537 = vmatprep.mubr.f32.mxu0 0.0
    %2538 = vmatmul.mubr.f32.gmra.mrb[0].mxu0 %v601
    %v2539 = vpop.f32.mrb[0].mxu0
    %v2540 = vadd.f32 %v2465, %v2539
    %v2541 = vpop.f32.mrb[0].mxu0
    %2542 = vmatprep.mubr.f32.mxu0 0.0
    %2543 = vmatmul.mubr.f32.gmra.mrb[0].mxu0 %v604
    %v2544 = vpop.f32.mrb[0].mxu0
    %v2545 = vadd.f32 %v2470, %v2544
    %v2546 = vpop.f32.mrb[0].mxu0
    %2547 = vdwg.mxu0
    %s2548 = scalar_lea.vmem %s4, 192
    %v2549 = vld [vmem:[%s2548] sm:$0xff]
    %v2550 = vld [vmem:[%s2548 + $0x8] sm:$0xff]
    %v2551 = vld [vmem:[%s2548 + $0x10] sm:$0xff]
    %v2552 = vld [vmem:[%s2548 + $0x18] sm:$0xff]
    %v2554 = vsel %vm959, %v2549, 0
    %v2557 = vsel %vm959, %v2550, 0
    %v2560 = vsel %vm959, %v2551, 0
    %v2563 = vsel %vm959, %v2552, 0
    %2565 = vmatprep.subr.mxu0 0.0
    %2566 = vmatpush1.msra.mxu0 %v2540
    %2567 = vmatprep.subr.mxu0 0.0
    %2568 = vmatpush1.msra.mxu0 %v2545
    %2569 = vmatprep.subr.mxu0 0.0
    %2570 = vmatpush1.msra.mxu0 0.0
    %2571 = vmatprep.subr.mxu0 0.0
    %2572 = vmatpush1.msra.mxu0 0.0
    %2573 = vmatprep.subr.mxu0 0.0
    %2574 = vmatpush1.msra.mxu0 0.0
    %2575 = vmatprep.subr.mxu0 0.0
    %2576 = vmatpush1.msra.mxu0 0.0
    %2577 = vmatprep.subr.mxu0 0.0
    %2578 = vmatpush1.msra.mxu0 0.0
    %2579 = vmatprep.subr.mxu0 0.0
    %2580 = vmatpush1.msra.mxu0 0.0
    %2581 = vmatprep.subr.mxu0 0.0
    %2582 = vmatpush1.msra.mxu0 0.0
    %2583 = vmatprep.subr.mxu0 0.0
    %2584 = vmatpush1.msra.mxu0 0.0
    %2585 = vmatprep.subr.mxu0 0.0
    %2586 = vmatpush1.msra.mxu0 0.0
    %2587 = vmatprep.subr.mxu0 0.0
    %2588 = vmatpush1.msra.mxu0 0.0
    %2589 = vmatprep.subr.mxu0 0.0
    %2590 = vmatpush1.msra.mxu0 0.0
    %2591 = vmatprep.subr.mxu0 0.0
    %2592 = vmatpush1.msra.mxu0 0.0
    %2593 = vmatprep.subr.mxu0 0.0
    %2594 = vmatpush1.msra.mxu0 0.0
    %2595 = vmatprep.subr.mxu0 0.0
    %2596 = vmatpush1.msra.mxu0 0.0
    %2597 = vmatprep.subr.mxu0 0.0
    %2598 = vmatpush1.msra.mxu0 0.0
    %2599 = vmatprep.subr.mxu0 0.0
    %2600 = vmatpush1.msra.mxu0 0.0
    %2601 = vmatprep.subr.mxu0 0.0
    %2602 = vmatpush1.msra.mxu0 0.0
    %2603 = vmatprep.subr.mxu0 0.0
    %2604 = vmatpush1.msra.mxu0 0.0
    %2605 = vmatprep.subr.mxu0 0.0
    %2606 = vmatpush1.msra.mxu0 0.0
    %2607 = vmatprep.subr.mxu0 0.0
    %2608 = vmatpush1.msra.mxu0 0.0
    %2609 = vmatprep.subr.mxu0 0.0
    %2610 = vmatpush1.msra.mxu0 0.0
    %2611 = vmatprep.subr.mxu0 0.0
    %2612 = vmatpush1.msra.mxu0 0.0
    %2613 = vmatprep.subr.mxu0 0.0
    %2614 = vmatpush1.msra.mxu0 0.0
    %2615 = vmatprep.subr.mxu0 0.0
    %2616 = vmatpush1.msra.mxu0 0.0
    %2617 = vmatprep.subr.mxu0 0.0
    %2618 = vmatpush1.msra.mxu0 0.0
    %2619 = vmatprep.subr.mxu0 0.0
    %2620 = vmatpush1.msra.mxu0 0.0
    %2621 = vmatprep.subr.mxu0 0.0
    %2622 = vmatpush1.msra.mxu0 0.0
    %2623 = vmatprep.subr.mxu0 0.0
    %2624 = vmatpush1.msra.mxu0 0.0
    %2625 = vmatprep.subr.mxu0 0.0
    %2626 = vmatpush1.msra.mxu0 0.0
    %2627 = vmatprep.subr.mxu0 0.0
    %2628 = vmatpush1.msra.mxu0 0.0
    %2629 = vmatprep.mubr.f32.mxu0 0.0
    %2630 = vmatmul.mubr.f32.gmra.mrb[0].mxu0 %v2554
    %v2631 = vpop.f32.mrb[0].mxu0
    %v2632 = vadd.f32 0.0, %v2631
    %v2633 = vpop.f32.mrb[0].mxu0
    %2634 = vmatprep.mubr.f32.mxu0 0.0
    %2635 = vmatmul.mubr.f32.gmra.mrb[0].mxu0 %v2557
    %v2636 = vpop.f32.mrb[0].mxu0
    %v2637 = vadd.f32 0.0, %v2636
    %v2638 = vpop.f32.mrb[0].mxu0
    %2639 = vmatprep.mubr.f32.mxu0 0.0
    %2640 = vmatmul.mubr.f32.gmra.mrb[0].mxu0 %v2560
    %v2641 = vpop.f32.mrb[0].mxu0
    %v2642 = vadd.f32 0.0, %v2641
    %v2643 = vpop.f32.mrb[0].mxu0
    %2644 = vmatprep.mubr.f32.mxu0 0.0
    %2645 = vmatmul.mubr.f32.gmra.mrb[0].mxu0 %v2563
    %v2646 = vpop.f32.mrb[0].mxu0
    %v2647 = vadd.f32 0.0, %v2646
    %v2648 = vpop.f32.mrb[0].mxu0
    %2649 = vdwg.mxu0
    %v2650 = vadd.f32 %v2350, %v2632
    %v2651 = vadd.f32 %v2351, %v2637
    %v2652 = vadd.f32 %v2352, %v2642
    %v2653 = vadd.f32 %v2353, %v2647
    %s2654 = scalar_lea.vmem %s5, 2408
    %v2655 = vld [vmem:[%s2654] sm:$0xff]
    %v2656 = vld [vmem:[%s2654 + $0x8] sm:$0xff]
    %v2657 = vld [vmem:[%s2654 + $0x10] sm:$0xff]
    %v2658 = vld [vmem:[%s2654 + $0x18] sm:$0xff]
    %v2659 = vld [vmem:[%s2654 + $0x20] sm:$0xff]
    %v2660 = vld [vmem:[%s2654 + $0x28] sm:$0xff]
    %v2661 = vld [vmem:[%s2654 + $0x30] sm:$0xff]
    %v2662 = vld [vmem:[%s2654 + $0x38] sm:$0xff]
    %v2663 = vld [vmem:[%s2654 + $0x40] sm:$0xff]
    %v2664 = vld [vmem:[%s2654 + $0x48] sm:$0xff]
    %v2665 = vld [vmem:[%s2654 + $0x50] sm:$0xff]
    %v2666 = vld [vmem:[%s2654 + $0x58] sm:$0xff]
    %v2667 = vld [vmem:[%s2654 + $0x60] sm:$0xff]
    %v2668 = vld [vmem:[%s2654 + $0x68] sm:$0xff]
    %v2669 = vld [vmem:[%s2654 + $0x70] sm:$0xff]
    %v2670 = vld [vmem:[%s2654 + $0x78] sm:$0xff]
    %v2671 = vld [vmem:[%s2654 + $0x80] sm:$0xff]
    %v2672 = vld [vmem:[%s2654 + $0x88] sm:$0xff]
    %v2673 = vld [vmem:[%s2654 + $0x90] sm:$0xff]
    %v2674 = vld [vmem:[%s2654 + $0x98] sm:$0xff]
    %v2675 = vld [vmem:[%s2654 + $0xa0] sm:$0xff]
    %v2676 = vld [vmem:[%s2654 + $0xa8] sm:$0xff]
    %v2677 = vld [vmem:[%s2654 + $0xb0] sm:$0xff]
    %v2678 = vld [vmem:[%s2654 + $0xb8] sm:$0xff]
    %v2679 = vld [vmem:[%s2654 + $0xc0] sm:$0xff]
    %v2680 = vld [vmem:[%s2654 + $0xc8] sm:$0xff]
    %v2681 = vld [vmem:[%s2654 + $0xd0] sm:$0xff]
    %v2682 = vld [vmem:[%s2654 + $0xd8] sm:$0xff]
    %v2683 = vld [vmem:[%s2654 + $0xe0] sm:$0xff]
    %v2684 = vld [vmem:[%s2654 + $0xe8] sm:$0xff]
    %v2685 = vld [vmem:[%s2654 + $0xf0] sm:$0xff]
    %v2686 = vld [vmem:[%s2654 + $0xf8] sm:$0xff]
    %v2687 = vld [vmem:[%s2654 + $0x100] sm:$0xff]
    %v2688 = vld [vmem:[%s2654 + $0x108] sm:$0xff]
    %v2689 = vld [vmem:[%s2654 + $0x110] sm:$0xff]
    %v2690 = vld [vmem:[%s2654 + $0x118] sm:$0xff]
    %v2691 = vld [vmem:[%s2654 + $0x120] sm:$0xff]
    %v2692 = vld [vmem:[%s2654 + $0x128] sm:$0xff]
    %v2693 = vld [vmem:[%s2654 + $0x130] sm:$0xff]
    %v2694 = vld [vmem:[%s2654 + $0x138] sm:$0xff]
    %v2695 = vld [vmem:[%s2654 + $0x140] sm:$0xff]
    %v2696 = vld [vmem:[%s2654 + $0x148] sm:$0xff]
    %v2697 = vld [vmem:[%s2654 + $0x150] sm:$0xff]
    %2698 = vmatprep.subr.mxu0 0.0
    %2699 = vmatpush1.msra.mxu0 %v2655
    %2700 = vmatprep.subr.mxu0 0.0
    %2701 = vmatpush1.msra.mxu0 %v2656
    %2702 = vmatprep.subr.mxu0 0.0
    %2703 = vmatpush1.msra.mxu0 %v2657
    %2704 = vmatprep.subr.mxu0 0.0
    %2705 = vmatpush1.msra.mxu0 %v2658
    %2706 = vmatprep.subr.mxu0 0.0
    %2707 = vmatpush1.msra.mxu0 %v2659
    %2708 = vmatprep.subr.mxu0 0.0
    %2709 = vmatpush1.msra.mxu0 %v2660
    %2710 = vmatprep.subr.mxu0 0.0
    %2711 = vmatpush1.msra.mxu0 %v2661
    %2712 = vmatprep.subr.mxu0 0.0
    %2713 = vmatpush1.msra.mxu0 %v2662
    %2714 = vmatprep.subr.mxu0 0.0
    %2715 = vmatpush1.msra.mxu0 %v2663
    %2716 = vmatprep.subr.mxu0 0.0
    %2717 = vmatpush1.msra.mxu0 %v2664
    %2718 = vmatprep.subr.mxu0 0.0
    %2719 = vmatpush1.msra.mxu0 %v2665
    %2720 = vmatprep.subr.mxu0 0.0
    %2721 = vmatpush1.msra.mxu0 %v2666
    %2722 = vmatprep.subr.mxu0 0.0
    %2723 = vmatpush1.msra.mxu0 %v2667
    %2724 = vmatprep.subr.mxu0 0.0
    %2725 = vmatpush1.msra.mxu0 %v2668
    %2726 = vmatprep.subr.mxu0 0.0
    %2727 = vmatpush1.msra.mxu0 %v2669
    %2728 = vmatprep.subr.mxu0 0.0
    %2729 = vmatpush1.msra.mxu0 %v2670
    %2730 = vmatprep.subr.mxu0 0.0
    %2731 = vmatpush1.msra.mxu0 %v2671
    %2732 = vmatprep.subr.mxu0 0.0
    %2733 = vmatpush1.msra.mxu0 %v2672
    %2734 = vmatprep.subr.mxu0 0.0
    %2735 = vmatpush1.msra.mxu0 %v2673
    %2736 = vmatprep.subr.mxu0 0.0
    %2737 = vmatpush1.msra.mxu0 %v2674
    %2738 = vmatprep.subr.mxu0 0.0
    %2739 = vmatpush1.msra.mxu0 %v2675
    %2740 = vmatprep.subr.mxu0 0.0
    %2741 = vmatpush1.msra.mxu0 %v2676
    %2742 = vmatprep.subr.mxu0 0.0
    %2743 = vmatpush1.msra.mxu0 %v2677
    %2744 = vmatprep.subr.mxu0 0.0
    %2745 = vmatpush1.msra.mxu0 %v2678
    %2746 = vmatprep.subr.mxu0 0.0
    %2747 = vmatpush1.msra.mxu0 %v2679
    %2748 = vmatprep.subr.mxu0 0.0
    %2749 = vmatpush1.msra.mxu0 %v2680
    %2750 = vmatprep.subr.mxu0 0.0
    %2751 = vmatpush1.msra.mxu0 %v2681
    %2752 = vmatprep.subr.mxu0 0.0
    %2753 = vmatpush1.msra.mxu0 %v2682
    %2754 = vmatprep.subr.mxu0 0.0
    %2755 = vmatpush1.msra.mxu0 %v2683
    %2756 = vmatprep.subr.mxu0 0.0
    %2757 = vmatpush1.msra.mxu0 %v2684
    %2758 = vmatprep.subr.mxu0 0.0
    %2759 = vmatpush1.msra.mxu0 %v2685
    %2760 = vmatprep.subr.mxu0 0.0
    %2761 = vmatpush1.msra.mxu0 %v2686
    %2762 = vmatprep.mubr.f32.mxu0 %v552
    %2763 = vmatmul.mubr.f32.gmra.mrb[0].mxu0 %v551
    %v2764 = vpop.f32.mrb[0].mxu0
    %v2765 = vadd.f32 0.0, %v2764
    %v2766 = vpop.f32.mrb[0].mxu0
    %2767 = vmatprep.mubr.f32.mxu0 %v555
    %2768 = vmatmul.mubr.f32.gmra.mrb[0].mxu0 %v554
    %v2769 = vpop.f32.mrb[0].mxu0
    %v2770 = vadd.f32 0.0, %v2769
    %v2771 = vpop.f32.mrb[0].mxu0
    %2772 = vdwg.mxu0
    %2773 = vmatprep.subr.mxu0 0.0
    %2774 = vmatpush1.msra.mxu0 %v2687
    %2775 = vmatprep.subr.mxu0 0.0
    %2776 = vmatpush1.msra.mxu0 %v2688
    %2777 = vmatprep.subr.mxu0 0.0
    %2778 = vmatpush1.msra.mxu0 %v2689
    %2779 = vmatprep.subr.mxu0 0.0
    %2780 = vmatpush1.msra.mxu0 %v2690
    %2781 = vmatprep.subr.mxu0 0.0
    %2782 = vmatpush1.msra.mxu0 %v2691
    %2783 = vmatprep.subr.mxu0 0.0
    %2784 = vmatpush1.msra.mxu0 %v2692
    %2785 = vmatprep.subr.mxu0 0.0
    %2786 = vmatpush1.msra.mxu0 %v2693
    %2787 = vmatprep.subr.mxu0 0.0
    %2788 = vmatpush1.msra.mxu0 %v2694
    %2789 = vmatprep.subr.mxu0 0.0
    %2790 = vmatpush1.msra.mxu0 %v2695
    %2791 = vmatprep.subr.mxu0 0.0
    %2792 = vmatpush1.msra.mxu0 %v2696
    %2793 = vmatprep.subr.mxu0 0.0
    %2794 = vmatpush1.msra.mxu0 %v2697
    %2795 = vmatprep.subr.mxu0 0.0
    %2796 = vmatpush1.msra.mxu0 0.0
    %2797 = vmatprep.subr.mxu0 0.0
    %2798 = vmatpush1.msra.mxu0 0.0
    %2799 = vmatprep.subr.mxu0 0.0
    %2800 = vmatpush1.msra.mxu0 0.0
    %2801 = vmatprep.subr.mxu0 0.0
    %2802 = vmatpush1.msra.mxu0 0.0
    %2803 = vmatprep.subr.mxu0 0.0
    %2804 = vmatpush1.msra.mxu0 0.0
    %2805 = vmatprep.subr.mxu0 0.0
    %2806 = vmatpush1.msra.mxu0 0.0
    %2807 = vmatprep.subr.mxu0 0.0
    %2808 = vmatpush1.msra.mxu0 0.0
    %2809 = vmatprep.subr.mxu0 0.0
    %2810 = vmatpush1.msra.mxu0 0.0
    %2811 = vmatprep.subr.mxu0 0.0
    %2812 = vmatpush1.msra.mxu0 0.0
    %2813 = vmatprep.subr.mxu0 0.0
    %2814 = vmatpush1.msra.mxu0 0.0
    %2815 = vmatprep.subr.mxu0 0.0
    %2816 = vmatpush1.msra.mxu0 0.0
    %2817 = vmatprep.subr.mxu0 0.0
    %2818 = vmatpush1.msra.mxu0 0.0
    %2819 = vmatprep.subr.mxu0 0.0
    %2820 = vmatpush1.msra.mxu0 0.0
    %2821 = vmatprep.subr.mxu0 0.0
    %2822 = vmatpush1.msra.mxu0 0.0
    %2823 = vmatprep.subr.mxu0 0.0
    %2824 = vmatpush1.msra.mxu0 0.0
    %2825 = vmatprep.subr.mxu0 0.0
    %2826 = vmatpush1.msra.mxu0 0.0
    %2827 = vmatprep.subr.mxu0 0.0
    %2828 = vmatpush1.msra.mxu0 0.0
    %2829 = vmatprep.subr.mxu0 0.0
    %2830 = vmatpush1.msra.mxu0 0.0
    %2831 = vmatprep.subr.mxu0 0.0
    %2832 = vmatpush1.msra.mxu0 0.0
    %2833 = vmatprep.subr.mxu0 0.0
    %2834 = vmatpush1.msra.mxu0 0.0
    %2835 = vmatprep.subr.mxu0 0.0
    %2836 = vmatpush1.msra.mxu0 0.0
    %2837 = vmatprep.mubr.f32.mxu0 0.0
    %2838 = vmatmul.mubr.f32.gmra.mrb[0].mxu0 %v601
    %v2839 = vpop.f32.mrb[0].mxu0
    %v2840 = vadd.f32 %v2765, %v2839
    %v2841 = vpop.f32.mrb[0].mxu0
    %2842 = vmatprep.mubr.f32.mxu0 0.0
    %2843 = vmatmul.mubr.f32.gmra.mrb[0].mxu0 %v604
    %v2844 = vpop.f32.mrb[0].mxu0
    %v2845 = vadd.f32 %v2770, %v2844
    %v2846 = vpop.f32.mrb[0].mxu0
    %2847 = vdwg.mxu0
    %s2848 = scalar_lea.vmem %s4, 224
    %v2849 = vld [vmem:[%s2848] sm:$0xff]
    %v2850 = vld [vmem:[%s2848 + $0x8] sm:$0xff]
    %v2851 = vld [vmem:[%s2848 + $0x10] sm:$0xff]
    %v2852 = vld [vmem:[%s2848 + $0x18] sm:$0xff]
    %v2854 = vsel %vm959, %v2849, 0
    %v2857 = vsel %vm959, %v2850, 0
    %v2860 = vsel %vm959, %v2851, 0
    %v2863 = vsel %vm959, %v2852, 0
    %2865 = vmatprep.subr.mxu0 0.0
    %2866 = vmatpush1.msra.mxu0 %v2840
    %2867 = vmatprep.subr.mxu0 0.0
    %2868 = vmatpush1.msra.mxu0 %v2845
    %2869 = vmatprep.subr.mxu0 0.0
    %2870 = vmatpush1.msra.mxu0 0.0
    %2871 = vmatprep.subr.mxu0 0.0
    %2872 = vmatpush1.msra.mxu0 0.0
    %2873 = vmatprep.subr.mxu0 0.0
    %2874 = vmatpush1.msra.mxu0 0.0
    %2875 = vmatprep.subr.mxu0 0.0
    %2876 = vmatpush1.msra.mxu0 0.0
    %2877 = vmatprep.subr.mxu0 0.0
    %2878 = vmatpush1.msra.mxu0 0.0
    %2879 = vmatprep.subr.mxu0 0.0
    %2880 = vmatpush1.msra.mxu0 0.0
    %2881 = vmatprep.subr.mxu0 0.0
    %2882 = vmatpush1.msra.mxu0 0.0
    %2883 = vmatprep.subr.mxu0 0.0
    %2884 = vmatpush1.msra.mxu0 0.0
    %2885 = vmatprep.subr.mxu0 0.0
    %2886 = vmatpush1.msra.mxu0 0.0
    %2887 = vmatprep.subr.mxu0 0.0
    %2888 = vmatpush1.msra.mxu0 0.0
    %2889 = vmatprep.subr.mxu0 0.0
    %2890 = vmatpush1.msra.mxu0 0.0
    %2891 = vmatprep.subr.mxu0 0.0
    %2892 = vmatpush1.msra.mxu0 0.0
    %2893 = vmatprep.subr.mxu0 0.0
    %2894 = vmatpush1.msra.mxu0 0.0
    %2895 = vmatprep.subr.mxu0 0.0
    %2896 = vmatpush1.msra.mxu0 0.0
    %2897 = vmatprep.subr.mxu0 0.0
    %2898 = vmatpush1.msra.mxu0 0.0
    %2899 = vmatprep.subr.mxu0 0.0
    %2900 = vmatpush1.msra.mxu0 0.0
    %2901 = vmatprep.subr.mxu0 0.0
    %2902 = vmatpush1.msra.mxu0 0.0
    %2903 = vmatprep.subr.mxu0 0.0
    %2904 = vmatpush1.msra.mxu0 0.0
    %2905 = vmatprep.subr.mxu0 0.0
    %2906 = vmatpush1.msra.mxu0 0.0
    %2907 = vmatprep.subr.mxu0 0.0
    %2908 = vmatpush1.msra.mxu0 0.0
    %2909 = vmatprep.subr.mxu0 0.0
    %2910 = vmatpush1.msra.mxu0 0.0
    %2911 = vmatprep.subr.mxu0 0.0
    %2912 = vmatpush1.msra.mxu0 0.0
    %2913 = vmatprep.subr.mxu0 0.0
    %2914 = vmatpush1.msra.mxu0 0.0
    %2915 = vmatprep.subr.mxu0 0.0
    %2916 = vmatpush1.msra.mxu0 0.0
    %2917 = vmatprep.subr.mxu0 0.0
    %2918 = vmatpush1.msra.mxu0 0.0
    %2919 = vmatprep.subr.mxu0 0.0
    %2920 = vmatpush1.msra.mxu0 0.0
    %2921 = vmatprep.subr.mxu0 0.0
    %2922 = vmatpush1.msra.mxu0 0.0
    %2923 = vmatprep.subr.mxu0 0.0
    %2924 = vmatpush1.msra.mxu0 0.0
    %2925 = vmatprep.subr.mxu0 0.0
    %2926 = vmatpush1.msra.mxu0 0.0
    %2927 = vmatprep.subr.mxu0 0.0
    %2928 = vmatpush1.msra.mxu0 0.0
    %2929 = vmatprep.mubr.f32.mxu0 0.0
    %2930 = vmatmul.mubr.f32.gmra.mrb[0].mxu0 %v2854
    %v2931 = vpop.f32.mrb[0].mxu0
    %v2932 = vadd.f32 0.0, %v2931
    %v2933 = vpop.f32.mrb[0].mxu0
    %2934 = vmatprep.mubr.f32.mxu0 0.0
    %2935 = vmatmul.mubr.f32.gmra.mrb[0].mxu0 %v2857
    %v2936 = vpop.f32.mrb[0].mxu0
    %v2937 = vadd.f32 0.0, %v2936
    %v2938 = vpop.f32.mrb[0].mxu0
    %2939 = vmatprep.mubr.f32.mxu0 0.0
    %2940 = vmatmul.mubr.f32.gmra.mrb[0].mxu0 %v2860
    %v2941 = vpop.f32.mrb[0].mxu0
    %v2942 = vadd.f32 0.0, %v2941
    %v2943 = vpop.f32.mrb[0].mxu0
    %2944 = vmatprep.mubr.f32.mxu0 0.0
    %2945 = vmatmul.mubr.f32.gmra.mrb[0].mxu0 %v2863
    %v2946 = vpop.f32.mrb[0].mxu0
    %v2947 = vadd.f32 0.0, %v2946
    %v2948 = vpop.f32.mrb[0].mxu0
    %2949 = vdwg.mxu0
    %v2950 = vadd.f32 %v2650, %v2932
    %v2951 = vadd.f32 %v2651, %v2937
    %v2952 = vadd.f32 %v2652, %v2942
    %v2953 = vadd.f32 %v2653, %v2947
    %s2954 = scalar_lea.vmem %s5, 2752
    %v2955 = vld [vmem:[%s2954] sm:$0xff]
    %v2956 = vld [vmem:[%s2954 + $0x8] sm:$0xff]
    %v2957 = vld [vmem:[%s2954 + $0x10] sm:$0xff]
    %v2958 = vld [vmem:[%s2954 + $0x18] sm:$0xff]
    %v2959 = vld [vmem:[%s2954 + $0x20] sm:$0xff]
    %v2960 = vld [vmem:[%s2954 + $0x28] sm:$0xff]
    %v2961 = vld [vmem:[%s2954 + $0x30] sm:$0xff]
    %v2962 = vld [vmem:[%s2954 + $0x38] sm:$0xff]
    %v2963 = vld [vmem:[%s2954 + $0x40] sm:$0xff]
    %v2964 = vld [vmem:[%s2954 + $0x48] sm:$0xff]
    %v2965 = vld [vmem:[%s2954 + $0x50] sm:$0xff]
    %v2966 = vld [vmem:[%s2954 + $0x58] sm:$0xff]
    %v2967 = vld [vmem:[%s2954 + $0x60] sm:$0xff]
    %v2968 = vld [vmem:[%s2954 + $0x68] sm:$0xff]
    %v2969 = vld [vmem:[%s2954 + $0x70] sm:$0xff]
    %v2970 = vld [vmem:[%s2954 + $0x78] sm:$0xff]
    %v2971 = vld [vmem:[%s2954 + $0x80] sm:$0xff]
    %v2972 = vld [vmem:[%s2954 + $0x88] sm:$0xff]
    %v2973 = vld [vmem:[%s2954 + $0x90] sm:$0xff]
    %v2974 = vld [vmem:[%s2954 + $0x98] sm:$0xff]
    %v2975 = vld [vmem:[%s2954 + $0xa0] sm:$0xff]
    %v2976 = vld [vmem:[%s2954 + $0xa8] sm:$0xff]
    %v2977 = vld [vmem:[%s2954 + $0xb0] sm:$0xff]
    %v2978 = vld [vmem:[%s2954 + $0xb8] sm:$0xff]
    %v2979 = vld [vmem:[%s2954 + $0xc0] sm:$0xff]
    %v2980 = vld [vmem:[%s2954 + $0xc8] sm:$0xff]
    %v2981 = vld [vmem:[%s2954 + $0xd0] sm:$0xff]
    %v2982 = vld [vmem:[%s2954 + $0xd8] sm:$0xff]
    %v2983 = vld [vmem:[%s2954 + $0xe0] sm:$0xff]
    %v2984 = vld [vmem:[%s2954 + $0xe8] sm:$0xff]
    %v2985 = vld [vmem:[%s2954 + $0xf0] sm:$0xff]
    %v2986 = vld [vmem:[%s2954 + $0xf8] sm:$0xff]
    %v2987 = vld [vmem:[%s2954 + $0x100] sm:$0xff]
    %v2988 = vld [vmem:[%s2954 + $0x108] sm:$0xff]
    %v2989 = vld [vmem:[%s2954 + $0x110] sm:$0xff]
    %v2990 = vld [vmem:[%s2954 + $0x118] sm:$0xff]
    %v2991 = vld [vmem:[%s2954 + $0x120] sm:$0xff]
    %v2992 = vld [vmem:[%s2954 + $0x128] sm:$0xff]
    %v2993 = vld [vmem:[%s2954 + $0x130] sm:$0xff]
    %v2994 = vld [vmem:[%s2954 + $0x138] sm:$0xff]
    %v2995 = vld [vmem:[%s2954 + $0x140] sm:$0xff]
    %v2996 = vld [vmem:[%s2954 + $0x148] sm:$0xff]
    %v2997 = vld [vmem:[%s2954 + $0x150] sm:$0xff]
    %2998 = vmatprep.subr.mxu0 0.0
    %2999 = vmatpush1.msra.mxu0 %v2955
    %3000 = vmatprep.subr.mxu0 0.0
    %3001 = vmatpush1.msra.mxu0 %v2956
    %3002 = vmatprep.subr.mxu0 0.0
    %3003 = vmatpush1.msra.mxu0 %v2957
    %3004 = vmatprep.subr.mxu0 0.0
    %3005 = vmatpush1.msra.mxu0 %v2958
    %3006 = vmatprep.subr.mxu0 0.0
    %3007 = vmatpush1.msra.mxu0 %v2959
    %3008 = vmatprep.subr.mxu0 0.0
    %3009 = vmatpush1.msra.mxu0 %v2960
    %3010 = vmatprep.subr.mxu0 0.0
    %3011 = vmatpush1.msra.mxu0 %v2961
    %3012 = vmatprep.subr.mxu0 0.0
    %3013 = vmatpush1.msra.mxu0 %v2962
    %3014 = vmatprep.subr.mxu0 0.0
    %3015 = vmatpush1.msra.mxu0 %v2963
    %3016 = vmatprep.subr.mxu0 0.0
    %3017 = vmatpush1.msra.mxu0 %v2964
    %3018 = vmatprep.subr.mxu0 0.0
    %3019 = vmatpush1.msra.mxu0 %v2965
    %3020 = vmatprep.subr.mxu0 0.0
    %3021 = vmatpush1.msra.mxu0 %v2966
    %3022 = vmatprep.subr.mxu0 0.0
    %3023 = vmatpush1.msra.mxu0 %v2967
    %3024 = vmatprep.subr.mxu0 0.0
    %3025 = vmatpush1.msra.mxu0 %v2968
    %3026 = vmatprep.subr.mxu0 0.0
    %3027 = vmatpush1.msra.mxu0 %v2969
    %3028 = vmatprep.subr.mxu0 0.0
    %3029 = vmatpush1.msra.mxu0 %v2970
    %3030 = vmatprep.subr.mxu0 0.0
    %3031 = vmatpush1.msra.mxu0 %v2971
    %3032 = vmatprep.subr.mxu0 0.0
    %3033 = vmatpush1.msra.mxu0 %v2972
    %3034 = vmatprep.subr.mxu0 0.0
    %3035 = vmatpush1.msra.mxu0 %v2973
    %3036 = vmatprep.subr.mxu0 0.0
    %3037 = vmatpush1.msra.mxu0 %v2974
    %3038 = vmatprep.subr.mxu0 0.0
    %3039 = vmatpush1.msra.mxu0 %v2975
    %3040 = vmatprep.subr.mxu0 0.0
    %3041 = vmatpush1.msra.mxu0 %v2976
    %3042 = vmatprep.subr.mxu0 0.0
    %3043 = vmatpush1.msra.mxu0 %v2977
    %3044 = vmatprep.subr.mxu0 0.0
    %3045 = vmatpush1.msra.mxu0 %v2978
    %3046 = vmatprep.subr.mxu0 0.0
    %3047 = vmatpush1.msra.mxu0 %v2979
    %3048 = vmatprep.subr.mxu0 0.0
    %3049 = vmatpush1.msra.mxu0 %v2980
    %3050 = vmatprep.subr.mxu0 0.0
    %3051 = vmatpush1.msra.mxu0 %v2981
    %3052 = vmatprep.subr.mxu0 0.0
    %3053 = vmatpush1.msra.mxu0 %v2982
    %3054 = vmatprep.subr.mxu0 0.0
    %3055 = vmatpush1.msra.mxu0 %v2983
    %3056 = vmatprep.subr.mxu0 0.0
    %3057 = vmatpush1.msra.mxu0 %v2984
    %3058 = vmatprep.subr.mxu0 0.0
    %3059 = vmatpush1.msra.mxu0 %v2985
    %3060 = vmatprep.subr.mxu0 0.0
    %3061 = vmatpush1.msra.mxu0 %v2986
    %3062 = vmatprep.mubr.f32.mxu0 %v552
    %3063 = vmatmul.mubr.f32.gmra.mrb[0].mxu0 %v551
    %v3064 = vpop.f32.mrb[0].mxu0
    %v3065 = vadd.f32 0.0, %v3064
    %v3066 = vpop.f32.mrb[0].mxu0
    %3067 = vmatprep.mubr.f32.mxu0 %v555
    %3068 = vmatmul.mubr.f32.gmra.mrb[0].mxu0 %v554
    %v3069 = vpop.f32.mrb[0].mxu0
    %v3070 = vadd.f32 0.0, %v3069
    %v3071 = vpop.f32.mrb[0].mxu0
    %3072 = vdwg.mxu0
    %3073 = vmatprep.subr.mxu0 0.0
    %3074 = vmatpush1.msra.mxu0 %v2987
    %3075 = vmatprep.subr.mxu0 0.0
    %3076 = vmatpush1.msra.mxu0 %v2988
    %3077 = vmatprep.subr.mxu0 0.0
    %3078 = vmatpush1.msra.mxu0 %v2989
    %3079 = vmatprep.subr.mxu0 0.0
    %3080 = vmatpush1.msra.mxu0 %v2990
    %3081 = vmatprep.subr.mxu0 0.0
    %3082 = vmatpush1.msra.mxu0 %v2991
    %3083 = vmatprep.subr.mxu0 0.0
    %3084 = vmatpush1.msra.mxu0 %v2992
    %3085 = vmatprep.subr.mxu0 0.0
    %3086 = vmatpush1.msra.mxu0 %v2993
    %3087 = vmatprep.subr.mxu0 0.0
    %3088 = vmatpush1.msra.mxu0 %v2994
    %3089 = vmatprep.subr.mxu0 0.0
    %3090 = vmatpush1.msra.mxu0 %v2995
    %3091 = vmatprep.subr.mxu0 0.0
    %3092 = vmatpush1.msra.mxu0 %v2996
    %3093 = vmatprep.subr.mxu0 0.0
    %3094 = vmatpush1.msra.mxu0 %v2997
    %3095 = vmatprep.subr.mxu0 0.0
    %3096 = vmatpush1.msra.mxu0 0.0
    %3097 = vmatprep.subr.mxu0 0.0
    %3098 = vmatpush1.msra.mxu0 0.0
    %3099 = vmatprep.subr.mxu0 0.0
    %3100 = vmatpush1.msra.mxu0 0.0
    %3101 = vmatprep.subr.mxu0 0.0
    %3102 = vmatpush1.msra.mxu0 0.0
    %3103 = vmatprep.subr.mxu0 0.0
    %3104 = vmatpush1.msra.mxu0 0.0
    %3105 = vmatprep.subr.mxu0 0.0
    %3106 = vmatpush1.msra.mxu0 0.0
    %3107 = vmatprep.subr.mxu0 0.0
    %3108 = vmatpush1.msra.mxu0 0.0
    %3109 = vmatprep.subr.mxu0 0.0
    %3110 = vmatpush1.msra.mxu0 0.0
    %3111 = vmatprep.subr.mxu0 0.0
    %3112 = vmatpush1.msra.mxu0 0.0
    %3113 = vmatprep.subr.mxu0 0.0
    %3114 = vmatpush1.msra.mxu0 0.0
    %3115 = vmatprep.subr.mxu0 0.0
    %3116 = vmatpush1.msra.mxu0 0.0
    %3117 = vmatprep.subr.mxu0 0.0
    %3118 = vmatpush1.msra.mxu0 0.0
    %3119 = vmatprep.subr.mxu0 0.0
    %3120 = vmatpush1.msra.mxu0 0.0
    %3121 = vmatprep.subr.mxu0 0.0
    %3122 = vmatpush1.msra.mxu0 0.0
    %3123 = vmatprep.subr.mxu0 0.0
    %3124 = vmatpush1.msra.mxu0 0.0
    %3125 = vmatprep.subr.mxu0 0.0
    %3126 = vmatpush1.msra.mxu0 0.0
    %3127 = vmatprep.subr.mxu0 0.0
    %3128 = vmatpush1.msra.mxu0 0.0
    %3129 = vmatprep.subr.mxu0 0.0
    %3130 = vmatpush1.msra.mxu0 0.0
    %3131 = vmatprep.subr.mxu0 0.0
    %3132 = vmatpush1.msra.mxu0 0.0
    %3133 = vmatprep.subr.mxu0 0.0
    %3134 = vmatpush1.msra.mxu0 0.0
    %3135 = vmatprep.subr.mxu0 0.0
    %3136 = vmatpush1.msra.mxu0 0.0
    %3137 = vmatprep.mubr.f32.mxu0 0.0
    %3138 = vmatmul.mubr.f32.gmra.mrb[0].mxu0 %v601
    %v3139 = vpop.f32.mrb[0].mxu0
    %v3140 = vadd.f32 %v3065, %v3139
    %v3141 = vpop.f32.mrb[0].mxu0
    %3142 = vmatprep.mubr.f32.mxu0 0.0
    %3143 = vmatmul.mubr.f32.gmra.mrb[0].mxu0 %v604
    %v3144 = vpop.f32.mrb[0].mxu0
    %v3145 = vadd.f32 %v3070, %v3144
    %v3146 = vpop.f32.mrb[0].mxu0
    %3147 = vdwg.mxu0
    %s3148 = scalar_lea.vmem %s4, 256
    %v3149 = vld [vmem:[%s3148] sm:$0xff]
    %v3150 = vld [vmem:[%s3148 + $0x8] sm:$0xff]
    %v3151 = vld [vmem:[%s3148 + $0x10] sm:$0xff]
    %v3152 = vld [vmem:[%s3148 + $0x18] sm:$0xff]
    %v3154 = vsel %vm959, %v3149, 0
    %v3157 = vsel %vm959, %v3150, 0
    %v3160 = vsel %vm959, %v3151, 0
    %v3163 = vsel %vm959, %v3152, 0
    %3165 = vmatprep.subr.mxu0 0.0
    %3166 = vmatpush1.msra.mxu0 %v3140
    %3167 = vmatprep.subr.mxu0 0.0
    %3168 = vmatpush1.msra.mxu0 %v3145
    %3169 = vmatprep.subr.mxu0 0.0
    %3170 = vmatpush1.msra.mxu0 0.0
    %3171 = vmatprep.subr.mxu0 0.0
    %3172 = vmatpush1.msra.mxu0 0.0
    %3173 = vmatprep.subr.mxu0 0.0
    %3174 = vmatpush1.msra.mxu0 0.0
    %3175 = vmatprep.subr.mxu0 0.0
    %3176 = vmatpush1.msra.mxu0 0.0
    %3177 = vmatprep.subr.mxu0 0.0
    %3178 = vmatpush1.msra.mxu0 0.0
    %3179 = vmatprep.subr.mxu0 0.0
    %3180 = vmatpush1.msra.mxu0 0.0
    %3181 = vmatprep.subr.mxu0 0.0
    %3182 = vmatpush1.msra.mxu0 0.0
    %3183 = vmatprep.subr.mxu0 0.0
    %3184 = vmatpush1.msra.mxu0 0.0
    %3185 = vmatprep.subr.mxu0 0.0
    %3186 = vmatpush1.msra.mxu0 0.0
    %3187 = vmatprep.subr.mxu0 0.0
    %3188 = vmatpush1.msra.mxu0 0.0
    %3189 = vmatprep.subr.mxu0 0.0
    %3190 = vmatpush1.msra.mxu0 0.0
    %3191 = vmatprep.subr.mxu0 0.0
    %3192 = vmatpush1.msra.mxu0 0.0
    %3193 = vmatprep.subr.mxu0 0.0
    %3194 = vmatpush1.msra.mxu0 0.0
    %3195 = vmatprep.subr.mxu0 0.0
    %3196 = vmatpush1.msra.mxu0 0.0
    %3197 = vmatprep.subr.mxu0 0.0
    %3198 = vmatpush1.msra.mxu0 0.0
    %3199 = vmatprep.subr.mxu0 0.0
    %3200 = vmatpush1.msra.mxu0 0.0
    %3201 = vmatprep.subr.mxu0 0.0
    %3202 = vmatpush1.msra.mxu0 0.0
    %3203 = vmatprep.subr.mxu0 0.0
    %3204 = vmatpush1.msra.mxu0 0.0
    %3205 = vmatprep.subr.mxu0 0.0
    %3206 = vmatpush1.msra.mxu0 0.0
    %3207 = vmatprep.subr.mxu0 0.0
    %3208 = vmatpush1.msra.mxu0 0.0
    %3209 = vmatprep.subr.mxu0 0.0
    %3210 = vmatpush1.msra.mxu0 0.0
    %3211 = vmatprep.subr.mxu0 0.0
    %3212 = vmatpush1.msra.mxu0 0.0
    %3213 = vmatprep.subr.mxu0 0.0
    %3214 = vmatpush1.msra.mxu0 0.0
    %3215 = vmatprep.subr.mxu0 0.0
    %3216 = vmatpush1.msra.mxu0 0.0
    %3217 = vmatprep.subr.mxu0 0.0
    %3218 = vmatpush1.msra.mxu0 0.0
    %3219 = vmatprep.subr.mxu0 0.0
    %3220 = vmatpush1.msra.mxu0 0.0
    %3221 = vmatprep.subr.mxu0 0.0
    %3222 = vmatpush1.msra.mxu0 0.0
    %3223 = vmatprep.subr.mxu0 0.0
    %3224 = vmatpush1.msra.mxu0 0.0
    %3225 = vmatprep.subr.mxu0 0.0
    %3226 = vmatpush1.msra.mxu0 0.0
    %3227 = vmatprep.subr.mxu0 0.0
    %3228 = vmatpush1.msra.mxu0 0.0
    %3229 = vmatprep.mubr.f32.mxu0 0.0
    %3230 = vmatmul.mubr.f32.gmra.mrb[0].mxu0 %v3154
    %v3231 = vpop.f32.mrb[0].mxu0
    %v3232 = vadd.f32 0.0, %v3231
    %v3233 = vpop.f32.mrb[0].mxu0
    %3234 = vmatprep.mubr.f32.mxu0 0.0
    %3235 = vmatmul.mubr.f32.gmra.mrb[0].mxu0 %v3157
    %v3236 = vpop.f32.mrb[0].mxu0
    %v3237 = vadd.f32 0.0, %v3236
    %v3238 = vpop.f32.mrb[0].mxu0
    %3239 = vmatprep.mubr.f32.mxu0 0.0
    %3240 = vmatmul.mubr.f32.gmra.mrb[0].mxu0 %v3160
    %v3241 = vpop.f32.mrb[0].mxu0
    %v3242 = vadd.f32 0.0, %v3241
    %v3243 = vpop.f32.mrb[0].mxu0
    %3244 = vmatprep.mubr.f32.mxu0 0.0
    %3245 = vmatmul.mubr.f32.gmra.mrb[0].mxu0 %v3163
    %v3246 = vpop.f32.mrb[0].mxu0
    %v3247 = vadd.f32 0.0, %v3246
    %v3248 = vpop.f32.mrb[0].mxu0
    %3249 = vdwg.mxu0
    %v3250 = vadd.f32 %v2950, %v3232
    %v3251 = vadd.f32 %v2951, %v3237
    %v3252 = vadd.f32 %v2952, %v3242
    %v3253 = vadd.f32 %v2953, %v3247
    %s3254 = scalar_lea.vmem %s5, 3096
    %v3255 = vld [vmem:[%s3254] sm:$0xff]
    %v3256 = vld [vmem:[%s3254 + $0x8] sm:$0xff]
    %v3257 = vld [vmem:[%s3254 + $0x10] sm:$0xff]
    %v3258 = vld [vmem:[%s3254 + $0x18] sm:$0xff]
    %v3259 = vld [vmem:[%s3254 + $0x20] sm:$0xff]
    %v3260 = vld [vmem:[%s3254 + $0x28] sm:$0xff]
    %v3261 = vld [vmem:[%s3254 + $0x30] sm:$0xff]
    %v3262 = vld [vmem:[%s3254 + $0x38] sm:$0xff]
    %v3263 = vld [vmem:[%s3254 + $0x40] sm:$0xff]
    %v3264 = vld [vmem:[%s3254 + $0x48] sm:$0xff]
    %v3265 = vld [vmem:[%s3254 + $0x50] sm:$0xff]
    %v3266 = vld [vmem:[%s3254 + $0x58] sm:$0xff]
    %v3267 = vld [vmem:[%s3254 + $0x60] sm:$0xff]
    %v3268 = vld [vmem:[%s3254 + $0x68] sm:$0xff]
    %v3269 = vld [vmem:[%s3254 + $0x70] sm:$0xff]
    %v3270 = vld [vmem:[%s3254 + $0x78] sm:$0xff]
    %v3271 = vld [vmem:[%s3254 + $0x80] sm:$0xff]
    %v3272 = vld [vmem:[%s3254 + $0x88] sm:$0xff]
    %v3273 = vld [vmem:[%s3254 + $0x90] sm:$0xff]
    %v3274 = vld [vmem:[%s3254 + $0x98] sm:$0xff]
    %v3275 = vld [vmem:[%s3254 + $0xa0] sm:$0xff]
    %v3276 = vld [vmem:[%s3254 + $0xa8] sm:$0xff]
    %v3277 = vld [vmem:[%s3254 + $0xb0] sm:$0xff]
    %v3278 = vld [vmem:[%s3254 + $0xb8] sm:$0xff]
    %v3279 = vld [vmem:[%s3254 + $0xc0] sm:$0xff]
    %v3280 = vld [vmem:[%s3254 + $0xc8] sm:$0xff]
    %v3281 = vld [vmem:[%s3254 + $0xd0] sm:$0xff]
    %v3282 = vld [vmem:[%s3254 + $0xd8] sm:$0xff]
    %v3283 = vld [vmem:[%s3254 + $0xe0] sm:$0xff]
    %v3284 = vld [vmem:[%s3254 + $0xe8] sm:$0xff]
    %v3285 = vld [vmem:[%s3254 + $0xf0] sm:$0xff]
    %v3286 = vld [vmem:[%s3254 + $0xf8] sm:$0xff]
    %v3287 = vld [vmem:[%s3254 + $0x100] sm:$0xff]
    %v3288 = vld [vmem:[%s3254 + $0x108] sm:$0xff]
    %v3289 = vld [vmem:[%s3254 + $0x110] sm:$0xff]
    %v3290 = vld [vmem:[%s3254 + $0x118] sm:$0xff]
    %v3291 = vld [vmem:[%s3254 + $0x120] sm:$0xff]
    %v3292 = vld [vmem:[%s3254 + $0x128] sm:$0xff]
    %v3293 = vld [vmem:[%s3254 + $0x130] sm:$0xff]
    %v3294 = vld [vmem:[%s3254 + $0x138] sm:$0xff]
    %v3295 = vld [vmem:[%s3254 + $0x140] sm:$0xff]
    %v3296 = vld [vmem:[%s3254 + $0x148] sm:$0xff]
    %v3297 = vld [vmem:[%s3254 + $0x150] sm:$0xff]
    %3298 = vmatprep.subr.mxu0 0.0
    %3299 = vmatpush1.msra.mxu0 %v3255
    %3300 = vmatprep.subr.mxu0 0.0
    %3301 = vmatpush1.msra.mxu0 %v3256
    %3302 = vmatprep.subr.mxu0 0.0
    %3303 = vmatpush1.msra.mxu0 %v3257
    %3304 = vmatprep.subr.mxu0 0.0
    %3305 = vmatpush1.msra.mxu0 %v3258
    %3306 = vmatprep.subr.mxu0 0.0
    %3307 = vmatpush1.msra.mxu0 %v3259
    %3308 = vmatprep.subr.mxu0 0.0
    %3309 = vmatpush1.msra.mxu0 %v3260
    %3310 = vmatprep.subr.mxu0 0.0
    %3311 = vmatpush1.msra.mxu0 %v3261
    %3312 = vmatprep.subr.mxu0 0.0
    %3313 = vmatpush1.msra.mxu0 %v3262
    %3314 = vmatprep.subr.mxu0 0.0
    %3315 = vmatpush1.msra.mxu0 %v3263
    %3316 = vmatprep.subr.mxu0 0.0
    %3317 = vmatpush1.msra.mxu0 %v3264
    %3318 = vmatprep.subr.mxu0 0.0
    %3319 = vmatpush1.msra.mxu0 %v3265
    %3320 = vmatprep.subr.mxu0 0.0
    %3321 = vmatpush1.msra.mxu0 %v3266
    %3322 = vmatprep.subr.mxu0 0.0
    %3323 = vmatpush1.msra.mxu0 %v3267
    %3324 = vmatprep.subr.mxu0 0.0
    %3325 = vmatpush1.msra.mxu0 %v3268
    %3326 = vmatprep.subr.mxu0 0.0
    %3327 = vmatpush1.msra.mxu0 %v3269
    %3328 = vmatprep.subr.mxu0 0.0
    %3329 = vmatpush1.msra.mxu0 %v3270
    %3330 = vmatprep.subr.mxu0 0.0
    %3331 = vmatpush1.msra.mxu0 %v3271
    %3332 = vmatprep.subr.mxu0 0.0
    %3333 = vmatpush1.msra.mxu0 %v3272
    %3334 = vmatprep.subr.mxu0 0.0
    %3335 = vmatpush1.msra.mxu0 %v3273
    %3336 = vmatprep.subr.mxu0 0.0
    %3337 = vmatpush1.msra.mxu0 %v3274
    %3338 = vmatprep.subr.mxu0 0.0
    %3339 = vmatpush1.msra.mxu0 %v3275
    %3340 = vmatprep.subr.mxu0 0.0
    %3341 = vmatpush1.msra.mxu0 %v3276
    %3342 = vmatprep.subr.mxu0 0.0
    %3343 = vmatpush1.msra.mxu0 %v3277
    %3344 = vmatprep.subr.mxu0 0.0
    %3345 = vmatpush1.msra.mxu0 %v3278
    %3346 = vmatprep.subr.mxu0 0.0
    %3347 = vmatpush1.msra.mxu0 %v3279
    %3348 = vmatprep.subr.mxu0 0.0
    %3349 = vmatpush1.msra.mxu0 %v3280
    %3350 = vmatprep.subr.mxu0 0.0
    %3351 = vmatpush1.msra.mxu0 %v3281
    %3352 = vmatprep.subr.mxu0 0.0
    %3353 = vmatpush1.msra.mxu0 %v3282
    %3354 = vmatprep.subr.mxu0 0.0
    %3355 = vmatpush1.msra.mxu0 %v3283
    %3356 = vmatprep.subr.mxu0 0.0
    %3357 = vmatpush1.msra.mxu0 %v3284
    %3358 = vmatprep.subr.mxu0 0.0
    %3359 = vmatpush1.msra.mxu0 %v3285
    %3360 = vmatprep.subr.mxu0 0.0
    %3361 = vmatpush1.msra.mxu0 %v3286
    %3362 = vmatprep.mubr.f32.mxu0 %v552
    %3363 = vmatmul.mubr.f32.gmra.mrb[0].mxu0 %v551
    %v3364 = vpop.f32.mrb[0].mxu0
    %v3365 = vadd.f32 0.0, %v3364
    %v3366 = vpop.f32.mrb[0].mxu0
    %3367 = vmatprep.mubr.f32.mxu0 %v555
    %3368 = vmatmul.mubr.f32.gmra.mrb[0].mxu0 %v554
    %v3369 = vpop.f32.mrb[0].mxu0
    %v3370 = vadd.f32 0.0, %v3369
    %v3371 = vpop.f32.mrb[0].mxu0
    %3372 = vdwg.mxu0
    %3373 = vmatprep.subr.mxu0 0.0
    %3374 = vmatpush1.msra.mxu0 %v3287
    %3375 = vmatprep.subr.mxu0 0.0
    %3376 = vmatpush1.msra.mxu0 %v3288
    %3377 = vmatprep.subr.mxu0 0.0
    %3378 = vmatpush1.msra.mxu0 %v3289
    %3379 = vmatprep.subr.mxu0 0.0
    %3380 = vmatpush1.msra.mxu0 %v3290
    %3381 = vmatprep.subr.mxu0 0.0
    %3382 = vmatpush1.msra.mxu0 %v3291
    %3383 = vmatprep.subr.mxu0 0.0
    %3384 = vmatpush1.msra.mxu0 %v3292
    %3385 = vmatprep.subr.mxu0 0.0
    %3386 = vmatpush1.msra.mxu0 %v3293
    %3387 = vmatprep.subr.mxu0 0.0
    %3388 = vmatpush1.msra.mxu0 %v3294
    %3389 = vmatprep.subr.mxu0 0.0
    %3390 = vmatpush1.msra.mxu0 %v3295
    %3391 = vmatprep.subr.mxu0 0.0
    %3392 = vmatpush1.msra.mxu0 %v3296
    %3393 = vmatprep.subr.mxu0 0.0
    %3394 = vmatpush1.msra.mxu0 %v3297
    %3395 = vmatprep.subr.mxu0 0.0
    %3396 = vmatpush1.msra.mxu0 0.0
    %3397 = vmatprep.subr.mxu0 0.0
    %3398 = vmatpush1.msra.mxu0 0.0
    %3399 = vmatprep.subr.mxu0 0.0
    %3400 = vmatpush1.msra.mxu0 0.0
    %3401 = vmatprep.subr.mxu0 0.0
    %3402 = vmatpush1.msra.mxu0 0.0
    %3403 = vmatprep.subr.mxu0 0.0
    %3404 = vmatpush1.msra.mxu0 0.0
    %3405 = vmatprep.subr.mxu0 0.0
    %3406 = vmatpush1.msra.mxu0 0.0
    %3407 = vmatprep.subr.mxu0 0.0
    %3408 = vmatpush1.msra.mxu0 0.0
    %3409 = vmatprep.subr.mxu0 0.0
    %3410 = vmatpush1.msra.mxu0 0.0
    %3411 = vmatprep.subr.mxu0 0.0
    %3412 = vmatpush1.msra.mxu0 0.0
    %3413 = vmatprep.subr.mxu0 0.0
    %3414 = vmatpush1.msra.mxu0 0.0
    %3415 = vmatprep.subr.mxu0 0.0
    %3416 = vmatpush1.msra.mxu0 0.0
    %3417 = vmatprep.subr.mxu0 0.0
    %3418 = vmatpush1.msra.mxu0 0.0
    %3419 = vmatprep.subr.mxu0 0.0
    %3420 = vmatpush1.msra.mxu0 0.0
    %3421 = vmatprep.subr.mxu0 0.0
    %3422 = vmatpush1.msra.mxu0 0.0
    %3423 = vmatprep.subr.mxu0 0.0
    %3424 = vmatpush1.msra.mxu0 0.0
    %3425 = vmatprep.subr.mxu0 0.0
    %3426 = vmatpush1.msra.mxu0 0.0
    %3427 = vmatprep.subr.mxu0 0.0
    %3428 = vmatpush1.msra.mxu0 0.0
    %3429 = vmatprep.subr.mxu0 0.0
    %3430 = vmatpush1.msra.mxu0 0.0
    %3431 = vmatprep.subr.mxu0 0.0
    %3432 = vmatpush1.msra.mxu0 0.0
    %3433 = vmatprep.subr.mxu0 0.0
    %3434 = vmatpush1.msra.mxu0 0.0
    %3435 = vmatprep.subr.mxu0 0.0
    %3436 = vmatpush1.msra.mxu0 0.0
    %3437 = vmatprep.mubr.f32.mxu0 0.0
    %3438 = vmatmul.mubr.f32.gmra.mrb[0].mxu0 %v601
    %v3439 = vpop.f32.mrb[0].mxu0
    %v3440 = vadd.f32 %v3365, %v3439
    %v3441 = vpop.f32.mrb[0].mxu0
    %3442 = vmatprep.mubr.f32.mxu0 0.0
    %3443 = vmatmul.mubr.f32.gmra.mrb[0].mxu0 %v604
    %v3444 = vpop.f32.mrb[0].mxu0
    %v3445 = vadd.f32 %v3370, %v3444
    %v3446 = vpop.f32.mrb[0].mxu0
    %3447 = vdwg.mxu0
    %s3448 = scalar_lea.vmem %s4, 288
    %v3449 = vld [vmem:[%s3448] sm:$0xff]
    %v3450 = vld [vmem:[%s3448 + $0x8] sm:$0xff]
    %v3451 = vld [vmem:[%s3448 + $0x10] sm:$0xff]
    %v3452 = vld [vmem:[%s3448 + $0x18] sm:$0xff]
    %v3454 = vsel %vm959, %v3449, 0
    %v3457 = vsel %vm959, %v3450, 0
    %v3460 = vsel %vm959, %v3451, 0
    %v3463 = vsel %vm959, %v3452, 0
    %3465 = vmatprep.subr.mxu0 0.0
    %3466 = vmatpush1.msra.mxu0 %v3440
    %3467 = vmatprep.subr.mxu0 0.0
    %3468 = vmatpush1.msra.mxu0 %v3445
    %3469 = vmatprep.subr.mxu0 0.0
    %3470 = vmatpush1.msra.mxu0 0.0
    %3471 = vmatprep.subr.mxu0 0.0
    %3472 = vmatpush1.msra.mxu0 0.0
    %3473 = vmatprep.subr.mxu0 0.0
    %3474 = vmatpush1.msra.mxu0 0.0
    %3475 = vmatprep.subr.mxu0 0.0
    %3476 = vmatpush1.msra.mxu0 0.0
    %3477 = vmatprep.subr.mxu0 0.0
    %3478 = vmatpush1.msra.mxu0 0.0
    %3479 = vmatprep.subr.mxu0 0.0
    %3480 = vmatpush1.msra.mxu0 0.0
    %3481 = vmatprep.subr.mxu0 0.0
    %3482 = vmatpush1.msra.mxu0 0.0
    %3483 = vmatprep.subr.mxu0 0.0
    %3484 = vmatpush1.msra.mxu0 0.0
    %3485 = vmatprep.subr.mxu0 0.0
    %3486 = vmatpush1.msra.mxu0 0.0
    %3487 = vmatprep.subr.mxu0 0.0
    %3488 = vmatpush1.msra.mxu0 0.0
    %3489 = vmatprep.subr.mxu0 0.0
    %3490 = vmatpush1.msra.mxu0 0.0
    %3491 = vmatprep.subr.mxu0 0.0
    %3492 = vmatpush1.msra.mxu0 0.0
    %3493 = vmatprep.subr.mxu0 0.0
    %3494 = vmatpush1.msra.mxu0 0.0
    %3495 = vmatprep.subr.mxu0 0.0
    %3496 = vmatpush1.msra.mxu0 0.0
    %3497 = vmatprep.subr.mxu0 0.0
    %3498 = vmatpush1.msra.mxu0 0.0
    %3499 = vmatprep.subr.mxu0 0.0
    %3500 = vmatpush1.msra.mxu0 0.0
    %3501 = vmatprep.subr.mxu0 0.0
    %3502 = vmatpush1.msra.mxu0 0.0
    %3503 = vmatprep.subr.mxu0 0.0
    %3504 = vmatpush1.msra.mxu0 0.0
    %3505 = vmatprep.subr.mxu0 0.0
    %3506 = vmatpush1.msra.mxu0 0.0
    %3507 = vmatprep.subr.mxu0 0.0
    %3508 = vmatpush1.msra.mxu0 0.0
    %3509 = vmatprep.subr.mxu0 0.0
    %3510 = vmatpush1.msra.mxu0 0.0
    %3511 = vmatprep.subr.mxu0 0.0
    %3512 = vmatpush1.msra.mxu0 0.0
    %3513 = vmatprep.subr.mxu0 0.0
    %3514 = vmatpush1.msra.mxu0 0.0
    %3515 = vmatprep.subr.mxu0 0.0
    %3516 = vmatpush1.msra.mxu0 0.0
    %3517 = vmatprep.subr.mxu0 0.0
    %3518 = vmatpush1.msra.mxu0 0.0
    %3519 = vmatprep.subr.mxu0 0.0
    %3520 = vmatpush1.msra.mxu0 0.0
    %3521 = vmatprep.subr.mxu0 0.0
    %3522 = vmatpush1.msra.mxu0 0.0
    %3523 = vmatprep.subr.mxu0 0.0
    %3524 = vmatpush1.msra.mxu0 0.0
    %3525 = vmatprep.subr.mxu0 0.0
    %3526 = vmatpush1.msra.mxu0 0.0
    %3527 = vmatprep.subr.mxu0 0.0
    %3528 = vmatpush1.msra.mxu0 0.0
    %3529 = vmatprep.mubr.f32.mxu0 0.0
    %3530 = vmatmul.mubr.f32.gmra.mrb[0].mxu0 %v3454
    %v3531 = vpop.f32.mrb[0].mxu0
    %v3532 = vadd.f32 0.0, %v3531
    %v3533 = vpop.f32.mrb[0].mxu0
    %3534 = vmatprep.mubr.f32.mxu0 0.0
    %3535 = vmatmul.mubr.f32.gmra.mrb[0].mxu0 %v3457
    %v3536 = vpop.f32.mrb[0].mxu0
    %v3537 = vadd.f32 0.0, %v3536
    %v3538 = vpop.f32.mrb[0].mxu0
    %3539 = vmatprep.mubr.f32.mxu0 0.0
    %3540 = vmatmul.mubr.f32.gmra.mrb[0].mxu0 %v3460
    %v3541 = vpop.f32.mrb[0].mxu0
    %v3542 = vadd.f32 0.0, %v3541
    %v3543 = vpop.f32.mrb[0].mxu0
    %3544 = vmatprep.mubr.f32.mxu0 0.0
    %3545 = vmatmul.mubr.f32.gmra.mrb[0].mxu0 %v3463
    %v3546 = vpop.f32.mrb[0].mxu0
    %v3547 = vadd.f32 0.0, %v3546
    %v3548 = vpop.f32.mrb[0].mxu0
    %3549 = vdwg.mxu0
    %v3550 = vadd.f32 %v3250, %v3532
    %v3551 = vadd.f32 %v3251, %v3537
    %v3552 = vadd.f32 %v3252, %v3542
    %v3553 = vadd.f32 %v3253, %v3547
    %s3554 = scalar_lea.vmem %s5, 3440
    %v3555 = vld [vmem:[%s3554] sm:$0xff]
    %v3556 = vld [vmem:[%s3554 + $0x8] sm:$0xff]
    %v3557 = vld [vmem:[%s3554 + $0x10] sm:$0xff]
    %v3558 = vld [vmem:[%s3554 + $0x18] sm:$0xff]
    %v3559 = vld [vmem:[%s3554 + $0x20] sm:$0xff]
    %v3560 = vld [vmem:[%s3554 + $0x28] sm:$0xff]
    %v3561 = vld [vmem:[%s3554 + $0x30] sm:$0xff]
    %v3562 = vld [vmem:[%s3554 + $0x38] sm:$0xff]
    %v3563 = vld [vmem:[%s3554 + $0x40] sm:$0xff]
    %v3564 = vld [vmem:[%s3554 + $0x48] sm:$0xff]
    %v3565 = vld [vmem:[%s3554 + $0x50] sm:$0xff]
    %v3566 = vld [vmem:[%s3554 + $0x58] sm:$0xff]
    %v3567 = vld [vmem:[%s3554 + $0x60] sm:$0xff]
    %v3568 = vld [vmem:[%s3554 + $0x68] sm:$0xff]
    %v3569 = vld [vmem:[%s3554 + $0x70] sm:$0xff]
    %v3570 = vld [vmem:[%s3554 + $0x78] sm:$0xff]
    %v3571 = vld [vmem:[%s3554 + $0x80] sm:$0xff]
    %v3572 = vld [vmem:[%s3554 + $0x88] sm:$0xff]
    %v3573 = vld [vmem:[%s3554 + $0x90] sm:$0xff]
    %v3574 = vld [vmem:[%s3554 + $0x98] sm:$0xff]
    %v3575 = vld [vmem:[%s3554 + $0xa0] sm:$0xff]
    %v3576 = vld [vmem:[%s3554 + $0xa8] sm:$0xff]
    %v3577 = vld [vmem:[%s3554 + $0xb0] sm:$0xff]
    %v3578 = vld [vmem:[%s3554 + $0xb8] sm:$0xff]
    %v3579 = vld [vmem:[%s3554 + $0xc0] sm:$0xff]
    %v3580 = vld [vmem:[%s3554 + $0xc8] sm:$0xff]
    %v3581 = vld [vmem:[%s3554 + $0xd0] sm:$0xff]
    %v3582 = vld [vmem:[%s3554 + $0xd8] sm:$0xff]
    %v3583 = vld [vmem:[%s3554 + $0xe0] sm:$0xff]
    %v3584 = vld [vmem:[%s3554 + $0xe8] sm:$0xff]
    %v3585 = vld [vmem:[%s3554 + $0xf0] sm:$0xff]
    %v3586 = vld [vmem:[%s3554 + $0xf8] sm:$0xff]
    %v3587 = vld [vmem:[%s3554 + $0x100] sm:$0xff]
    %v3588 = vld [vmem:[%s3554 + $0x108] sm:$0xff]
    %v3589 = vld [vmem:[%s3554 + $0x110] sm:$0xff]
    %v3590 = vld [vmem:[%s3554 + $0x118] sm:$0xff]
    %v3591 = vld [vmem:[%s3554 + $0x120] sm:$0xff]
    %v3592 = vld [vmem:[%s3554 + $0x128] sm:$0xff]
    %v3593 = vld [vmem:[%s3554 + $0x130] sm:$0xff]
    %v3594 = vld [vmem:[%s3554 + $0x138] sm:$0xff]
    %v3595 = vld [vmem:[%s3554 + $0x140] sm:$0xff]
    %v3596 = vld [vmem:[%s3554 + $0x148] sm:$0xff]
    %v3597 = vld [vmem:[%s3554 + $0x150] sm:$0xff]
    %3598 = vmatprep.subr.mxu0 0.0
    %3599 = vmatpush1.msra.mxu0 %v3555
    %3600 = vmatprep.subr.mxu0 0.0
    %3601 = vmatpush1.msra.mxu0 %v3556
    %3602 = vmatprep.subr.mxu0 0.0
    %3603 = vmatpush1.msra.mxu0 %v3557
    %3604 = vmatprep.subr.mxu0 0.0
    %3605 = vmatpush1.msra.mxu0 %v3558
    %3606 = vmatprep.subr.mxu0 0.0
    %3607 = vmatpush1.msra.mxu0 %v3559
    %3608 = vmatprep.subr.mxu0 0.0
    %3609 = vmatpush1.msra.mxu0 %v3560
    %3610 = vmatprep.subr.mxu0 0.0
    %3611 = vmatpush1.msra.mxu0 %v3561
    %3612 = vmatprep.subr.mxu0 0.0
    %3613 = vmatpush1.msra.mxu0 %v3562
    %3614 = vmatprep.subr.mxu0 0.0
    %3615 = vmatpush1.msra.mxu0 %v3563
    %3616 = vmatprep.subr.mxu0 0.0
    %3617 = vmatpush1.msra.mxu0 %v3564
    %3618 = vmatprep.subr.mxu0 0.0
    %3619 = vmatpush1.msra.mxu0 %v3565
    %3620 = vmatprep.subr.mxu0 0.0
    %3621 = vmatpush1.msra.mxu0 %v3566
    %3622 = vmatprep.subr.mxu0 0.0
    %3623 = vmatpush1.msra.mxu0 %v3567
    %3624 = vmatprep.subr.mxu0 0.0
    %3625 = vmatpush1.msra.mxu0 %v3568
    %3626 = vmatprep.subr.mxu0 0.0
    %3627 = vmatpush1.msra.mxu0 %v3569
    %3628 = vmatprep.subr.mxu0 0.0
    %3629 = vmatpush1.msra.mxu0 %v3570
    %3630 = vmatprep.subr.mxu0 0.0
    %3631 = vmatpush1.msra.mxu0 %v3571
    %3632 = vmatprep.subr.mxu0 0.0
    %3633 = vmatpush1.msra.mxu0 %v3572
    %3634 = vmatprep.subr.mxu0 0.0
    %3635 = vmatpush1.msra.mxu0 %v3573
    %3636 = vmatprep.subr.mxu0 0.0
    %3637 = vmatpush1.msra.mxu0 %v3574
    %3638 = vmatprep.subr.mxu0 0.0
    %3639 = vmatpush1.msra.mxu0 %v3575
    %3640 = vmatprep.subr.mxu0 0.0
    %3641 = vmatpush1.msra.mxu0 %v3576
    %3642 = vmatprep.subr.mxu0 0.0
    %3643 = vmatpush1.msra.mxu0 %v3577
    %3644 = vmatprep.subr.mxu0 0.0
    %3645 = vmatpush1.msra.mxu0 %v3578
    %3646 = vmatprep.subr.mxu0 0.0
    %3647 = vmatpush1.msra.mxu0 %v3579
    %3648 = vmatprep.subr.mxu0 0.0
    %3649 = vmatpush1.msra.mxu0 %v3580
    %3650 = vmatprep.subr.mxu0 0.0
    %3651 = vmatpush1.msra.mxu0 %v3581
    %3652 = vmatprep.subr.mxu0 0.0
    %3653 = vmatpush1.msra.mxu0 %v3582
    %3654 = vmatprep.subr.mxu0 0.0
    %3655 = vmatpush1.msra.mxu0 %v3583
    %3656 = vmatprep.subr.mxu0 0.0
    %3657 = vmatpush1.msra.mxu0 %v3584
    %3658 = vmatprep.subr.mxu0 0.0
    %3659 = vmatpush1.msra.mxu0 %v3585
    %3660 = vmatprep.subr.mxu0 0.0
    %3661 = vmatpush1.msra.mxu0 %v3586
    %3662 = vmatprep.mubr.f32.mxu0 %v552
    %3663 = vmatmul.mubr.f32.gmra.mrb[0].mxu0 %v551
    %v3664 = vpop.f32.mrb[0].mxu0
    %v3665 = vadd.f32 0.0, %v3664
    %v3666 = vpop.f32.mrb[0].mxu0
    %3667 = vmatprep.mubr.f32.mxu0 %v555
    %3668 = vmatmul.mubr.f32.gmra.mrb[0].mxu0 %v554
    %v3669 = vpop.f32.mrb[0].mxu0
    %v3670 = vadd.f32 0.0, %v3669
    %v3671 = vpop.f32.mrb[0].mxu0
    %3672 = vdwg.mxu0
    %3673 = vmatprep.subr.mxu0 0.0
    %3674 = vmatpush1.msra.mxu0 %v3587
    %3675 = vmatprep.subr.mxu0 0.0
    %3676 = vmatpush1.msra.mxu0 %v3588
    %3677 = vmatprep.subr.mxu0 0.0
    %3678 = vmatpush1.msra.mxu0 %v3589
    %3679 = vmatprep.subr.mxu0 0.0
    %3680 = vmatpush1.msra.mxu0 %v3590
    %3681 = vmatprep.subr.mxu0 0.0
    %3682 = vmatpush1.msra.mxu0 %v3591
    %3683 = vmatprep.subr.mxu0 0.0
    %3684 = vmatpush1.msra.mxu0 %v3592
    %3685 = vmatprep.subr.mxu0 0.0
    %3686 = vmatpush1.msra.mxu0 %v3593
    %3687 = vmatprep.subr.mxu0 0.0
    %3688 = vmatpush1.msra.mxu0 %v3594
    %3689 = vmatprep.subr.mxu0 0.0
    %3690 = vmatpush1.msra.mxu0 %v3595
    %3691 = vmatprep.subr.mxu0 0.0
    %3692 = vmatpush1.msra.mxu0 %v3596
    %3693 = vmatprep.subr.mxu0 0.0
    %3694 = vmatpush1.msra.mxu0 %v3597
    %3695 = vmatprep.subr.mxu0 0.0
    %3696 = vmatpush1.msra.mxu0 0.0
    %3697 = vmatprep.subr.mxu0 0.0
    %3698 = vmatpush1.msra.mxu0 0.0
    %3699 = vmatprep.subr.mxu0 0.0
    %3700 = vmatpush1.msra.mxu0 0.0
    %3701 = vmatprep.subr.mxu0 0.0
    %3702 = vmatpush1.msra.mxu0 0.0
    %3703 = vmatprep.subr.mxu0 0.0
    %3704 = vmatpush1.msra.mxu0 0.0
    %3705 = vmatprep.subr.mxu0 0.0
    %3706 = vmatpush1.msra.mxu0 0.0
    %3707 = vmatprep.subr.mxu0 0.0
    %3708 = vmatpush1.msra.mxu0 0.0
    %3709 = vmatprep.subr.mxu0 0.0
    %3710 = vmatpush1.msra.mxu0 0.0
    %3711 = vmatprep.subr.mxu0 0.0
    %3712 = vmatpush1.msra.mxu0 0.0
    %3713 = vmatprep.subr.mxu0 0.0
    %3714 = vmatpush1.msra.mxu0 0.0
    %3715 = vmatprep.subr.mxu0 0.0
    %3716 = vmatpush1.msra.mxu0 0.0
    %3717 = vmatprep.subr.mxu0 0.0
    %3718 = vmatpush1.msra.mxu0 0.0
    %3719 = vmatprep.subr.mxu0 0.0
    %3720 = vmatpush1.msra.mxu0 0.0
    %3721 = vmatprep.subr.mxu0 0.0
    %3722 = vmatpush1.msra.mxu0 0.0
    %3723 = vmatprep.subr.mxu0 0.0
    %3724 = vmatpush1.msra.mxu0 0.0
    %3725 = vmatprep.subr.mxu0 0.0
    %3726 = vmatpush1.msra.mxu0 0.0
    %3727 = vmatprep.subr.mxu0 0.0
    %3728 = vmatpush1.msra.mxu0 0.0
    %3729 = vmatprep.subr.mxu0 0.0
    %3730 = vmatpush1.msra.mxu0 0.0
    %3731 = vmatprep.subr.mxu0 0.0
    %3732 = vmatpush1.msra.mxu0 0.0
    %3733 = vmatprep.subr.mxu0 0.0
    %3734 = vmatpush1.msra.mxu0 0.0
    %3735 = vmatprep.subr.mxu0 0.0
    %3736 = vmatpush1.msra.mxu0 0.0
    %3737 = vmatprep.mubr.f32.mxu0 0.0
    %3738 = vmatmul.mubr.f32.gmra.mrb[0].mxu0 %v601
    %v3739 = vpop.f32.mrb[0].mxu0
    %v3740 = vadd.f32 %v3665, %v3739
    %v3741 = vpop.f32.mrb[0].mxu0
    %3742 = vmatprep.mubr.f32.mxu0 0.0
    %3743 = vmatmul.mubr.f32.gmra.mrb[0].mxu0 %v604
    %v3744 = vpop.f32.mrb[0].mxu0
    %v3745 = vadd.f32 %v3670, %v3744
    %v3746 = vpop.f32.mrb[0].mxu0
    %3747 = vdwg.mxu0
    %s3748 = scalar_lea.vmem %s4, 320
    %v3749 = vld [vmem:[%s3748] sm:$0xff]
    %v3750 = vld [vmem:[%s3748 + $0x8] sm:$0xff]
    %v3751 = vld [vmem:[%s3748 + $0x10] sm:$0xff]
    %v3752 = vld [vmem:[%s3748 + $0x18] sm:$0xff]
    %v3754 = vsel %vm959, %v3749, 0
    %v3757 = vsel %vm959, %v3750, 0
    %v3760 = vsel %vm959, %v3751, 0
    %v3763 = vsel %vm959, %v3752, 0
    %3765 = vmatprep.subr.mxu0 0.0
    %3766 = vmatpush1.msra.mxu0 %v3740
    %3767 = vmatprep.subr.mxu0 0.0
    %3768 = vmatpush1.msra.mxu0 %v3745
    %3769 = vmatprep.subr.mxu0 0.0
    %3770 = vmatpush1.msra.mxu0 0.0
    %3771 = vmatprep.subr.mxu0 0.0
    %3772 = vmatpush1.msra.mxu0 0.0
    %3773 = vmatprep.subr.mxu0 0.0
    %3774 = vmatpush1.msra.mxu0 0.0
    %3775 = vmatprep.subr.mxu0 0.0
    %3776 = vmatpush1.msra.mxu0 0.0
    %3777 = vmatprep.subr.mxu0 0.0
    %3778 = vmatpush1.msra.mxu0 0.0
    %3779 = vmatprep.subr.mxu0 0.0
    %3780 = vmatpush1.msra.mxu0 0.0
    %3781 = vmatprep.subr.mxu0 0.0
    %3782 = vmatpush1.msra.mxu0 0.0
    %3783 = vmatprep.subr.mxu0 0.0
    %3784 = vmatpush1.msra.mxu0 0.0
    %3785 = vmatprep.subr.mxu0 0.0
    %3786 = vmatpush1.msra.mxu0 0.0
    %3787 = vmatprep.subr.mxu0 0.0
    %3788 = vmatpush1.msra.mxu0 0.0
    %3789 = vmatprep.subr.mxu0 0.0
    %3790 = vmatpush1.msra.mxu0 0.0
    %3791 = vmatprep.subr.mxu0 0.0
    %3792 = vmatpush1.msra.mxu0 0.0
    %3793 = vmatprep.subr.mxu0 0.0
    %3794 = vmatpush1.msra.mxu0 0.0
    %3795 = vmatprep.subr.mxu0 0.0
    %3796 = vmatpush1.msra.mxu0 0.0
    %3797 = vmatprep.subr.mxu0 0.0
    %3798 = vmatpush1.msra.mxu0 0.0
    %3799 = vmatprep.subr.mxu0 0.0
    %3800 = vmatpush1.msra.mxu0 0.0
    %3801 = vmatprep.subr.mxu0 0.0
    %3802 = vmatpush1.msra.mxu0 0.0
    %3803 = vmatprep.subr.mxu0 0.0
    %3804 = vmatpush1.msra.mxu0 0.0
    %3805 = vmatprep.subr.mxu0 0.0
    %3806 = vmatpush1.msra.mxu0 0.0
    %3807 = vmatprep.subr.mxu0 0.0
    %3808 = vmatpush1.msra.mxu0 0.0
    %3809 = vmatprep.subr.mxu0 0.0
    %3810 = vmatpush1.msra.mxu0 0.0
    %3811 = vmatprep.subr.mxu0 0.0
    %3812 = vmatpush1.msra.mxu0 0.0
    %3813 = vmatprep.subr.mxu0 0.0
    %3814 = vmatpush1.msra.mxu0 0.0
    %3815 = vmatprep.subr.mxu0 0.0
    %3816 = vmatpush1.msra.mxu0 0.0
    %3817 = vmatprep.subr.mxu0 0.0
    %3818 = vmatpush1.msra.mxu0 0.0
    %3819 = vmatprep.subr.mxu0 0.0
    %3820 = vmatpush1.msra.mxu0 0.0
    %3821 = vmatprep.subr.mxu0 0.0
    %3822 = vmatpush1.msra.mxu0 0.0
    %3823 = vmatprep.subr.mxu0 0.0
    %3824 = vmatpush1.msra.mxu0 0.0
    %3825 = vmatprep.subr.mxu0 0.0
    %3826 = vmatpush1.msra.mxu0 0.0
    %3827 = vmatprep.subr.mxu0 0.0
    %3828 = vmatpush1.msra.mxu0 0.0
    %3829 = vmatprep.mubr.f32.mxu0 0.0
    %3830 = vmatmul.mubr.f32.gmra.mrb[0].mxu0 %v3754
    %v3831 = vpop.f32.mrb[0].mxu0
    %v3832 = vadd.f32 0.0, %v3831
    %v3833 = vpop.f32.mrb[0].mxu0
    %3834 = vmatprep.mubr.f32.mxu0 0.0
    %3835 = vmatmul.mubr.f32.gmra.mrb[0].mxu0 %v3757
    %v3836 = vpop.f32.mrb[0].mxu0
    %v3837 = vadd.f32 0.0, %v3836
    %v3838 = vpop.f32.mrb[0].mxu0
    %3839 = vmatprep.mubr.f32.mxu0 0.0
    %3840 = vmatmul.mubr.f32.gmra.mrb[0].mxu0 %v3760
    %v3841 = vpop.f32.mrb[0].mxu0
    %v3842 = vadd.f32 0.0, %v3841
    %v3843 = vpop.f32.mrb[0].mxu0
    %3844 = vmatprep.mubr.f32.mxu0 0.0
    %3845 = vmatmul.mubr.f32.gmra.mrb[0].mxu0 %v3763
    %v3846 = vpop.f32.mrb[0].mxu0
    %v3847 = vadd.f32 0.0, %v3846
    %v3848 = vpop.f32.mrb[0].mxu0
    %3849 = vdwg.mxu0
    %v3850 = vadd.f32 %v3550, %v3832
    %v3851 = vadd.f32 %v3551, %v3837
    %v3852 = vadd.f32 %v3552, %v3842
    %v3853 = vadd.f32 %v3553, %v3847
    %s3854 = scalar_lea.vmem %s5, 3784
    %v3855 = vld [vmem:[%s3854] sm:$0xff]
    %v3856 = vld [vmem:[%s3854 + $0x8] sm:$0xff]
    %v3857 = vld [vmem:[%s3854 + $0x10] sm:$0xff]
    %v3858 = vld [vmem:[%s3854 + $0x18] sm:$0xff]
    %v3859 = vld [vmem:[%s3854 + $0x20] sm:$0xff]
    %v3860 = vld [vmem:[%s3854 + $0x28] sm:$0xff]
    %v3861 = vld [vmem:[%s3854 + $0x30] sm:$0xff]
    %v3862 = vld [vmem:[%s3854 + $0x38] sm:$0xff]
    %v3863 = vld [vmem:[%s3854 + $0x40] sm:$0xff]
    %v3864 = vld [vmem:[%s3854 + $0x48] sm:$0xff]
    %v3865 = vld [vmem:[%s3854 + $0x50] sm:$0xff]
    %v3866 = vld [vmem:[%s3854 + $0x58] sm:$0xff]
    %v3867 = vld [vmem:[%s3854 + $0x60] sm:$0xff]
    %v3868 = vld [vmem:[%s3854 + $0x68] sm:$0xff]
    %v3869 = vld [vmem:[%s3854 + $0x70] sm:$0xff]
    %v3870 = vld [vmem:[%s3854 + $0x78] sm:$0xff]
    %v3871 = vld [vmem:[%s3854 + $0x80] sm:$0xff]
    %v3872 = vld [vmem:[%s3854 + $0x88] sm:$0xff]
    %v3873 = vld [vmem:[%s3854 + $0x90] sm:$0xff]
    %v3874 = vld [vmem:[%s3854 + $0x98] sm:$0xff]
    %v3875 = vld [vmem:[%s3854 + $0xa0] sm:$0xff]
    %v3876 = vld [vmem:[%s3854 + $0xa8] sm:$0xff]
    %v3877 = vld [vmem:[%s3854 + $0xb0] sm:$0xff]
    %v3878 = vld [vmem:[%s3854 + $0xb8] sm:$0xff]
    %v3879 = vld [vmem:[%s3854 + $0xc0] sm:$0xff]
    %v3880 = vld [vmem:[%s3854 + $0xc8] sm:$0xff]
    %v3881 = vld [vmem:[%s3854 + $0xd0] sm:$0xff]
    %v3882 = vld [vmem:[%s3854 + $0xd8] sm:$0xff]
    %v3883 = vld [vmem:[%s3854 + $0xe0] sm:$0xff]
    %v3884 = vld [vmem:[%s3854 + $0xe8] sm:$0xff]
    %v3885 = vld [vmem:[%s3854 + $0xf0] sm:$0xff]
    %v3886 = vld [vmem:[%s3854 + $0xf8] sm:$0xff]
    %v3887 = vld [vmem:[%s3854 + $0x100] sm:$0xff]
    %v3888 = vld [vmem:[%s3854 + $0x108] sm:$0xff]
    %v3889 = vld [vmem:[%s3854 + $0x110] sm:$0xff]
    %v3890 = vld [vmem:[%s3854 + $0x118] sm:$0xff]
    %v3891 = vld [vmem:[%s3854 + $0x120] sm:$0xff]
    %v3892 = vld [vmem:[%s3854 + $0x128] sm:$0xff]
    %v3893 = vld [vmem:[%s3854 + $0x130] sm:$0xff]
    %v3894 = vld [vmem:[%s3854 + $0x138] sm:$0xff]
    %v3895 = vld [vmem:[%s3854 + $0x140] sm:$0xff]
    %v3896 = vld [vmem:[%s3854 + $0x148] sm:$0xff]
    %v3897 = vld [vmem:[%s3854 + $0x150] sm:$0xff]
    %3898 = vmatprep.subr.mxu0 0.0
    %3899 = vmatpush1.msra.mxu0 %v3855
    %3900 = vmatprep.subr.mxu0 0.0
    %3901 = vmatpush1.msra.mxu0 %v3856
    %3902 = vmatprep.subr.mxu0 0.0
    %3903 = vmatpush1.msra.mxu0 %v3857
    %3904 = vmatprep.subr.mxu0 0.0
    %3905 = vmatpush1.msra.mxu0 %v3858
    %3906 = vmatprep.subr.mxu0 0.0
    %3907 = vmatpush1.msra.mxu0 %v3859
    %3908 = vmatprep.subr.mxu0 0.0
    %3909 = vmatpush1.msra.mxu0 %v3860
    %3910 = vmatprep.subr.mxu0 0.0
    %3911 = vmatpush1.msra.mxu0 %v3861
    %3912 = vmatprep.subr.mxu0 0.0
    %3913 = vmatpush1.msra.mxu0 %v3862
    %3914 = vmatprep.subr.mxu0 0.0
    %3915 = vmatpush1.msra.mxu0 %v3863
    %3916 = vmatprep.subr.mxu0 0.0
    %3917 = vmatpush1.msra.mxu0 %v3864
    %3918 = vmatprep.subr.mxu0 0.0
    %3919 = vmatpush1.msra.mxu0 %v3865
    %3920 = vmatprep.subr.mxu0 0.0
    %3921 = vmatpush1.msra.mxu0 %v3866
    %3922 = vmatprep.subr.mxu0 0.0
    %3923 = vmatpush1.msra.mxu0 %v3867
    %3924 = vmatprep.subr.mxu0 0.0
    %3925 = vmatpush1.msra.mxu0 %v3868
    %3926 = vmatprep.subr.mxu0 0.0
    %3927 = vmatpush1.msra.mxu0 %v3869
    %3928 = vmatprep.subr.mxu0 0.0
    %3929 = vmatpush1.msra.mxu0 %v3870
    %3930 = vmatprep.subr.mxu0 0.0
    %3931 = vmatpush1.msra.mxu0 %v3871
    %3932 = vmatprep.subr.mxu0 0.0
    %3933 = vmatpush1.msra.mxu0 %v3872
    %3934 = vmatprep.subr.mxu0 0.0
    %3935 = vmatpush1.msra.mxu0 %v3873
    %3936 = vmatprep.subr.mxu0 0.0
    %3937 = vmatpush1.msra.mxu0 %v3874
    %3938 = vmatprep.subr.mxu0 0.0
    %3939 = vmatpush1.msra.mxu0 %v3875
    %3940 = vmatprep.subr.mxu0 0.0
    %3941 = vmatpush1.msra.mxu0 %v3876
    %3942 = vmatprep.subr.mxu0 0.0
    %3943 = vmatpush1.msra.mxu0 %v3877
    %3944 = vmatprep.subr.mxu0 0.0
    %3945 = vmatpush1.msra.mxu0 %v3878
    %3946 = vmatprep.subr.mxu0 0.0
    %3947 = vmatpush1.msra.mxu0 %v3879
    %3948 = vmatprep.subr.mxu0 0.0
    %3949 = vmatpush1.msra.mxu0 %v3880
    %3950 = vmatprep.subr.mxu0 0.0
    %3951 = vmatpush1.msra.mxu0 %v3881
    %3952 = vmatprep.subr.mxu0 0.0
    %3953 = vmatpush1.msra.mxu0 %v3882
    %3954 = vmatprep.subr.mxu0 0.0
    %3955 = vmatpush1.msra.mxu0 %v3883
    %3956 = vmatprep.subr.mxu0 0.0
    %3957 = vmatpush1.msra.mxu0 %v3884
    %3958 = vmatprep.subr.mxu0 0.0
    %3959 = vmatpush1.msra.mxu0 %v3885
    %3960 = vmatprep.subr.mxu0 0.0
    %3961 = vmatpush1.msra.mxu0 %v3886
    %3962 = vmatprep.mubr.f32.mxu0 %v552
    %3963 = vmatmul.mubr.f32.gmra.mrb[0].mxu0 %v551
    %v3964 = vpop.f32.mrb[0].mxu0
    %v3965 = vadd.f32 0.0, %v3964
    %v3966 = vpop.f32.mrb[0].mxu0
    %3967 = vmatprep.mubr.f32.mxu0 %v555
    %3968 = vmatmul.mubr.f32.gmra.mrb[0].mxu0 %v554
    %v3969 = vpop.f32.mrb[0].mxu0
    %v3970 = vadd.f32 0.0, %v3969
    %v3971 = vpop.f32.mrb[0].mxu0
    %3972 = vdwg.mxu0
    %3973 = vmatprep.subr.mxu0 0.0
    %3974 = vmatpush1.msra.mxu0 %v3887
    %3975 = vmatprep.subr.mxu0 0.0
    %3976 = vmatpush1.msra.mxu0 %v3888
    %3977 = vmatprep.subr.mxu0 0.0
    %3978 = vmatpush1.msra.mxu0 %v3889
    %3979 = vmatprep.subr.mxu0 0.0
    %3980 = vmatpush1.msra.mxu0 %v3890
    %3981 = vmatprep.subr.mxu0 0.0
    %3982 = vmatpush1.msra.mxu0 %v3891
    %3983 = vmatprep.subr.mxu0 0.0
    %3984 = vmatpush1.msra.mxu0 %v3892
    %3985 = vmatprep.subr.mxu0 0.0
    %3986 = vmatpush1.msra.mxu0 %v3893
    %3987 = vmatprep.subr.mxu0 0.0
    %3988 = vmatpush1.msra.mxu0 %v3894
    %3989 = vmatprep.subr.mxu0 0.0
    %3990 = vmatpush1.msra.mxu0 %v3895
    %3991 = vmatprep.subr.mxu0 0.0
    %3992 = vmatpush1.msra.mxu0 %v3896
    %3993 = vmatprep.subr.mxu0 0.0
    %3994 = vmatpush1.msra.mxu0 %v3897
    %3995 = vmatprep.subr.mxu0 0.0
    %3996 = vmatpush1.msra.mxu0 0.0
    %3997 = vmatprep.subr.mxu0 0.0
    %3998 = vmatpush1.msra.mxu0 0.0
    %3999 = vmatprep.subr.mxu0 0.0
    %4000 = vmatpush1.msra.mxu0 0.0
    %4001 = vmatprep.subr.mxu0 0.0
    %4002 = vmatpush1.msra.mxu0 0.0
    %4003 = vmatprep.subr.mxu0 0.0
    %4004 = vmatpush1.msra.mxu0 0.0
    %4005 = vmatprep.subr.mxu0 0.0
    %4006 = vmatpush1.msra.mxu0 0.0
    %4007 = vmatprep.subr.mxu0 0.0
    %4008 = vmatpush1.msra.mxu0 0.0
    %4009 = vmatprep.subr.mxu0 0.0
    %4010 = vmatpush1.msra.mxu0 0.0
    %4011 = vmatprep.subr.mxu0 0.0
    %4012 = vmatpush1.msra.mxu0 0.0
    %4013 = vmatprep.subr.mxu0 0.0
    %4014 = vmatpush1.msra.mxu0 0.0
    %4015 = vmatprep.subr.mxu0 0.0
    %4016 = vmatpush1.msra.mxu0 0.0
    %4017 = vmatprep.subr.mxu0 0.0
    %4018 = vmatpush1.msra.mxu0 0.0
    %4019 = vmatprep.subr.mxu0 0.0
    %4020 = vmatpush1.msra.mxu0 0.0
    %4021 = vmatprep.subr.mxu0 0.0
    %4022 = vmatpush1.msra.mxu0 0.0
    %4023 = vmatprep.subr.mxu0 0.0
    %4024 = vmatpush1.msra.mxu0 0.0
    %4025 = vmatprep.subr.mxu0 0.0
    %4026 = vmatpush1.msra.mxu0 0.0
    %4027 = vmatprep.subr.mxu0 0.0
    %4028 = vmatpush1.msra.mxu0 0.0
    %4029 = vmatprep.subr.mxu0 0.0
    %4030 = vmatpush1.msra.mxu0 0.0
    %4031 = vmatprep.subr.mxu0 0.0
    %4032 = vmatpush1.msra.mxu0 0.0
    %4033 = vmatprep.subr.mxu0 0.0
    %4034 = vmatpush1.msra.mxu0 0.0
    %4035 = vmatprep.subr.mxu0 0.0
    %4036 = vmatpush1.msra.mxu0 0.0
    %4037 = vmatprep.mubr.f32.mxu0 0.0
    %4038 = vmatmul.mubr.f32.gmra.mrb[0].mxu0 %v601
    %v4039 = vpop.f32.mrb[0].mxu0
    %v4040 = vadd.f32 %v3965, %v4039
    %v4041 = vpop.f32.mrb[0].mxu0
    %4042 = vmatprep.mubr.f32.mxu0 0.0
    %4043 = vmatmul.mubr.f32.gmra.mrb[0].mxu0 %v604
    %v4044 = vpop.f32.mrb[0].mxu0
    %v4045 = vadd.f32 %v3970, %v4044
    %v4046 = vpop.f32.mrb[0].mxu0
    %4047 = vdwg.mxu0
    %s4048 = scalar_lea.vmem %s4, 352
    %v4049 = vld [vmem:[%s4048] sm:$0xff]
    %v4050 = vld [vmem:[%s4048 + $0x8] sm:$0xff]
    %v4051 = vld [vmem:[%s4048 + $0x10] sm:$0xff]
    %v4052 = vld [vmem:[%s4048 + $0x18] sm:$0xff]
    %v4054 = vsel %vm959, %v4049, 0
    %v4057 = vsel %vm959, %v4050, 0
    %v4060 = vsel %vm959, %v4051, 0
    %v4063 = vsel %vm959, %v4052, 0
    %4065 = vmatprep.subr.mxu0 0.0
    %4066 = vmatpush1.msra.mxu0 %v4040
    %4067 = vmatprep.subr.mxu0 0.0
    %4068 = vmatpush1.msra.mxu0 %v4045
    %4069 = vmatprep.subr.mxu0 0.0
    %4070 = vmatpush1.msra.mxu0 0.0
    %4071 = vmatprep.subr.mxu0 0.0
    %4072 = vmatpush1.msra.mxu0 0.0
    %4073 = vmatprep.subr.mxu0 0.0
    %4074 = vmatpush1.msra.mxu0 0.0
    %4075 = vmatprep.subr.mxu0 0.0
    %4076 = vmatpush1.msra.mxu0 0.0
    %4077 = vmatprep.subr.mxu0 0.0
    %4078 = vmatpush1.msra.mxu0 0.0
    %4079 = vmatprep.subr.mxu0 0.0
    %4080 = vmatpush1.msra.mxu0 0.0
    %4081 = vmatprep.subr.mxu0 0.0
    %4082 = vmatpush1.msra.mxu0 0.0
    %4083 = vmatprep.subr.mxu0 0.0
    %4084 = vmatpush1.msra.mxu0 0.0
    %4085 = vmatprep.subr.mxu0 0.0
    %4086 = vmatpush1.msra.mxu0 0.0
    %4087 = vmatprep.subr.mxu0 0.0
    %4088 = vmatpush1.msra.mxu0 0.0
    %4089 = vmatprep.subr.mxu0 0.0
    %4090 = vmatpush1.msra.mxu0 0.0
    %4091 = vmatprep.subr.mxu0 0.0
    %4092 = vmatpush1.msra.mxu0 0.0
    %4093 = vmatprep.subr.mxu0 0.0
    %4094 = vmatpush1.msra.mxu0 0.0
    %4095 = vmatprep.subr.mxu0 0.0
    %4096 = vmatpush1.msra.mxu0 0.0
    %4097 = vmatprep.subr.mxu0 0.0
    %4098 = vmatpush1.msra.mxu0 0.0
    %4099 = vmatprep.subr.mxu0 0.0
    %4100 = vmatpush1.msra.mxu0 0.0
    %4101 = vmatprep.subr.mxu0 0.0
    %4102 = vmatpush1.msra.mxu0 0.0
    %4103 = vmatprep.subr.mxu0 0.0
    %4104 = vmatpush1.msra.mxu0 0.0
    %4105 = vmatprep.subr.mxu0 0.0
    %4106 = vmatpush1.msra.mxu0 0.0
    %4107 = vmatprep.subr.mxu0 0.0
    %4108 = vmatpush1.msra.mxu0 0.0
    %4109 = vmatprep.subr.mxu0 0.0
    %4110 = vmatpush1.msra.mxu0 0.0
    %4111 = vmatprep.subr.mxu0 0.0
    %4112 = vmatpush1.msra.mxu0 0.0
    %4113 = vmatprep.subr.mxu0 0.0
    %4114 = vmatpush1.msra.mxu0 0.0
    %4115 = vmatprep.subr.mxu0 0.0
    %4116 = vmatpush1.msra.mxu0 0.0
    %4117 = vmatprep.subr.mxu0 0.0
    %4118 = vmatpush1.msra.mxu0 0.0
    %4119 = vmatprep.subr.mxu0 0.0
    %4120 = vmatpush1.msra.mxu0 0.0
    %4121 = vmatprep.subr.mxu0 0.0
    %4122 = vmatpush1.msra.mxu0 0.0
    %4123 = vmatprep.subr.mxu0 0.0
    %4124 = vmatpush1.msra.mxu0 0.0
    %4125 = vmatprep.subr.mxu0 0.0
    %4126 = vmatpush1.msra.mxu0 0.0
    %4127 = vmatprep.subr.mxu0 0.0
    %4128 = vmatpush1.msra.mxu0 0.0
    %4129 = vmatprep.mubr.f32.mxu0 0.0
    %4130 = vmatmul.mubr.f32.gmra.mrb[0].mxu0 %v4054
    %v4131 = vpop.f32.mrb[0].mxu0
    %v4132 = vadd.f32 0.0, %v4131
    %v4133 = vpop.f32.mrb[0].mxu0
    %4134 = vmatprep.mubr.f32.mxu0 0.0
    %4135 = vmatmul.mubr.f32.gmra.mrb[0].mxu0 %v4057
    %v4136 = vpop.f32.mrb[0].mxu0
    %v4137 = vadd.f32 0.0, %v4136
    %v4138 = vpop.f32.mrb[0].mxu0
    %4139 = vmatprep.mubr.f32.mxu0 0.0
    %4140 = vmatmul.mubr.f32.gmra.mrb[0].mxu0 %v4060
    %v4141 = vpop.f32.mrb[0].mxu0
    %v4142 = vadd.f32 0.0, %v4141
    %v4143 = vpop.f32.mrb[0].mxu0
    %4144 = vmatprep.mubr.f32.mxu0 0.0
    %4145 = vmatmul.mubr.f32.gmra.mrb[0].mxu0 %v4063
    %v4146 = vpop.f32.mrb[0].mxu0
    %v4147 = vadd.f32 0.0, %v4146
    %v4148 = vpop.f32.mrb[0].mxu0
    %4149 = vdwg.mxu0
    %v4150 = vadd.f32 %v3850, %v4132
    %v4151 = vadd.f32 %v3851, %v4137
    %v4152 = vadd.f32 %v3852, %v4142
    %v4153 = vadd.f32 %v3853, %v4147
    %s4154 = scalar_lea.vmem %s5, 4128
    %v4155 = vld [vmem:[%s4154] sm:$0xff]
    %v4156 = vld [vmem:[%s4154 + $0x8] sm:$0xff]
    %v4157 = vld [vmem:[%s4154 + $0x10] sm:$0xff]
    %v4158 = vld [vmem:[%s4154 + $0x18] sm:$0xff]
    %v4159 = vld [vmem:[%s4154 + $0x20] sm:$0xff]
    %v4160 = vld [vmem:[%s4154 + $0x28] sm:$0xff]
    %v4161 = vld [vmem:[%s4154 + $0x30] sm:$0xff]
    %v4162 = vld [vmem:[%s4154 + $0x38] sm:$0xff]
    %v4163 = vld [vmem:[%s4154 + $0x40] sm:$0xff]
    %v4164 = vld [vmem:[%s4154 + $0x48] sm:$0xff]
    %v4165 = vld [vmem:[%s4154 + $0x50] sm:$0xff]
    %v4166 = vld [vmem:[%s4154 + $0x58] sm:$0xff]
    %v4167 = vld [vmem:[%s4154 + $0x60] sm:$0xff]
    %v4168 = vld [vmem:[%s4154 + $0x68] sm:$0xff]
    %v4169 = vld [vmem:[%s4154 + $0x70] sm:$0xff]
    %v4170 = vld [vmem:[%s4154 + $0x78] sm:$0xff]
    %v4171 = vld [vmem:[%s4154 + $0x80] sm:$0xff]
    %v4172 = vld [vmem:[%s4154 + $0x88] sm:$0xff]
    %v4173 = vld [vmem:[%s4154 + $0x90] sm:$0xff]
    %v4174 = vld [vmem:[%s4154 + $0x98] sm:$0xff]
    %v4175 = vld [vmem:[%s4154 + $0xa0] sm:$0xff]
    %v4176 = vld [vmem:[%s4154 + $0xa8] sm:$0xff]
    %v4177 = vld [vmem:[%s4154 + $0xb0] sm:$0xff]
    %v4178 = vld [vmem:[%s4154 + $0xb8] sm:$0xff]
    %v4179 = vld [vmem:[%s4154 + $0xc0] sm:$0xff]
    %v4180 = vld [vmem:[%s4154 + $0xc8] sm:$0xff]
    %v4181 = vld [vmem:[%s4154 + $0xd0] sm:$0xff]
    %v4182 = vld [vmem:[%s4154 + $0xd8] sm:$0xff]
    %v4183 = vld [vmem:[%s4154 + $0xe0] sm:$0xff]
    %v4184 = vld [vmem:[%s4154 + $0xe8] sm:$0xff]
    %v4185 = vld [vmem:[%s4154 + $0xf0] sm:$0xff]
    %v4186 = vld [vmem:[%s4154 + $0xf8] sm:$0xff]
    %v4187 = vld [vmem:[%s4154 + $0x100] sm:$0xff]
    %v4188 = vld [vmem:[%s4154 + $0x108] sm:$0xff]
    %v4189 = vld [vmem:[%s4154 + $0x110] sm:$0xff]
    %v4190 = vld [vmem:[%s4154 + $0x118] sm:$0xff]
    %v4191 = vld [vmem:[%s4154 + $0x120] sm:$0xff]
    %v4192 = vld [vmem:[%s4154 + $0x128] sm:$0xff]
    %v4193 = vld [vmem:[%s4154 + $0x130] sm:$0xff]
    %v4194 = vld [vmem:[%s4154 + $0x138] sm:$0xff]
    %v4195 = vld [vmem:[%s4154 + $0x140] sm:$0xff]
    %v4196 = vld [vmem:[%s4154 + $0x148] sm:$0xff]
    %v4197 = vld [vmem:[%s4154 + $0x150] sm:$0xff]
    %4198 = vmatprep.subr.mxu0 0.0
    %4199 = vmatpush1.msra.mxu0 %v4155
    %4200 = vmatprep.subr.mxu0 0.0
    %4201 = vmatpush1.msra.mxu0 %v4156
    %4202 = vmatprep.subr.mxu0 0.0
    %4203 = vmatpush1.msra.mxu0 %v4157
    %4204 = vmatprep.subr.mxu0 0.0
    %4205 = vmatpush1.msra.mxu0 %v4158
    %4206 = vmatprep.subr.mxu0 0.0
    %4207 = vmatpush1.msra.mxu0 %v4159
    %4208 = vmatprep.subr.mxu0 0.0
    %4209 = vmatpush1.msra.mxu0 %v4160
    %4210 = vmatprep.subr.mxu0 0.0
    %4211 = vmatpush1.msra.mxu0 %v4161
    %4212 = vmatprep.subr.mxu0 0.0
    %4213 = vmatpush1.msra.mxu0 %v4162
    %4214 = vmatprep.subr.mxu0 0.0
    %4215 = vmatpush1.msra.mxu0 %v4163
    %4216 = vmatprep.subr.mxu0 0.0
    %4217 = vmatpush1.msra.mxu0 %v4164
    %4218 = vmatprep.subr.mxu0 0.0
    %4219 = vmatpush1.msra.mxu0 %v4165
    %4220 = vmatprep.subr.mxu0 0.0
    %4221 = vmatpush1.msra.mxu0 %v4166
    %4222 = vmatprep.subr.mxu0 0.0
    %4223 = vmatpush1.msra.mxu0 %v4167
    %4224 = vmatprep.subr.mxu0 0.0
    %4225 = vmatpush1.msra.mxu0 %v4168
    %4226 = vmatprep.subr.mxu0 0.0
    %4227 = vmatpush1.msra.mxu0 %v4169
    %4228 = vmatprep.subr.mxu0 0.0
    %4229 = vmatpush1.msra.mxu0 %v4170
    %4230 = vmatprep.subr.mxu0 0.0
    %4231 = vmatpush1.msra.mxu0 %v4171
    %4232 = vmatprep.subr.mxu0 0.0
    %4233 = vmatpush1.msra.mxu0 %v4172
    %4234 = vmatprep.subr.mxu0 0.0
    %4235 = vmatpush1.msra.mxu0 %v4173
    %4236 = vmatprep.subr.mxu0 0.0
    %4237 = vmatpush1.msra.mxu0 %v4174
    %4238 = vmatprep.subr.mxu0 0.0
    %4239 = vmatpush1.msra.mxu0 %v4175
    %4240 = vmatprep.subr.mxu0 0.0
    %4241 = vmatpush1.msra.mxu0 %v4176
    %4242 = vmatprep.subr.mxu0 0.0
    %4243 = vmatpush1.msra.mxu0 %v4177
    %4244 = vmatprep.subr.mxu0 0.0
    %4245 = vmatpush1.msra.mxu0 %v4178
    %4246 = vmatprep.subr.mxu0 0.0
    %4247 = vmatpush1.msra.mxu0 %v4179
    %4248 = vmatprep.subr.mxu0 0.0
    %4249 = vmatpush1.msra.mxu0 %v4180
    %4250 = vmatprep.subr.mxu0 0.0
    %4251 = vmatpush1.msra.mxu0 %v4181
    %4252 = vmatprep.subr.mxu0 0.0
    %4253 = vmatpush1.msra.mxu0 %v4182
    %4254 = vmatprep.subr.mxu0 0.0
    %4255 = vmatpush1.msra.mxu0 %v4183
    %4256 = vmatprep.subr.mxu0 0.0
    %4257 = vmatpush1.msra.mxu0 %v4184
    %4258 = vmatprep.subr.mxu0 0.0
    %4259 = vmatpush1.msra.mxu0 %v4185
    %4260 = vmatprep.subr.mxu0 0.0
    %4261 = vmatpush1.msra.mxu0 %v4186
    %4262 = vmatprep.mubr.f32.mxu0 %v552
    %4263 = vmatmul.mubr.f32.gmra.mrb[0].mxu0 %v551
    %v4264 = vpop.f32.mrb[0].mxu0
    %v4265 = vadd.f32 0.0, %v4264
    %v4266 = vpop.f32.mrb[0].mxu0
    %4267 = vmatprep.mubr.f32.mxu0 %v555
    %4268 = vmatmul.mubr.f32.gmra.mrb[0].mxu0 %v554
    %v4269 = vpop.f32.mrb[0].mxu0
    %v4270 = vadd.f32 0.0, %v4269
    %v4271 = vpop.f32.mrb[0].mxu0
    %4272 = vdwg.mxu0
    %4273 = vmatprep.subr.mxu0 0.0
    %4274 = vmatpush1.msra.mxu0 %v4187
    %4275 = vmatprep.subr.mxu0 0.0
    %4276 = vmatpush1.msra.mxu0 %v4188
    %4277 = vmatprep.subr.mxu0 0.0
    %4278 = vmatpush1.msra.mxu0 %v4189
    %4279 = vmatprep.subr.mxu0 0.0
    %4280 = vmatpush1.msra.mxu0 %v4190
    %4281 = vmatprep.subr.mxu0 0.0
    %4282 = vmatpush1.msra.mxu0 %v4191
    %4283 = vmatprep.subr.mxu0 0.0
    %4284 = vmatpush1.msra.mxu0 %v4192
    %4285 = vmatprep.subr.mxu0 0.0
    %4286 = vmatpush1.msra.mxu0 %v4193
    %4287 = vmatprep.subr.mxu0 0.0
    %4288 = vmatpush1.msra.mxu0 %v4194
    %4289 = vmatprep.subr.mxu0 0.0
    %4290 = vmatpush1.msra.mxu0 %v4195
    %4291 = vmatprep.subr.mxu0 0.0
    %4292 = vmatpush1.msra.mxu0 %v4196
    %4293 = vmatprep.subr.mxu0 0.0
    %4294 = vmatpush1.msra.mxu0 %v4197
    %4295 = vmatprep.subr.mxu0 0.0
    %4296 = vmatpush1.msra.mxu0 0.0
    %4297 = vmatprep.subr.mxu0 0.0
    %4298 = vmatpush1.msra.mxu0 0.0
    %4299 = vmatprep.subr.mxu0 0.0
    %4300 = vmatpush1.msra.mxu0 0.0
    %4301 = vmatprep.subr.mxu0 0.0
    %4302 = vmatpush1.msra.mxu0 0.0
    %4303 = vmatprep.subr.mxu0 0.0
    %4304 = vmatpush1.msra.mxu0 0.0
    %4305 = vmatprep.subr.mxu0 0.0
    %4306 = vmatpush1.msra.mxu0 0.0
    %4307 = vmatprep.subr.mxu0 0.0
    %4308 = vmatpush1.msra.mxu0 0.0
    %4309 = vmatprep.subr.mxu0 0.0
    %4310 = vmatpush1.msra.mxu0 0.0
    %4311 = vmatprep.subr.mxu0 0.0
    %4312 = vmatpush1.msra.mxu0 0.0
    %4313 = vmatprep.subr.mxu0 0.0
    %4314 = vmatpush1.msra.mxu0 0.0
    %4315 = vmatprep.subr.mxu0 0.0
    %4316 = vmatpush1.msra.mxu0 0.0
    %4317 = vmatprep.subr.mxu0 0.0
    %4318 = vmatpush1.msra.mxu0 0.0
    %4319 = vmatprep.subr.mxu0 0.0
    %4320 = vmatpush1.msra.mxu0 0.0
    %4321 = vmatprep.subr.mxu0 0.0
    %4322 = vmatpush1.msra.mxu0 0.0
    %4323 = vmatprep.subr.mxu0 0.0
    %4324 = vmatpush1.msra.mxu0 0.0
    %4325 = vmatprep.subr.mxu0 0.0
    %4326 = vmatpush1.msra.mxu0 0.0
    %4327 = vmatprep.subr.mxu0 0.0
    %4328 = vmatpush1.msra.mxu0 0.0
    %4329 = vmatprep.subr.mxu0 0.0
    %4330 = vmatpush1.msra.mxu0 0.0
    %4331 = vmatprep.subr.mxu0 0.0
    %4332 = vmatpush1.msra.mxu0 0.0
    %4333 = vmatprep.subr.mxu0 0.0
    %4334 = vmatpush1.msra.mxu0 0.0
    %4335 = vmatprep.subr.mxu0 0.0
    %4336 = vmatpush1.msra.mxu0 0.0
    %4337 = vmatprep.mubr.f32.mxu0 0.0
    %4338 = vmatmul.mubr.f32.gmra.mrb[0].mxu0 %v601
    %v4339 = vpop.f32.mrb[0].mxu0
    %v4340 = vadd.f32 %v4265, %v4339
    %v4341 = vpop.f32.mrb[0].mxu0
    %4342 = vmatprep.mubr.f32.mxu0 0.0
    %4343 = vmatmul.mubr.f32.gmra.mrb[0].mxu0 %v604
    %v4344 = vpop.f32.mrb[0].mxu0
    %v4345 = vadd.f32 %v4270, %v4344
    %v4346 = vpop.f32.mrb[0].mxu0
    %4347 = vdwg.mxu0
    %s4348 = scalar_lea.vmem %s4, 384
    %v4349 = vld [vmem:[%s4348] sm:$0xff]
    %v4350 = vld [vmem:[%s4348 + $0x8] sm:$0xff]
    %v4351 = vld [vmem:[%s4348 + $0x10] sm:$0xff]
    %v4352 = vld [vmem:[%s4348 + $0x18] sm:$0xff]
    %v4354 = vsel %vm959, %v4349, 0
    %v4357 = vsel %vm959, %v4350, 0
    %v4360 = vsel %vm959, %v4351, 0
    %v4363 = vsel %vm959, %v4352, 0
    %4365 = vmatprep.subr.mxu0 0.0
    %4366 = vmatpush1.msra.mxu0 %v4340
    %4367 = vmatprep.subr.mxu0 0.0
    %4368 = vmatpush1.msra.mxu0 %v4345
    %4369 = vmatprep.subr.mxu0 0.0
    %4370 = vmatpush1.msra.mxu0 0.0
    %4371 = vmatprep.subr.mxu0 0.0
    %4372 = vmatpush1.msra.mxu0 0.0
    %4373 = vmatprep.subr.mxu0 0.0
    %4374 = vmatpush1.msra.mxu0 0.0
    %4375 = vmatprep.subr.mxu0 0.0
    %4376 = vmatpush1.msra.mxu0 0.0
    %4377 = vmatprep.subr.mxu0 0.0
    %4378 = vmatpush1.msra.mxu0 0.0
    %4379 = vmatprep.subr.mxu0 0.0
    %4380 = vmatpush1.msra.mxu0 0.0
    %4381 = vmatprep.subr.mxu0 0.0
    %4382 = vmatpush1.msra.mxu0 0.0
    %4383 = vmatprep.subr.mxu0 0.0
    %4384 = vmatpush1.msra.mxu0 0.0
    %4385 = vmatprep.subr.mxu0 0.0
    %4386 = vmatpush1.msra.mxu0 0.0
    %4387 = vmatprep.subr.mxu0 0.0
    %4388 = vmatpush1.msra.mxu0 0.0
    %4389 = vmatprep.subr.mxu0 0.0
    %4390 = vmatpush1.msra.mxu0 0.0
    %4391 = vmatprep.subr.mxu0 0.0
    %4392 = vmatpush1.msra.mxu0 0.0
    %4393 = vmatprep.subr.mxu0 0.0
    %4394 = vmatpush1.msra.mxu0 0.0
    %4395 = vmatprep.subr.mxu0 0.0
    %4396 = vmatpush1.msra.mxu0 0.0
    %4397 = vmatprep.subr.mxu0 0.0
    %4398 = vmatpush1.msra.mxu0 0.0
    %4399 = vmatprep.subr.mxu0 0.0
    %4400 = vmatpush1.msra.mxu0 0.0
    %4401 = vmatprep.subr.mxu0 0.0
    %4402 = vmatpush1.msra.mxu0 0.0
    %4403 = vmatprep.subr.mxu0 0.0
    %4404 = vmatpush1.msra.mxu0 0.0
    %4405 = vmatprep.subr.mxu0 0.0
    %4406 = vmatpush1.msra.mxu0 0.0
    %4407 = vmatprep.subr.mxu0 0.0
    %4408 = vmatpush1.msra.mxu0 0.0
    %4409 = vmatprep.subr.mxu0 0.0
    %4410 = vmatpush1.msra.mxu0 0.0
    %4411 = vmatprep.subr.mxu0 0.0
    %4412 = vmatpush1.msra.mxu0 0.0
    %4413 = vmatprep.subr.mxu0 0.0
    %4414 = vmatpush1.msra.mxu0 0.0
    %4415 = vmatprep.subr.mxu0 0.0
    %4416 = vmatpush1.msra.mxu0 0.0
    %4417 = vmatprep.subr.mxu0 0.0
    %4418 = vmatpush1.msra.mxu0 0.0
    %4419 = vmatprep.subr.mxu0 0.0
    %4420 = vmatpush1.msra.mxu0 0.0
    %4421 = vmatprep.subr.mxu0 0.0
    %4422 = vmatpush1.msra.mxu0 0.0
    %4423 = vmatprep.subr.mxu0 0.0
    %4424 = vmatpush1.msra.mxu0 0.0
    %4425 = vmatprep.subr.mxu0 0.0
    %4426 = vmatpush1.msra.mxu0 0.0
    %4427 = vmatprep.subr.mxu0 0.0
    %4428 = vmatpush1.msra.mxu0 0.0
    %4429 = vmatprep.mubr.f32.mxu0 0.0
    %4430 = vmatmul.mubr.f32.gmra.mrb[0].mxu0 %v4354
    %v4431 = vpop.f32.mrb[0].mxu0
    %v4432 = vadd.f32 0.0, %v4431
    %v4433 = vpop.f32.mrb[0].mxu0
    %4434 = vmatprep.mubr.f32.mxu0 0.0
    %4435 = vmatmul.mubr.f32.gmra.mrb[0].mxu0 %v4357
    %v4436 = vpop.f32.mrb[0].mxu0
    %v4437 = vadd.f32 0.0, %v4436
    %v4438 = vpop.f32.mrb[0].mxu0
    %4439 = vmatprep.mubr.f32.mxu0 0.0
    %4440 = vmatmul.mubr.f32.gmra.mrb[0].mxu0 %v4360
    %v4441 = vpop.f32.mrb[0].mxu0
    %v4442 = vadd.f32 0.0, %v4441
    %v4443 = vpop.f32.mrb[0].mxu0
    %4444 = vmatprep.mubr.f32.mxu0 0.0
    %4445 = vmatmul.mubr.f32.gmra.mrb[0].mxu0 %v4363
    %v4446 = vpop.f32.mrb[0].mxu0
    %v4447 = vadd.f32 0.0, %v4446
    %v4448 = vpop.f32.mrb[0].mxu0
    %4449 = vdwg.mxu0
    %v4450 = vadd.f32 %v4150, %v4432
    %v4451 = vadd.f32 %v4151, %v4437
    %v4452 = vadd.f32 %v4152, %v4442
    %v4453 = vadd.f32 %v4153, %v4447
    %s4454 = scalar_lea.vmem %s5, 4472
    %v4455 = vld [vmem:[%s4454] sm:$0xff]
    %v4456 = vld [vmem:[%s4454 + $0x8] sm:$0xff]
    %v4457 = vld [vmem:[%s4454 + $0x10] sm:$0xff]
    %v4458 = vld [vmem:[%s4454 + $0x18] sm:$0xff]
    %v4459 = vld [vmem:[%s4454 + $0x20] sm:$0xff]
    %v4460 = vld [vmem:[%s4454 + $0x28] sm:$0xff]
    %v4461 = vld [vmem:[%s4454 + $0x30] sm:$0xff]
    %v4462 = vld [vmem:[%s4454 + $0x38] sm:$0xff]
    %v4463 = vld [vmem:[%s4454 + $0x40] sm:$0xff]
    %v4464 = vld [vmem:[%s4454 + $0x48] sm:$0xff]
    %v4465 = vld [vmem:[%s4454 + $0x50] sm:$0xff]
    %v4466 = vld [vmem:[%s4454 + $0x58] sm:$0xff]
    %v4467 = vld [vmem:[%s4454 + $0x60] sm:$0xff]
    %v4468 = vld [vmem:[%s4454 + $0x68] sm:$0xff]
    %v4469 = vld [vmem:[%s4454 + $0x70] sm:$0xff]
    %v4470 = vld [vmem:[%s4454 + $0x78] sm:$0xff]
    %v4471 = vld [vmem:[%s4454 + $0x80] sm:$0xff]
    %v4472 = vld [vmem:[%s4454 + $0x88] sm:$0xff]
    %v4473 = vld [vmem:[%s4454 + $0x90] sm:$0xff]
    %v4474 = vld [vmem:[%s4454 + $0x98] sm:$0xff]
    %v4475 = vld [vmem:[%s4454 + $0xa0] sm:$0xff]
    %v4476 = vld [vmem:[%s4454 + $0xa8] sm:$0xff]
    %v4477 = vld [vmem:[%s4454 + $0xb0] sm:$0xff]
    %v4478 = vld [vmem:[%s4454 + $0xb8] sm:$0xff]
    %v4479 = vld [vmem:[%s4454 + $0xc0] sm:$0xff]
    %v4480 = vld [vmem:[%s4454 + $0xc8] sm:$0xff]
    %v4481 = vld [vmem:[%s4454 + $0xd0] sm:$0xff]
    %v4482 = vld [vmem:[%s4454 + $0xd8] sm:$0xff]
    %v4483 = vld [vmem:[%s4454 + $0xe0] sm:$0xff]
    %v4484 = vld [vmem:[%s4454 + $0xe8] sm:$0xff]
    %v4485 = vld [vmem:[%s4454 + $0xf0] sm:$0xff]
    %v4486 = vld [vmem:[%s4454 + $0xf8] sm:$0xff]
    %v4487 = vld [vmem:[%s4454 + $0x100] sm:$0xff]
    %v4488 = vld [vmem:[%s4454 + $0x108] sm:$0xff]
    %v4489 = vld [vmem:[%s4454 + $0x110] sm:$0xff]
    %v4490 = vld [vmem:[%s4454 + $0x118] sm:$0xff]
    %v4491 = vld [vmem:[%s4454 + $0x120] sm:$0xff]
    %v4492 = vld [vmem:[%s4454 + $0x128] sm:$0xff]
    %v4493 = vld [vmem:[%s4454 + $0x130] sm:$0xff]
    %v4494 = vld [vmem:[%s4454 + $0x138] sm:$0xff]
    %v4495 = vld [vmem:[%s4454 + $0x140] sm:$0xff]
    %v4496 = vld [vmem:[%s4454 + $0x148] sm:$0xff]
    %v4497 = vld [vmem:[%s4454 + $0x150] sm:$0xff]
    %4498 = vmatprep.subr.mxu0 0.0
    %4499 = vmatpush1.msra.mxu0 %v4455
    %4500 = vmatprep.subr.mxu0 0.0
    %4501 = vmatpush1.msra.mxu0 %v4456
    %4502 = vmatprep.subr.mxu0 0.0
    %4503 = vmatpush1.msra.mxu0 %v4457
    %4504 = vmatprep.subr.mxu0 0.0
    %4505 = vmatpush1.msra.mxu0 %v4458
    %4506 = vmatprep.subr.mxu0 0.0
    %4507 = vmatpush1.msra.mxu0 %v4459
    %4508 = vmatprep.subr.mxu0 0.0
    %4509 = vmatpush1.msra.mxu0 %v4460
    %4510 = vmatprep.subr.mxu0 0.0
    %4511 = vmatpush1.msra.mxu0 %v4461
    %4512 = vmatprep.subr.mxu0 0.0
    %4513 = vmatpush1.msra.mxu0 %v4462
    %4514 = vmatprep.subr.mxu0 0.0
    %4515 = vmatpush1.msra.mxu0 %v4463
    %4516 = vmatprep.subr.mxu0 0.0
    %4517 = vmatpush1.msra.mxu0 %v4464
    %4518 = vmatprep.subr.mxu0 0.0
    %4519 = vmatpush1.msra.mxu0 %v4465
    %4520 = vmatprep.subr.mxu0 0.0
    %4521 = vmatpush1.msra.mxu0 %v4466
    %4522 = vmatprep.subr.mxu0 0.0
    %4523 = vmatpush1.msra.mxu0 %v4467
    %4524 = vmatprep.subr.mxu0 0.0
    %4525 = vmatpush1.msra.mxu0 %v4468
    %4526 = vmatprep.subr.mxu0 0.0
    %4527 = vmatpush1.msra.mxu0 %v4469
    %4528 = vmatprep.subr.mxu0 0.0
    %4529 = vmatpush1.msra.mxu0 %v4470
    %4530 = vmatprep.subr.mxu0 0.0
    %4531 = vmatpush1.msra.mxu0 %v4471
    %4532 = vmatprep.subr.mxu0 0.0
    %4533 = vmatpush1.msra.mxu0 %v4472
    %4534 = vmatprep.subr.mxu0 0.0
    %4535 = vmatpush1.msra.mxu0 %v4473
    %4536 = vmatprep.subr.mxu0 0.0
    %4537 = vmatpush1.msra.mxu0 %v4474
    %4538 = vmatprep.subr.mxu0 0.0
    %4539 = vmatpush1.msra.mxu0 %v4475
    %4540 = vmatprep.subr.mxu0 0.0
    %4541 = vmatpush1.msra.mxu0 %v4476
    %4542 = vmatprep.subr.mxu0 0.0
    %4543 = vmatpush1.msra.mxu0 %v4477
    %4544 = vmatprep.subr.mxu0 0.0
    %4545 = vmatpush1.msra.mxu0 %v4478
    %4546 = vmatprep.subr.mxu0 0.0
    %4547 = vmatpush1.msra.mxu0 %v4479
    %4548 = vmatprep.subr.mxu0 0.0
    %4549 = vmatpush1.msra.mxu0 %v4480
    %4550 = vmatprep.subr.mxu0 0.0
    %4551 = vmatpush1.msra.mxu0 %v4481
    %4552 = vmatprep.subr.mxu0 0.0
    %4553 = vmatpush1.msra.mxu0 %v4482
    %4554 = vmatprep.subr.mxu0 0.0
    %4555 = vmatpush1.msra.mxu0 %v4483
    %4556 = vmatprep.subr.mxu0 0.0
    %4557 = vmatpush1.msra.mxu0 %v4484
    %4558 = vmatprep.subr.mxu0 0.0
    %4559 = vmatpush1.msra.mxu0 %v4485
    %4560 = vmatprep.subr.mxu0 0.0
    %4561 = vmatpush1.msra.mxu0 %v4486
    %4562 = vmatprep.mubr.f32.mxu0 %v552
    %4563 = vmatmul.mubr.f32.gmra.mrb[0].mxu0 %v551
    %v4564 = vpop.f32.mrb[0].mxu0
    %v4565 = vadd.f32 0.0, %v4564
    %v4566 = vpop.f32.mrb[0].mxu0
    %4567 = vmatprep.mubr.f32.mxu0 %v555
    %4568 = vmatmul.mubr.f32.gmra.mrb[0].mxu0 %v554
    %v4569 = vpop.f32.mrb[0].mxu0
    %v4570 = vadd.f32 0.0, %v4569
    %v4571 = vpop.f32.mrb[0].mxu0
    %4572 = vdwg.mxu0
    %4573 = vmatprep.subr.mxu0 0.0
    %4574 = vmatpush1.msra.mxu0 %v4487
    %4575 = vmatprep.subr.mxu0 0.0
    %4576 = vmatpush1.msra.mxu0 %v4488
    %4577 = vmatprep.subr.mxu0 0.0
    %4578 = vmatpush1.msra.mxu0 %v4489
    %4579 = vmatprep.subr.mxu0 0.0
    %4580 = vmatpush1.msra.mxu0 %v4490
    %4581 = vmatprep.subr.mxu0 0.0
    %4582 = vmatpush1.msra.mxu0 %v4491
    %4583 = vmatprep.subr.mxu0 0.0
    %4584 = vmatpush1.msra.mxu0 %v4492
    %4585 = vmatprep.subr.mxu0 0.0
    %4586 = vmatpush1.msra.mxu0 %v4493
    %4587 = vmatprep.subr.mxu0 0.0
    %4588 = vmatpush1.msra.mxu0 %v4494
    %4589 = vmatprep.subr.mxu0 0.0
    %4590 = vmatpush1.msra.mxu0 %v4495
    %4591 = vmatprep.subr.mxu0 0.0
    %4592 = vmatpush1.msra.mxu0 %v4496
    %4593 = vmatprep.subr.mxu0 0.0
    %4594 = vmatpush1.msra.mxu0 %v4497
    %4595 = vmatprep.subr.mxu0 0.0
    %4596 = vmatpush1.msra.mxu0 0.0
    %4597 = vmatprep.subr.mxu0 0.0
    %4598 = vmatpush1.msra.mxu0 0.0
    %4599 = vmatprep.subr.mxu0 0.0
    %4600 = vmatpush1.msra.mxu0 0.0
    %4601 = vmatprep.subr.mxu0 0.0
    %4602 = vmatpush1.msra.mxu0 0.0
    %4603 = vmatprep.subr.mxu0 0.0
    %4604 = vmatpush1.msra.mxu0 0.0
    %4605 = vmatprep.subr.mxu0 0.0
    %4606 = vmatpush1.msra.mxu0 0.0
    %4607 = vmatprep.subr.mxu0 0.0
    %4608 = vmatpush1.msra.mxu0 0.0
    %4609 = vmatprep.subr.mxu0 0.0
    %4610 = vmatpush1.msra.mxu0 0.0
    %4611 = vmatprep.subr.mxu0 0.0
    %4612 = vmatpush1.msra.mxu0 0.0
    %4613 = vmatprep.subr.mxu0 0.0
    %4614 = vmatpush1.msra.mxu0 0.0
    %4615 = vmatprep.subr.mxu0 0.0
    %4616 = vmatpush1.msra.mxu0 0.0
    %4617 = vmatprep.subr.mxu0 0.0
    %4618 = vmatpush1.msra.mxu0 0.0
    %4619 = vmatprep.subr.mxu0 0.0
    %4620 = vmatpush1.msra.mxu0 0.0
    %4621 = vmatprep.subr.mxu0 0.0
    %4622 = vmatpush1.msra.mxu0 0.0
    %4623 = vmatprep.subr.mxu0 0.0
    %4624 = vmatpush1.msra.mxu0 0.0
    %4625 = vmatprep.subr.mxu0 0.0
    %4626 = vmatpush1.msra.mxu0 0.0
    %4627 = vmatprep.subr.mxu0 0.0
    %4628 = vmatpush1.msra.mxu0 0.0
    %4629 = vmatprep.subr.mxu0 0.0
    %4630 = vmatpush1.msra.mxu0 0.0
    %4631 = vmatprep.subr.mxu0 0.0
    %4632 = vmatpush1.msra.mxu0 0.0
    %4633 = vmatprep.subr.mxu0 0.0
    %4634 = vmatpush1.msra.mxu0 0.0
    %4635 = vmatprep.subr.mxu0 0.0
    %4636 = vmatpush1.msra.mxu0 0.0
    %4637 = vmatprep.mubr.f32.mxu0 0.0
    %4638 = vmatmul.mubr.f32.gmra.mrb[0].mxu0 %v601
    %v4639 = vpop.f32.mrb[0].mxu0
    %v4640 = vadd.f32 %v4565, %v4639
    %v4641 = vpop.f32.mrb[0].mxu0
    %4642 = vmatprep.mubr.f32.mxu0 0.0
    %4643 = vmatmul.mubr.f32.gmra.mrb[0].mxu0 %v604
    %v4644 = vpop.f32.mrb[0].mxu0
    %v4645 = vadd.f32 %v4570, %v4644
    %v4646 = vpop.f32.mrb[0].mxu0
    %4647 = vdwg.mxu0
    %s4648 = scalar_lea.vmem %s4, 416
    %v4649 = vld [vmem:[%s4648] sm:$0xff]
    %v4650 = vld [vmem:[%s4648 + $0x8] sm:$0xff]
    %v4651 = vld [vmem:[%s4648 + $0x10] sm:$0xff]
    %v4652 = vld [vmem:[%s4648 + $0x18] sm:$0xff]
    %v4654 = vsel %vm959, %v4649, 0
    %v4657 = vsel %vm959, %v4650, 0
    %v4660 = vsel %vm959, %v4651, 0
    %v4663 = vsel %vm959, %v4652, 0
    %4665 = vmatprep.subr.mxu0 0.0
    %4666 = vmatpush1.msra.mxu0 %v4640
    %4667 = vmatprep.subr.mxu0 0.0
    %4668 = vmatpush1.msra.mxu0 %v4645
    %4669 = vmatprep.subr.mxu0 0.0
    %4670 = vmatpush1.msra.mxu0 0.0
    %4671 = vmatprep.subr.mxu0 0.0
    %4672 = vmatpush1.msra.mxu0 0.0
    %4673 = vmatprep.subr.mxu0 0.0
    %4674 = vmatpush1.msra.mxu0 0.0
    %4675 = vmatprep.subr.mxu0 0.0
    %4676 = vmatpush1.msra.mxu0 0.0
    %4677 = vmatprep.subr.mxu0 0.0
    %4678 = vmatpush1.msra.mxu0 0.0
    %4679 = vmatprep.subr.mxu0 0.0
    %4680 = vmatpush1.msra.mxu0 0.0
    %4681 = vmatprep.subr.mxu0 0.0
    %4682 = vmatpush1.msra.mxu0 0.0
    %4683 = vmatprep.subr.mxu0 0.0
    %4684 = vmatpush1.msra.mxu0 0.0
    %4685 = vmatprep.subr.mxu0 0.0
    %4686 = vmatpush1.msra.mxu0 0.0
    %4687 = vmatprep.subr.mxu0 0.0
    %4688 = vmatpush1.msra.mxu0 0.0
    %4689 = vmatprep.subr.mxu0 0.0
    %4690 = vmatpush1.msra.mxu0 0.0
    %4691 = vmatprep.subr.mxu0 0.0
    %4692 = vmatpush1.msra.mxu0 0.0
    %4693 = vmatprep.subr.mxu0 0.0
    %4694 = vmatpush1.msra.mxu0 0.0
    %4695 = vmatprep.subr.mxu0 0.0
    %4696 = vmatpush1.msra.mxu0 0.0
    %4697 = vmatprep.subr.mxu0 0.0
    %4698 = vmatpush1.msra.mxu0 0.0
    %4699 = vmatprep.subr.mxu0 0.0
    %4700 = vmatpush1.msra.mxu0 0.0
    %4701 = vmatprep.subr.mxu0 0.0
    %4702 = vmatpush1.msra.mxu0 0.0
    %4703 = vmatprep.subr.mxu0 0.0
    %4704 = vmatpush1.msra.mxu0 0.0
    %4705 = vmatprep.subr.mxu0 0.0
    %4706 = vmatpush1.msra.mxu0 0.0
    %4707 = vmatprep.subr.mxu0 0.0
    %4708 = vmatpush1.msra.mxu0 0.0
    %4709 = vmatprep.subr.mxu0 0.0
    %4710 = vmatpush1.msra.mxu0 0.0
    %4711 = vmatprep.subr.mxu0 0.0
    %4712 = vmatpush1.msra.mxu0 0.0
    %4713 = vmatprep.subr.mxu0 0.0
    %4714 = vmatpush1.msra.mxu0 0.0
    %4715 = vmatprep.subr.mxu0 0.0
    %4716 = vmatpush1.msra.mxu0 0.0
    %4717 = vmatprep.subr.mxu0 0.0
    %4718 = vmatpush1.msra.mxu0 0.0
    %4719 = vmatprep.subr.mxu0 0.0
    %4720 = vmatpush1.msra.mxu0 0.0
    %4721 = vmatprep.subr.mxu0 0.0
    %4722 = vmatpush1.msra.mxu0 0.0
    %4723 = vmatprep.subr.mxu0 0.0
    %4724 = vmatpush1.msra.mxu0 0.0
    %4725 = vmatprep.subr.mxu0 0.0
    %4726 = vmatpush1.msra.mxu0 0.0
    %4727 = vmatprep.subr.mxu0 0.0
    %4728 = vmatpush1.msra.mxu0 0.0
    %4729 = vmatprep.mubr.f32.mxu0 0.0
    %4730 = vmatmul.mubr.f32.gmra.mrb[0].mxu0 %v4654
    %v4731 = vpop.f32.mrb[0].mxu0
    %v4732 = vadd.f32 0.0, %v4731
    %v4733 = vpop.f32.mrb[0].mxu0
    %4734 = vmatprep.mubr.f32.mxu0 0.0
    %4735 = vmatmul.mubr.f32.gmra.mrb[0].mxu0 %v4657
    %v4736 = vpop.f32.mrb[0].mxu0
    %v4737 = vadd.f32 0.0, %v4736
    %v4738 = vpop.f32.mrb[0].mxu0
    %4739 = vmatprep.mubr.f32.mxu0 0.0
    %4740 = vmatmul.mubr.f32.gmra.mrb[0].mxu0 %v4660
    %v4741 = vpop.f32.mrb[0].mxu0
    %v4742 = vadd.f32 0.0, %v4741
    %v4743 = vpop.f32.mrb[0].mxu0
    %4744 = vmatprep.mubr.f32.mxu0 0.0
    %4745 = vmatmul.mubr.f32.gmra.mrb[0].mxu0 %v4663
    %v4746 = vpop.f32.mrb[0].mxu0
    %v4747 = vadd.f32 0.0, %v4746
    %v4748 = vpop.f32.mrb[0].mxu0
    %4749 = vdwg.mxu0
    %v4750 = vadd.f32 %v4450, %v4732
    %v4751 = vadd.f32 %v4451, %v4737
    %v4752 = vadd.f32 %v4452, %v4742
    %v4753 = vadd.f32 %v4453, %v4747
    %s4754 = scalar_lea.vmem %s5, 4816
    %v4755 = vld [vmem:[%s4754] sm:$0xff]
    %v4756 = vld [vmem:[%s4754 + $0x8] sm:$0xff]
    %v4757 = vld [vmem:[%s4754 + $0x10] sm:$0xff]
    %v4758 = vld [vmem:[%s4754 + $0x18] sm:$0xff]
    %v4759 = vld [vmem:[%s4754 + $0x20] sm:$0xff]
    %v4760 = vld [vmem:[%s4754 + $0x28] sm:$0xff]
    %v4761 = vld [vmem:[%s4754 + $0x30] sm:$0xff]
    %v4762 = vld [vmem:[%s4754 + $0x38] sm:$0xff]
    %v4763 = vld [vmem:[%s4754 + $0x40] sm:$0xff]
    %v4764 = vld [vmem:[%s4754 + $0x48] sm:$0xff]
    %v4765 = vld [vmem:[%s4754 + $0x50] sm:$0xff]
    %v4766 = vld [vmem:[%s4754 + $0x58] sm:$0xff]
    %v4767 = vld [vmem:[%s4754 + $0x60] sm:$0xff]
    %v4768 = vld [vmem:[%s4754 + $0x68] sm:$0xff]
    %v4769 = vld [vmem:[%s4754 + $0x70] sm:$0xff]
    %v4770 = vld [vmem:[%s4754 + $0x78] sm:$0xff]
    %v4771 = vld [vmem:[%s4754 + $0x80] sm:$0xff]
    %v4772 = vld [vmem:[%s4754 + $0x88] sm:$0xff]
    %v4773 = vld [vmem:[%s4754 + $0x90] sm:$0xff]
    %v4774 = vld [vmem:[%s4754 + $0x98] sm:$0xff]
    %v4775 = vld [vmem:[%s4754 + $0xa0] sm:$0xff]
    %v4776 = vld [vmem:[%s4754 + $0xa8] sm:$0xff]
    %v4777 = vld [vmem:[%s4754 + $0xb0] sm:$0xff]
    %v4778 = vld [vmem:[%s4754 + $0xb8] sm:$0xff]
    %v4779 = vld [vmem:[%s4754 + $0xc0] sm:$0xff]
    %v4780 = vld [vmem:[%s4754 + $0xc8] sm:$0xff]
    %v4781 = vld [vmem:[%s4754 + $0xd0] sm:$0xff]
    %v4782 = vld [vmem:[%s4754 + $0xd8] sm:$0xff]
    %v4783 = vld [vmem:[%s4754 + $0xe0] sm:$0xff]
    %v4784 = vld [vmem:[%s4754 + $0xe8] sm:$0xff]
    %v4785 = vld [vmem:[%s4754 + $0xf0] sm:$0xff]
    %v4786 = vld [vmem:[%s4754 + $0xf8] sm:$0xff]
    %v4787 = vld [vmem:[%s4754 + $0x100] sm:$0xff]
    %v4788 = vld [vmem:[%s4754 + $0x108] sm:$0xff]
    %v4789 = vld [vmem:[%s4754 + $0x110] sm:$0xff]
    %v4790 = vld [vmem:[%s4754 + $0x118] sm:$0xff]
    %v4791 = vld [vmem:[%s4754 + $0x120] sm:$0xff]
    %v4792 = vld [vmem:[%s4754 + $0x128] sm:$0xff]
    %v4793 = vld [vmem:[%s4754 + $0x130] sm:$0xff]
    %v4794 = vld [vmem:[%s4754 + $0x138] sm:$0xff]
    %v4795 = vld [vmem:[%s4754 + $0x140] sm:$0xff]
    %v4796 = vld [vmem:[%s4754 + $0x148] sm:$0xff]
    %v4797 = vld [vmem:[%s4754 + $0x150] sm:$0xff]
    %4798 = vmatprep.subr.mxu0 0.0
    %4799 = vmatpush1.msra.mxu0 %v4755
    %4800 = vmatprep.subr.mxu0 0.0
    %4801 = vmatpush1.msra.mxu0 %v4756
    %4802 = vmatprep.subr.mxu0 0.0
    %4803 = vmatpush1.msra.mxu0 %v4757
    %4804 = vmatprep.subr.mxu0 0.0
    %4805 = vmatpush1.msra.mxu0 %v4758
    %4806 = vmatprep.subr.mxu0 0.0
    %4807 = vmatpush1.msra.mxu0 %v4759
    %4808 = vmatprep.subr.mxu0 0.0
    %4809 = vmatpush1.msra.mxu0 %v4760
    %4810 = vmatprep.subr.mxu0 0.0
    %4811 = vmatpush1.msra.mxu0 %v4761
    %4812 = vmatprep.subr.mxu0 0.0
    %4813 = vmatpush1.msra.mxu0 %v4762
    %4814 = vmatprep.subr.mxu0 0.0
    %4815 = vmatpush1.msra.mxu0 %v4763
    %4816 = vmatprep.subr.mxu0 0.0
    %4817 = vmatpush1.msra.mxu0 %v4764
    %4818 = vmatprep.subr.mxu0 0.0
    %4819 = vmatpush1.msra.mxu0 %v4765
    %4820 = vmatprep.subr.mxu0 0.0
    %4821 = vmatpush1.msra.mxu0 %v4766
    %4822 = vmatprep.subr.mxu0 0.0
    %4823 = vmatpush1.msra.mxu0 %v4767
    %4824 = vmatprep.subr.mxu0 0.0
    %4825 = vmatpush1.msra.mxu0 %v4768
    %4826 = vmatprep.subr.mxu0 0.0
    %4827 = vmatpush1.msra.mxu0 %v4769
    %4828 = vmatprep.subr.mxu0 0.0
    %4829 = vmatpush1.msra.mxu0 %v4770
    %4830 = vmatprep.subr.mxu0 0.0
    %4831 = vmatpush1.msra.mxu0 %v4771
    %4832 = vmatprep.subr.mxu0 0.0
    %4833 = vmatpush1.msra.mxu0 %v4772
    %4834 = vmatprep.subr.mxu0 0.0
    %4835 = vmatpush1.msra.mxu0 %v4773
    %4836 = vmatprep.subr.mxu0 0.0
    %4837 = vmatpush1.msra.mxu0 %v4774
    %4838 = vmatprep.subr.mxu0 0.0
    %4839 = vmatpush1.msra.mxu0 %v4775
    %4840 = vmatprep.subr.mxu0 0.0
    %4841 = vmatpush1.msra.mxu0 %v4776
    %4842 = vmatprep.subr.mxu0 0.0
    %4843 = vmatpush1.msra.mxu0 %v4777
    %4844 = vmatprep.subr.mxu0 0.0
    %4845 = vmatpush1.msra.mxu0 %v4778
    %4846 = vmatprep.subr.mxu0 0.0
    %4847 = vmatpush1.msra.mxu0 %v4779
    %4848 = vmatprep.subr.mxu0 0.0
    %4849 = vmatpush1.msra.mxu0 %v4780
    %4850 = vmatprep.subr.mxu0 0.0
    %4851 = vmatpush1.msra.mxu0 %v4781
    %4852 = vmatprep.subr.mxu0 0.0
    %4853 = vmatpush1.msra.mxu0 %v4782
    %4854 = vmatprep.subr.mxu0 0.0
    %4855 = vmatpush1.msra.mxu0 %v4783
    %4856 = vmatprep.subr.mxu0 0.0
    %4857 = vmatpush1.msra.mxu0 %v4784
    %4858 = vmatprep.subr.mxu0 0.0
    %4859 = vmatpush1.msra.mxu0 %v4785
    %4860 = vmatprep.subr.mxu0 0.0
    %4861 = vmatpush1.msra.mxu0 %v4786
    %4862 = vmatprep.mubr.f32.mxu0 %v552
    %4863 = vmatmul.mubr.f32.gmra.mrb[0].mxu0 %v551
    %v4864 = vpop.f32.mrb[0].mxu0
    %v4865 = vadd.f32 0.0, %v4864
    %v4866 = vpop.f32.mrb[0].mxu0
    %4867 = vmatprep.mubr.f32.mxu0 %v555
    %4868 = vmatmul.mubr.f32.gmra.mrb[0].mxu0 %v554
    %v4869 = vpop.f32.mrb[0].mxu0
    %v4870 = vadd.f32 0.0, %v4869
    %v4871 = vpop.f32.mrb[0].mxu0
    %4872 = vdwg.mxu0
    %4873 = vmatprep.subr.mxu0 0.0
    %4874 = vmatpush1.msra.mxu0 %v4787
    %4875 = vmatprep.subr.mxu0 0.0
    %4876 = vmatpush1.msra.mxu0 %v4788
    %4877 = vmatprep.subr.mxu0 0.0
    %4878 = vmatpush1.msra.mxu0 %v4789
    %4879 = vmatprep.subr.mxu0 0.0
    %4880 = vmatpush1.msra.mxu0 %v4790
    %4881 = vmatprep.subr.mxu0 0.0
    %4882 = vmatpush1.msra.mxu0 %v4791
    %4883 = vmatprep.subr.mxu0 0.0
    %4884 = vmatpush1.msra.mxu0 %v4792
    %4885 = vmatprep.subr.mxu0 0.0
    %4886 = vmatpush1.msra.mxu0 %v4793
    %4887 = vmatprep.subr.mxu0 0.0
    %4888 = vmatpush1.msra.mxu0 %v4794
    %4889 = vmatprep.subr.mxu0 0.0
    %4890 = vmatpush1.msra.mxu0 %v4795
    %4891 = vmatprep.subr.mxu0 0.0
    %4892 = vmatpush1.msra.mxu0 %v4796
    %4893 = vmatprep.subr.mxu0 0.0
    %4894 = vmatpush1.msra.mxu0 %v4797
    %4895 = vmatprep.subr.mxu0 0.0
    %4896 = vmatpush1.msra.mxu0 0.0
    %4897 = vmatprep.subr.mxu0 0.0
    %4898 = vmatpush1.msra.mxu0 0.0
    %4899 = vmatprep.subr.mxu0 0.0
    %4900 = vmatpush1.msra.mxu0 0.0
    %4901 = vmatprep.subr.mxu0 0.0
    %4902 = vmatpush1.msra.mxu0 0.0
    %4903 = vmatprep.subr.mxu0 0.0
    %4904 = vmatpush1.msra.mxu0 0.0
    %4905 = vmatprep.subr.mxu0 0.0
    %4906 = vmatpush1.msra.mxu0 0.0
    %4907 = vmatprep.subr.mxu0 0.0
    %4908 = vmatpush1.msra.mxu0 0.0
    %4909 = vmatprep.subr.mxu0 0.0
    %4910 = vmatpush1.msra.mxu0 0.0
    %4911 = vmatprep.subr.mxu0 0.0
    %4912 = vmatpush1.msra.mxu0 0.0
    %4913 = vmatprep.subr.mxu0 0.0
    %4914 = vmatpush1.msra.mxu0 0.0
    %4915 = vmatprep.subr.mxu0 0.0
    %4916 = vmatpush1.msra.mxu0 0.0
    %4917 = vmatprep.subr.mxu0 0.0
    %4918 = vmatpush1.msra.mxu0 0.0
    %4919 = vmatprep.subr.mxu0 0.0
    %4920 = vmatpush1.msra.mxu0 0.0
    %4921 = vmatprep.subr.mxu0 0.0
    %4922 = vmatpush1.msra.mxu0 0.0
    %4923 = vmatprep.subr.mxu0 0.0
    %4924 = vmatpush1.msra.mxu0 0.0
    %4925 = vmatprep.subr.mxu0 0.0
    %4926 = vmatpush1.msra.mxu0 0.0
    %4927 = vmatprep.subr.mxu0 0.0
    %4928 = vmatpush1.msra.mxu0 0.0
    %4929 = vmatprep.subr.mxu0 0.0
    %4930 = vmatpush1.msra.mxu0 0.0
    %4931 = vmatprep.subr.mxu0 0.0
    %4932 = vmatpush1.msra.mxu0 0.0
    %4933 = vmatprep.subr.mxu0 0.0
    %4934 = vmatpush1.msra.mxu0 0.0
    %4935 = vmatprep.subr.mxu0 0.0
    %4936 = vmatpush1.msra.mxu0 0.0
    %4937 = vmatprep.mubr.f32.mxu0 0.0
    %4938 = vmatmul.mubr.f32.gmra.mrb[0].mxu0 %v601
    %v4939 = vpop.f32.mrb[0].mxu0
    %v4940 = vadd.f32 %v4865, %v4939
    %v4941 = vpop.f32.mrb[0].mxu0
    %4942 = vmatprep.mubr.f32.mxu0 0.0
    %4943 = vmatmul.mubr.f32.gmra.mrb[0].mxu0 %v604
    %v4944 = vpop.f32.mrb[0].mxu0
    %v4945 = vadd.f32 %v4870, %v4944
    %v4946 = vpop.f32.mrb[0].mxu0
    %4947 = vdwg.mxu0
    %s4948 = scalar_lea.vmem %s4, 448
    %v4949 = vld [vmem:[%s4948] sm:$0xff]
    %v4950 = vld [vmem:[%s4948 + $0x8] sm:$0xff]
    %v4951 = vld [vmem:[%s4948 + $0x10] sm:$0xff]
    %v4952 = vld [vmem:[%s4948 + $0x18] sm:$0xff]
    %v4954 = vsel %vm959, %v4949, 0
    %v4957 = vsel %vm959, %v4950, 0
    %v4960 = vsel %vm959, %v4951, 0
    %v4963 = vsel %vm959, %v4952, 0
    %4965 = vmatprep.subr.mxu0 0.0
    %4966 = vmatpush1.msra.mxu0 %v4940
    %4967 = vmatprep.subr.mxu0 0.0
    %4968 = vmatpush1.msra.mxu0 %v4945
    %4969 = vmatprep.subr.mxu0 0.0
    %4970 = vmatpush1.msra.mxu0 0.0
    %4971 = vmatprep.subr.mxu0 0.0
    %4972 = vmatpush1.msra.mxu0 0.0
    %4973 = vmatprep.subr.mxu0 0.0
    %4974 = vmatpush1.msra.mxu0 0.0
    %4975 = vmatprep.subr.mxu0 0.0
    %4976 = vmatpush1.msra.mxu0 0.0
    %4977 = vmatprep.subr.mxu0 0.0
    %4978 = vmatpush1.msra.mxu0 0.0
    %4979 = vmatprep.subr.mxu0 0.0
    %4980 = vmatpush1.msra.mxu0 0.0
    %4981 = vmatprep.subr.mxu0 0.0
    %4982 = vmatpush1.msra.mxu0 0.0
    %4983 = vmatprep.subr.mxu0 0.0
    %4984 = vmatpush1.msra.mxu0 0.0
    %4985 = vmatprep.subr.mxu0 0.0
    %4986 = vmatpush1.msra.mxu0 0.0
    %4987 = vmatprep.subr.mxu0 0.0
    %4988 = vmatpush1.msra.mxu0 0.0
    %4989 = vmatprep.subr.mxu0 0.0
    %4990 = vmatpush1.msra.mxu0 0.0
    %4991 = vmatprep.subr.mxu0 0.0
    %4992 = vmatpush1.msra.mxu0 0.0
    %4993 = vmatprep.subr.mxu0 0.0
    %4994 = vmatpush1.msra.mxu0 0.0
    %4995 = vmatprep.subr.mxu0 0.0
    %4996 = vmatpush1.msra.mxu0 0.0
    %4997 = vmatprep.subr.mxu0 0.0
    %4998 = vmatpush1.msra.mxu0 0.0
    %4999 = vmatprep.subr.mxu0 0.0
    %5000 = vmatpush1.msra.mxu0 0.0
    %5001 = vmatprep.subr.mxu0 0.0
    %5002 = vmatpush1.msra.mxu0 0.0
    %5003 = vmatprep.subr.mxu0 0.0
    %5004 = vmatpush1.msra.mxu0 0.0
    %5005 = vmatprep.subr.mxu0 0.0
    %5006 = vmatpush1.msra.mxu0 0.0
    %5007 = vmatprep.subr.mxu0 0.0
    %5008 = vmatpush1.msra.mxu0 0.0
    %5009 = vmatprep.subr.mxu0 0.0
    %5010 = vmatpush1.msra.mxu0 0.0
    %5011 = vmatprep.subr.mxu0 0.0
    %5012 = vmatpush1.msra.mxu0 0.0
    %5013 = vmatprep.subr.mxu0 0.0
    %5014 = vmatpush1.msra.mxu0 0.0
    %5015 = vmatprep.subr.mxu0 0.0
    %5016 = vmatpush1.msra.mxu0 0.0
    %5017 = vmatprep.subr.mxu0 0.0
    %5018 = vmatpush1.msra.mxu0 0.0
    %5019 = vmatprep.subr.mxu0 0.0
    %5020 = vmatpush1.msra.mxu0 0.0
    %5021 = vmatprep.subr.mxu0 0.0
    %5022 = vmatpush1.msra.mxu0 0.0
    %5023 = vmatprep.subr.mxu0 0.0
    %5024 = vmatpush1.msra.mxu0 0.0
    %5025 = vmatprep.subr.mxu0 0.0
    %5026 = vmatpush1.msra.mxu0 0.0
    %5027 = vmatprep.subr.mxu0 0.0
    %5028 = vmatpush1.msra.mxu0 0.0
    %5029 = vmatprep.mubr.f32.mxu0 0.0
    %5030 = vmatmul.mubr.f32.gmra.mrb[0].mxu0 %v4954
    %v5031 = vpop.f32.mrb[0].mxu0
    %v5032 = vadd.f32 0.0, %v5031
    %v5033 = vpop.f32.mrb[0].mxu0
    %5034 = vmatprep.mubr.f32.mxu0 0.0
    %5035 = vmatmul.mubr.f32.gmra.mrb[0].mxu0 %v4957
    %v5036 = vpop.f32.mrb[0].mxu0
    %v5037 = vadd.f32 0.0, %v5036
    %v5038 = vpop.f32.mrb[0].mxu0
    %5039 = vmatprep.mubr.f32.mxu0 0.0
    %5040 = vmatmul.mubr.f32.gmra.mrb[0].mxu0 %v4960
    %v5041 = vpop.f32.mrb[0].mxu0
    %v5042 = vadd.f32 0.0, %v5041
    %v5043 = vpop.f32.mrb[0].mxu0
    %5044 = vmatprep.mubr.f32.mxu0 0.0
    %5045 = vmatmul.mubr.f32.gmra.mrb[0].mxu0 %v4963
    %v5046 = vpop.f32.mrb[0].mxu0
    %v5047 = vadd.f32 0.0, %v5046
    %v5048 = vpop.f32.mrb[0].mxu0
    %5049 = vdwg.mxu0
    %v5050 = vadd.f32 %v4750, %v5032
    %v5051 = vadd.f32 %v4751, %v5037
    %v5052 = vadd.f32 %v4752, %v5042
    %v5053 = vadd.f32 %v4753, %v5047
    %s5054 = scalar_lea.vmem %s5, 5160
    %v5055 = vld [vmem:[%s5054] sm:$0xff]
    %v5056 = vld [vmem:[%s5054 + $0x8] sm:$0xff]
    %v5057 = vld [vmem:[%s5054 + $0x10] sm:$0xff]
    %v5058 = vld [vmem:[%s5054 + $0x18] sm:$0xff]
    %v5059 = vld [vmem:[%s5054 + $0x20] sm:$0xff]
    %v5060 = vld [vmem:[%s5054 + $0x28] sm:$0xff]
    %v5061 = vld [vmem:[%s5054 + $0x30] sm:$0xff]
    %v5062 = vld [vmem:[%s5054 + $0x38] sm:$0xff]
    %v5063 = vld [vmem:[%s5054 + $0x40] sm:$0xff]
    %v5064 = vld [vmem:[%s5054 + $0x48] sm:$0xff]
    %v5065 = vld [vmem:[%s5054 + $0x50] sm:$0xff]
    %v5066 = vld [vmem:[%s5054 + $0x58] sm:$0xff]
    %v5067 = vld [vmem:[%s5054 + $0x60] sm:$0xff]
    %v5068 = vld [vmem:[%s5054 + $0x68] sm:$0xff]
    %v5069 = vld [vmem:[%s5054 + $0x70] sm:$0xff]
    %v5070 = vld [vmem:[%s5054 + $0x78] sm:$0xff]
    %v5071 = vld [vmem:[%s5054 + $0x80] sm:$0xff]
    %v5072 = vld [vmem:[%s5054 + $0x88] sm:$0xff]
    %v5073 = vld [vmem:[%s5054 + $0x90] sm:$0xff]
    %v5074 = vld [vmem:[%s5054 + $0x98] sm:$0xff]
    %v5075 = vld [vmem:[%s5054 + $0xa0] sm:$0xff]
    %v5076 = vld [vmem:[%s5054 + $0xa8] sm:$0xff]
    %v5077 = vld [vmem:[%s5054 + $0xb0] sm:$0xff]
    %v5078 = vld [vmem:[%s5054 + $0xb8] sm:$0xff]
    %v5079 = vld [vmem:[%s5054 + $0xc0] sm:$0xff]
    %v5080 = vld [vmem:[%s5054 + $0xc8] sm:$0xff]
    %v5081 = vld [vmem:[%s5054 + $0xd0] sm:$0xff]
    %v5082 = vld [vmem:[%s5054 + $0xd8] sm:$0xff]
    %v5083 = vld [vmem:[%s5054 + $0xe0] sm:$0xff]
    %v5084 = vld [vmem:[%s5054 + $0xe8] sm:$0xff]
    %v5085 = vld [vmem:[%s5054 + $0xf0] sm:$0xff]
    %v5086 = vld [vmem:[%s5054 + $0xf8] sm:$0xff]
    %v5087 = vld [vmem:[%s5054 + $0x100] sm:$0xff]
    %v5088 = vld [vmem:[%s5054 + $0x108] sm:$0xff]
    %v5089 = vld [vmem:[%s5054 + $0x110] sm:$0xff]
    %v5090 = vld [vmem:[%s5054 + $0x118] sm:$0xff]
    %v5091 = vld [vmem:[%s5054 + $0x120] sm:$0xff]
    %v5092 = vld [vmem:[%s5054 + $0x128] sm:$0xff]
    %v5093 = vld [vmem:[%s5054 + $0x130] sm:$0xff]
    %v5094 = vld [vmem:[%s5054 + $0x138] sm:$0xff]
    %v5095 = vld [vmem:[%s5054 + $0x140] sm:$0xff]
    %v5096 = vld [vmem:[%s5054 + $0x148] sm:$0xff]
    %v5097 = vld [vmem:[%s5054 + $0x150] sm:$0xff]
    %5098 = vmatprep.subr.mxu0 0.0
    %5099 = vmatpush1.msra.mxu0 %v5055
    %5100 = vmatprep.subr.mxu0 0.0
    %5101 = vmatpush1.msra.mxu0 %v5056
    %5102 = vmatprep.subr.mxu0 0.0
    %5103 = vmatpush1.msra.mxu0 %v5057
    %5104 = vmatprep.subr.mxu0 0.0
    %5105 = vmatpush1.msra.mxu0 %v5058
    %5106 = vmatprep.subr.mxu0 0.0
    %5107 = vmatpush1.msra.mxu0 %v5059
    %5108 = vmatprep.subr.mxu0 0.0
    %5109 = vmatpush1.msra.mxu0 %v5060
    %5110 = vmatprep.subr.mxu0 0.0
    %5111 = vmatpush1.msra.mxu0 %v5061
    %5112 = vmatprep.subr.mxu0 0.0
    %5113 = vmatpush1.msra.mxu0 %v5062
    %5114 = vmatprep.subr.mxu0 0.0
    %5115 = vmatpush1.msra.mxu0 %v5063
    %5116 = vmatprep.subr.mxu0 0.0
    %5117 = vmatpush1.msra.mxu0 %v5064
    %5118 = vmatprep.subr.mxu0 0.0
    %5119 = vmatpush1.msra.mxu0 %v5065
    %5120 = vmatprep.subr.mxu0 0.0
    %5121 = vmatpush1.msra.mxu0 %v5066
    %5122 = vmatprep.subr.mxu0 0.0
    %5123 = vmatpush1.msra.mxu0 %v5067
    %5124 = vmatprep.subr.mxu0 0.0
    %5125 = vmatpush1.msra.mxu0 %v5068
    %5126 = vmatprep.subr.mxu0 0.0
    %5127 = vmatpush1.msra.mxu0 %v5069
    %5128 = vmatprep.subr.mxu0 0.0
    %5129 = vmatpush1.msra.mxu0 %v5070
    %5130 = vmatprep.subr.mxu0 0.0
    %5131 = vmatpush1.msra.mxu0 %v5071
    %5132 = vmatprep.subr.mxu0 0.0
    %5133 = vmatpush1.msra.mxu0 %v5072
    %5134 = vmatprep.subr.mxu0 0.0
    %5135 = vmatpush1.msra.mxu0 %v5073
    %5136 = vmatprep.subr.mxu0 0.0
    %5137 = vmatpush1.msra.mxu0 %v5074
    %5138 = vmatprep.subr.mxu0 0.0
    %5139 = vmatpush1.msra.mxu0 %v5075
    %5140 = vmatprep.subr.mxu0 0.0
    %5141 = vmatpush1.msra.mxu0 %v5076
    %5142 = vmatprep.subr.mxu0 0.0
    %5143 = vmatpush1.msra.mxu0 %v5077
    %5144 = vmatprep.subr.mxu0 0.0
    %5145 = vmatpush1.msra.mxu0 %v5078
    %5146 = vmatprep.subr.mxu0 0.0
    %5147 = vmatpush1.msra.mxu0 %v5079
    %5148 = vmatprep.subr.mxu0 0.0
    %5149 = vmatpush1.msra.mxu0 %v5080
    %5150 = vmatprep.subr.mxu0 0.0
    %5151 = vmatpush1.msra.mxu0 %v5081
    %5152 = vmatprep.subr.mxu0 0.0
    %5153 = vmatpush1.msra.mxu0 %v5082
    %5154 = vmatprep.subr.mxu0 0.0
    %5155 = vmatpush1.msra.mxu0 %v5083
    %5156 = vmatprep.subr.mxu0 0.0
    %5157 = vmatpush1.msra.mxu0 %v5084
    %5158 = vmatprep.subr.mxu0 0.0
    %5159 = vmatpush1.msra.mxu0 %v5085
    %5160 = vmatprep.subr.mxu0 0.0
    %5161 = vmatpush1.msra.mxu0 %v5086
    %5162 = vmatprep.mubr.f32.mxu0 %v552
    %5163 = vmatmul.mubr.f32.gmra.mrb[0].mxu0 %v551
    %v5164 = vpop.f32.mrb[0].mxu0
    %v5165 = vadd.f32 0.0, %v5164
    %v5166 = vpop.f32.mrb[0].mxu0
    %5167 = vmatprep.mubr.f32.mxu0 %v555
    %5168 = vmatmul.mubr.f32.gmra.mrb[0].mxu0 %v554
    %v5169 = vpop.f32.mrb[0].mxu0
    %v5170 = vadd.f32 0.0, %v5169
    %v5171 = vpop.f32.mrb[0].mxu0
    %5172 = vdwg.mxu0
    %5173 = vmatprep.subr.mxu0 0.0
    %5174 = vmatpush1.msra.mxu0 %v5087
    %5175 = vmatprep.subr.mxu0 0.0
    %5176 = vmatpush1.msra.mxu0 %v5088
    %5177 = vmatprep.subr.mxu0 0.0
    %5178 = vmatpush1.msra.mxu0 %v5089
    %5179 = vmatprep.subr.mxu0 0.0
    %5180 = vmatpush1.msra.mxu0 %v5090
    %5181 = vmatprep.subr.mxu0 0.0
    %5182 = vmatpush1.msra.mxu0 %v5091
    %5183 = vmatprep.subr.mxu0 0.0
    %5184 = vmatpush1.msra.mxu0 %v5092
    %5185 = vmatprep.subr.mxu0 0.0
    %5186 = vmatpush1.msra.mxu0 %v5093
    %5187 = vmatprep.subr.mxu0 0.0
    %5188 = vmatpush1.msra.mxu0 %v5094
    %5189 = vmatprep.subr.mxu0 0.0
    %5190 = vmatpush1.msra.mxu0 %v5095
    %5191 = vmatprep.subr.mxu0 0.0
    %5192 = vmatpush1.msra.mxu0 %v5096
    %5193 = vmatprep.subr.mxu0 0.0
    %5194 = vmatpush1.msra.mxu0 %v5097
    %5195 = vmatprep.subr.mxu0 0.0
    %5196 = vmatpush1.msra.mxu0 0.0
    %5197 = vmatprep.subr.mxu0 0.0
    %5198 = vmatpush1.msra.mxu0 0.0
    %5199 = vmatprep.subr.mxu0 0.0
    %5200 = vmatpush1.msra.mxu0 0.0
    %5201 = vmatprep.subr.mxu0 0.0
    %5202 = vmatpush1.msra.mxu0 0.0
    %5203 = vmatprep.subr.mxu0 0.0
    %5204 = vmatpush1.msra.mxu0 0.0
    %5205 = vmatprep.subr.mxu0 0.0
    %5206 = vmatpush1.msra.mxu0 0.0
    %5207 = vmatprep.subr.mxu0 0.0
    %5208 = vmatpush1.msra.mxu0 0.0
    %5209 = vmatprep.subr.mxu0 0.0
    %5210 = vmatpush1.msra.mxu0 0.0
    %5211 = vmatprep.subr.mxu0 0.0
    %5212 = vmatpush1.msra.mxu0 0.0
    %5213 = vmatprep.subr.mxu0 0.0
    %5214 = vmatpush1.msra.mxu0 0.0
    %5215 = vmatprep.subr.mxu0 0.0
    %5216 = vmatpush1.msra.mxu0 0.0
    %5217 = vmatprep.subr.mxu0 0.0
    %5218 = vmatpush1.msra.mxu0 0.0
    %5219 = vmatprep.subr.mxu0 0.0
    %5220 = vmatpush1.msra.mxu0 0.0
    %5221 = vmatprep.subr.mxu0 0.0
    %5222 = vmatpush1.msra.mxu0 0.0
    %5223 = vmatprep.subr.mxu0 0.0
    %5224 = vmatpush1.msra.mxu0 0.0
    %5225 = vmatprep.subr.mxu0 0.0
    %5226 = vmatpush1.msra.mxu0 0.0
    %5227 = vmatprep.subr.mxu0 0.0
    %5228 = vmatpush1.msra.mxu0 0.0
    %5229 = vmatprep.subr.mxu0 0.0
    %5230 = vmatpush1.msra.mxu0 0.0
    %5231 = vmatprep.subr.mxu0 0.0
    %5232 = vmatpush1.msra.mxu0 0.0
    %5233 = vmatprep.subr.mxu0 0.0
    %5234 = vmatpush1.msra.mxu0 0.0
    %5235 = vmatprep.subr.mxu0 0.0
    %5236 = vmatpush1.msra.mxu0 0.0
    %5237 = vmatprep.mubr.f32.mxu0 0.0
    %5238 = vmatmul.mubr.f32.gmra.mrb[0].mxu0 %v601
    %v5239 = vpop.f32.mrb[0].mxu0
    %v5240 = vadd.f32 %v5165, %v5239
    %v5241 = vpop.f32.mrb[0].mxu0
    %5242 = vmatprep.mubr.f32.mxu0 0.0
    %5243 = vmatmul.mubr.f32.gmra.mrb[0].mxu0 %v604
    %v5244 = vpop.f32.mrb[0].mxu0
    %v5245 = vadd.f32 %v5170, %v5244
    %v5246 = vpop.f32.mrb[0].mxu0
    %5247 = vdwg.mxu0
    %s5248 = scalar_lea.vmem %s4, 480
    %v5249 = vld [vmem:[%s5248] sm:$0xff]
    %v5250 = vld [vmem:[%s5248 + $0x8] sm:$0xff]
    %v5251 = vld [vmem:[%s5248 + $0x10] sm:$0xff]
    %v5252 = vld [vmem:[%s5248 + $0x18] sm:$0xff]
    %v5254 = vsel %vm959, %v5249, 0
    %v5257 = vsel %vm959, %v5250, 0
    %v5260 = vsel %vm959, %v5251, 0
    %v5263 = vsel %vm959, %v5252, 0
    %5265 = vmatprep.subr.mxu0 0.0
    %5266 = vmatpush1.msra.mxu0 %v5240
    %5267 = vmatprep.subr.mxu0 0.0
    %5268 = vmatpush1.msra.mxu0 %v5245
    %5269 = vmatprep.subr.mxu0 0.0
    %5270 = vmatpush1.msra.mxu0 0.0
    %5271 = vmatprep.subr.mxu0 0.0
    %5272 = vmatpush1.msra.mxu0 0.0
    %5273 = vmatprep.subr.mxu0 0.0
    %5274 = vmatpush1.msra.mxu0 0.0
    %5275 = vmatprep.subr.mxu0 0.0
    %5276 = vmatpush1.msra.mxu0 0.0
    %5277 = vmatprep.subr.mxu0 0.0
    %5278 = vmatpush1.msra.mxu0 0.0
    %5279 = vmatprep.subr.mxu0 0.0
    %5280 = vmatpush1.msra.mxu0 0.0
    %5281 = vmatprep.subr.mxu0 0.0
    %5282 = vmatpush1.msra.mxu0 0.0
    %5283 = vmatprep.subr.mxu0 0.0
    %5284 = vmatpush1.msra.mxu0 0.0
    %5285 = vmatprep.subr.mxu0 0.0
    %5286 = vmatpush1.msra.mxu0 0.0
    %5287 = vmatprep.subr.mxu0 0.0
    %5288 = vmatpush1.msra.mxu0 0.0
    %5289 = vmatprep.subr.mxu0 0.0
    %5290 = vmatpush1.msra.mxu0 0.0
    %5291 = vmatprep.subr.mxu0 0.0
    %5292 = vmatpush1.msra.mxu0 0.0
    %5293 = vmatprep.subr.mxu0 0.0
    %5294 = vmatpush1.msra.mxu0 0.0
    %5295 = vmatprep.subr.mxu0 0.0
    %5296 = vmatpush1.msra.mxu0 0.0
    %5297 = vmatprep.subr.mxu0 0.0
    %5298 = vmatpush1.msra.mxu0 0.0
    %5299 = vmatprep.subr.mxu0 0.0
    %5300 = vmatpush1.msra.mxu0 0.0
    %5301 = vmatprep.subr.mxu0 0.0
    %5302 = vmatpush1.msra.mxu0 0.0
    %5303 = vmatprep.subr.mxu0 0.0
    %5304 = vmatpush1.msra.mxu0 0.0
    %5305 = vmatprep.subr.mxu0 0.0
    %5306 = vmatpush1.msra.mxu0 0.0
    %5307 = vmatprep.subr.mxu0 0.0
    %5308 = vmatpush1.msra.mxu0 0.0
    %5309 = vmatprep.subr.mxu0 0.0
    %5310 = vmatpush1.msra.mxu0 0.0
    %5311 = vmatprep.subr.mxu0 0.0
    %5312 = vmatpush1.msra.mxu0 0.0
    %5313 = vmatprep.subr.mxu0 0.0
    %5314 = vmatpush1.msra.mxu0 0.0
    %5315 = vmatprep.subr.mxu0 0.0
    %5316 = vmatpush1.msra.mxu0 0.0
    %5317 = vmatprep.subr.mxu0 0.0
    %5318 = vmatpush1.msra.mxu0 0.0
    %5319 = vmatprep.subr.mxu0 0.0
    %5320 = vmatpush1.msra.mxu0 0.0
    %5321 = vmatprep.subr.mxu0 0.0
    %5322 = vmatpush1.msra.mxu0 0.0
    %5323 = vmatprep.subr.mxu0 0.0
    %5324 = vmatpush1.msra.mxu0 0.0
    %5325 = vmatprep.subr.mxu0 0.0
    %5326 = vmatpush1.msra.mxu0 0.0
    %5327 = vmatprep.subr.mxu0 0.0
    %5328 = vmatpush1.msra.mxu0 0.0
    %5329 = vmatprep.mubr.f32.mxu0 0.0
    %5330 = vmatmul.mubr.f32.gmra.mrb[0].mxu0 %v5254
    %v5331 = vpop.f32.mrb[0].mxu0
    %v5332 = vadd.f32 0.0, %v5331
    %v5333 = vpop.f32.mrb[0].mxu0
    %5334 = vmatprep.mubr.f32.mxu0 0.0
    %5335 = vmatmul.mubr.f32.gmra.mrb[0].mxu0 %v5257
    %v5336 = vpop.f32.mrb[0].mxu0
    %v5337 = vadd.f32 0.0, %v5336
    %v5338 = vpop.f32.mrb[0].mxu0
    %5339 = vmatprep.mubr.f32.mxu0 0.0
    %5340 = vmatmul.mubr.f32.gmra.mrb[0].mxu0 %v5260
    %v5341 = vpop.f32.mrb[0].mxu0
    %v5342 = vadd.f32 0.0, %v5341
    %v5343 = vpop.f32.mrb[0].mxu0
    %5344 = vmatprep.mubr.f32.mxu0 0.0
    %5345 = vmatmul.mubr.f32.gmra.mrb[0].mxu0 %v5263
    %v5346 = vpop.f32.mrb[0].mxu0
    %v5347 = vadd.f32 0.0, %v5346
    %v5348 = vpop.f32.mrb[0].mxu0
    %5349 = vdwg.mxu0
    %v5350 = vadd.f32 %v5050, %v5332
    %v5351 = vadd.f32 %v5051, %v5337
    %v5352 = vadd.f32 %v5052, %v5342
    %v5353 = vadd.f32 %v5053, %v5347
    %v5354 = vld [vmem:[%s6] sm:$0xff]
    %v5355 = vld [vmem:[%s6 + $0x8] sm:$0xff]
    %v5356 = vld [vmem:[%s6 + $0x10] sm:$0xff]
    %v5357 = vld [vmem:[%s6 + $0x18] sm:$0xff]
    %v5358 = vld [vmem:[%s7] sm:$0xff]
    %v5359 = vld [vmem:[%s7 + $0x8] sm:$0xff]
    %v5360 = vld [vmem:[%s7 + $0x10] sm:$0xff]
    %v5361 = vld [vmem:[%s7 + $0x18] sm:$0xff]
    %vm5362 = vcmask 457728
    %v5363 = vsel %vm5362, %v5350, 0.0
    %5364 = vadd.xlane.f32.xlu0 %v5363
    %v5365 = vpop.xlane.xlu0 %5364
    %v5366 = vsel %vm5362, %v5351, 0.0
    %5367 = vadd.xlane.f32.xlu0 %v5366
    %v5368 = vpop.xlane.xlu0 %5367
    %v5369 = vsel %vm5362, %v5352, 0.0
    %5370 = vadd.xlane.f32.xlu0 %v5369
    %v5371 = vpop.xlane.xlu0 %5370
    %v5372 = vsel %vm5362, %v5353, 0.0
    %5373 = vadd.xlane.f32.xlu0 %v5372
    %v5374 = vpop.xlane.xlu0 %5373
    %v5375 = vmul.f32 %v5350, %v5350
    %v5376 = vmul.f32 %v5351, %v5351
    %v5377 = vmul.f32 %v5352, %v5352
    %v5378 = vmul.f32 %v5353, %v5353
    %v5379 = vsel %vm5362, %v5375, 0.0
    %5380 = vadd.xlane.f32.xlu0 %v5379
    %v5381 = vpop.xlane.xlu0 %5380
    %v5382 = vsel %vm5362, %v5376, 0.0
    %5383 = vadd.xlane.f32.xlu0 %v5382
    %v5384 = vpop.xlane.xlu0 %5383
    %v5385 = vsel %vm5362, %v5377, 0.0
    %5386 = vadd.xlane.f32.xlu0 %v5385
    %v5387 = vpop.xlane.xlu0 %5386
    %v5388 = vsel %vm5362, %v5378, 0.0
    %5389 = vadd.xlane.f32.xlu0 %v5388
    %v5390 = vpop.xlane.xlu0 %5389
    %v5391 = vmul.f32 %v5365, 0.02
    %v5392 = vmul.f32 %v5368, 0.02
    %v5393 = vmul.f32 %v5371, 0.02
    %v5394 = vmul.f32 %v5374, 0.02
    %v5395 = vmul.f32 %v5381, 0.02
    %v5396 = vmul.f32 %v5384, 0.02
    %v5397 = vmul.f32 %v5387, 0.02
    %v5398 = vmul.f32 %v5390, 0.02
    %v5399 = vmul.f32 %v5391, %v5391
    %v5400 = vmul.f32 %v5392, %v5392
    %v5401 = vmul.f32 %v5393, %v5393
    %v5402 = vmul.f32 %v5394, %v5394
    %v5403 = vsub.f32 %v5395, %v5399
    %v5404 = vsub.f32 %v5396, %v5400
    %v5405 = vsub.f32 %v5397, %v5401
    %v5406 = vsub.f32 %v5398, %v5402
    %v5407 = vadd.f32 %v5403, 1e-05
    %v5408 = vadd.f32 %v5404, 1e-05
    %v5409 = vadd.f32 %v5405, 1e-05
    %v5410 = vadd.f32 %v5406, 1e-05
    %v5411 = vrsqrt.pop %v5407
    %v5412 = vrsqrt.pop %v5408
    %v5413 = vrsqrt.pop %v5409
    %v5414 = vrsqrt.pop %v5410
    %v5415 = vmul.f32 %v5354, %v5411
    %v5416 = vmul.f32 %v5355, %v5412
    %v5417 = vmul.f32 %v5356, %v5413
    %v5418 = vmul.f32 %v5357, %v5414
    %v5419 = vmul.f32 %v5391, %v5415
    %v5420 = vmul.f32 %v5392, %v5416
    %v5421 = vmul.f32 %v5393, %v5417
    %v5422 = vmul.f32 %v5394, %v5418
    %v5423 = vsub.f32 %v5358, %v5419
    %v5424 = vsub.f32 %v5359, %v5420
    %v5425 = vsub.f32 %v5360, %v5421
    %v5426 = vsub.f32 %v5361, %v5422
    %5428 = vset.pattern.permute.xlu0 0
    %5429 = vperm.xlu0 %5428, %v5415
    %v5430 = vpop.permute.xlu0 %5429
    %5433 = vset.pattern.permute.xlu0 0
    %5434 = vperm.xlu0 %5433, %v5416
    %v5435 = vpop.permute.xlu0 %5434
    %5438 = vset.pattern.permute.xlu0 0
    %5439 = vperm.xlu0 %5438, %v5417
    %v5440 = vpop.permute.xlu0 %5439
    %5443 = vset.pattern.permute.xlu0 0
    %5444 = vperm.xlu0 %5443, %v5418
    %v5445 = vpop.permute.xlu0 %5444
    %v5447 = vmul.f32 %v5350, %v5430
    %v5448 = vmul.f32 %v5351, %v5435
    %v5449 = vmul.f32 %v5352, %v5440
    %v5450 = vmul.f32 %v5353, %v5445
    %5452 = vset.pattern.permute.xlu0 0
    %5453 = vperm.xlu0 %5452, %v5423
    %v5454 = vpop.permute.xlu0 %5453
    %5457 = vset.pattern.permute.xlu0 0
    %5458 = vperm.xlu0 %5457, %v5424
    %v5459 = vpop.permute.xlu0 %5458
    %5462 = vset.pattern.permute.xlu0 0
    %5463 = vperm.xlu0 %5462, %v5425
    %v5464 = vpop.permute.xlu0 %5463
    %5467 = vset.pattern.permute.xlu0 0
    %5468 = vperm.xlu0 %5467, %v5426
    %v5469 = vpop.permute.xlu0 %5468
    %v5471 = vadd.f32 %v5447, %v5454
    %v5472 = vadd.f32 %v5448, %v5459
    %v5473 = vadd.f32 %v5449, %v5464
    %v5474 = vadd.f32 %v5450, %v5469
    %vm5475 = vcmp.gt.f32.partialorder %v5471, 0.0
    %vm5476 = vcmp.gt.f32.partialorder %v5472, 0.0
    %vm5477 = vcmp.gt.f32.partialorder %v5473, 0.0
    %vm5478 = vcmp.gt.f32.partialorder %v5474, 0.0
    %v5479 = vmul.f32 %v5471, 0.2
    %v5480 = vmul.f32 %v5472, 0.2
    %v5481 = vmul.f32 %v5473, 0.2
    %v5482 = vmul.f32 %v5474, 0.2
    %v5483 = vsel %vm5475, %v5471, %v5479
    %v5484 = vsel %vm5476, %v5472, %v5480
    %v5485 = vsel %vm5477, %v5473, %v5481
    %v5486 = vsel %vm5478, %v5474, %v5482
    %v5487 = vld [vmem:[%s8] sm:$0x1]
    %vm5488 = vcmask 261120
    %v5490 = vsel %vm5488, %v5487, 0
    %5492 = vmatprep.subr.mxu0 0.0
    %5493 = vmatpush1.msra.mxu0 %v5483
    %5494 = vmatprep.subr.mxu0 0.0
    %5495 = vmatpush1.msra.mxu0 %v5484
    %5496 = vmatprep.subr.mxu0 0.0
    %5497 = vmatpush1.msra.mxu0 %v5485
    %5498 = vmatprep.subr.mxu0 0.0
    %5499 = vmatpush1.msra.mxu0 %v5486
    %5500 = vmatprep.subr.mxu0 0.0
    %5501 = vmatpush1.msra.mxu0 0.0
    %5502 = vmatprep.subr.mxu0 0.0
    %5503 = vmatpush1.msra.mxu0 0.0
    %5504 = vmatprep.subr.mxu0 0.0
    %5505 = vmatpush1.msra.mxu0 0.0
    %5506 = vmatprep.subr.mxu0 0.0
    %5507 = vmatpush1.msra.mxu0 0.0
    %5508 = vmatprep.subr.mxu0 0.0
    %5509 = vmatpush1.msra.mxu0 0.0
    %5510 = vmatprep.subr.mxu0 0.0
    %5511 = vmatpush1.msra.mxu0 0.0
    %5512 = vmatprep.subr.mxu0 0.0
    %5513 = vmatpush1.msra.mxu0 0.0
    %5514 = vmatprep.subr.mxu0 0.0
    %5515 = vmatpush1.msra.mxu0 0.0
    %5516 = vmatprep.subr.mxu0 0.0
    %5517 = vmatpush1.msra.mxu0 0.0
    %5518 = vmatprep.subr.mxu0 0.0
    %5519 = vmatpush1.msra.mxu0 0.0
    %5520 = vmatprep.subr.mxu0 0.0
    %5521 = vmatpush1.msra.mxu0 0.0
    %5522 = vmatprep.subr.mxu0 0.0
    %5523 = vmatpush1.msra.mxu0 0.0
    %5524 = vmatprep.subr.mxu0 0.0
    %5525 = vmatpush1.msra.mxu0 0.0
    %5526 = vmatprep.subr.mxu0 0.0
    %5527 = vmatpush1.msra.mxu0 0.0
    %5528 = vmatprep.subr.mxu0 0.0
    %5529 = vmatpush1.msra.mxu0 0.0
    %5530 = vmatprep.subr.mxu0 0.0
    %5531 = vmatpush1.msra.mxu0 0.0
    %5532 = vmatprep.subr.mxu0 0.0
    %5533 = vmatpush1.msra.mxu0 0.0
    %5534 = vmatprep.subr.mxu0 0.0
    %5535 = vmatpush1.msra.mxu0 0.0
    %5536 = vmatprep.subr.mxu0 0.0
    %5537 = vmatpush1.msra.mxu0 0.0
    %5538 = vmatprep.subr.mxu0 0.0
    %5539 = vmatpush1.msra.mxu0 0.0
    %5540 = vmatprep.subr.mxu0 0.0
    %5541 = vmatpush1.msra.mxu0 0.0
    %5542 = vmatprep.subr.mxu0 0.0
    %5543 = vmatpush1.msra.mxu0 0.0
    %5544 = vmatprep.subr.mxu0 0.0
    %5545 = vmatpush1.msra.mxu0 0.0
    %5546 = vmatprep.subr.mxu0 0.0
    %5547 = vmatpush1.msra.mxu0 0.0
    %5548 = vmatprep.subr.mxu0 0.0
    %5549 = vmatpush1.msra.mxu0 0.0
    %5550 = vmatprep.subr.mxu0 0.0
    %5551 = vmatpush1.msra.mxu0 0.0
    %5552 = vmatprep.subr.mxu0 0.0
    %5553 = vmatpush1.msra.mxu0 0.0
    %5554 = vmatprep.subr.mxu0 0.0
    %5555 = vmatpush1.msra.mxu0 0.0
    %5556 = vmatprep.mubr.f32.mxu0 0.0
    %5557 = vmatmul.mubr.f32.gmra.mrb[0].mxu0 %v5490
    %v5558 = vpop.f32.mrb[0].mxu0
    %v5559 = vadd.f32 0.0, %v5558
    %v5560 = vpop.f32.mrb[0].mxu0
    %5561 = vdwg.mxu0
    %v5562 = vld [vmem:[%s9] sm:$0xff]
    %v5563 = vld [vmem:[%s9 + $0x8] sm:$0xff]
    %v5564 = vld [vmem:[%s9 + $0x10] sm:$0xff]
    %v5565 = vld [vmem:[%s9 + $0x18] sm:$0xff]
    %v5566 = vld [vmem:[%s9 + $0x20] sm:$0xff]
    %v5567 = vld [vmem:[%s9 + $0x28] sm:$0xff]
    %v5568 = vld [vmem:[%s9 + $0x30] sm:$0xff]
    %s5569 = scalar_lea.vmem %s8, 1
    %v5570 = vld [vmem:[%s5569] sm:$0x1]
    %v5572 = vsel %vm5488, %v5570, 0
    %5574 = vmatprep.subr.mxu0 0.0
    %5575 = vmatpush1.msra.mxu0 %v5483
    %5576 = vmatprep.subr.mxu0 0.0
    %5577 = vmatpush1.msra.mxu0 %v5484
    %5578 = vmatprep.subr.mxu0 0.0
    %5579 = vmatpush1.msra.mxu0 %v5485
    %5580 = vmatprep.subr.mxu0 0.0
    %5581 = vmatpush1.msra.mxu0 %v5486
    %5582 = vmatprep.subr.mxu0 0.0
    %5583 = vmatpush1.msra.mxu0 0.0
    %5584 = vmatprep.subr.mxu0 0.0
    %5585 = vmatpush1.msra.mxu0 0.0
    %5586 = vmatprep.subr.mxu0 0.0
    %5587 = vmatpush1.msra.mxu0 0.0
    %5588 = vmatprep.subr.mxu0 0.0
    %5589 = vmatpush1.msra.mxu0 0.0
    %5590 = vmatprep.subr.mxu0 0.0
    %5591 = vmatpush1.msra.mxu0 0.0
    %5592 = vmatprep.subr.mxu0 0.0
    %5593 = vmatpush1.msra.mxu0 0.0
    %5594 = vmatprep.subr.mxu0 0.0
    %5595 = vmatpush1.msra.mxu0 0.0
    %5596 = vmatprep.subr.mxu0 0.0
    %5597 = vmatpush1.msra.mxu0 0.0
    %5598 = vmatprep.subr.mxu0 0.0
    %5599 = vmatpush1.msra.mxu0 0.0
    %5600 = vmatprep.subr.mxu0 0.0
    %5601 = vmatpush1.msra.mxu0 0.0
    %5602 = vmatprep.subr.mxu0 0.0
    %5603 = vmatpush1.msra.mxu0 0.0
    %5604 = vmatprep.subr.mxu0 0.0
    %5605 = vmatpush1.msra.mxu0 0.0
    %5606 = vmatprep.subr.mxu0 0.0
    %5607 = vmatpush1.msra.mxu0 0.0
    %5608 = vmatprep.subr.mxu0 0.0
    %5609 = vmatpush1.msra.mxu0 0.0
    %5610 = vmatprep.subr.mxu0 0.0
    %5611 = vmatpush1.msra.mxu0 0.0
    %5612 = vmatprep.subr.mxu0 0.0
    %5613 = vmatpush1.msra.mxu0 0.0
    %5614 = vmatprep.subr.mxu0 0.0
    %5615 = vmatpush1.msra.mxu0 0.0
    %5616 = vmatprep.subr.mxu0 0.0
    %5617 = vmatpush1.msra.mxu0 0.0
    %5618 = vmatprep.subr.mxu0 0.0
    %5619 = vmatpush1.msra.mxu0 0.0
    %5620 = vmatprep.subr.mxu0 0.0
    %5621 = vmatpush1.msra.mxu0 0.0
    %5622 = vmatprep.subr.mxu0 0.0
    %5623 = vmatpush1.msra.mxu0 0.0
    %5624 = vmatprep.subr.mxu0 0.0
    %5625 = vmatpush1.msra.mxu0 0.0
    %5626 = vmatprep.subr.mxu0 0.0
    %5627 = vmatpush1.msra.mxu0 0.0
    %5628 = vmatprep.subr.mxu0 0.0
    %5629 = vmatpush1.msra.mxu0 0.0
    %5630 = vmatprep.subr.mxu0 0.0
    %5631 = vmatpush1.msra.mxu0 0.0
    %5632 = vmatprep.subr.mxu0 0.0
    %5633 = vmatpush1.msra.mxu0 0.0
    %5634 = vmatprep.subr.mxu0 0.0
    %5635 = vmatpush1.msra.mxu0 0.0
    %5636 = vmatprep.subr.mxu0 0.0
    %5637 = vmatpush1.msra.mxu0 0.0
    %5638 = vmatprep.mubr.f32.mxu0 0.0
    %5639 = vmatmul.mubr.f32.gmra.mrb[0].mxu0 %v5572
    %v5640 = vpop.f32.mrb[0].mxu0
    %v5641 = vadd.f32 0.0, %v5640
    %v5642 = vpop.f32.mrb[0].mxu0
    %5643 = vdwg.mxu0
    %s5644 = scalar_lea.vmem %s9, 56
    %v5645 = vld [vmem:[%s5644] sm:$0xff]
    %v5646 = vld [vmem:[%s5644 + $0x8] sm:$0xff]
    %v5647 = vld [vmem:[%s5644 + $0x10] sm:$0xff]
    %v5648 = vld [vmem:[%s5644 + $0x18] sm:$0xff]
    %v5649 = vld [vmem:[%s5644 + $0x20] sm:$0xff]
    %v5650 = vld [vmem:[%s5644 + $0x28] sm:$0xff]
    %v5651 = vld [vmem:[%s5644 + $0x30] sm:$0xff]
    %v5653 = vsel %vm5362, %v5641, 0
    %5655 = vmatprep.subr.mxu0 0.0
    %5656 = vmatpush1.msra.mxu0 %v5645
    %5657 = vmatprep.subr.mxu0 0.0
    %5658 = vmatpush1.msra.mxu0 %v5646
    %5659 = vmatprep.subr.mxu0 0.0
    %5660 = vmatpush1.msra.mxu0 %v5647
    %5661 = vmatprep.subr.mxu0 0.0
    %5662 = vmatpush1.msra.mxu0 %v5648
    %5663 = vmatprep.subr.mxu0 0.0
    %5664 = vmatpush1.msra.mxu0 %v5649
    %5665 = vmatprep.subr.mxu0 0.0
    %5666 = vmatpush1.msra.mxu0 %v5650
    %5667 = vmatprep.subr.mxu0 0.0
    %5668 = vmatpush1.msra.mxu0 %v5651
    %5669 = vmatprep.subr.mxu0 0.0
    %5670 = vmatpush1.msra.mxu0 0.0
    %5671 = vmatprep.subr.mxu0 0.0
    %5672 = vmatpush1.msra.mxu0 0.0
    %5673 = vmatprep.subr.mxu0 0.0
    %5674 = vmatpush1.msra.mxu0 0.0
    %5675 = vmatprep.subr.mxu0 0.0
    %5676 = vmatpush1.msra.mxu0 0.0
    %5677 = vmatprep.subr.mxu0 0.0
    %5678 = vmatpush1.msra.mxu0 0.0
    %5679 = vmatprep.subr.mxu0 0.0
    %5680 = vmatpush1.msra.mxu0 0.0
    %5681 = vmatprep.subr.mxu0 0.0
    %5682 = vmatpush1.msra.mxu0 0.0
    %5683 = vmatprep.subr.mxu0 0.0
    %5684 = vmatpush1.msra.mxu0 0.0
    %5685 = vmatprep.subr.mxu0 0.0
    %5686 = vmatpush1.msra.mxu0 0.0
    %5687 = vmatprep.subr.mxu0 0.0
    %5688 = vmatpush1.msra.mxu0 0.0
    %5689 = vmatprep.subr.mxu0 0.0
    %5690 = vmatpush1.msra.mxu0 0.0
    %5691 = vmatprep.subr.mxu0 0.0
    %5692 = vmatpush1.msra.mxu0 0.0
    %5693 = vmatprep.subr.mxu0 0.0
    %5694 = vmatpush1.msra.mxu0 0.0
    %5695 = vmatprep.subr.mxu0 0.0
    %5696 = vmatpush1.msra.mxu0 0.0
    %5697 = vmatprep.subr.mxu0 0.0
    %5698 = vmatpush1.msra.mxu0 0.0
    %5699 = vmatprep.subr.mxu0 0.0
    %5700 = vmatpush1.msra.mxu0 0.0
    %5701 = vmatprep.subr.mxu0 0.0
    %5702 = vmatpush1.msra.mxu0 0.0
    %5703 = vmatprep.subr.mxu0 0.0
    %5704 = vmatpush1.msra.mxu0 0.0
    %5705 = vmatprep.subr.mxu0 0.0
    %5706 = vmatpush1.msra.mxu0 0.0
    %5707 = vmatprep.subr.mxu0 0.0
    %5708 = vmatpush1.msra.mxu0 0.0
    %5709 = vmatprep.subr.mxu0 0.0
    %5710 = vmatpush1.msra.mxu0 0.0
    %5711 = vmatprep.subr.mxu0 0.0
    %5712 = vmatpush1.msra.mxu0 0.0
    %5713 = vmatprep.subr.mxu0 0.0
    %5714 = vmatpush1.msra.mxu0 0.0
    %5715 = vmatprep.subr.mxu0 0.0
    %5716 = vmatpush1.msra.mxu0 0.0
    %5717 = vmatprep.subr.mxu0 0.0
    %5718 = vmatpush1.msra.mxu0 0.0
    %5719 = vmatprep.mubr.f32.mxu0 0.0
    %5720 = vmatmul.mubr.f32.gmra.mrb[0].mxu0 %v5653
    %v5721 = vpop.f32.mrb[0].mxu0
    %v5722 = vadd.f32 0.0, %v5721
    %v5723 = vpop.f32.mrb[0].mxu0
    %5724 = vdwg.mxu0
    %v5726 = vsel %vm5362, %v5559, 0
    %5728 = vmatprep.subr.mxu0 0.0
    %5729 = vmatpush1.msra.mxu0 %v5562
    %5730 = vmatprep.subr.mxu0 0.0
    %5731 = vmatpush1.msra.mxu0 %v5563
    %5732 = vmatprep.subr.mxu0 0.0
    %5733 = vmatpush1.msra.mxu0 %v5564
    %5734 = vmatprep.subr.mxu0 0.0
    %5735 = vmatpush1.msra.mxu0 %v5565
    %5736 = vmatprep.subr.mxu0 0.0
    %5737 = vmatpush1.msra.mxu0 %v5566
    %5738 = vmatprep.subr.mxu0 0.0
    %5739 = vmatpush1.msra.mxu0 %v5567
    %5740 = vmatprep.subr.mxu0 0.0
    %5741 = vmatpush1.msra.mxu0 %v5568
    %5742 = vmatprep.subr.mxu0 0.0
    %5743 = vmatpush1.msra.mxu0 0.0
    %5744 = vmatprep.subr.mxu0 0.0
    %5745 = vmatpush1.msra.mxu0 0.0
    %5746 = vmatprep.subr.mxu0 0.0
    %5747 = vmatpush1.msra.mxu0 0.0
    %5748 = vmatprep.subr.mxu0 0.0
    %5749 = vmatpush1.msra.mxu0 0.0
    %5750 = vmatprep.subr.mxu0 0.0
    %5751 = vmatpush1.msra.mxu0 0.0
    %5752 = vmatprep.subr.mxu0 0.0
    %5753 = vmatpush1.msra.mxu0 0.0
    %5754 = vmatprep.subr.mxu0 0.0
    %5755 = vmatpush1.msra.mxu0 0.0
    %5756 = vmatprep.subr.mxu0 0.0
    %5757 = vmatpush1.msra.mxu0 0.0
    %5758 = vmatprep.subr.mxu0 0.0
    %5759 = vmatpush1.msra.mxu0 0.0
    %5760 = vmatprep.subr.mxu0 0.0
    %5761 = vmatpush1.msra.mxu0 0.0
    %5762 = vmatprep.subr.mxu0 0.0
    %5763 = vmatpush1.msra.mxu0 0.0
    %5764 = vmatprep.subr.mxu0 0.0
    %5765 = vmatpush1.msra.mxu0 0.0
    %5766 = vmatprep.subr.mxu0 0.0
    %5767 = vmatpush1.msra.mxu0 0.0
    %5768 = vmatprep.subr.mxu0 0.0
    %5769 = vmatpush1.msra.mxu0 0.0
    %5770 = vmatprep.subr.mxu0 0.0
    %5771 = vmatpush1.msra.mxu0 0.0
    %5772 = vmatprep.subr.mxu0 0.0
    %5773 = vmatpush1.msra.mxu0 0.0
    %5774 = vmatprep.subr.mxu0 0.0
    %5775 = vmatpush1.msra.mxu0 0.0
    %5776 = vmatprep.subr.mxu0 0.0
    %5777 = vmatpush1.msra.mxu0 0.0
    %5778 = vmatprep.subr.mxu0 0.0
    %5779 = vmatpush1.msra.mxu0 0.0
    %5780 = vmatprep.subr.mxu0 0.0
    %5781 = vmatpush1.msra.mxu0 0.0
    %5782 = vmatprep.subr.mxu0 0.0
    %5783 = vmatpush1.msra.mxu0 0.0
    %5784 = vmatprep.subr.mxu0 0.0
    %5785 = vmatpush1.msra.mxu0 0.0
    %5786 = vmatprep.subr.mxu0 0.0
    %5787 = vmatpush1.msra.mxu0 0.0
    %5788 = vmatprep.subr.mxu0 0.0
    %5789 = vmatpush1.msra.mxu0 0.0
    %5790 = vmatprep.subr.mxu0 0.0
    %5791 = vmatpush1.msra.mxu0 0.0
    %5792 = vmatprep.mubr.f32.mxu0 0.0
    %5793 = vmatmul.mubr.f32.gmra.mrb[0].mxu0 %v5726
    %v5794 = vpop.f32.mrb[0].mxu0
    %v5795 = vadd.f32 %v5722, %v5794
    %v5796 = vpop.f32.mrb[0].mxu0
    %5797 = vdwg.mxu0
    %s5798 = scalar_lea.vmem %s8, 2
    %v5799 = vld [vmem:[%s5798] sm:$0x1]
    %v5801 = vsel %vm5488, %v5799, 0
    %5803 = vmatprep.subr.mxu0 0.0
    %5804 = vmatpush1.msra.mxu0 %v5483
    %5805 = vmatprep.subr.mxu0 0.0
    %5806 = vmatpush1.msra.mxu0 %v5484
    %5807 = vmatprep.subr.mxu0 0.0
    %5808 = vmatpush1.msra.mxu0 %v5485
    %5809 = vmatprep.subr.mxu0 0.0
    %5810 = vmatpush1.msra.mxu0 %v5486
    %5811 = vmatprep.subr.mxu0 0.0
    %5812 = vmatpush1.msra.mxu0 0.0
    %5813 = vmatprep.subr.mxu0 0.0
    %5814 = vmatpush1.msra.mxu0 0.0
    %5815 = vmatprep.subr.mxu0 0.0
    %5816 = vmatpush1.msra.mxu0 0.0
    %5817 = vmatprep.subr.mxu0 0.0
    %5818 = vmatpush1.msra.mxu0 0.0
    %5819 = vmatprep.subr.mxu0 0.0
    %5820 = vmatpush1.msra.mxu0 0.0
    %5821 = vmatprep.subr.mxu0 0.0
    %5822 = vmatpush1.msra.mxu0 0.0
    %5823 = vmatprep.subr.mxu0 0.0
    %5824 = vmatpush1.msra.mxu0 0.0
    %5825 = vmatprep.subr.mxu0 0.0
    %5826 = vmatpush1.msra.mxu0 0.0
    %5827 = vmatprep.subr.mxu0 0.0
    %5828 = vmatpush1.msra.mxu0 0.0
    %5829 = vmatprep.subr.mxu0 0.0
    %5830 = vmatpush1.msra.mxu0 0.0
    %5831 = vmatprep.subr.mxu0 0.0
    %5832 = vmatpush1.msra.mxu0 0.0
    %5833 = vmatprep.subr.mxu0 0.0
    %5834 = vmatpush1.msra.mxu0 0.0
    %5835 = vmatprep.subr.mxu0 0.0
    %5836 = vmatpush1.msra.mxu0 0.0
    %5837 = vmatprep.subr.mxu0 0.0
    %5838 = vmatpush1.msra.mxu0 0.0
    %5839 = vmatprep.subr.mxu0 0.0
    %5840 = vmatpush1.msra.mxu0 0.0
    %5841 = vmatprep.subr.mxu0 0.0
    %5842 = vmatpush1.msra.mxu0 0.0
    %5843 = vmatprep.subr.mxu0 0.0
    %5844 = vmatpush1.msra.mxu0 0.0
    %5845 = vmatprep.subr.mxu0 0.0
    %5846 = vmatpush1.msra.mxu0 0.0
    %5847 = vmatprep.subr.mxu0 0.0
    %5848 = vmatpush1.msra.mxu0 0.0
    %5849 = vmatprep.subr.mxu0 0.0
    %5850 = vmatpush1.msra.mxu0 0.0
    %5851 = vmatprep.subr.mxu0 0.0
    %5852 = vmatpush1.msra.mxu0 0.0
    %5853 = vmatprep.subr.mxu0 0.0
    %5854 = vmatpush1.msra.mxu0 0.0
    %5855 = vmatprep.subr.mxu0 0.0
    %5856 = vmatpush1.msra.mxu0 0.0
    %5857 = vmatprep.subr.mxu0 0.0
    %5858 = vmatpush1.msra.mxu0 0.0
    %5859 = vmatprep.subr.mxu0 0.0
    %5860 = vmatpush1.msra.mxu0 0.0
    %5861 = vmatprep.subr.mxu0 0.0
    %5862 = vmatpush1.msra.mxu0 0.0
    %5863 = vmatprep.subr.mxu0 0.0
    %5864 = vmatpush1.msra.mxu0 0.0
    %5865 = vmatprep.subr.mxu0 0.0
    %5866 = vmatpush1.msra.mxu0 0.0
    %5867 = vmatprep.mubr.f32.mxu0 0.0
    %5868 = vmatmul.mubr.f32.gmra.mrb[0].mxu0 %v5801
    %v5869 = vpop.f32.mrb[0].mxu0
    %v5870 = vadd.f32 0.0, %v5869
    %v5871 = vpop.f32.mrb[0].mxu0
    %5872 = vdwg.mxu0
    %s5873 = scalar_lea.vmem %s9, 112
    %v5874 = vld [vmem:[%s5873] sm:$0xff]
    %v5875 = vld [vmem:[%s5873 + $0x8] sm:$0xff]
    %v5876 = vld [vmem:[%s5873 + $0x10] sm:$0xff]
    %v5877 = vld [vmem:[%s5873 + $0x18] sm:$0xff]
    %v5878 = vld [vmem:[%s5873 + $0x20] sm:$0xff]
    %v5879 = vld [vmem:[%s5873 + $0x28] sm:$0xff]
    %v5880 = vld [vmem:[%s5873 + $0x30] sm:$0xff]
    %v5882 = vsel %vm5362, %v5870, 0
    %5884 = vmatprep.subr.mxu0 0.0
    %5885 = vmatpush1.msra.mxu0 %v5874
    %5886 = vmatprep.subr.mxu0 0.0
    %5887 = vmatpush1.msra.mxu0 %v5875
    %5888 = vmatprep.subr.mxu0 0.0
    %5889 = vmatpush1.msra.mxu0 %v5876
    %5890 = vmatprep.subr.mxu0 0.0
    %5891 = vmatpush1.msra.mxu0 %v5877
    %5892 = vmatprep.subr.mxu0 0.0
    %5893 = vmatpush1.msra.mxu0 %v5878
    %5894 = vmatprep.subr.mxu0 0.0
    %5895 = vmatpush1.msra.mxu0 %v5879
    %5896 = vmatprep.subr.mxu0 0.0
    %5897 = vmatpush1.msra.mxu0 %v5880
    %5898 = vmatprep.subr.mxu0 0.0
    %5899 = vmatpush1.msra.mxu0 0.0
    %5900 = vmatprep.subr.mxu0 0.0
    %5901 = vmatpush1.msra.mxu0 0.0
    %5902 = vmatprep.subr.mxu0 0.0
    %5903 = vmatpush1.msra.mxu0 0.0
    %5904 = vmatprep.subr.mxu0 0.0
    %5905 = vmatpush1.msra.mxu0 0.0
    %5906 = vmatprep.subr.mxu0 0.0
    %5907 = vmatpush1.msra.mxu0 0.0
    %5908 = vmatprep.subr.mxu0 0.0
    %5909 = vmatpush1.msra.mxu0 0.0
    %5910 = vmatprep.subr.mxu0 0.0
    %5911 = vmatpush1.msra.mxu0 0.0
    %5912 = vmatprep.subr.mxu0 0.0
    %5913 = vmatpush1.msra.mxu0 0.0
    %5914 = vmatprep.subr.mxu0 0.0
    %5915 = vmatpush1.msra.mxu0 0.0
    %5916 = vmatprep.subr.mxu0 0.0
    %5917 = vmatpush1.msra.mxu0 0.0
    %5918 = vmatprep.subr.mxu0 0.0
    %5919 = vmatpush1.msra.mxu0 0.0
    %5920 = vmatprep.subr.mxu0 0.0
    %5921 = vmatpush1.msra.mxu0 0.0
    %5922 = vmatprep.subr.mxu0 0.0
    %5923 = vmatpush1.msra.mxu0 0.0
    %5924 = vmatprep.subr.mxu0 0.0
    %5925 = vmatpush1.msra.mxu0 0.0
    %5926 = vmatprep.subr.mxu0 0.0
    %5927 = vmatpush1.msra.mxu0 0.0
    %5928 = vmatprep.subr.mxu0 0.0
    %5929 = vmatpush1.msra.mxu0 0.0
    %5930 = vmatprep.subr.mxu0 0.0
    %5931 = vmatpush1.msra.mxu0 0.0
    %5932 = vmatprep.subr.mxu0 0.0
    %5933 = vmatpush1.msra.mxu0 0.0
    %5934 = vmatprep.subr.mxu0 0.0
    %5935 = vmatpush1.msra.mxu0 0.0
    %5936 = vmatprep.subr.mxu0 0.0
    %5937 = vmatpush1.msra.mxu0 0.0
    %5938 = vmatprep.subr.mxu0 0.0
    %5939 = vmatpush1.msra.mxu0 0.0
    %5940 = vmatprep.subr.mxu0 0.0
    %5941 = vmatpush1.msra.mxu0 0.0
    %5942 = vmatprep.subr.mxu0 0.0
    %5943 = vmatpush1.msra.mxu0 0.0
    %5944 = vmatprep.subr.mxu0 0.0
    %5945 = vmatpush1.msra.mxu0 0.0
    %5946 = vmatprep.subr.mxu0 0.0
    %5947 = vmatpush1.msra.mxu0 0.0
    %5948 = vmatprep.mubr.f32.mxu0 0.0
    %5949 = vmatmul.mubr.f32.gmra.mrb[0].mxu0 %v5882
    %v5950 = vpop.f32.mrb[0].mxu0
    %v5951 = vadd.f32 0.0, %v5950
    %v5952 = vpop.f32.mrb[0].mxu0
    %5953 = vdwg.mxu0
    %v5954 = vadd.f32 %v5795, %v5951
    %s5955 = scalar_lea.vmem %s8, 3
    %v5956 = vld [vmem:[%s5955] sm:$0x1]
    %v5958 = vsel %vm5488, %v5956, 0
    %5960 = vmatprep.subr.mxu0 0.0
    %5961 = vmatpush1.msra.mxu0 %v5483
    %5962 = vmatprep.subr.mxu0 0.0
    %5963 = vmatpush1.msra.mxu0 %v5484
    %5964 = vmatprep.subr.mxu0 0.0
    %5965 = vmatpush1.msra.mxu0 %v5485
    %5966 = vmatprep.subr.mxu0 0.0
    %5967 = vmatpush1.msra.mxu0 %v5486
    %5968 = vmatprep.subr.mxu0 0.0
    %5969 = vmatpush1.msra.mxu0 0.0
    %5970 = vmatprep.subr.mxu0 0.0
    %5971 = vmatpush1.msra.mxu0 0.0
    %5972 = vmatprep.subr.mxu0 0.0
    %5973 = vmatpush1.msra.mxu0 0.0
    %5974 = vmatprep.subr.mxu0 0.0
    %5975 = vmatpush1.msra.mxu0 0.0
    %5976 = vmatprep.subr.mxu0 0.0
    %5977 = vmatpush1.msra.mxu0 0.0
    %5978 = vmatprep.subr.mxu0 0.0
    %5979 = vmatpush1.msra.mxu0 0.0
    %5980 = vmatprep.subr.mxu0 0.0
    %5981 = vmatpush1.msra.mxu0 0.0
    %5982 = vmatprep.subr.mxu0 0.0
    %5983 = vmatpush1.msra.mxu0 0.0
    %5984 = vmatprep.subr.mxu0 0.0
    %5985 = vmatpush1.msra.mxu0 0.0
    %5986 = vmatprep.subr.mxu0 0.0
    %5987 = vmatpush1.msra.mxu0 0.0
    %5988 = vmatprep.subr.mxu0 0.0
    %5989 = vmatpush1.msra.mxu0 0.0
    %5990 = vmatprep.subr.mxu0 0.0
    %5991 = vmatpush1.msra.mxu0 0.0
    %5992 = vmatprep.subr.mxu0 0.0
    %5993 = vmatpush1.msra.mxu0 0.0
    %5994 = vmatprep.subr.mxu0 0.0
    %5995 = vmatpush1.msra.mxu0 0.0
    %5996 = vmatprep.subr.mxu0 0.0
    %5997 = vmatpush1.msra.mxu0 0.0
    %5998 = vmatprep.subr.mxu0 0.0
    %5999 = vmatpush1.msra.mxu0 0.0
    %6000 = vmatprep.subr.mxu0 0.0
    %6001 = vmatpush1.msra.mxu0 0.0
    %6002 = vmatprep.subr.mxu0 0.0
    %6003 = vmatpush1.msra.mxu0 0.0
    %6004 = vmatprep.subr.mxu0 0.0
    %6005 = vmatpush1.msra.mxu0 0.0
    %6006 = vmatprep.subr.mxu0 0.0
    %6007 = vmatpush1.msra.mxu0 0.0
    %6008 = vmatprep.subr.mxu0 0.0
    %6009 = vmatpush1.msra.mxu0 0.0
    %6010 = vmatprep.subr.mxu0 0.0
    %6011 = vmatpush1.msra.mxu0 0.0
    %6012 = vmatprep.subr.mxu0 0.0
    %6013 = vmatpush1.msra.mxu0 0.0
    %6014 = vmatprep.subr.mxu0 0.0
    %6015 = vmatpush1.msra.mxu0 0.0
    %6016 = vmatprep.subr.mxu0 0.0
    %6017 = vmatpush1.msra.mxu0 0.0
    %6018 = vmatprep.subr.mxu0 0.0
    %6019 = vmatpush1.msra.mxu0 0.0
    %6020 = vmatprep.subr.mxu0 0.0
    %6021 = vmatpush1.msra.mxu0 0.0
    %6022 = vmatprep.subr.mxu0 0.0
    %6023 = vmatpush1.msra.mxu0 0.0
    %6024 = vmatprep.mubr.f32.mxu0 0.0
    %6025 = vmatmul.mubr.f32.gmra.mrb[0].mxu0 %v5958
    %v6026 = vpop.f32.mrb[0].mxu0
    %v6027 = vadd.f32 0.0, %v6026
    %v6028 = vpop.f32.mrb[0].mxu0
    %6029 = vdwg.mxu0
    %s6030 = scalar_lea.vmem %s9, 168
    %v6031 = vld [vmem:[%s6030] sm:$0xff]
    %v6032 = vld [vmem:[%s6030 + $0x8] sm:$0xff]
    %v6033 = vld [vmem:[%s6030 + $0x10] sm:$0xff]
    %v6034 = vld [vmem:[%s6030 + $0x18] sm:$0xff]
    %v6035 = vld [vmem:[%s6030 + $0x20] sm:$0xff]
    %v6036 = vld [vmem:[%s6030 + $0x28] sm:$0xff]
    %v6037 = vld [vmem:[%s6030 + $0x30] sm:$0xff]
    %v6039 = vsel %vm5362, %v6027, 0
    %6041 = vmatprep.subr.mxu0 0.0
    %6042 = vmatpush1.msra.mxu0 %v6031
    %6043 = vmatprep.subr.mxu0 0.0
    %6044 = vmatpush1.msra.mxu0 %v6032
    %6045 = vmatprep.subr.mxu0 0.0
    %6046 = vmatpush1.msra.mxu0 %v6033
    %6047 = vmatprep.subr.mxu0 0.0
    %6048 = vmatpush1.msra.mxu0 %v6034
    %6049 = vmatprep.subr.mxu0 0.0
    %6050 = vmatpush1.msra.mxu0 %v6035
    %6051 = vmatprep.subr.mxu0 0.0
    %6052 = vmatpush1.msra.mxu0 %v6036
    %6053 = vmatprep.subr.mxu0 0.0
    %6054 = vmatpush1.msra.mxu0 %v6037
    %6055 = vmatprep.subr.mxu0 0.0
    %6056 = vmatpush1.msra.mxu0 0.0
    %6057 = vmatprep.subr.mxu0 0.0
    %6058 = vmatpush1.msra.mxu0 0.0
    %6059 = vmatprep.subr.mxu0 0.0
    %6060 = vmatpush1.msra.mxu0 0.0
    %6061 = vmatprep.subr.mxu0 0.0
    %6062 = vmatpush1.msra.mxu0 0.0
    %6063 = vmatprep.subr.mxu0 0.0
    %6064 = vmatpush1.msra.mxu0 0.0
    %6065 = vmatprep.subr.mxu0 0.0
    %6066 = vmatpush1.msra.mxu0 0.0
    %6067 = vmatprep.subr.mxu0 0.0
    %6068 = vmatpush1.msra.mxu0 0.0
    %6069 = vmatprep.subr.mxu0 0.0
    %6070 = vmatpush1.msra.mxu0 0.0
    %6071 = vmatprep.subr.mxu0 0.0
    %6072 = vmatpush1.msra.mxu0 0.0
    %6073 = vmatprep.subr.mxu0 0.0
    %6074 = vmatpush1.msra.mxu0 0.0
    %6075 = vmatprep.subr.mxu0 0.0
    %6076 = vmatpush1.msra.mxu0 0.0
    %6077 = vmatprep.subr.mxu0 0.0
    %6078 = vmatpush1.msra.mxu0 0.0
    %6079 = vmatprep.subr.mxu0 0.0
    %6080 = vmatpush1.msra.mxu0 0.0
    %6081 = vmatprep.subr.mxu0 0.0
    %6082 = vmatpush1.msra.mxu0 0.0
    %6083 = vmatprep.subr.mxu0 0.0
    %6084 = vmatpush1.msra.mxu0 0.0
    %6085 = vmatprep.subr.mxu0 0.0
    %6086 = vmatpush1.msra.mxu0 0.0
    %6087 = vmatprep.subr.mxu0 0.0
    %6088 = vmatpush1.msra.mxu0 0.0
    %6089 = vmatprep.subr.mxu0 0.0
    %6090 = vmatpush1.msra.mxu0 0.0
    %6091 = vmatprep.subr.mxu0 0.0
    %6092 = vmatpush1.msra.mxu0 0.0
    %6093 = vmatprep.subr.mxu0 0.0
    %6094 = vmatpush1.msra.mxu0 0.0
    %6095 = vmatprep.subr.mxu0 0.0
    %6096 = vmatpush1.msra.mxu0 0.0
    %6097 = vmatprep.subr.mxu0 0.0
    %6098 = vmatpush1.msra.mxu0 0.0
    %6099 = vmatprep.subr.mxu0 0.0
    %6100 = vmatpush1.msra.mxu0 0.0
    %6101 = vmatprep.subr.mxu0 0.0
    %6102 = vmatpush1.msra.mxu0 0.0
    %6103 = vmatprep.subr.mxu0 0.0
    %6104 = vmatpush1.msra.mxu0 0.0
    %6105 = vmatprep.mubr.f32.mxu0 0.0
    %6106 = vmatmul.mubr.f32.gmra.mrb[0].mxu0 %v6039
    %v6107 = vpop.f32.mrb[0].mxu0
    %v6108 = vadd.f32 0.0, %v6107
    %v6109 = vpop.f32.mrb[0].mxu0
    %6110 = vdwg.mxu0
    %v6111 = vadd.f32 %v5954, %v6108
    %s6112 = scalar_lea.vmem %s8, 4
    %v6113 = vld [vmem:[%s6112] sm:$0x1]
    %v6115 = vsel %vm5488, %v6113, 0
    %6117 = vmatprep.subr.mxu0 0.0
    %6118 = vmatpush1.msra.mxu0 %v5483
    %6119 = vmatprep.subr.mxu0 0.0
    %6120 = vmatpush1.msra.mxu0 %v5484
    %6121 = vmatprep.subr.mxu0 0.0
    %6122 = vmatpush1.msra.mxu0 %v5485
    %6123 = vmatprep.subr.mxu0 0.0
    %6124 = vmatpush1.msra.mxu0 %v5486
    %6125 = vmatprep.subr.mxu0 0.0
    %6126 = vmatpush1.msra.mxu0 0.0
    %6127 = vmatprep.subr.mxu0 0.0
    %6128 = vmatpush1.msra.mxu0 0.0
    %6129 = vmatprep.subr.mxu0 0.0
    %6130 = vmatpush1.msra.mxu0 0.0
    %6131 = vmatprep.subr.mxu0 0.0
    %6132 = vmatpush1.msra.mxu0 0.0
    %6133 = vmatprep.subr.mxu0 0.0
    %6134 = vmatpush1.msra.mxu0 0.0
    %6135 = vmatprep.subr.mxu0 0.0
    %6136 = vmatpush1.msra.mxu0 0.0
    %6137 = vmatprep.subr.mxu0 0.0
    %6138 = vmatpush1.msra.mxu0 0.0
    %6139 = vmatprep.subr.mxu0 0.0
    %6140 = vmatpush1.msra.mxu0 0.0
    %6141 = vmatprep.subr.mxu0 0.0
    %6142 = vmatpush1.msra.mxu0 0.0
    %6143 = vmatprep.subr.mxu0 0.0
    %6144 = vmatpush1.msra.mxu0 0.0
    %6145 = vmatprep.subr.mxu0 0.0
    %6146 = vmatpush1.msra.mxu0 0.0
    %6147 = vmatprep.subr.mxu0 0.0
    %6148 = vmatpush1.msra.mxu0 0.0
    %6149 = vmatprep.subr.mxu0 0.0
    %6150 = vmatpush1.msra.mxu0 0.0
    %6151 = vmatprep.subr.mxu0 0.0
    %6152 = vmatpush1.msra.mxu0 0.0
    %6153 = vmatprep.subr.mxu0 0.0
    %6154 = vmatpush1.msra.mxu0 0.0
    %6155 = vmatprep.subr.mxu0 0.0
    %6156 = vmatpush1.msra.mxu0 0.0
    %6157 = vmatprep.subr.mxu0 0.0
    %6158 = vmatpush1.msra.mxu0 0.0
    %6159 = vmatprep.subr.mxu0 0.0
    %6160 = vmatpush1.msra.mxu0 0.0
    %6161 = vmatprep.subr.mxu0 0.0
    %6162 = vmatpush1.msra.mxu0 0.0
    %6163 = vmatprep.subr.mxu0 0.0
    %6164 = vmatpush1.msra.mxu0 0.0
    %6165 = vmatprep.subr.mxu0 0.0
    %6166 = vmatpush1.msra.mxu0 0.0
    %6167 = vmatprep.subr.mxu0 0.0
    %6168 = vmatpush1.msra.mxu0 0.0
    %6169 = vmatprep.subr.mxu0 0.0
    %6170 = vmatpush1.msra.mxu0 0.0
    %6171 = vmatprep.subr.mxu0 0.0
    %6172 = vmatpush1.msra.mxu0 0.0
    %6173 = vmatprep.subr.mxu0 0.0
    %6174 = vmatpush1.msra.mxu0 0.0
    %6175 = vmatprep.subr.mxu0 0.0
    %6176 = vmatpush1.msra.mxu0 0.0
    %6177 = vmatprep.subr.mxu0 0.0
    %6178 = vmatpush1.msra.mxu0 0.0
    %6179 = vmatprep.subr.mxu0 0.0
    %6180 = vmatpush1.msra.mxu0 0.0
    %6181 = vmatprep.mubr.f32.mxu0 0.0
    %6182 = vmatmul.mubr.f32.gmra.mrb[0].mxu0 %v6115
    %v6183 = vpop.f32.mrb[0].mxu0
    %v6184 = vadd.f32 0.0, %v6183
    %v6185 = vpop.f32.mrb[0].mxu0
    %6186 = vdwg.mxu0
    %s6187 = scalar_lea.vmem %s9, 224
    %v6188 = vld [vmem:[%s6187] sm:$0xff]
    %v6189 = vld [vmem:[%s6187 + $0x8] sm:$0xff]
    %v6190 = vld [vmem:[%s6187 + $0x10] sm:$0xff]
    %v6191 = vld [vmem:[%s6187 + $0x18] sm:$0xff]
    %v6192 = vld [vmem:[%s6187 + $0x20] sm:$0xff]
    %v6193 = vld [vmem:[%s6187 + $0x28] sm:$0xff]
    %v6194 = vld [vmem:[%s6187 + $0x30] sm:$0xff]
    %v6196 = vsel %vm5362, %v6184, 0
    %6198 = vmatprep.subr.mxu0 0.0
    %6199 = vmatpush1.msra.mxu0 %v6188
    %6200 = vmatprep.subr.mxu0 0.0
    %6201 = vmatpush1.msra.mxu0 %v6189
    %6202 = vmatprep.subr.mxu0 0.0
    %6203 = vmatpush1.msra.mxu0 %v6190
    %6204 = vmatprep.subr.mxu0 0.0
    %6205 = vmatpush1.msra.mxu0 %v6191
    %6206 = vmatprep.subr.mxu0 0.0
    %6207 = vmatpush1.msra.mxu0 %v6192
    %6208 = vmatprep.subr.mxu0 0.0
    %6209 = vmatpush1.msra.mxu0 %v6193
    %6210 = vmatprep.subr.mxu0 0.0
    %6211 = vmatpush1.msra.mxu0 %v6194
    %6212 = vmatprep.subr.mxu0 0.0
    %6213 = vmatpush1.msra.mxu0 0.0
    %6214 = vmatprep.subr.mxu0 0.0
    %6215 = vmatpush1.msra.mxu0 0.0
    %6216 = vmatprep.subr.mxu0 0.0
    %6217 = vmatpush1.msra.mxu0 0.0
    %6218 = vmatprep.subr.mxu0 0.0
    %6219 = vmatpush1.msra.mxu0 0.0
    %6220 = vmatprep.subr.mxu0 0.0
    %6221 = vmatpush1.msra.mxu0 0.0
    %6222 = vmatprep.subr.mxu0 0.0
    %6223 = vmatpush1.msra.mxu0 0.0
    %6224 = vmatprep.subr.mxu0 0.0
    %6225 = vmatpush1.msra.mxu0 0.0
    %6226 = vmatprep.subr.mxu0 0.0
    %6227 = vmatpush1.msra.mxu0 0.0
    %6228 = vmatprep.subr.mxu0 0.0
    %6229 = vmatpush1.msra.mxu0 0.0
    %6230 = vmatprep.subr.mxu0 0.0
    %6231 = vmatpush1.msra.mxu0 0.0
    %6232 = vmatprep.subr.mxu0 0.0
    %6233 = vmatpush1.msra.mxu0 0.0
    %6234 = vmatprep.subr.mxu0 0.0
    %6235 = vmatpush1.msra.mxu0 0.0
    %6236 = vmatprep.subr.mxu0 0.0
    %6237 = vmatpush1.msra.mxu0 0.0
    %6238 = vmatprep.subr.mxu0 0.0
    %6239 = vmatpush1.msra.mxu0 0.0
    %6240 = vmatprep.subr.mxu0 0.0
    %6241 = vmatpush1.msra.mxu0 0.0
    %6242 = vmatprep.subr.mxu0 0.0
    %6243 = vmatpush1.msra.mxu0 0.0
    %6244 = vmatprep.subr.mxu0 0.0
    %6245 = vmatpush1.msra.mxu0 0.0
    %6246 = vmatprep.subr.mxu0 0.0
    %6247 = vmatpush1.msra.mxu0 0.0
    %6248 = vmatprep.subr.mxu0 0.0
    %6249 = vmatpush1.msra.mxu0 0.0
    %6250 = vmatprep.subr.mxu0 0.0
    %6251 = vmatpush1.msra.mxu0 0.0
    %6252 = vmatprep.subr.mxu0 0.0
    %6253 = vmatpush1.msra.mxu0 0.0
    %6254 = vmatprep.subr.mxu0 0.0
    %6255 = vmatpush1.msra.mxu0 0.0
    %6256 = vmatprep.subr.mxu0 0.0
    %6257 = vmatpush1.msra.mxu0 0.0
    %6258 = vmatprep.subr.mxu0 0.0
    %6259 = vmatpush1.msra.mxu0 0.0
    %6260 = vmatprep.subr.mxu0 0.0
    %6261 = vmatpush1.msra.mxu0 0.0
    %6262 = vmatprep.mubr.f32.mxu0 0.0
    %6263 = vmatmul.mubr.f32.gmra.mrb[0].mxu0 %v6196
    %v6264 = vpop.f32.mrb[0].mxu0
    %v6265 = vadd.f32 0.0, %v6264
    %v6266 = vpop.f32.mrb[0].mxu0
    %6267 = vdwg.mxu0
    %v6268 = vadd.f32 %v6111, %v6265
    %s6269 = scalar_lea.vmem %s8, 5
    %v6270 = vld [vmem:[%s6269] sm:$0x1]
    %v6272 = vsel %vm5488, %v6270, 0
    %6274 = vmatprep.subr.mxu0 0.0
    %6275 = vmatpush1.msra.mxu0 %v5483
    %6276 = vmatprep.subr.mxu0 0.0
    %6277 = vmatpush1.msra.mxu0 %v5484
    %6278 = vmatprep.subr.mxu0 0.0
    %6279 = vmatpush1.msra.mxu0 %v5485
    %6280 = vmatprep.subr.mxu0 0.0
    %6281 = vmatpush1.msra.mxu0 %v5486
    %6282 = vmatprep.subr.mxu0 0.0
    %6283 = vmatpush1.msra.mxu0 0.0
    %6284 = vmatprep.subr.mxu0 0.0
    %6285 = vmatpush1.msra.mxu0 0.0
    %6286 = vmatprep.subr.mxu0 0.0
    %6287 = vmatpush1.msra.mxu0 0.0
    %6288 = vmatprep.subr.mxu0 0.0
    %6289 = vmatpush1.msra.mxu0 0.0
    %6290 = vmatprep.subr.mxu0 0.0
    %6291 = vmatpush1.msra.mxu0 0.0
    %6292 = vmatprep.subr.mxu0 0.0
    %6293 = vmatpush1.msra.mxu0 0.0
    %6294 = vmatprep.subr.mxu0 0.0
    %6295 = vmatpush1.msra.mxu0 0.0
    %6296 = vmatprep.subr.mxu0 0.0
    %6297 = vmatpush1.msra.mxu0 0.0
    %6298 = vmatprep.subr.mxu0 0.0
    %6299 = vmatpush1.msra.mxu0 0.0
    %6300 = vmatprep.subr.mxu0 0.0
    %6301 = vmatpush1.msra.mxu0 0.0
    %6302 = vmatprep.subr.mxu0 0.0
    %6303 = vmatpush1.msra.mxu0 0.0
    %6304 = vmatprep.subr.mxu0 0.0
    %6305 = vmatpush1.msra.mxu0 0.0
    %6306 = vmatprep.subr.mxu0 0.0
    %6307 = vmatpush1.msra.mxu0 0.0
    %6308 = vmatprep.subr.mxu0 0.0
    %6309 = vmatpush1.msra.mxu0 0.0
    %6310 = vmatprep.subr.mxu0 0.0
    %6311 = vmatpush1.msra.mxu0 0.0
    %6312 = vmatprep.subr.mxu0 0.0
    %6313 = vmatpush1.msra.mxu0 0.0
    %6314 = vmatprep.subr.mxu0 0.0
    %6315 = vmatpush1.msra.mxu0 0.0
    %6316 = vmatprep.subr.mxu0 0.0
    %6317 = vmatpush1.msra.mxu0 0.0
    %6318 = vmatprep.subr.mxu0 0.0
    %6319 = vmatpush1.msra.mxu0 0.0
    %6320 = vmatprep.subr.mxu0 0.0
    %6321 = vmatpush1.msra.mxu0 0.0
    %6322 = vmatprep.subr.mxu0 0.0
    %6323 = vmatpush1.msra.mxu0 0.0
    %6324 = vmatprep.subr.mxu0 0.0
    %6325 = vmatpush1.msra.mxu0 0.0
    %6326 = vmatprep.subr.mxu0 0.0
    %6327 = vmatpush1.msra.mxu0 0.0
    %6328 = vmatprep.subr.mxu0 0.0
    %6329 = vmatpush1.msra.mxu0 0.0
    %6330 = vmatprep.subr.mxu0 0.0
    %6331 = vmatpush1.msra.mxu0 0.0
    %6332 = vmatprep.subr.mxu0 0.0
    %6333 = vmatpush1.msra.mxu0 0.0
    %6334 = vmatprep.subr.mxu0 0.0
    %6335 = vmatpush1.msra.mxu0 0.0
    %6336 = vmatprep.subr.mxu0 0.0
    %6337 = vmatpush1.msra.mxu0 0.0
    %6338 = vmatprep.mubr.f32.mxu0 0.0
    %6339 = vmatmul.mubr.f32.gmra.mrb[0].mxu0 %v6272
    %v6340 = vpop.f32.mrb[0].mxu0
    %v6341 = vadd.f32 0.0, %v6340
    %v6342 = vpop.f32.mrb[0].mxu0
    %6343 = vdwg.mxu0
    %s6344 = scalar_lea.vmem %s9, 280
    %v6345 = vld [vmem:[%s6344] sm:$0xff]
    %v6346 = vld [vmem:[%s6344 + $0x8] sm:$0xff]
    %v6347 = vld [vmem:[%s6344 + $0x10] sm:$0xff]
    %v6348 = vld [vmem:[%s6344 + $0x18] sm:$0xff]
    %v6349 = vld [vmem:[%s6344 + $0x20] sm:$0xff]
    %v6350 = vld [vmem:[%s6344 + $0x28] sm:$0xff]
    %v6351 = vld [vmem:[%s6344 + $0x30] sm:$0xff]
    %v6353 = vsel %vm5362, %v6341, 0
    %6355 = vmatprep.subr.mxu0 0.0
    %6356 = vmatpush1.msra.mxu0 %v6345
    %6357 = vmatprep.subr.mxu0 0.0
    %6358 = vmatpush1.msra.mxu0 %v6346
    %6359 = vmatprep.subr.mxu0 0.0
    %6360 = vmatpush1.msra.mxu0 %v6347
    %6361 = vmatprep.subr.mxu0 0.0
    %6362 = vmatpush1.msra.mxu0 %v6348
    %6363 = vmatprep.subr.mxu0 0.0
    %6364 = vmatpush1.msra.mxu0 %v6349
    %6365 = vmatprep.subr.mxu0 0.0
    %6366 = vmatpush1.msra.mxu0 %v6350
    %6367 = vmatprep.subr.mxu0 0.0
    %6368 = vmatpush1.msra.mxu0 %v6351
    %6369 = vmatprep.subr.mxu0 0.0
    %6370 = vmatpush1.msra.mxu0 0.0
    %6371 = vmatprep.subr.mxu0 0.0
    %6372 = vmatpush1.msra.mxu0 0.0
    %6373 = vmatprep.subr.mxu0 0.0
    %6374 = vmatpush1.msra.mxu0 0.0
    %6375 = vmatprep.subr.mxu0 0.0
    %6376 = vmatpush1.msra.mxu0 0.0
    %6377 = vmatprep.subr.mxu0 0.0
    %6378 = vmatpush1.msra.mxu0 0.0
    %6379 = vmatprep.subr.mxu0 0.0
    %6380 = vmatpush1.msra.mxu0 0.0
    %6381 = vmatprep.subr.mxu0 0.0
    %6382 = vmatpush1.msra.mxu0 0.0
    %6383 = vmatprep.subr.mxu0 0.0
    %6384 = vmatpush1.msra.mxu0 0.0
    %6385 = vmatprep.subr.mxu0 0.0
    %6386 = vmatpush1.msra.mxu0 0.0
    %6387 = vmatprep.subr.mxu0 0.0
    %6388 = vmatpush1.msra.mxu0 0.0
    %6389 = vmatprep.subr.mxu0 0.0
    %6390 = vmatpush1.msra.mxu0 0.0
    %6391 = vmatprep.subr.mxu0 0.0
    %6392 = vmatpush1.msra.mxu0 0.0
    %6393 = vmatprep.subr.mxu0 0.0
    %6394 = vmatpush1.msra.mxu0 0.0
    %6395 = vmatprep.subr.mxu0 0.0
    %6396 = vmatpush1.msra.mxu0 0.0
    %6397 = vmatprep.subr.mxu0 0.0
    %6398 = vmatpush1.msra.mxu0 0.0
    %6399 = vmatprep.subr.mxu0 0.0
    %6400 = vmatpush1.msra.mxu0 0.0
    %6401 = vmatprep.subr.mxu0 0.0
    %6402 = vmatpush1.msra.mxu0 0.0
    %6403 = vmatprep.subr.mxu0 0.0
    %6404 = vmatpush1.msra.mxu0 0.0
    %6405 = vmatprep.subr.mxu0 0.0
    %6406 = vmatpush1.msra.mxu0 0.0
    %6407 = vmatprep.subr.mxu0 0.0
    %6408 = vmatpush1.msra.mxu0 0.0
    %6409 = vmatprep.subr.mxu0 0.0
    %6410 = vmatpush1.msra.mxu0 0.0
    %6411 = vmatprep.subr.mxu0 0.0
    %6412 = vmatpush1.msra.mxu0 0.0
    %6413 = vmatprep.subr.mxu0 0.0
    %6414 = vmatpush1.msra.mxu0 0.0
    %6415 = vmatprep.subr.mxu0 0.0
    %6416 = vmatpush1.msra.mxu0 0.0
    %6417 = vmatprep.subr.mxu0 0.0
    %6418 = vmatpush1.msra.mxu0 0.0
    %6419 = vmatprep.mubr.f32.mxu0 0.0
    %6420 = vmatmul.mubr.f32.gmra.mrb[0].mxu0 %v6353
    %v6421 = vpop.f32.mrb[0].mxu0
    %v6422 = vadd.f32 0.0, %v6421
    %v6423 = vpop.f32.mrb[0].mxu0
    %6424 = vdwg.mxu0
    %v6425 = vadd.f32 %v6268, %v6422
    %s6426 = scalar_lea.vmem %s8, 6
    %v6427 = vld [vmem:[%s6426] sm:$0x1]
    %v6429 = vsel %vm5488, %v6427, 0
    %6431 = vmatprep.subr.mxu0 0.0
    %6432 = vmatpush1.msra.mxu0 %v5483
    %6433 = vmatprep.subr.mxu0 0.0
    %6434 = vmatpush1.msra.mxu0 %v5484
    %6435 = vmatprep.subr.mxu0 0.0
    %6436 = vmatpush1.msra.mxu0 %v5485
    %6437 = vmatprep.subr.mxu0 0.0
    %6438 = vmatpush1.msra.mxu0 %v5486
    %6439 = vmatprep.subr.mxu0 0.0
    %6440 = vmatpush1.msra.mxu0 0.0
    %6441 = vmatprep.subr.mxu0 0.0
    %6442 = vmatpush1.msra.mxu0 0.0
    %6443 = vmatprep.subr.mxu0 0.0
    %6444 = vmatpush1.msra.mxu0 0.0
    %6445 = vmatprep.subr.mxu0 0.0
    %6446 = vmatpush1.msra.mxu0 0.0
    %6447 = vmatprep.subr.mxu0 0.0
    %6448 = vmatpush1.msra.mxu0 0.0
    %6449 = vmatprep.subr.mxu0 0.0
    %6450 = vmatpush1.msra.mxu0 0.0
    %6451 = vmatprep.subr.mxu0 0.0
    %6452 = vmatpush1.msra.mxu0 0.0
    %6453 = vmatprep.subr.mxu0 0.0
    %6454 = vmatpush1.msra.mxu0 0.0
    %6455 = vmatprep.subr.mxu0 0.0
    %6456 = vmatpush1.msra.mxu0 0.0
    %6457 = vmatprep.subr.mxu0 0.0
    %6458 = vmatpush1.msra.mxu0 0.0
    %6459 = vmatprep.subr.mxu0 0.0
    %6460 = vmatpush1.msra.mxu0 0.0
    %6461 = vmatprep.subr.mxu0 0.0
    %6462 = vmatpush1.msra.mxu0 0.0
    %6463 = vmatprep.subr.mxu0 0.0
    %6464 = vmatpush1.msra.mxu0 0.0
    %6465 = vmatprep.subr.mxu0 0.0
    %6466 = vmatpush1.msra.mxu0 0.0
    %6467 = vmatprep.subr.mxu0 0.0
    %6468 = vmatpush1.msra.mxu0 0.0
    %6469 = vmatprep.subr.mxu0 0.0
    %6470 = vmatpush1.msra.mxu0 0.0
    %6471 = vmatprep.subr.mxu0 0.0
    %6472 = vmatpush1.msra.mxu0 0.0
    %6473 = vmatprep.subr.mxu0 0.0
    %6474 = vmatpush1.msra.mxu0 0.0
    %6475 = vmatprep.subr.mxu0 0.0
    %6476 = vmatpush1.msra.mxu0 0.0
    %6477 = vmatprep.subr.mxu0 0.0
    %6478 = vmatpush1.msra.mxu0 0.0
    %6479 = vmatprep.subr.mxu0 0.0
    %6480 = vmatpush1.msra.mxu0 0.0
    %6481 = vmatprep.subr.mxu0 0.0
    %6482 = vmatpush1.msra.mxu0 0.0
    %6483 = vmatprep.subr.mxu0 0.0
    %6484 = vmatpush1.msra.mxu0 0.0
    %6485 = vmatprep.subr.mxu0 0.0
    %6486 = vmatpush1.msra.mxu0 0.0
    %6487 = vmatprep.subr.mxu0 0.0
    %6488 = vmatpush1.msra.mxu0 0.0
    %6489 = vmatprep.subr.mxu0 0.0
    %6490 = vmatpush1.msra.mxu0 0.0
    %6491 = vmatprep.subr.mxu0 0.0
    %6492 = vmatpush1.msra.mxu0 0.0
    %6493 = vmatprep.subr.mxu0 0.0
    %6494 = vmatpush1.msra.mxu0 0.0
    %6495 = vmatprep.mubr.f32.mxu0 0.0
    %6496 = vmatmul.mubr.f32.gmra.mrb[0].mxu0 %v6429
    %v6497 = vpop.f32.mrb[0].mxu0
    %v6498 = vadd.f32 0.0, %v6497
    %v6499 = vpop.f32.mrb[0].mxu0
    %6500 = vdwg.mxu0
    %s6501 = scalar_lea.vmem %s9, 336
    %v6502 = vld [vmem:[%s6501] sm:$0xff]
    %v6503 = vld [vmem:[%s6501 + $0x8] sm:$0xff]
    %v6504 = vld [vmem:[%s6501 + $0x10] sm:$0xff]
    %v6505 = vld [vmem:[%s6501 + $0x18] sm:$0xff]
    %v6506 = vld [vmem:[%s6501 + $0x20] sm:$0xff]
    %v6507 = vld [vmem:[%s6501 + $0x28] sm:$0xff]
    %v6508 = vld [vmem:[%s6501 + $0x30] sm:$0xff]
    %v6510 = vsel %vm5362, %v6498, 0
    %6512 = vmatprep.subr.mxu0 0.0
    %6513 = vmatpush1.msra.mxu0 %v6502
    %6514 = vmatprep.subr.mxu0 0.0
    %6515 = vmatpush1.msra.mxu0 %v6503
    %6516 = vmatprep.subr.mxu0 0.0
    %6517 = vmatpush1.msra.mxu0 %v6504
    %6518 = vmatprep.subr.mxu0 0.0
    %6519 = vmatpush1.msra.mxu0 %v6505
    %6520 = vmatprep.subr.mxu0 0.0
    %6521 = vmatpush1.msra.mxu0 %v6506
    %6522 = vmatprep.subr.mxu0 0.0
    %6523 = vmatpush1.msra.mxu0 %v6507
    %6524 = vmatprep.subr.mxu0 0.0
    %6525 = vmatpush1.msra.mxu0 %v6508
    %6526 = vmatprep.subr.mxu0 0.0
    %6527 = vmatpush1.msra.mxu0 0.0
    %6528 = vmatprep.subr.mxu0 0.0
    %6529 = vmatpush1.msra.mxu0 0.0
    %6530 = vmatprep.subr.mxu0 0.0
    %6531 = vmatpush1.msra.mxu0 0.0
    %6532 = vmatprep.subr.mxu0 0.0
    %6533 = vmatpush1.msra.mxu0 0.0
    %6534 = vmatprep.subr.mxu0 0.0
    %6535 = vmatpush1.msra.mxu0 0.0
    %6536 = vmatprep.subr.mxu0 0.0
    %6537 = vmatpush1.msra.mxu0 0.0
    %6538 = vmatprep.subr.mxu0 0.0
    %6539 = vmatpush1.msra.mxu0 0.0
    %6540 = vmatprep.subr.mxu0 0.0
    %6541 = vmatpush1.msra.mxu0 0.0
    %6542 = vmatprep.subr.mxu0 0.0
    %6543 = vmatpush1.msra.mxu0 0.0
    %6544 = vmatprep.subr.mxu0 0.0
    %6545 = vmatpush1.msra.mxu0 0.0
    %6546 = vmatprep.subr.mxu0 0.0
    %6547 = vmatpush1.msra.mxu0 0.0
    %6548 = vmatprep.subr.mxu0 0.0
    %6549 = vmatpush1.msra.mxu0 0.0
    %6550 = vmatprep.subr.mxu0 0.0
    %6551 = vmatpush1.msra.mxu0 0.0
    %6552 = vmatprep.subr.mxu0 0.0
    %6553 = vmatpush1.msra.mxu0 0.0
    %6554 = vmatprep.subr.mxu0 0.0
    %6555 = vmatpush1.msra.mxu0 0.0
    %6556 = vmatprep.subr.mxu0 0.0
    %6557 = vmatpush1.msra.mxu0 0.0
    %6558 = vmatprep.subr.mxu0 0.0
    %6559 = vmatpush1.msra.mxu0 0.0
    %6560 = vmatprep.subr.mxu0 0.0
    %6561 = vmatpush1.msra.mxu0 0.0
    %6562 = vmatprep.subr.mxu0 0.0
    %6563 = vmatpush1.msra.mxu0 0.0
    %6564 = vmatprep.subr.mxu0 0.0
    %6565 = vmatpush1.msra.mxu0 0.0
    %6566 = vmatprep.subr.mxu0 0.0
    %6567 = vmatpush1.msra.mxu0 0.0
    %6568 = vmatprep.subr.mxu0 0.0
    %6569 = vmatpush1.msra.mxu0 0.0
    %6570 = vmatprep.subr.mxu0 0.0
    %6571 = vmatpush1.msra.mxu0 0.0
    %6572 = vmatprep.subr.mxu0 0.0
    %6573 = vmatpush1.msra.mxu0 0.0
    %6574 = vmatprep.subr.mxu0 0.0
    %6575 = vmatpush1.msra.mxu0 0.0
    %6576 = vmatprep.mubr.f32.mxu0 0.0
    %6577 = vmatmul.mubr.f32.gmra.mrb[0].mxu0 %v6510
    %v6578 = vpop.f32.mrb[0].mxu0
    %v6579 = vadd.f32 0.0, %v6578
    %v6580 = vpop.f32.mrb[0].mxu0
    %6581 = vdwg.mxu0
    %v6582 = vadd.f32 %v6425, %v6579
    %s6583 = scalar_lea.vmem %s8, 7
    %v6584 = vld [vmem:[%s6583] sm:$0x1]
    %v6586 = vsel %vm5488, %v6584, 0
    %6588 = vmatprep.subr.mxu0 0.0
    %6589 = vmatpush1.msra.mxu0 %v5483
    %6590 = vmatprep.subr.mxu0 0.0
    %6591 = vmatpush1.msra.mxu0 %v5484
    %6592 = vmatprep.subr.mxu0 0.0
    %6593 = vmatpush1.msra.mxu0 %v5485
    %6594 = vmatprep.subr.mxu0 0.0
    %6595 = vmatpush1.msra.mxu0 %v5486
    %6596 = vmatprep.subr.mxu0 0.0
    %6597 = vmatpush1.msra.mxu0 0.0
    %6598 = vmatprep.subr.mxu0 0.0
    %6599 = vmatpush1.msra.mxu0 0.0
    %6600 = vmatprep.subr.mxu0 0.0
    %6601 = vmatpush1.msra.mxu0 0.0
    %6602 = vmatprep.subr.mxu0 0.0
    %6603 = vmatpush1.msra.mxu0 0.0
    %6604 = vmatprep.subr.mxu0 0.0
    %6605 = vmatpush1.msra.mxu0 0.0
    %6606 = vmatprep.subr.mxu0 0.0
    %6607 = vmatpush1.msra.mxu0 0.0
    %6608 = vmatprep.subr.mxu0 0.0
    %6609 = vmatpush1.msra.mxu0 0.0
    %6610 = vmatprep.subr.mxu0 0.0
    %6611 = vmatpush1.msra.mxu0 0.0
    %6612 = vmatprep.subr.mxu0 0.0
    %6613 = vmatpush1.msra.mxu0 0.0
    %6614 = vmatprep.subr.mxu0 0.0
    %6615 = vmatpush1.msra.mxu0 0.0
    %6616 = vmatprep.subr.mxu0 0.0
    %6617 = vmatpush1.msra.mxu0 0.0
    %6618 = vmatprep.subr.mxu0 0.0
    %6619 = vmatpush1.msra.mxu0 0.0
    %6620 = vmatprep.subr.mxu0 0.0
    %6621 = vmatpush1.msra.mxu0 0.0
    %6622 = vmatprep.subr.mxu0 0.0
    %6623 = vmatpush1.msra.mxu0 0.0
    %6624 = vmatprep.subr.mxu0 0.0
    %6625 = vmatpush1.msra.mxu0 0.0
    %6626 = vmatprep.subr.mxu0 0.0
    %6627 = vmatpush1.msra.mxu0 0.0
    %6628 = vmatprep.subr.mxu0 0.0
    %6629 = vmatpush1.msra.mxu0 0.0
    %6630 = vmatprep.subr.mxu0 0.0
    %6631 = vmatpush1.msra.mxu0 0.0
    %6632 = vmatprep.subr.mxu0 0.0
    %6633 = vmatpush1.msra.mxu0 0.0
    %6634 = vmatprep.subr.mxu0 0.0
    %6635 = vmatpush1.msra.mxu0 0.0
    %6636 = vmatprep.subr.mxu0 0.0
    %6637 = vmatpush1.msra.mxu0 0.0
    %6638 = vmatprep.subr.mxu0 0.0
    %6639 = vmatpush1.msra.mxu0 0.0
    %6640 = vmatprep.subr.mxu0 0.0
    %6641 = vmatpush1.msra.mxu0 0.0
    %6642 = vmatprep.subr.mxu0 0.0
    %6643 = vmatpush1.msra.mxu0 0.0
    %6644 = vmatprep.subr.mxu0 0.0
    %6645 = vmatpush1.msra.mxu0 0.0
    %6646 = vmatprep.subr.mxu0 0.0
    %6647 = vmatpush1.msra.mxu0 0.0
    %6648 = vmatprep.subr.mxu0 0.0
    %6649 = vmatpush1.msra.mxu0 0.0
    %6650 = vmatprep.subr.mxu0 0.0
    %6651 = vmatpush1.msra.mxu0 0.0
    %6652 = vmatprep.mubr.f32.mxu0 0.0
    %6653 = vmatmul.mubr.f32.gmra.mrb[0].mxu0 %v6586
    %v6654 = vpop.f32.mrb[0].mxu0
    %v6655 = vadd.f32 0.0, %v6654
    %v6656 = vpop.f32.mrb[0].mxu0
    %6657 = vdwg.mxu0
    %s6658 = scalar_lea.vmem %s9, 392
    %v6659 = vld [vmem:[%s6658] sm:$0xff]
    %v6660 = vld [vmem:[%s6658 + $0x8] sm:$0xff]
    %v6661 = vld [vmem:[%s6658 + $0x10] sm:$0xff]
    %v6662 = vld [vmem:[%s6658 + $0x18] sm:$0xff]
    %v6663 = vld [vmem:[%s6658 + $0x20] sm:$0xff]
    %v6664 = vld [vmem:[%s6658 + $0x28] sm:$0xff]
    %v6665 = vld [vmem:[%s6658 + $0x30] sm:$0xff]
    %v6667 = vsel %vm5362, %v6655, 0
    %6669 = vmatprep.subr.mxu0 0.0
    %6670 = vmatpush1.msra.mxu0 %v6659
    %6671 = vmatprep.subr.mxu0 0.0
    %6672 = vmatpush1.msra.mxu0 %v6660
    %6673 = vmatprep.subr.mxu0 0.0
    %6674 = vmatpush1.msra.mxu0 %v6661
    %6675 = vmatprep.subr.mxu0 0.0
    %6676 = vmatpush1.msra.mxu0 %v6662
    %6677 = vmatprep.subr.mxu0 0.0
    %6678 = vmatpush1.msra.mxu0 %v6663
    %6679 = vmatprep.subr.mxu0 0.0
    %6680 = vmatpush1.msra.mxu0 %v6664
    %6681 = vmatprep.subr.mxu0 0.0
    %6682 = vmatpush1.msra.mxu0 %v6665
    %6683 = vmatprep.subr.mxu0 0.0
    %6684 = vmatpush1.msra.mxu0 0.0
    %6685 = vmatprep.subr.mxu0 0.0
    %6686 = vmatpush1.msra.mxu0 0.0
    %6687 = vmatprep.subr.mxu0 0.0
    %6688 = vmatpush1.msra.mxu0 0.0
    %6689 = vmatprep.subr.mxu0 0.0
    %6690 = vmatpush1.msra.mxu0 0.0
    %6691 = vmatprep.subr.mxu0 0.0
    %6692 = vmatpush1.msra.mxu0 0.0
    %6693 = vmatprep.subr.mxu0 0.0
    %6694 = vmatpush1.msra.mxu0 0.0
    %6695 = vmatprep.subr.mxu0 0.0
    %6696 = vmatpush1.msra.mxu0 0.0
    %6697 = vmatprep.subr.mxu0 0.0
    %6698 = vmatpush1.msra.mxu0 0.0
    %6699 = vmatprep.subr.mxu0 0.0
    %6700 = vmatpush1.msra.mxu0 0.0
    %6701 = vmatprep.subr.mxu0 0.0
    %6702 = vmatpush1.msra.mxu0 0.0
    %6703 = vmatprep.subr.mxu0 0.0
    %6704 = vmatpush1.msra.mxu0 0.0
    %6705 = vmatprep.subr.mxu0 0.0
    %6706 = vmatpush1.msra.mxu0 0.0
    %6707 = vmatprep.subr.mxu0 0.0
    %6708 = vmatpush1.msra.mxu0 0.0
    %6709 = vmatprep.subr.mxu0 0.0
    %6710 = vmatpush1.msra.mxu0 0.0
    %6711 = vmatprep.subr.mxu0 0.0
    %6712 = vmatpush1.msra.mxu0 0.0
    %6713 = vmatprep.subr.mxu0 0.0
    %6714 = vmatpush1.msra.mxu0 0.0
    %6715 = vmatprep.subr.mxu0 0.0
    %6716 = vmatpush1.msra.mxu0 0.0
    %6717 = vmatprep.subr.mxu0 0.0
    %6718 = vmatpush1.msra.mxu0 0.0
    %6719 = vmatprep.subr.mxu0 0.0
    %6720 = vmatpush1.msra.mxu0 0.0
    %6721 = vmatprep.subr.mxu0 0.0
    %6722 = vmatpush1.msra.mxu0 0.0
    %6723 = vmatprep.subr.mxu0 0.0
    %6724 = vmatpush1.msra.mxu0 0.0
    %6725 = vmatprep.subr.mxu0 0.0
    %6726 = vmatpush1.msra.mxu0 0.0
    %6727 = vmatprep.subr.mxu0 0.0
    %6728 = vmatpush1.msra.mxu0 0.0
    %6729 = vmatprep.subr.mxu0 0.0
    %6730 = vmatpush1.msra.mxu0 0.0
    %6731 = vmatprep.subr.mxu0 0.0
    %6732 = vmatpush1.msra.mxu0 0.0
    %6733 = vmatprep.mubr.f32.mxu0 0.0
    %6734 = vmatmul.mubr.f32.gmra.mrb[0].mxu0 %v6667
    %v6735 = vpop.f32.mrb[0].mxu0
    %v6736 = vadd.f32 0.0, %v6735
    %v6737 = vpop.f32.mrb[0].mxu0
    %6738 = vdwg.mxu0
    %v6739 = vadd.f32 %v6582, %v6736
    %s6740 = scalar_lea.vmem %s8, 8
    %v6741 = vld [vmem:[%s6740] sm:$0x1]
    %v6743 = vsel %vm5488, %v6741, 0
    %6745 = vmatprep.subr.mxu0 0.0
    %6746 = vmatpush1.msra.mxu0 %v5483
    %6747 = vmatprep.subr.mxu0 0.0
    %6748 = vmatpush1.msra.mxu0 %v5484
    %6749 = vmatprep.subr.mxu0 0.0
    %6750 = vmatpush1.msra.mxu0 %v5485
    %6751 = vmatprep.subr.mxu0 0.0
    %6752 = vmatpush1.msra.mxu0 %v5486
    %6753 = vmatprep.subr.mxu0 0.0
    %6754 = vmatpush1.msra.mxu0 0.0
    %6755 = vmatprep.subr.mxu0 0.0
    %6756 = vmatpush1.msra.mxu0 0.0
    %6757 = vmatprep.subr.mxu0 0.0
    %6758 = vmatpush1.msra.mxu0 0.0
    %6759 = vmatprep.subr.mxu0 0.0
    %6760 = vmatpush1.msra.mxu0 0.0
    %6761 = vmatprep.subr.mxu0 0.0
    %6762 = vmatpush1.msra.mxu0 0.0
    %6763 = vmatprep.subr.mxu0 0.0
    %6764 = vmatpush1.msra.mxu0 0.0
    %6765 = vmatprep.subr.mxu0 0.0
    %6766 = vmatpush1.msra.mxu0 0.0
    %6767 = vmatprep.subr.mxu0 0.0
    %6768 = vmatpush1.msra.mxu0 0.0
    %6769 = vmatprep.subr.mxu0 0.0
    %6770 = vmatpush1.msra.mxu0 0.0
    %6771 = vmatprep.subr.mxu0 0.0
    %6772 = vmatpush1.msra.mxu0 0.0
    %6773 = vmatprep.subr.mxu0 0.0
    %6774 = vmatpush1.msra.mxu0 0.0
    %6775 = vmatprep.subr.mxu0 0.0
    %6776 = vmatpush1.msra.mxu0 0.0
    %6777 = vmatprep.subr.mxu0 0.0
    %6778 = vmatpush1.msra.mxu0 0.0
    %6779 = vmatprep.subr.mxu0 0.0
    %6780 = vmatpush1.msra.mxu0 0.0
    %6781 = vmatprep.subr.mxu0 0.0
    %6782 = vmatpush1.msra.mxu0 0.0
    %6783 = vmatprep.subr.mxu0 0.0
    %6784 = vmatpush1.msra.mxu0 0.0
    %6785 = vmatprep.subr.mxu0 0.0
    %6786 = vmatpush1.msra.mxu0 0.0
    %6787 = vmatprep.subr.mxu0 0.0
    %6788 = vmatpush1.msra.mxu0 0.0
    %6789 = vmatprep.subr.mxu0 0.0
    %6790 = vmatpush1.msra.mxu0 0.0
    %6791 = vmatprep.subr.mxu0 0.0
    %6792 = vmatpush1.msra.mxu0 0.0
    %6793 = vmatprep.subr.mxu0 0.0
    %6794 = vmatpush1.msra.mxu0 0.0
    %6795 = vmatprep.subr.mxu0 0.0
    %6796 = vmatpush1.msra.mxu0 0.0
    %6797 = vmatprep.subr.mxu0 0.0
    %6798 = vmatpush1.msra.mxu0 0.0
    %6799 = vmatprep.subr.mxu0 0.0
    %6800 = vmatpush1.msra.mxu0 0.0
    %6801 = vmatprep.subr.mxu0 0.0
    %6802 = vmatpush1.msra.mxu0 0.0
    %6803 = vmatprep.subr.mxu0 0.0
    %6804 = vmatpush1.msra.mxu0 0.0
    %6805 = vmatprep.subr.mxu0 0.0
    %6806 = vmatpush1.msra.mxu0 0.0
    %6807 = vmatprep.subr.mxu0 0.0
    %6808 = vmatpush1.msra.mxu0 0.0
    %6809 = vmatprep.mubr.f32.mxu0 0.0
    %6810 = vmatmul.mubr.f32.gmra.mrb[0].mxu0 %v6743
    %v6811 = vpop.f32.mrb[0].mxu0
    %v6812 = vadd.f32 0.0, %v6811
    %v6813 = vpop.f32.mrb[0].mxu0
    %6814 = vdwg.mxu0
    %s6815 = scalar_lea.vmem %s9, 448
    %v6816 = vld [vmem:[%s6815] sm:$0xff]
    %v6817 = vld [vmem:[%s6815 + $0x8] sm:$0xff]
    %v6818 = vld [vmem:[%s6815 + $0x10] sm:$0xff]
    %v6819 = vld [vmem:[%s6815 + $0x18] sm:$0xff]
    %v6820 = vld [vmem:[%s6815 + $0x20] sm:$0xff]
    %v6821 = vld [vmem:[%s6815 + $0x28] sm:$0xff]
    %v6822 = vld [vmem:[%s6815 + $0x30] sm:$0xff]
    %v6824 = vsel %vm5362, %v6812, 0
    %6826 = vmatprep.subr.mxu0 0.0
    %6827 = vmatpush1.msra.mxu0 %v6816
    %6828 = vmatprep.subr.mxu0 0.0
    %6829 = vmatpush1.msra.mxu0 %v6817
    %6830 = vmatprep.subr.mxu0 0.0
    %6831 = vmatpush1.msra.mxu0 %v6818
    %6832 = vmatprep.subr.mxu0 0.0
    %6833 = vmatpush1.msra.mxu0 %v6819
    %6834 = vmatprep.subr.mxu0 0.0
    %6835 = vmatpush1.msra.mxu0 %v6820
    %6836 = vmatprep.subr.mxu0 0.0
    %6837 = vmatpush1.msra.mxu0 %v6821
    %6838 = vmatprep.subr.mxu0 0.0
    %6839 = vmatpush1.msra.mxu0 %v6822
    %6840 = vmatprep.subr.mxu0 0.0
    %6841 = vmatpush1.msra.mxu0 0.0
    %6842 = vmatprep.subr.mxu0 0.0
    %6843 = vmatpush1.msra.mxu0 0.0
    %6844 = vmatprep.subr.mxu0 0.0
    %6845 = vmatpush1.msra.mxu0 0.0
    %6846 = vmatprep.subr.mxu0 0.0
    %6847 = vmatpush1.msra.mxu0 0.0
    %6848 = vmatprep.subr.mxu0 0.0
    %6849 = vmatpush1.msra.mxu0 0.0
    %6850 = vmatprep.subr.mxu0 0.0
    %6851 = vmatpush1.msra.mxu0 0.0
    %6852 = vmatprep.subr.mxu0 0.0
    %6853 = vmatpush1.msra.mxu0 0.0
    %6854 = vmatprep.subr.mxu0 0.0
    %6855 = vmatpush1.msra.mxu0 0.0
    %6856 = vmatprep.subr.mxu0 0.0
    %6857 = vmatpush1.msra.mxu0 0.0
    %6858 = vmatprep.subr.mxu0 0.0
    %6859 = vmatpush1.msra.mxu0 0.0
    %6860 = vmatprep.subr.mxu0 0.0
    %6861 = vmatpush1.msra.mxu0 0.0
    %6862 = vmatprep.subr.mxu0 0.0
    %6863 = vmatpush1.msra.mxu0 0.0
    %6864 = vmatprep.subr.mxu0 0.0
    %6865 = vmatpush1.msra.mxu0 0.0
    %6866 = vmatprep.subr.mxu0 0.0
    %6867 = vmatpush1.msra.mxu0 0.0
    %6868 = vmatprep.subr.mxu0 0.0
    %6869 = vmatpush1.msra.mxu0 0.0
    %6870 = vmatprep.subr.mxu0 0.0
    %6871 = vmatpush1.msra.mxu0 0.0
    %6872 = vmatprep.subr.mxu0 0.0
    %6873 = vmatpush1.msra.mxu0 0.0
    %6874 = vmatprep.subr.mxu0 0.0
    %6875 = vmatpush1.msra.mxu0 0.0
    %6876 = vmatprep.subr.mxu0 0.0
    %6877 = vmatpush1.msra.mxu0 0.0
    %6878 = vmatprep.subr.mxu0 0.0
    %6879 = vmatpush1.msra.mxu0 0.0
    %6880 = vmatprep.subr.mxu0 0.0
    %6881 = vmatpush1.msra.mxu0 0.0
    %6882 = vmatprep.subr.mxu0 0.0
    %6883 = vmatpush1.msra.mxu0 0.0
    %6884 = vmatprep.subr.mxu0 0.0
    %6885 = vmatpush1.msra.mxu0 0.0
    %6886 = vmatprep.subr.mxu0 0.0
    %6887 = vmatpush1.msra.mxu0 0.0
    %6888 = vmatprep.subr.mxu0 0.0
    %6889 = vmatpush1.msra.mxu0 0.0
    %6890 = vmatprep.mubr.f32.mxu0 0.0
    %6891 = vmatmul.mubr.f32.gmra.mrb[0].mxu0 %v6824
    %v6892 = vpop.f32.mrb[0].mxu0
    %v6893 = vadd.f32 0.0, %v6892
    %v6894 = vpop.f32.mrb[0].mxu0
    %6895 = vdwg.mxu0
    %v6896 = vadd.f32 %v6739, %v6893
    %s6897 = scalar_lea.vmem %s8, 9
    %v6898 = vld [vmem:[%s6897] sm:$0x1]
    %v6900 = vsel %vm5488, %v6898, 0
    %6902 = vmatprep.subr.mxu0 0.0
    %6903 = vmatpush1.msra.mxu0 %v5483
    %6904 = vmatprep.subr.mxu0 0.0
    %6905 = vmatpush1.msra.mxu0 %v5484
    %6906 = vmatprep.subr.mxu0 0.0
    %6907 = vmatpush1.msra.mxu0 %v5485
    %6908 = vmatprep.subr.mxu0 0.0
    %6909 = vmatpush1.msra.mxu0 %v5486
    %6910 = vmatprep.subr.mxu0 0.0
    %6911 = vmatpush1.msra.mxu0 0.0
    %6912 = vmatprep.subr.mxu0 0.0
    %6913 = vmatpush1.msra.mxu0 0.0
    %6914 = vmatprep.subr.mxu0 0.0
    %6915 = vmatpush1.msra.mxu0 0.0
    %6916 = vmatprep.subr.mxu0 0.0
    %6917 = vmatpush1.msra.mxu0 0.0
    %6918 = vmatprep.subr.mxu0 0.0
    %6919 = vmatpush1.msra.mxu0 0.0
    %6920 = vmatprep.subr.mxu0 0.0
    %6921 = vmatpush1.msra.mxu0 0.0
    %6922 = vmatprep.subr.mxu0 0.0
    %6923 = vmatpush1.msra.mxu0 0.0
    %6924 = vmatprep.subr.mxu0 0.0
    %6925 = vmatpush1.msra.mxu0 0.0
    %6926 = vmatprep.subr.mxu0 0.0
    %6927 = vmatpush1.msra.mxu0 0.0
    %6928 = vmatprep.subr.mxu0 0.0
    %6929 = vmatpush1.msra.mxu0 0.0
    %6930 = vmatprep.subr.mxu0 0.0
    %6931 = vmatpush1.msra.mxu0 0.0
    %6932 = vmatprep.subr.mxu0 0.0
    %6933 = vmatpush1.msra.mxu0 0.0
    %6934 = vmatprep.subr.mxu0 0.0
    %6935 = vmatpush1.msra.mxu0 0.0
    %6936 = vmatprep.subr.mxu0 0.0
    %6937 = vmatpush1.msra.mxu0 0.0
    %6938 = vmatprep.subr.mxu0 0.0
    %6939 = vmatpush1.msra.mxu0 0.0
    %6940 = vmatprep.subr.mxu0 0.0
    %6941 = vmatpush1.msra.mxu0 0.0
    %6942 = vmatprep.subr.mxu0 0.0
    %6943 = vmatpush1.msra.mxu0 0.0
    %6944 = vmatprep.subr.mxu0 0.0
    %6945 = vmatpush1.msra.mxu0 0.0
    %6946 = vmatprep.subr.mxu0 0.0
    %6947 = vmatpush1.msra.mxu0 0.0
    %6948 = vmatprep.subr.mxu0 0.0
    %6949 = vmatpush1.msra.mxu0 0.0
    %6950 = vmatprep.subr.mxu0 0.0
    %6951 = vmatpush1.msra.mxu0 0.0
    %6952 = vmatprep.subr.mxu0 0.0
    %6953 = vmatpush1.msra.mxu0 0.0
    %6954 = vmatprep.subr.mxu0 0.0
    %6955 = vmatpush1.msra.mxu0 0.0
    %6956 = vmatprep.subr.mxu0 0.0
    %6957 = vmatpush1.msra.mxu0 0.0
    %6958 = vmatprep.subr.mxu0 0.0
    %6959 = vmatpush1.msra.mxu0 0.0
    %6960 = vmatprep.subr.mxu0 0.0
    %6961 = vmatpush1.msra.mxu0 0.0
    %6962 = vmatprep.subr.mxu0 0.0
    %6963 = vmatpush1.msra.mxu0 0.0
    %6964 = vmatprep.subr.mxu0 0.0
    %6965 = vmatpush1.msra.mxu0 0.0
    %6966 = vmatprep.mubr.f32.mxu0 0.0
    %6967 = vmatmul.mubr.f32.gmra.mrb[0].mxu0 %v6900
    %v6968 = vpop.f32.mrb[0].mxu0
    %v6969 = vadd.f32 0.0, %v6968
    %v6970 = vpop.f32.mrb[0].mxu0
    %6971 = vdwg.mxu0
    %s6972 = scalar_lea.vmem %s9, 504
    %v6973 = vld [vmem:[%s6972] sm:$0xff]
    %v6974 = vld [vmem:[%s6972 + $0x8] sm:$0xff]
    %v6975 = vld [vmem:[%s6972 + $0x10] sm:$0xff]
    %v6976 = vld [vmem:[%s6972 + $0x18] sm:$0xff]
    %v6977 = vld [vmem:[%s6972 + $0x20] sm:$0xff]
    %v6978 = vld [vmem:[%s6972 + $0x28] sm:$0xff]
    %v6979 = vld [vmem:[%s6972 + $0x30] sm:$0xff]
    %v6981 = vsel %vm5362, %v6969, 0
    %6983 = vmatprep.subr.mxu0 0.0
    %6984 = vmatpush1.msra.mxu0 %v6973
    %6985 = vmatprep.subr.mxu0 0.0
    %6986 = vmatpush1.msra.mxu0 %v6974
    %6987 = vmatprep.subr.mxu0 0.0
    %6988 = vmatpush1.msra.mxu0 %v6975
    %6989 = vmatprep.subr.mxu0 0.0
    %6990 = vmatpush1.msra.mxu0 %v6976
    %6991 = vmatprep.subr.mxu0 0.0
    %6992 = vmatpush1.msra.mxu0 %v6977
    %6993 = vmatprep.subr.mxu0 0.0
    %6994 = vmatpush1.msra.mxu0 %v6978
    %6995 = vmatprep.subr.mxu0 0.0
    %6996 = vmatpush1.msra.mxu0 %v6979
    %6997 = vmatprep.subr.mxu0 0.0
    %6998 = vmatpush1.msra.mxu0 0.0
    %6999 = vmatprep.subr.mxu0 0.0
    %7000 = vmatpush1.msra.mxu0 0.0
    %7001 = vmatprep.subr.mxu0 0.0
    %7002 = vmatpush1.msra.mxu0 0.0
    %7003 = vmatprep.subr.mxu0 0.0
    %7004 = vmatpush1.msra.mxu0 0.0
    %7005 = vmatprep.subr.mxu0 0.0
    %7006 = vmatpush1.msra.mxu0 0.0
    %7007 = vmatprep.subr.mxu0 0.0
    %7008 = vmatpush1.msra.mxu0 0.0
    %7009 = vmatprep.subr.mxu0 0.0
    %7010 = vmatpush1.msra.mxu0 0.0
    %7011 = vmatprep.subr.mxu0 0.0
    %7012 = vmatpush1.msra.mxu0 0.0
    %7013 = vmatprep.subr.mxu0 0.0
    %7014 = vmatpush1.msra.mxu0 0.0
    %7015 = vmatprep.subr.mxu0 0.0
    %7016 = vmatpush1.msra.mxu0 0.0
    %7017 = vmatprep.subr.mxu0 0.0
    %7018 = vmatpush1.msra.mxu0 0.0
    %7019 = vmatprep.subr.mxu0 0.0
    %7020 = vmatpush1.msra.mxu0 0.0
    %7021 = vmatprep.subr.mxu0 0.0
    %7022 = vmatpush1.msra.mxu0 0.0
    %7023 = vmatprep.subr.mxu0 0.0
    %7024 = vmatpush1.msra.mxu0 0.0
    %7025 = vmatprep.subr.mxu0 0.0
    %7026 = vmatpush1.msra.mxu0 0.0
    %7027 = vmatprep.subr.mxu0 0.0
    %7028 = vmatpush1.msra.mxu0 0.0
    %7029 = vmatprep.subr.mxu0 0.0
    %7030 = vmatpush1.msra.mxu0 0.0
    %7031 = vmatprep.subr.mxu0 0.0
    %7032 = vmatpush1.msra.mxu0 0.0
    %7033 = vmatprep.subr.mxu0 0.0
    %7034 = vmatpush1.msra.mxu0 0.0
    %7035 = vmatprep.subr.mxu0 0.0
    %7036 = vmatpush1.msra.mxu0 0.0
    %7037 = vmatprep.subr.mxu0 0.0
    %7038 = vmatpush1.msra.mxu0 0.0
    %7039 = vmatprep.subr.mxu0 0.0
    %7040 = vmatpush1.msra.mxu0 0.0
    %7041 = vmatprep.subr.mxu0 0.0
    %7042 = vmatpush1.msra.mxu0 0.0
    %7043 = vmatprep.subr.mxu0 0.0
    %7044 = vmatpush1.msra.mxu0 0.0
    %7045 = vmatprep.subr.mxu0 0.0
    %7046 = vmatpush1.msra.mxu0 0.0
    %7047 = vmatprep.mubr.f32.mxu0 0.0
    %7048 = vmatmul.mubr.f32.gmra.mrb[0].mxu0 %v6981
    %v7049 = vpop.f32.mrb[0].mxu0
    %v7050 = vadd.f32 0.0, %v7049
    %v7051 = vpop.f32.mrb[0].mxu0
    %7052 = vdwg.mxu0
    %v7053 = vadd.f32 %v6896, %v7050
    %s7054 = scalar_lea.vmem %s8, 10
    %v7055 = vld [vmem:[%s7054] sm:$0x1]
    %v7057 = vsel %vm5488, %v7055, 0
    %7059 = vmatprep.subr.mxu0 0.0
    %7060 = vmatpush1.msra.mxu0 %v5483
    %7061 = vmatprep.subr.mxu0 0.0
    %7062 = vmatpush1.msra.mxu0 %v5484
    %7063 = vmatprep.subr.mxu0 0.0
    %7064 = vmatpush1.msra.mxu0 %v5485
    %7065 = vmatprep.subr.mxu0 0.0
    %7066 = vmatpush1.msra.mxu0 %v5486
    %7067 = vmatprep.subr.mxu0 0.0
    %7068 = vmatpush1.msra.mxu0 0.0
    %7069 = vmatprep.subr.mxu0 0.0
    %7070 = vmatpush1.msra.mxu0 0.0
    %7071 = vmatprep.subr.mxu0 0.0
    %7072 = vmatpush1.msra.mxu0 0.0
    %7073 = vmatprep.subr.mxu0 0.0
    %7074 = vmatpush1.msra.mxu0 0.0
    %7075 = vmatprep.subr.mxu0 0.0
    %7076 = vmatpush1.msra.mxu0 0.0
    %7077 = vmatprep.subr.mxu0 0.0
    %7078 = vmatpush1.msra.mxu0 0.0
    %7079 = vmatprep.subr.mxu0 0.0
    %7080 = vmatpush1.msra.mxu0 0.0
    %7081 = vmatprep.subr.mxu0 0.0
    %7082 = vmatpush1.msra.mxu0 0.0
    %7083 = vmatprep.subr.mxu0 0.0
    %7084 = vmatpush1.msra.mxu0 0.0
    %7085 = vmatprep.subr.mxu0 0.0
    %7086 = vmatpush1.msra.mxu0 0.0
    %7087 = vmatprep.subr.mxu0 0.0
    %7088 = vmatpush1.msra.mxu0 0.0
    %7089 = vmatprep.subr.mxu0 0.0
    %7090 = vmatpush1.msra.mxu0 0.0
    %7091 = vmatprep.subr.mxu0 0.0
    %7092 = vmatpush1.msra.mxu0 0.0
    %7093 = vmatprep.subr.mxu0 0.0
    %7094 = vmatpush1.msra.mxu0 0.0
    %7095 = vmatprep.subr.mxu0 0.0
    %7096 = vmatpush1.msra.mxu0 0.0
    %7097 = vmatprep.subr.mxu0 0.0
    %7098 = vmatpush1.msra.mxu0 0.0
    %7099 = vmatprep.subr.mxu0 0.0
    %7100 = vmatpush1.msra.mxu0 0.0
    %7101 = vmatprep.subr.mxu0 0.0
    %7102 = vmatpush1.msra.mxu0 0.0
    %7103 = vmatprep.subr.mxu0 0.0
    %7104 = vmatpush1.msra.mxu0 0.0
    %7105 = vmatprep.subr.mxu0 0.0
    %7106 = vmatpush1.msra.mxu0 0.0
    %7107 = vmatprep.subr.mxu0 0.0
    %7108 = vmatpush1.msra.mxu0 0.0
    %7109 = vmatprep.subr.mxu0 0.0
    %7110 = vmatpush1.msra.mxu0 0.0
    %7111 = vmatprep.subr.mxu0 0.0
    %7112 = vmatpush1.msra.mxu0 0.0
    %7113 = vmatprep.subr.mxu0 0.0
    %7114 = vmatpush1.msra.mxu0 0.0
    %7115 = vmatprep.subr.mxu0 0.0
    %7116 = vmatpush1.msra.mxu0 0.0
    %7117 = vmatprep.subr.mxu0 0.0
    %7118 = vmatpush1.msra.mxu0 0.0
    %7119 = vmatprep.subr.mxu0 0.0
    %7120 = vmatpush1.msra.mxu0 0.0
    %7121 = vmatprep.subr.mxu0 0.0
    %7122 = vmatpush1.msra.mxu0 0.0
    %7123 = vmatprep.mubr.f32.mxu0 0.0
    %7124 = vmatmul.mubr.f32.gmra.mrb[0].mxu0 %v7057
    %v7125 = vpop.f32.mrb[0].mxu0
    %v7126 = vadd.f32 0.0, %v7125
    %v7127 = vpop.f32.mrb[0].mxu0
    %7128 = vdwg.mxu0
    %s7129 = scalar_lea.vmem %s9, 560
    %v7130 = vld [vmem:[%s7129] sm:$0xff]
    %v7131 = vld [vmem:[%s7129 + $0x8] sm:$0xff]
    %v7132 = vld [vmem:[%s7129 + $0x10] sm:$0xff]
    %v7133 = vld [vmem:[%s7129 + $0x18] sm:$0xff]
    %v7134 = vld [vmem:[%s7129 + $0x20] sm:$0xff]
    %v7135 = vld [vmem:[%s7129 + $0x28] sm:$0xff]
    %v7136 = vld [vmem:[%s7129 + $0x30] sm:$0xff]
    %v7138 = vsel %vm5362, %v7126, 0
    %7140 = vmatprep.subr.mxu0 0.0
    %7141 = vmatpush1.msra.mxu0 %v7130
    %7142 = vmatprep.subr.mxu0 0.0
    %7143 = vmatpush1.msra.mxu0 %v7131
    %7144 = vmatprep.subr.mxu0 0.0
    %7145 = vmatpush1.msra.mxu0 %v7132
    %7146 = vmatprep.subr.mxu0 0.0
    %7147 = vmatpush1.msra.mxu0 %v7133
    %7148 = vmatprep.subr.mxu0 0.0
    %7149 = vmatpush1.msra.mxu0 %v7134
    %7150 = vmatprep.subr.mxu0 0.0
    %7151 = vmatpush1.msra.mxu0 %v7135
    %7152 = vmatprep.subr.mxu0 0.0
    %7153 = vmatpush1.msra.mxu0 %v7136
    %7154 = vmatprep.subr.mxu0 0.0
    %7155 = vmatpush1.msra.mxu0 0.0
    %7156 = vmatprep.subr.mxu0 0.0
    %7157 = vmatpush1.msra.mxu0 0.0
    %7158 = vmatprep.subr.mxu0 0.0
    %7159 = vmatpush1.msra.mxu0 0.0
    %7160 = vmatprep.subr.mxu0 0.0
    %7161 = vmatpush1.msra.mxu0 0.0
    %7162 = vmatprep.subr.mxu0 0.0
    %7163 = vmatpush1.msra.mxu0 0.0
    %7164 = vmatprep.subr.mxu0 0.0
    %7165 = vmatpush1.msra.mxu0 0.0
    %7166 = vmatprep.subr.mxu0 0.0
    %7167 = vmatpush1.msra.mxu0 0.0
    %7168 = vmatprep.subr.mxu0 0.0
    %7169 = vmatpush1.msra.mxu0 0.0
    %7170 = vmatprep.subr.mxu0 0.0
    %7171 = vmatpush1.msra.mxu0 0.0
    %7172 = vmatprep.subr.mxu0 0.0
    %7173 = vmatpush1.msra.mxu0 0.0
    %7174 = vmatprep.subr.mxu0 0.0
    %7175 = vmatpush1.msra.mxu0 0.0
    %7176 = vmatprep.subr.mxu0 0.0
    %7177 = vmatpush1.msra.mxu0 0.0
    %7178 = vmatprep.subr.mxu0 0.0
    %7179 = vmatpush1.msra.mxu0 0.0
    %7180 = vmatprep.subr.mxu0 0.0
    %7181 = vmatpush1.msra.mxu0 0.0
    %7182 = vmatprep.subr.mxu0 0.0
    %7183 = vmatpush1.msra.mxu0 0.0
    %7184 = vmatprep.subr.mxu0 0.0
    %7185 = vmatpush1.msra.mxu0 0.0
    %7186 = vmatprep.subr.mxu0 0.0
    %7187 = vmatpush1.msra.mxu0 0.0
    %7188 = vmatprep.subr.mxu0 0.0
    %7189 = vmatpush1.msra.mxu0 0.0
    %7190 = vmatprep.subr.mxu0 0.0
    %7191 = vmatpush1.msra.mxu0 0.0
    %7192 = vmatprep.subr.mxu0 0.0
    %7193 = vmatpush1.msra.mxu0 0.0
    %7194 = vmatprep.subr.mxu0 0.0
    %7195 = vmatpush1.msra.mxu0 0.0
    %7196 = vmatprep.subr.mxu0 0.0
    %7197 = vmatpush1.msra.mxu0 0.0
    %7198 = vmatprep.subr.mxu0 0.0
    %7199 = vmatpush1.msra.mxu0 0.0
    %7200 = vmatprep.subr.mxu0 0.0
    %7201 = vmatpush1.msra.mxu0 0.0
    %7202 = vmatprep.subr.mxu0 0.0
    %7203 = vmatpush1.msra.mxu0 0.0
    %7204 = vmatprep.mubr.f32.mxu0 0.0
    %7205 = vmatmul.mubr.f32.gmra.mrb[0].mxu0 %v7138
    %v7206 = vpop.f32.mrb[0].mxu0
    %v7207 = vadd.f32 0.0, %v7206
    %v7208 = vpop.f32.mrb[0].mxu0
    %7209 = vdwg.mxu0
    %v7210 = vadd.f32 %v7053, %v7207
    %s7211 = scalar_lea.vmem %s8, 11
    %v7212 = vld [vmem:[%s7211] sm:$0x1]
    %v7214 = vsel %vm5488, %v7212, 0
    %7216 = vmatprep.subr.mxu0 0.0
    %7217 = vmatpush1.msra.mxu0 %v5483
    %7218 = vmatprep.subr.mxu0 0.0
    %7219 = vmatpush1.msra.mxu0 %v5484
    %7220 = vmatprep.subr.mxu0 0.0
    %7221 = vmatpush1.msra.mxu0 %v5485
    %7222 = vmatprep.subr.mxu0 0.0
    %7223 = vmatpush1.msra.mxu0 %v5486
    %7224 = vmatprep.subr.mxu0 0.0
    %7225 = vmatpush1.msra.mxu0 0.0
    %7226 = vmatprep.subr.mxu0 0.0
    %7227 = vmatpush1.msra.mxu0 0.0
    %7228 = vmatprep.subr.mxu0 0.0
    %7229 = vmatpush1.msra.mxu0 0.0
    %7230 = vmatprep.subr.mxu0 0.0
    %7231 = vmatpush1.msra.mxu0 0.0
    %7232 = vmatprep.subr.mxu0 0.0
    %7233 = vmatpush1.msra.mxu0 0.0
    %7234 = vmatprep.subr.mxu0 0.0
    %7235 = vmatpush1.msra.mxu0 0.0
    %7236 = vmatprep.subr.mxu0 0.0
    %7237 = vmatpush1.msra.mxu0 0.0
    %7238 = vmatprep.subr.mxu0 0.0
    %7239 = vmatpush1.msra.mxu0 0.0
    %7240 = vmatprep.subr.mxu0 0.0
    %7241 = vmatpush1.msra.mxu0 0.0
    %7242 = vmatprep.subr.mxu0 0.0
    %7243 = vmatpush1.msra.mxu0 0.0
    %7244 = vmatprep.subr.mxu0 0.0
    %7245 = vmatpush1.msra.mxu0 0.0
    %7246 = vmatprep.subr.mxu0 0.0
    %7247 = vmatpush1.msra.mxu0 0.0
    %7248 = vmatprep.subr.mxu0 0.0
    %7249 = vmatpush1.msra.mxu0 0.0
    %7250 = vmatprep.subr.mxu0 0.0
    %7251 = vmatpush1.msra.mxu0 0.0
    %7252 = vmatprep.subr.mxu0 0.0
    %7253 = vmatpush1.msra.mxu0 0.0
    %7254 = vmatprep.subr.mxu0 0.0
    %7255 = vmatpush1.msra.mxu0 0.0
    %7256 = vmatprep.subr.mxu0 0.0
    %7257 = vmatpush1.msra.mxu0 0.0
    %7258 = vmatprep.subr.mxu0 0.0
    %7259 = vmatpush1.msra.mxu0 0.0
    %7260 = vmatprep.subr.mxu0 0.0
    %7261 = vmatpush1.msra.mxu0 0.0
    %7262 = vmatprep.subr.mxu0 0.0
    %7263 = vmatpush1.msra.mxu0 0.0
    %7264 = vmatprep.subr.mxu0 0.0
    %7265 = vmatpush1.msra.mxu0 0.0
    %7266 = vmatprep.subr.mxu0 0.0
    %7267 = vmatpush1.msra.mxu0 0.0
    %7268 = vmatprep.subr.mxu0 0.0
    %7269 = vmatpush1.msra.mxu0 0.0
    %7270 = vmatprep.subr.mxu0 0.0
    %7271 = vmatpush1.msra.mxu0 0.0
    %7272 = vmatprep.subr.mxu0 0.0
    %7273 = vmatpush1.msra.mxu0 0.0
    %7274 = vmatprep.subr.mxu0 0.0
    %7275 = vmatpush1.msra.mxu0 0.0
    %7276 = vmatprep.subr.mxu0 0.0
    %7277 = vmatpush1.msra.mxu0 0.0
    %7278 = vmatprep.subr.mxu0 0.0
    %7279 = vmatpush1.msra.mxu0 0.0
    %7280 = vmatprep.mubr.f32.mxu0 0.0
    %7281 = vmatmul.mubr.f32.gmra.mrb[0].mxu0 %v7214
    %v7282 = vpop.f32.mrb[0].mxu0
    %v7283 = vadd.f32 0.0, %v7282
    %v7284 = vpop.f32.mrb[0].mxu0
    %7285 = vdwg.mxu0
    %s7286 = scalar_lea.vmem %s9, 616
    %v7287 = vld [vmem:[%s7286] sm:$0xff]
    %v7288 = vld [vmem:[%s7286 + $0x8] sm:$0xff]
    %v7289 = vld [vmem:[%s7286 + $0x10] sm:$0xff]
    %v7290 = vld [vmem:[%s7286 + $0x18] sm:$0xff]
    %v7291 = vld [vmem:[%s7286 + $0x20] sm:$0xff]
    %v7292 = vld [vmem:[%s7286 + $0x28] sm:$0xff]
    %v7293 = vld [vmem:[%s7286 + $0x30] sm:$0xff]
    %v7295 = vsel %vm5362, %v7283, 0
    %7297 = vmatprep.subr.mxu0 0.0
    %7298 = vmatpush1.msra.mxu0 %v7287
    %7299 = vmatprep.subr.mxu0 0.0
    %7300 = vmatpush1.msra.mxu0 %v7288
    %7301 = vmatprep.subr.mxu0 0.0
    %7302 = vmatpush1.msra.mxu0 %v7289
    %7303 = vmatprep.subr.mxu0 0.0
    %7304 = vmatpush1.msra.mxu0 %v7290
    %7305 = vmatprep.subr.mxu0 0.0
    %7306 = vmatpush1.msra.mxu0 %v7291
    %7307 = vmatprep.subr.mxu0 0.0
    %7308 = vmatpush1.msra.mxu0 %v7292
    %7309 = vmatprep.subr.mxu0 0.0
    %7310 = vmatpush1.msra.mxu0 %v7293
    %7311 = vmatprep.subr.mxu0 0.0
    %7312 = vmatpush1.msra.mxu0 0.0
    %7313 = vmatprep.subr.mxu0 0.0
    %7314 = vmatpush1.msra.mxu0 0.0
    %7315 = vmatprep.subr.mxu0 0.0
    %7316 = vmatpush1.msra.mxu0 0.0
    %7317 = vmatprep.subr.mxu0 0.0
    %7318 = vmatpush1.msra.mxu0 0.0
    %7319 = vmatprep.subr.mxu0 0.0
    %7320 = vmatpush1.msra.mxu0 0.0
    %7321 = vmatprep.subr.mxu0 0.0
    %7322 = vmatpush1.msra.mxu0 0.0
    %7323 = vmatprep.subr.mxu0 0.0
    %7324 = vmatpush1.msra.mxu0 0.0
    %7325 = vmatprep.subr.mxu0 0.0
    %7326 = vmatpush1.msra.mxu0 0.0
    %7327 = vmatprep.subr.mxu0 0.0
    %7328 = vmatpush1.msra.mxu0 0.0
    %7329 = vmatprep.subr.mxu0 0.0
    %7330 = vmatpush1.msra.mxu0 0.0
    %7331 = vmatprep.subr.mxu0 0.0
    %7332 = vmatpush1.msra.mxu0 0.0
    %7333 = vmatprep.subr.mxu0 0.0
    %7334 = vmatpush1.msra.mxu0 0.0
    %7335 = vmatprep.subr.mxu0 0.0
    %7336 = vmatpush1.msra.mxu0 0.0
    %7337 = vmatprep.subr.mxu0 0.0
    %7338 = vmatpush1.msra.mxu0 0.0
    %7339 = vmatprep.subr.mxu0 0.0
    %7340 = vmatpush1.msra.mxu0 0.0
    %7341 = vmatprep.subr.mxu0 0.0
    %7342 = vmatpush1.msra.mxu0 0.0
    %7343 = vmatprep.subr.mxu0 0.0
    %7344 = vmatpush1.msra.mxu0 0.0
    %7345 = vmatprep.subr.mxu0 0.0
    %7346 = vmatpush1.msra.mxu0 0.0
    %7347 = vmatprep.subr.mxu0 0.0
    %7348 = vmatpush1.msra.mxu0 0.0
    %7349 = vmatprep.subr.mxu0 0.0
    %7350 = vmatpush1.msra.mxu0 0.0
    %7351 = vmatprep.subr.mxu0 0.0
    %7352 = vmatpush1.msra.mxu0 0.0
    %7353 = vmatprep.subr.mxu0 0.0
    %7354 = vmatpush1.msra.mxu0 0.0
    %7355 = vmatprep.subr.mxu0 0.0
    %7356 = vmatpush1.msra.mxu0 0.0
    %7357 = vmatprep.subr.mxu0 0.0
    %7358 = vmatpush1.msra.mxu0 0.0
    %7359 = vmatprep.subr.mxu0 0.0
    %7360 = vmatpush1.msra.mxu0 0.0
    %7361 = vmatprep.mubr.f32.mxu0 0.0
    %7362 = vmatmul.mubr.f32.gmra.mrb[0].mxu0 %v7295
    %v7363 = vpop.f32.mrb[0].mxu0
    %v7364 = vadd.f32 0.0, %v7363
    %v7365 = vpop.f32.mrb[0].mxu0
    %7366 = vdwg.mxu0
    %v7367 = vadd.f32 %v7210, %v7364
    %s7368 = scalar_lea.vmem %s8, 12
    %v7369 = vld [vmem:[%s7368] sm:$0x1]
    %v7371 = vsel %vm5488, %v7369, 0
    %7373 = vmatprep.subr.mxu0 0.0
    %7374 = vmatpush1.msra.mxu0 %v5483
    %7375 = vmatprep.subr.mxu0 0.0
    %7376 = vmatpush1.msra.mxu0 %v5484
    %7377 = vmatprep.subr.mxu0 0.0
    %7378 = vmatpush1.msra.mxu0 %v5485
    %7379 = vmatprep.subr.mxu0 0.0
    %7380 = vmatpush1.msra.mxu0 %v5486
    %7381 = vmatprep.subr.mxu0 0.0
    %7382 = vmatpush1.msra.mxu0 0.0
    %7383 = vmatprep.subr.mxu0 0.0
    %7384 = vmatpush1.msra.mxu0 0.0
    %7385 = vmatprep.subr.mxu0 0.0
    %7386 = vmatpush1.msra.mxu0 0.0
    %7387 = vmatprep.subr.mxu0 0.0
    %7388 = vmatpush1.msra.mxu0 0.0
    %7389 = vmatprep.subr.mxu0 0.0
    %7390 = vmatpush1.msra.mxu0 0.0
    %7391 = vmatprep.subr.mxu0 0.0
    %7392 = vmatpush1.msra.mxu0 0.0
    %7393 = vmatprep.subr.mxu0 0.0
    %7394 = vmatpush1.msra.mxu0 0.0
    %7395 = vmatprep.subr.mxu0 0.0
    %7396 = vmatpush1.msra.mxu0 0.0
    %7397 = vmatprep.subr.mxu0 0.0
    %7398 = vmatpush1.msra.mxu0 0.0
    %7399 = vmatprep.subr.mxu0 0.0
    %7400 = vmatpush1.msra.mxu0 0.0
    %7401 = vmatprep.subr.mxu0 0.0
    %7402 = vmatpush1.msra.mxu0 0.0
    %7403 = vmatprep.subr.mxu0 0.0
    %7404 = vmatpush1.msra.mxu0 0.0
    %7405 = vmatprep.subr.mxu0 0.0
    %7406 = vmatpush1.msra.mxu0 0.0
    %7407 = vmatprep.subr.mxu0 0.0
    %7408 = vmatpush1.msra.mxu0 0.0
    %7409 = vmatprep.subr.mxu0 0.0
    %7410 = vmatpush1.msra.mxu0 0.0
    %7411 = vmatprep.subr.mxu0 0.0
    %7412 = vmatpush1.msra.mxu0 0.0
    %7413 = vmatprep.subr.mxu0 0.0
    %7414 = vmatpush1.msra.mxu0 0.0
    %7415 = vmatprep.subr.mxu0 0.0
    %7416 = vmatpush1.msra.mxu0 0.0
    %7417 = vmatprep.subr.mxu0 0.0
    %7418 = vmatpush1.msra.mxu0 0.0
    %7419 = vmatprep.subr.mxu0 0.0
    %7420 = vmatpush1.msra.mxu0 0.0
    %7421 = vmatprep.subr.mxu0 0.0
    %7422 = vmatpush1.msra.mxu0 0.0
    %7423 = vmatprep.subr.mxu0 0.0
    %7424 = vmatpush1.msra.mxu0 0.0
    %7425 = vmatprep.subr.mxu0 0.0
    %7426 = vmatpush1.msra.mxu0 0.0
    %7427 = vmatprep.subr.mxu0 0.0
    %7428 = vmatpush1.msra.mxu0 0.0
    %7429 = vmatprep.subr.mxu0 0.0
    %7430 = vmatpush1.msra.mxu0 0.0
    %7431 = vmatprep.subr.mxu0 0.0
    %7432 = vmatpush1.msra.mxu0 0.0
    %7433 = vmatprep.subr.mxu0 0.0
    %7434 = vmatpush1.msra.mxu0 0.0
    %7435 = vmatprep.subr.mxu0 0.0
    %7436 = vmatpush1.msra.mxu0 0.0
    %7437 = vmatprep.mubr.f32.mxu0 0.0
    %7438 = vmatmul.mubr.f32.gmra.mrb[0].mxu0 %v7371
    %v7439 = vpop.f32.mrb[0].mxu0
    %v7440 = vadd.f32 0.0, %v7439
    %v7441 = vpop.f32.mrb[0].mxu0
    %7442 = vdwg.mxu0
    %s7443 = scalar_lea.vmem %s9, 672
    %v7444 = vld [vmem:[%s7443] sm:$0xff]
    %v7445 = vld [vmem:[%s7443 + $0x8] sm:$0xff]
    %v7446 = vld [vmem:[%s7443 + $0x10] sm:$0xff]
    %v7447 = vld [vmem:[%s7443 + $0x18] sm:$0xff]
    %v7448 = vld [vmem:[%s7443 + $0x20] sm:$0xff]
    %v7449 = vld [vmem:[%s7443 + $0x28] sm:$0xff]
    %v7450 = vld [vmem:[%s7443 + $0x30] sm:$0xff]
    %v7452 = vsel %vm5362, %v7440, 0
    %7454 = vmatprep.subr.mxu0 0.0
    %7455 = vmatpush1.msra.mxu0 %v7444
    %7456 = vmatprep.subr.mxu0 0.0
    %7457 = vmatpush1.msra.mxu0 %v7445
    %7458 = vmatprep.subr.mxu0 0.0
    %7459 = vmatpush1.msra.mxu0 %v7446
    %7460 = vmatprep.subr.mxu0 0.0
    %7461 = vmatpush1.msra.mxu0 %v7447
    %7462 = vmatprep.subr.mxu0 0.0
    %7463 = vmatpush1.msra.mxu0 %v7448
    %7464 = vmatprep.subr.mxu0 0.0
    %7465 = vmatpush1.msra.mxu0 %v7449
    %7466 = vmatprep.subr.mxu0 0.0
    %7467 = vmatpush1.msra.mxu0 %v7450
    %7468 = vmatprep.subr.mxu0 0.0
    %7469 = vmatpush1.msra.mxu0 0.0
    %7470 = vmatprep.subr.mxu0 0.0
    %7471 = vmatpush1.msra.mxu0 0.0
    %7472 = vmatprep.subr.mxu0 0.0
    %7473 = vmatpush1.msra.mxu0 0.0
    %7474 = vmatprep.subr.mxu0 0.0
    %7475 = vmatpush1.msra.mxu0 0.0
    %7476 = vmatprep.subr.mxu0 0.0
    %7477 = vmatpush1.msra.mxu0 0.0
    %7478 = vmatprep.subr.mxu0 0.0
    %7479 = vmatpush1.msra.mxu0 0.0
    %7480 = vmatprep.subr.mxu0 0.0
    %7481 = vmatpush1.msra.mxu0 0.0
    %7482 = vmatprep.subr.mxu0 0.0
    %7483 = vmatpush1.msra.mxu0 0.0
    %7484 = vmatprep.subr.mxu0 0.0
    %7485 = vmatpush1.msra.mxu0 0.0
    %7486 = vmatprep.subr.mxu0 0.0
    %7487 = vmatpush1.msra.mxu0 0.0
    %7488 = vmatprep.subr.mxu0 0.0
    %7489 = vmatpush1.msra.mxu0 0.0
    %7490 = vmatprep.subr.mxu0 0.0
    %7491 = vmatpush1.msra.mxu0 0.0
    %7492 = vmatprep.subr.mxu0 0.0
    %7493 = vmatpush1.msra.mxu0 0.0
    %7494 = vmatprep.subr.mxu0 0.0
    %7495 = vmatpush1.msra.mxu0 0.0
    %7496 = vmatprep.subr.mxu0 0.0
    %7497 = vmatpush1.msra.mxu0 0.0
    %7498 = vmatprep.subr.mxu0 0.0
    %7499 = vmatpush1.msra.mxu0 0.0
    %7500 = vmatprep.subr.mxu0 0.0
    %7501 = vmatpush1.msra.mxu0 0.0
    %7502 = vmatprep.subr.mxu0 0.0
    %7503 = vmatpush1.msra.mxu0 0.0
    %7504 = vmatprep.subr.mxu0 0.0
    %7505 = vmatpush1.msra.mxu0 0.0
    %7506 = vmatprep.subr.mxu0 0.0
    %7507 = vmatpush1.msra.mxu0 0.0
    %7508 = vmatprep.subr.mxu0 0.0
    %7509 = vmatpush1.msra.mxu0 0.0
    %7510 = vmatprep.subr.mxu0 0.0
    %7511 = vmatpush1.msra.mxu0 0.0
    %7512 = vmatprep.subr.mxu0 0.0
    %7513 = vmatpush1.msra.mxu0 0.0
    %7514 = vmatprep.subr.mxu0 0.0
    %7515 = vmatpush1.msra.mxu0 0.0
    %7516 = vmatprep.subr.mxu0 0.0
    %7517 = vmatpush1.msra.mxu0 0.0
    %7518 = vmatprep.mubr.f32.mxu0 0.0
    %7519 = vmatmul.mubr.f32.gmra.mrb[0].mxu0 %v7452
    %v7520 = vpop.f32.mrb[0].mxu0
    %v7521 = vadd.f32 0.0, %v7520
    %v7522 = vpop.f32.mrb[0].mxu0
    %7523 = vdwg.mxu0
    %v7524 = vadd.f32 %v7367, %v7521
    %s7525 = scalar_lea.vmem %s8, 13
    %v7526 = vld [vmem:[%s7525] sm:$0x1]
    %v7528 = vsel %vm5488, %v7526, 0
    %7530 = vmatprep.subr.mxu0 0.0
    %7531 = vmatpush1.msra.mxu0 %v5483
    %7532 = vmatprep.subr.mxu0 0.0
    %7533 = vmatpush1.msra.mxu0 %v5484
    %7534 = vmatprep.subr.mxu0 0.0
    %7535 = vmatpush1.msra.mxu0 %v5485
    %7536 = vmatprep.subr.mxu0 0.0
    %7537 = vmatpush1.msra.mxu0 %v5486
    %7538 = vmatprep.subr.mxu0 0.0
    %7539 = vmatpush1.msra.mxu0 0.0
    %7540 = vmatprep.subr.mxu0 0.0
    %7541 = vmatpush1.msra.mxu0 0.0
    %7542 = vmatprep.subr.mxu0 0.0
    %7543 = vmatpush1.msra.mxu0 0.0
    %7544 = vmatprep.subr.mxu0 0.0
    %7545 = vmatpush1.msra.mxu0 0.0
    %7546 = vmatprep.subr.mxu0 0.0
    %7547 = vmatpush1.msra.mxu0 0.0
    %7548 = vmatprep.subr.mxu0 0.0
    %7549 = vmatpush1.msra.mxu0 0.0
    %7550 = vmatprep.subr.mxu0 0.0
    %7551 = vmatpush1.msra.mxu0 0.0
    %7552 = vmatprep.subr.mxu0 0.0
    %7553 = vmatpush1.msra.mxu0 0.0
    %7554 = vmatprep.subr.mxu0 0.0
    %7555 = vmatpush1.msra.mxu0 0.0
    %7556 = vmatprep.subr.mxu0 0.0
    %7557 = vmatpush1.msra.mxu0 0.0
    %7558 = vmatprep.subr.mxu0 0.0
    %7559 = vmatpush1.msra.mxu0 0.0
    %7560 = vmatprep.subr.mxu0 0.0
    %7561 = vmatpush1.msra.mxu0 0.0
    %7562 = vmatprep.subr.mxu0 0.0
    %7563 = vmatpush1.msra.mxu0 0.0
    %7564 = vmatprep.subr.mxu0 0.0
    %7565 = vmatpush1.msra.mxu0 0.0
    %7566 = vmatprep.subr.mxu0 0.0
    %7567 = vmatpush1.msra.mxu0 0.0
    %7568 = vmatprep.subr.mxu0 0.0
    %7569 = vmatpush1.msra.mxu0 0.0
    %7570 = vmatprep.subr.mxu0 0.0
    %7571 = vmatpush1.msra.mxu0 0.0
    %7572 = vmatprep.subr.mxu0 0.0
    %7573 = vmatpush1.msra.mxu0 0.0
    %7574 = vmatprep.subr.mxu0 0.0
    %7575 = vmatpush1.msra.mxu0 0.0
    %7576 = vmatprep.subr.mxu0 0.0
    %7577 = vmatpush1.msra.mxu0 0.0
    %7578 = vmatprep.subr.mxu0 0.0
    %7579 = vmatpush1.msra.mxu0 0.0
    %7580 = vmatprep.subr.mxu0 0.0
    %7581 = vmatpush1.msra.mxu0 0.0
    %7582 = vmatprep.subr.mxu0 0.0
    %7583 = vmatpush1.msra.mxu0 0.0
    %7584 = vmatprep.subr.mxu0 0.0
    %7585 = vmatpush1.msra.mxu0 0.0
    %7586 = vmatprep.subr.mxu0 0.0
    %7587 = vmatpush1.msra.mxu0 0.0
    %7588 = vmatprep.subr.mxu0 0.0
    %7589 = vmatpush1.msra.mxu0 0.0
    %7590 = vmatprep.subr.mxu0 0.0
    %7591 = vmatpush1.msra.mxu0 0.0
    %7592 = vmatprep.subr.mxu0 0.0
    %7593 = vmatpush1.msra.mxu0 0.0
    %7594 = vmatprep.mubr.f32.mxu0 0.0
    %7595 = vmatmul.mubr.f32.gmra.mrb[0].mxu0 %v7528
    %v7596 = vpop.f32.mrb[0].mxu0
    %v7597 = vadd.f32 0.0, %v7596
    %v7598 = vpop.f32.mrb[0].mxu0
    %7599 = vdwg.mxu0
    %s7600 = scalar_lea.vmem %s9, 728
    %v7601 = vld [vmem:[%s7600] sm:$0xff]
    %v7602 = vld [vmem:[%s7600 + $0x8] sm:$0xff]
    %v7603 = vld [vmem:[%s7600 + $0x10] sm:$0xff]
    %v7604 = vld [vmem:[%s7600 + $0x18] sm:$0xff]
    %v7605 = vld [vmem:[%s7600 + $0x20] sm:$0xff]
    %v7606 = vld [vmem:[%s7600 + $0x28] sm:$0xff]
    %v7607 = vld [vmem:[%s7600 + $0x30] sm:$0xff]
    %v7609 = vsel %vm5362, %v7597, 0
    %7611 = vmatprep.subr.mxu0 0.0
    %7612 = vmatpush1.msra.mxu0 %v7601
    %7613 = vmatprep.subr.mxu0 0.0
    %7614 = vmatpush1.msra.mxu0 %v7602
    %7615 = vmatprep.subr.mxu0 0.0
    %7616 = vmatpush1.msra.mxu0 %v7603
    %7617 = vmatprep.subr.mxu0 0.0
    %7618 = vmatpush1.msra.mxu0 %v7604
    %7619 = vmatprep.subr.mxu0 0.0
    %7620 = vmatpush1.msra.mxu0 %v7605
    %7621 = vmatprep.subr.mxu0 0.0
    %7622 = vmatpush1.msra.mxu0 %v7606
    %7623 = vmatprep.subr.mxu0 0.0
    %7624 = vmatpush1.msra.mxu0 %v7607
    %7625 = vmatprep.subr.mxu0 0.0
    %7626 = vmatpush1.msra.mxu0 0.0
    %7627 = vmatprep.subr.mxu0 0.0
    %7628 = vmatpush1.msra.mxu0 0.0
    %7629 = vmatprep.subr.mxu0 0.0
    %7630 = vmatpush1.msra.mxu0 0.0
    %7631 = vmatprep.subr.mxu0 0.0
    %7632 = vmatpush1.msra.mxu0 0.0
    %7633 = vmatprep.subr.mxu0 0.0
    %7634 = vmatpush1.msra.mxu0 0.0
    %7635 = vmatprep.subr.mxu0 0.0
    %7636 = vmatpush1.msra.mxu0 0.0
    %7637 = vmatprep.subr.mxu0 0.0
    %7638 = vmatpush1.msra.mxu0 0.0
    %7639 = vmatprep.subr.mxu0 0.0
    %7640 = vmatpush1.msra.mxu0 0.0
    %7641 = vmatprep.subr.mxu0 0.0
    %7642 = vmatpush1.msra.mxu0 0.0
    %7643 = vmatprep.subr.mxu0 0.0
    %7644 = vmatpush1.msra.mxu0 0.0
    %7645 = vmatprep.subr.mxu0 0.0
    %7646 = vmatpush1.msra.mxu0 0.0
    %7647 = vmatprep.subr.mxu0 0.0
    %7648 = vmatpush1.msra.mxu0 0.0
    %7649 = vmatprep.subr.mxu0 0.0
    %7650 = vmatpush1.msra.mxu0 0.0
    %7651 = vmatprep.subr.mxu0 0.0
    %7652 = vmatpush1.msra.mxu0 0.0
    %7653 = vmatprep.subr.mxu0 0.0
    %7654 = vmatpush1.msra.mxu0 0.0
    %7655 = vmatprep.subr.mxu0 0.0
    %7656 = vmatpush1.msra.mxu0 0.0
    %7657 = vmatprep.subr.mxu0 0.0
    %7658 = vmatpush1.msra.mxu0 0.0
    %7659 = vmatprep.subr.mxu0 0.0
    %7660 = vmatpush1.msra.mxu0 0.0
    %7661 = vmatprep.subr.mxu0 0.0
    %7662 = vmatpush1.msra.mxu0 0.0
    %7663 = vmatprep.subr.mxu0 0.0
    %7664 = vmatpush1.msra.mxu0 0.0
    %7665 = vmatprep.subr.mxu0 0.0
    %7666 = vmatpush1.msra.mxu0 0.0
    %7667 = vmatprep.subr.mxu0 0.0
    %7668 = vmatpush1.msra.mxu0 0.0
    %7669 = vmatprep.subr.mxu0 0.0
    %7670 = vmatpush1.msra.mxu0 0.0
    %7671 = vmatprep.subr.mxu0 0.0
    %7672 = vmatpush1.msra.mxu0 0.0
    %7673 = vmatprep.subr.mxu0 0.0
    %7674 = vmatpush1.msra.mxu0 0.0
    %7675 = vmatprep.mubr.f32.mxu0 0.0
    %7676 = vmatmul.mubr.f32.gmra.mrb[0].mxu0 %v7609
    %v7677 = vpop.f32.mrb[0].mxu0
    %v7678 = vadd.f32 0.0, %v7677
    %v7679 = vpop.f32.mrb[0].mxu0
    %7680 = vdwg.mxu0
    %v7681 = vadd.f32 %v7524, %v7678
    %s7682 = scalar_lea.vmem %s8, 14
    %v7683 = vld [vmem:[%s7682] sm:$0x1]
    %v7685 = vsel %vm5488, %v7683, 0
    %7687 = vmatprep.subr.mxu0 0.0
    %7688 = vmatpush1.msra.mxu0 %v5483
    %7689 = vmatprep.subr.mxu0 0.0
    %7690 = vmatpush1.msra.mxu0 %v5484
    %7691 = vmatprep.subr.mxu0 0.0
    %7692 = vmatpush1.msra.mxu0 %v5485
    %7693 = vmatprep.subr.mxu0 0.0
    %7694 = vmatpush1.msra.mxu0 %v5486
    %7695 = vmatprep.subr.mxu0 0.0
    %7696 = vmatpush1.msra.mxu0 0.0
    %7697 = vmatprep.subr.mxu0 0.0
    %7698 = vmatpush1.msra.mxu0 0.0
    %7699 = vmatprep.subr.mxu0 0.0
    %7700 = vmatpush1.msra.mxu0 0.0
    %7701 = vmatprep.subr.mxu0 0.0
    %7702 = vmatpush1.msra.mxu0 0.0
    %7703 = vmatprep.subr.mxu0 0.0
    %7704 = vmatpush1.msra.mxu0 0.0
    %7705 = vmatprep.subr.mxu0 0.0
    %7706 = vmatpush1.msra.mxu0 0.0
    %7707 = vmatprep.subr.mxu0 0.0
    %7708 = vmatpush1.msra.mxu0 0.0
    %7709 = vmatprep.subr.mxu0 0.0
    %7710 = vmatpush1.msra.mxu0 0.0
    %7711 = vmatprep.subr.mxu0 0.0
    %7712 = vmatpush1.msra.mxu0 0.0
    %7713 = vmatprep.subr.mxu0 0.0
    %7714 = vmatpush1.msra.mxu0 0.0
    %7715 = vmatprep.subr.mxu0 0.0
    %7716 = vmatpush1.msra.mxu0 0.0
    %7717 = vmatprep.subr.mxu0 0.0
    %7718 = vmatpush1.msra.mxu0 0.0
    %7719 = vmatprep.subr.mxu0 0.0
    %7720 = vmatpush1.msra.mxu0 0.0
    %7721 = vmatprep.subr.mxu0 0.0
    %7722 = vmatpush1.msra.mxu0 0.0
    %7723 = vmatprep.subr.mxu0 0.0
    %7724 = vmatpush1.msra.mxu0 0.0
    %7725 = vmatprep.subr.mxu0 0.0
    %7726 = vmatpush1.msra.mxu0 0.0
    %7727 = vmatprep.subr.mxu0 0.0
    %7728 = vmatpush1.msra.mxu0 0.0
    %7729 = vmatprep.subr.mxu0 0.0
    %7730 = vmatpush1.msra.mxu0 0.0
    %7731 = vmatprep.subr.mxu0 0.0
    %7732 = vmatpush1.msra.mxu0 0.0
    %7733 = vmatprep.subr.mxu0 0.0
    %7734 = vmatpush1.msra.mxu0 0.0
    %7735 = vmatprep.subr.mxu0 0.0
    %7736 = vmatpush1.msra.mxu0 0.0
    %7737 = vmatprep.subr.mxu0 0.0
    %7738 = vmatpush1.msra.mxu0 0.0
    %7739 = vmatprep.subr.mxu0 0.0
    %7740 = vmatpush1.msra.mxu0 0.0
    %7741 = vmatprep.subr.mxu0 0.0
    %7742 = vmatpush1.msra.mxu0 0.0
    %7743 = vmatprep.subr.mxu0 0.0
    %7744 = vmatpush1.msra.mxu0 0.0
    %7745 = vmatprep.subr.mxu0 0.0
    %7746 = vmatpush1.msra.mxu0 0.0
    %7747 = vmatprep.subr.mxu0 0.0
    %7748 = vmatpush1.msra.mxu0 0.0
    %7749 = vmatprep.subr.mxu0 0.0
    %7750 = vmatpush1.msra.mxu0 0.0
    %7751 = vmatprep.mubr.f32.mxu0 0.0
    %7752 = vmatmul.mubr.f32.gmra.mrb[0].mxu0 %v7685
    %v7753 = vpop.f32.mrb[0].mxu0
    %v7754 = vadd.f32 0.0, %v7753
    %v7755 = vpop.f32.mrb[0].mxu0
    %7756 = vdwg.mxu0
    %s7757 = scalar_lea.vmem %s9, 784
    %v7758 = vld [vmem:[%s7757] sm:$0xff]
    %v7759 = vld [vmem:[%s7757 + $0x8] sm:$0xff]
    %v7760 = vld [vmem:[%s7757 + $0x10] sm:$0xff]
    %v7761 = vld [vmem:[%s7757 + $0x18] sm:$0xff]
    %v7762 = vld [vmem:[%s7757 + $0x20] sm:$0xff]
    %v7763 = vld [vmem:[%s7757 + $0x28] sm:$0xff]
    %v7764 = vld [vmem:[%s7757 + $0x30] sm:$0xff]
    %v7766 = vsel %vm5362, %v7754, 0
    %7768 = vmatprep.subr.mxu0 0.0
    %7769 = vmatpush1.msra.mxu0 %v7758
    %7770 = vmatprep.subr.mxu0 0.0
    %7771 = vmatpush1.msra.mxu0 %v7759
    %7772 = vmatprep.subr.mxu0 0.0
    %7773 = vmatpush1.msra.mxu0 %v7760
    %7774 = vmatprep.subr.mxu0 0.0
    %7775 = vmatpush1.msra.mxu0 %v7761
    %7776 = vmatprep.subr.mxu0 0.0
    %7777 = vmatpush1.msra.mxu0 %v7762
    %7778 = vmatprep.subr.mxu0 0.0
    %7779 = vmatpush1.msra.mxu0 %v7763
    %7780 = vmatprep.subr.mxu0 0.0
    %7781 = vmatpush1.msra.mxu0 %v7764
    %7782 = vmatprep.subr.mxu0 0.0
    %7783 = vmatpush1.msra.mxu0 0.0
    %7784 = vmatprep.subr.mxu0 0.0
    %7785 = vmatpush1.msra.mxu0 0.0
    %7786 = vmatprep.subr.mxu0 0.0
    %7787 = vmatpush1.msra.mxu0 0.0
    %7788 = vmatprep.subr.mxu0 0.0
    %7789 = vmatpush1.msra.mxu0 0.0
    %7790 = vmatprep.subr.mxu0 0.0
    %7791 = vmatpush1.msra.mxu0 0.0
    %7792 = vmatprep.subr.mxu0 0.0
    %7793 = vmatpush1.msra.mxu0 0.0
    %7794 = vmatprep.subr.mxu0 0.0
    %7795 = vmatpush1.msra.mxu0 0.0
    %7796 = vmatprep.subr.mxu0 0.0
    %7797 = vmatpush1.msra.mxu0 0.0
    %7798 = vmatprep.subr.mxu0 0.0
    %7799 = vmatpush1.msra.mxu0 0.0
    %7800 = vmatprep.subr.mxu0 0.0
    %7801 = vmatpush1.msra.mxu0 0.0
    %7802 = vmatprep.subr.mxu0 0.0
    %7803 = vmatpush1.msra.mxu0 0.0
    %7804 = vmatprep.subr.mxu0 0.0
    %7805 = vmatpush1.msra.mxu0 0.0
    %7806 = vmatprep.subr.mxu0 0.0
    %7807 = vmatpush1.msra.mxu0 0.0
    %7808 = vmatprep.subr.mxu0 0.0
    %7809 = vmatpush1.msra.mxu0 0.0
    %7810 = vmatprep.subr.mxu0 0.0
    %7811 = vmatpush1.msra.mxu0 0.0
    %7812 = vmatprep.subr.mxu0 0.0
    %7813 = vmatpush1.msra.mxu0 0.0
    %7814 = vmatprep.subr.mxu0 0.0
    %7815 = vmatpush1.msra.mxu0 0.0
    %7816 = vmatprep.subr.mxu0 0.0
    %7817 = vmatpush1.msra.mxu0 0.0
    %7818 = vmatprep.subr.mxu0 0.0
    %7819 = vmatpush1.msra.mxu0 0.0
    %7820 = vmatprep.subr.mxu0 0.0
    %7821 = vmatpush1.msra.mxu0 0.0
    %7822 = vmatprep.subr.mxu0 0.0
    %7823 = vmatpush1.msra.mxu0 0.0
    %7824 = vmatprep.subr.mxu0 0.0
    %7825 = vmatpush1.msra.mxu0 0.0
    %7826 = vmatprep.subr.mxu0 0.0
    %7827 = vmatpush1.msra.mxu0 0.0
    %7828 = vmatprep.subr.mxu0 0.0
    %7829 = vmatpush1.msra.mxu0 0.0
    %7830 = vmatprep.subr.mxu0 0.0
    %7831 = vmatpush1.msra.mxu0 0.0
    %7832 = vmatprep.mubr.f32.mxu0 0.0
    %7833 = vmatmul.mubr.f32.gmra.mrb[0].mxu0 %v7766
    %v7834 = vpop.f32.mrb[0].mxu0
    %v7835 = vadd.f32 0.0, %v7834
    %v7836 = vpop.f32.mrb[0].mxu0
    %7837 = vdwg.mxu0
    %v7838 = vadd.f32 %v7681, %v7835
    %s7839 = scalar_lea.vmem %s8, 15
    %v7840 = vld [vmem:[%s7839] sm:$0x1]
    %v7842 = vsel %vm5488, %v7840, 0
    %7844 = vmatprep.subr.mxu0 0.0
    %7845 = vmatpush1.msra.mxu0 %v5483
    %7846 = vmatprep.subr.mxu0 0.0
    %7847 = vmatpush1.msra.mxu0 %v5484
    %7848 = vmatprep.subr.mxu0 0.0
    %7849 = vmatpush1.msra.mxu0 %v5485
    %7850 = vmatprep.subr.mxu0 0.0
    %7851 = vmatpush1.msra.mxu0 %v5486
    %7852 = vmatprep.subr.mxu0 0.0
    %7853 = vmatpush1.msra.mxu0 0.0
    %7854 = vmatprep.subr.mxu0 0.0
    %7855 = vmatpush1.msra.mxu0 0.0
    %7856 = vmatprep.subr.mxu0 0.0
    %7857 = vmatpush1.msra.mxu0 0.0
    %7858 = vmatprep.subr.mxu0 0.0
    %7859 = vmatpush1.msra.mxu0 0.0
    %7860 = vmatprep.subr.mxu0 0.0
    %7861 = vmatpush1.msra.mxu0 0.0
    %7862 = vmatprep.subr.mxu0 0.0
    %7863 = vmatpush1.msra.mxu0 0.0
    %7864 = vmatprep.subr.mxu0 0.0
    %7865 = vmatpush1.msra.mxu0 0.0
    %7866 = vmatprep.subr.mxu0 0.0
    %7867 = vmatpush1.msra.mxu0 0.0
    %7868 = vmatprep.subr.mxu0 0.0
    %7869 = vmatpush1.msra.mxu0 0.0
    %7870 = vmatprep.subr.mxu0 0.0
    %7871 = vmatpush1.msra.mxu0 0.0
    %7872 = vmatprep.subr.mxu0 0.0
    %7873 = vmatpush1.msra.mxu0 0.0
    %7874 = vmatprep.subr.mxu0 0.0
    %7875 = vmatpush1.msra.mxu0 0.0
    %7876 = vmatprep.subr.mxu0 0.0
    %7877 = vmatpush1.msra.mxu0 0.0
    %7878 = vmatprep.subr.mxu0 0.0
    %7879 = vmatpush1.msra.mxu0 0.0
    %7880 = vmatprep.subr.mxu0 0.0
    %7881 = vmatpush1.msra.mxu0 0.0
    %7882 = vmatprep.subr.mxu0 0.0
    %7883 = vmatpush1.msra.mxu0 0.0
    %7884 = vmatprep.subr.mxu0 0.0
    %7885 = vmatpush1.msra.mxu0 0.0
    %7886 = vmatprep.subr.mxu0 0.0
    %7887 = vmatpush1.msra.mxu0 0.0
    %7888 = vmatprep.subr.mxu0 0.0
    %7889 = vmatpush1.msra.mxu0 0.0
    %7890 = vmatprep.subr.mxu0 0.0
    %7891 = vmatpush1.msra.mxu0 0.0
    %7892 = vmatprep.subr.mxu0 0.0
    %7893 = vmatpush1.msra.mxu0 0.0
    %7894 = vmatprep.subr.mxu0 0.0
    %7895 = vmatpush1.msra.mxu0 0.0
    %7896 = vmatprep.subr.mxu0 0.0
    %7897 = vmatpush1.msra.mxu0 0.0
    %7898 = vmatprep.subr.mxu0 0.0
    %7899 = vmatpush1.msra.mxu0 0.0
    %7900 = vmatprep.subr.mxu0 0.0
    %7901 = vmatpush1.msra.mxu0 0.0
    %7902 = vmatprep.subr.mxu0 0.0
    %7903 = vmatpush1.msra.mxu0 0.0
    %7904 = vmatprep.subr.mxu0 0.0
    %7905 = vmatpush1.msra.mxu0 0.0
    %7906 = vmatprep.subr.mxu0 0.0
    %7907 = vmatpush1.msra.mxu0 0.0
    %7908 = vmatprep.mubr.f32.mxu0 0.0
    %7909 = vmatmul.mubr.f32.gmra.mrb[0].mxu0 %v7842
    %v7910 = vpop.f32.mrb[0].mxu0
    %v7911 = vadd.f32 0.0, %v7910
    %v7912 = vpop.f32.mrb[0].mxu0
    %7913 = vdwg.mxu0
    %s7914 = scalar_lea.vmem %s9, 840
    %v7915 = vld [vmem:[%s7914] sm:$0xff]
    %v7916 = vld [vmem:[%s7914 + $0x8] sm:$0xff]
    %v7917 = vld [vmem:[%s7914 + $0x10] sm:$0xff]
    %v7918 = vld [vmem:[%s7914 + $0x18] sm:$0xff]
    %v7919 = vld [vmem:[%s7914 + $0x20] sm:$0xff]
    %v7920 = vld [vmem:[%s7914 + $0x28] sm:$0xff]
    %v7921 = vld [vmem:[%s7914 + $0x30] sm:$0xff]
    %v7923 = vsel %vm5362, %v7911, 0
    %7925 = vmatprep.subr.mxu0 0.0
    %7926 = vmatpush1.msra.mxu0 %v7915
    %7927 = vmatprep.subr.mxu0 0.0
    %7928 = vmatpush1.msra.mxu0 %v7916
    %7929 = vmatprep.subr.mxu0 0.0
    %7930 = vmatpush1.msra.mxu0 %v7917
    %7931 = vmatprep.subr.mxu0 0.0
    %7932 = vmatpush1.msra.mxu0 %v7918
    %7933 = vmatprep.subr.mxu0 0.0
    %7934 = vmatpush1.msra.mxu0 %v7919
    %7935 = vmatprep.subr.mxu0 0.0
    %7936 = vmatpush1.msra.mxu0 %v7920
    %7937 = vmatprep.subr.mxu0 0.0
    %7938 = vmatpush1.msra.mxu0 %v7921
    %7939 = vmatprep.subr.mxu0 0.0
    %7940 = vmatpush1.msra.mxu0 0.0
    %7941 = vmatprep.subr.mxu0 0.0
    %7942 = vmatpush1.msra.mxu0 0.0
    %7943 = vmatprep.subr.mxu0 0.0
    %7944 = vmatpush1.msra.mxu0 0.0
    %7945 = vmatprep.subr.mxu0 0.0
    %7946 = vmatpush1.msra.mxu0 0.0
    %7947 = vmatprep.subr.mxu0 0.0
    %7948 = vmatpush1.msra.mxu0 0.0
    %7949 = vmatprep.subr.mxu0 0.0
    %7950 = vmatpush1.msra.mxu0 0.0
    %7951 = vmatprep.subr.mxu0 0.0
    %7952 = vmatpush1.msra.mxu0 0.0
    %7953 = vmatprep.subr.mxu0 0.0
    %7954 = vmatpush1.msra.mxu0 0.0
    %7955 = vmatprep.subr.mxu0 0.0
    %7956 = vmatpush1.msra.mxu0 0.0
    %7957 = vmatprep.subr.mxu0 0.0
    %7958 = vmatpush1.msra.mxu0 0.0
    %7959 = vmatprep.subr.mxu0 0.0
    %7960 = vmatpush1.msra.mxu0 0.0
    %7961 = vmatprep.subr.mxu0 0.0
    %7962 = vmatpush1.msra.mxu0 0.0
    %7963 = vmatprep.subr.mxu0 0.0
    %7964 = vmatpush1.msra.mxu0 0.0
    %7965 = vmatprep.subr.mxu0 0.0
    %7966 = vmatpush1.msra.mxu0 0.0
    %7967 = vmatprep.subr.mxu0 0.0
    %7968 = vmatpush1.msra.mxu0 0.0
    %7969 = vmatprep.subr.mxu0 0.0
    %7970 = vmatpush1.msra.mxu0 0.0
    %7971 = vmatprep.subr.mxu0 0.0
    %7972 = vmatpush1.msra.mxu0 0.0
    %7973 = vmatprep.subr.mxu0 0.0
    %7974 = vmatpush1.msra.mxu0 0.0
    %7975 = vmatprep.subr.mxu0 0.0
    %7976 = vmatpush1.msra.mxu0 0.0
    %7977 = vmatprep.subr.mxu0 0.0
    %7978 = vmatpush1.msra.mxu0 0.0
    %7979 = vmatprep.subr.mxu0 0.0
    %7980 = vmatpush1.msra.mxu0 0.0
    %7981 = vmatprep.subr.mxu0 0.0
    %7982 = vmatpush1.msra.mxu0 0.0
    %7983 = vmatprep.subr.mxu0 0.0
    %7984 = vmatpush1.msra.mxu0 0.0
    %7985 = vmatprep.subr.mxu0 0.0
    %7986 = vmatpush1.msra.mxu0 0.0
    %7987 = vmatprep.subr.mxu0 0.0
    %7988 = vmatpush1.msra.mxu0 0.0
    %7989 = vmatprep.mubr.f32.mxu0 0.0
    %7990 = vmatmul.mubr.f32.gmra.mrb[0].mxu0 %v7923
    %v7991 = vpop.f32.mrb[0].mxu0
    %v7992 = vadd.f32 0.0, %v7991
    %v7993 = vpop.f32.mrb[0].mxu0
    %7994 = vdwg.mxu0
    %v7995 = vadd.f32 %v7838, %v7992
    %v7996 = vld [vmem:[#allocation2] sm:$0x1]
    %7998 = vset.pattern.permute.xlu0 0
    %7999 = vperm.xlu0 %7998, %v7996
    %v8000 = vpop.permute.xlu0 %7999
    %v8002 = vlaneseq
    %v8003 = vshrl.u32 %v8002, 7
    %v8004 = vsub.s32 0, %v8003
    %v8005 = vrot.slane %v8000, %v8004
    %v8006 = vadd.f32 %v7995, %v8005
    %vm8007 = vcmask 8192
    %8008 = vst.msk [vmem:[#allocation3] sm:$0x1] %vm8007, %v8006
    // Predicated region
    $region46: #{discriminator_forward.1} parent=1 // pred_check
      _
    $region47: #{discriminator_forward.1} parent=1 // pred_check_branch
      %8010 = sbr.rel (0) target = $region49
    $region48: #{discriminator_forward.1} parent=1 // pred_region
      %s8012 = ssub.s32 16, 16
      %8013 = vsyncadd [#allocation4], %s8012
      %s8015 = sshll.u32 [#allocation3], 4
      %s8016 = int_to_ptr.vmem [resolvable:$true] %s8015
      %8018 = dma.vmem_to_hbm [thread:$0]  %s8016, 16, %s11, [#allocation4]
    $region49: #{discriminator_forward.1} parent=1 // pred_fallthru
      _
    // Predicated region
    $region50: #{discriminator_forward.1} parent=1 // pred_check
      _
    $region51: #{discriminator_forward.1} parent=1 // pred_check_branch
      %8020 = sbr.rel (0) target = $region53
    $region52: #{discriminator_forward.1} parent=1 // pred_region
      %8021 = dma.done [#allocation4], 16
    $region53: #{discriminator_forward.1} parent=1 // pred_fallthru
      _
    %8022 = vsyncpa [#allocation4], 1

</llo_original>
